<compile_context>
chip_gen: v6e
topology: v6e:2x2x1
jax: 0.10.0
libtpu: 0.0.40
codegen_flags: <defaults>
</compile_context>

<pallas_src>
import functools

import jax
import jax.numpy as jnp
from jax.experimental import pallas as pl
from jax.experimental.pallas import tpu as pltpu

LRELU = 0.2
BN_EPS = 1e-5

# Tile targets (re-derived per call; demo shapes collapse to single blocks).
TILE_M_EDGE = 1024     # B*N rows per EdgeConv step (k folded in-kernel)
TILE_N_SEG = 2048      # points per seg-head step (input is only 192 lanes wide)
TILE_N_REDUCE = 512    # points per global-max step
TILE_C_REDUCE = 256    # output-channel chunk for the global-max convs
TILE_R_PAIR = 128      # query rows per k-NN score step
TILE_C_PAIR = 512      # key columns per k-NN score step


def _round_up(v, m):
    return ((v + m - 1) // m) * m


def _row_tile(m, target):
    """Sublane-axis tile (multiple of 8). Pads m up instead of one-full-block fallback."""
    if m <= target:
        t = _round_up(m, 8)
        return t, t
    t = _round_up(target, 8)
    return t, _round_up(m, t)


def _col_tile(n, target):
    """Lane-axis tile: multiple of 128, or the whole dim as a single block."""
    if n <= target:
        return n, n
    t = _round_up(target, 128)
    return t, _round_up(n, t)


def _leaky(h, slope=LRELU):
    return jnp.where(h >= 0.0, h, slope * h)


def _bf(a):
    return a.astype(jnp.bfloat16)


# --------------------------- Pallas kernels ---------------------------------

def _edgeconv_kernel(*refs, n_extra, slope, k):
    # refs: neigh (tm, k, C) bf16, center (tm, C) f32,
    #       wd (C, C1), wc (C, C1), s0 (1, C1), b0 (1, C1),
    #       [w, s, b] * n_extra, out (tm, Cout).
    neigh_ref, center_ref, wd_ref, wc_ref, s0_ref, b0_ref = refs[:6]
    extra = [refs[6 + 3 * i: 9 + 3 * i] for i in range(n_extra)]
    o_ref = refs[6 + 3 * n_extra]

    c32 = center_ref[...]                                     # (tm, C) f32
    wd = wd_ref[...]
    wc = wc_ref[...]
    s0 = s0_ref[...]
    b0 = b0_ref[...]
    extra_w = [(w_r[...], s_r[...], b_r[...]) for (w_r, s_r, b_r) in extra]

    # Hoisted: center @ Wc is constant over the k neighbours.
    hc = jnp.dot(c32.astype(wc.dtype), wc, preferred_element_type=jnp.float32)

    nb = neigh_ref[...]                                        # (tm, k, C) bf16
    acc = None
    for kk in range(k):                                        # k folded in-kernel
        d = nb[:, kk, :].astype(jnp.float32) - c32             # f32 difference (parity)
        h = jnp.dot(d.astype(wd.dtype), wd,
                    preferred_element_type=jnp.float32) + hc
        h = h * s0 + b0                                        # folded eval-mode BN
        h = jnp.where(h >= 0.0, h, slope * h)
        for (w, s, b) in extra_w:
            h = jnp.dot(h.astype(w.dtype), w, preferred_element_type=jnp.float32)
            h = h * s + b
            h = jnp.where(h >= 0.0, h, slope * h)
        acc = h if acc is None else jnp.maximum(acc, h)        # running max over k
    o_ref[...] = acc.astype(o_ref.dtype)


def edgeconv_max(neigh, center, layers, tile_m=TILE_M_EDGE):
    """Fused EdgeConv: conv chain on concat(neigh-center, center) + max over k.

    neigh: (M, k, C) bf16, center: (M, C) f32.
    layers[0] = (wd, wc, scale, bias) (split halves of the (2C, C1) weight);
    layers[1:] = (w, scale, bias).  Returns (M, Cout) f32.
    """
    M, k, C = neigh.shape
    cout = layers[-1][0].shape[-1]
    tm, mpad = _row_tile(M, tile_m)
    if mpad != M:
        neigh = jnp.pad(neigh, ((0, mpad - M), (0, 0), (0, 0)))
        center = jnp.pad(center, ((0, mpad - M), (0, 0)))

    in_specs = [pl.BlockSpec((tm, k, C), lambda i: (i, 0, 0)),
                pl.BlockSpec((tm, C), lambda i: (i, 0))]
    args = [neigh, center]

    def add_resident(a):                                       # weights/scales stay resident
        in_specs.append(pl.BlockSpec(a.shape, lambda i: (0, 0)))
        args.append(a)

    wd, wc, s0, b0 = layers[0]
    add_resident(wd)
    add_resident(wc)
    add_resident(s0.reshape(1, -1).astype(jnp.float32))
    add_resident(b0.reshape(1, -1).astype(jnp.float32))
    for (w, s, b) in layers[1:]:
        add_resident(w)
        add_resident(s.reshape(1, -1).astype(jnp.float32))
        add_resident(b.reshape(1, -1).astype(jnp.float32))

    out = pl.pallas_call(
        functools.partial(_edgeconv_kernel, n_extra=len(layers) - 1,
                          slope=LRELU, k=k),
        out_shape=jax.ShapeDtypeStruct((mpad, cout), jnp.float32),
        grid=(mpad // tm,),
        in_specs=in_specs,
        out_specs=pl.BlockSpec((tm, cout), lambda i: (i, 0)),
        compiler_params=pltpu.CompilerParams(dimension_semantics=("parallel",)),
    )(*args)
    return out[:M] if mpad != M else out


def _conv_globalmax_kernel(x_ref, w_ref, s_ref, b_ref, o_ref, acc_ref,
                           *, slope, n_valid, tn, masked):
    # 1x1 conv + BN + LeakyReLU on a column chunk, then global max over points.
    i = pl.program_id(2)
    w = w_ref[...]
    h = jnp.dot(x_ref[0].astype(w.dtype), w, preferred_element_type=jnp.float32)
    h = h * s_ref[...] + b_ref[...]
    h = jnp.where(h >= 0.0, h, slope * h)
    if masked:                                                 # mask padded rows
        row = jax.lax.broadcasted_iota(jnp.int32, (tn, 1), 0) + i * tn
        h = jnp.where(row < n_valid, h, -jnp.inf)
    hmax = jnp.max(h, axis=0, keepdims=True)                   # (1, tc)

    @pl.when(i == 0)
    def _():
        acc_ref[...] = jnp.full_like(acc_ref, -jnp.inf)

    acc_ref[...] = jnp.maximum(acc_ref[...], hmax)

    @pl.when(i == pl.num_programs(2) - 1)
    def _():
        o_ref[0] = acc_ref[...].astype(o_ref.dtype)


def conv_globalmax(x_bnc, w, s, b, tile_n=TILE_N_REDUCE, tile_c=TILE_C_REDUCE):
    """(B, N, Cin) -> (B, Cout): fused 1x1 conv + max over all N points."""
    B, N, cin = x_bnc.shape
    cout = w.shape[-1]
    tn, npad = _row_tile(N, tile_n)
    tc = tile_c if (cout > tile_c and cout % tile_c == 0) else cout
    if npad != N:
        x_bnc = jnp.pad(x_bnc, ((0, 0), (0, npad - N), (0, 0)))
    s2 = s.reshape(1, -1).astype(jnp.float32)
    b2 = b.reshape(1, -1).astype(jnp.float32)
    out = pl.pallas_call(
        functools.partial(_conv_globalmax_kernel, slope=LRELU, n_valid=N,
                          tn=tn, masked=(npad != N)),
        out_shape=jax.ShapeDtypeStruct((B, 1, cout), jnp.float32),
        grid=(B, cout // tc, npad // tn),
        in_specs=[pl.BlockSpec((1, tn, cin), lambda bb, cc, i: (bb, i, 0)),
                  pl.BlockSpec((cin, tc), lambda bb, cc, i: (0, cc)),
                  pl.BlockSpec((1, tc), lambda bb, cc, i: (0, cc)),
                  pl.BlockSpec((1, tc), lambda bb, cc, i: (0, cc))],
        out_specs=pl.BlockSpec((1, 1, tc), lambda bb, cc, i: (bb, 0, cc)),
        scratch_shapes=[pltpu.VMEM((1, tc), jnp.float32)],
        compiler_params=pltpu.CompilerParams(
            dimension_semantics=("parallel", "parallel", "arbitrary")),
    )(x_bnc, w, s2, b2)
    return out.reshape(B, cout)


def _pairwise_kernel(xq_ref, xt_ref, sq_ref, o_ref):
    # score[i, j] = 2 <x_i, x_j> - ||x_j||^2  (pairwise_distance + per-row const,
    # so top-k indices over j match the PyTorch reference).
    g = jnp.dot(xq_ref[0], xt_ref[0], preferred_element_type=jnp.float32)  # (tr, tc)
    o_ref[0] = 2.0 * g - sq_ref[0]


def knn_scores(x_cl, tile_r=TILE_R_PAIR, tile_c=TILE_C_PAIR):
    """x_cl: (B, N, C) f32 -> (B, N, Ncpad) scores (larger = closer); padded cols = -inf."""
    B, N, C = x_cl.shape
    tr, nrpad = _row_tile(N, tile_r)
    tc, ncpad = _col_tile(N, tile_c)
    xq = x_cl if nrpad == N else jnp.pad(x_cl, ((0, 0), (0, nrpad - N), (0, 0)))
    xt = jnp.transpose(x_cl, (0, 2, 1))                        # pre-transpose once
    sq = jnp.sum(jnp.square(x_cl), axis=-1)                    # (B, N)
    if ncpad != N:
        xt = jnp.pad(xt, ((0, 0), (0, 0), (0, ncpad - N)))
        sq = jnp.pad(sq, ((0, 0), (0, ncpad - N)), constant_values=jnp.inf)
    sq = sq.reshape(B, 1, ncpad)
    out = pl.pallas_call(
        _pairwise_kernel,
        out_shape=jax.ShapeDtypeStruct((B, nrpad, ncpad), jnp.float32),
        grid=(nrpad // tr, B, ncpad // tc),
        in_specs=[pl.BlockSpec((1, tr, C), lambda i, b, j: (b, i, 0)),
                  pl.BlockSpec((1, C, tc), lambda i, b, j: (b, 0, j)),
                  pl.BlockSpec((1, 1, tc), lambda i, b, j: (b, 0, j))],
        out_specs=pl.BlockSpec((1, tr, tc), lambda i, b, j: (b, i, j)),
        compiler_params=pltpu.CompilerParams(
            dimension_semantics=("parallel", "parallel", "parallel")),
    )(xq, xt, sq)
    return out[:, :N, :] if nrpad != N else out


def _seghead_kernel(x_ref, gb_ref, w8_ref, s8_ref, b8_ref,
                    w9_ref, s9_ref, b9_ref, w10_ref, s10_ref, b10_ref,
                    w11_ref, o_ref, *, slope):
    # conv8 (point half + per-batch glob bias) -> conv9 -> conv10 -> conv11.
    w8 = w8_ref[...]
    h = jnp.dot(x_ref[0].astype(w8.dtype), w8, preferred_element_type=jnp.float32)
    h = h + gb_ref[0]                                          # glob @ W8[:1088] per batch
    h = h * s8_ref[...] + b8_ref[...]
    h = jnp.where(h >= 0.0, h, slope * h)
    # TODO(synk): dp1/dp2 Dropout implemented as eval-mode identity (no RNG mask).
    for (w_r, s_r, b_r) in ((w9_ref, s9_ref, b9_ref), (w10_ref, s10_ref, b10_ref)):
        w = w_r[...]
        h = jnp.dot(h.astype(w.dtype), w, preferred_element_type=jnp.float32)
        h = h * s_r[...] + b_r[...]
        h = jnp.where(h >= 0.0, h, slope * h)
    w11 = w11_ref[...]
    h = jnp.dot(h.astype(w11.dtype), w11, preferred_element_type=jnp.float32)
    o_ref[0] = h.astype(o_ref.dtype)


def seg_head(x_bnc, gbias, w8, s8, b8, w9, s9, b9, w10, s10, b10, w11,
             tile_n=TILE_N_SEG):
    """x_bnc: (B, N, 192) point features; gbias: (B, 256) conv8 glob contribution."""
    B, N, cin = x_bnc.shape
    segpad = w11.shape[-1]
    tn, npad = _row_tile(N, tile_n)
    if npad != N:
        x_bnc = jnp.pad(x_bnc, ((0, 0), (0, npad - N), (0, 0)))
    gb = gbias.reshape(B, 1, -1).astype(jnp.float32)

    def rs(v):
        return v.reshape(1, -1).astype(jnp.float32)

    resident = [w8, rs(s8), rs(b8), w9, rs(s9), rs(b9), w10, rs(s10), rs(b10), w11]
    in_specs = ([pl.BlockSpec((1, tn, cin), lambda i, b: (b, i, 0)),
                 pl.BlockSpec((1, 1, gb.shape[-1]), lambda i, b: (b, 0, 0))]
                + [pl.BlockSpec(a.shape, lambda i, b: (0, 0)) for a in resident])
    out = pl.pallas_call(
        functools.partial(_seghead_kernel, slope=LRELU),
        out_shape=jax.ShapeDtypeStruct((B, npad, segpad), jnp.float32),
        grid=(npad // tn, B),
        in_specs=in_specs,
        out_specs=pl.BlockSpec((1, tn, segpad), lambda i, b: (b, i, 0)),
        compiler_params=pltpu.CompilerParams(
            dimension_semantics=("parallel", "parallel")),
    )(x_bnc, gb, *resident)
    return out[:, :N] if npad != N else out


# ----------------------------- model glue ------------------------------------

def get_graph_feature(x_cl, k):
    """x_cl: (B, N, C) f32 -> (neigh (B*N, k, C) bf16, center (B*N, C) f32).

    The (2C)-wide edge-feature concat is folded into the edge-conv kernel by
    splitting the first-layer weight; k is reduced in-kernel, so neigh keeps
    the gather's natural (B*N, k, C) layout (no transpose).
    """
    B, N, C = x_cl.shape
    scores = knn_scores(x_cl)                                   # f32 score inputs (parity)
    _, idx = jax.lax.top_k(scores, k)                           # (B, N, k)
    # TODO(synk): a scalar-prefetched in-kernel gather (idx in SMEM, x in HBM)
    # would remove this XLA gather's HBM round trip.
    neigh = jax.vmap(lambda xb, ib: xb[ib])(x_cl, idx)          # (B, N, k, C)
    neigh = neigh.reshape(B * N, k, C).astype(jnp.bfloat16)
    center = x_cl.reshape(B * N, C)
    return neigh, center


def transform_net_forward(neigh0, center0, p, B, N):
    w1 = _bf(p["t_conv1_w"])
    h = edgeconv_max(
        neigh0, center0,
        layers=[(w1[:3], w1[3:], p["t_bn1_s"], p["t_bn1_b"]),
                (_bf(p["t_conv2_w"]), p["t_bn2_s"], p["t_bn2_b"])])   # (B*N, 128)
    h = conv_globalmax(h.reshape(B, N, 128), _bf(p["t_conv3_w"]),
                       p["t_bn3c_s"], p["t_bn3c_b"])                  # (B, 1024)

    # Tiny (B, .) head: left to XLA (far below one MXU tile).
    def lin_bn_lrelu(x, w, s, b):
        return _leaky(x @ w * s + b)

    h = lin_bn_lrelu(h, p["t_lin1_w"], p["t_bn3_s"], p["t_bn3_b"])
    h = lin_bn_lrelu(h, p["t_lin2_w"], p["t_bn4_s"], p["t_bn4_b"])
    t = h @ p["t_tr_w"] + p["t_tr_b"]
    return t.reshape(B, 3, 3)


def dgcnn_partseg_forward(x, l, p, k):
    # x: (B, 3, N) exactly like the PyTorch module; l: (B, 16) one-hot label.
    B, _, N = x.shape
    x_cl = jnp.transpose(x, (0, 2, 1)).astype(jnp.float32)      # (B, N, 3)

    neigh0, center0 = get_graph_feature(x_cl, k)
    t = transform_net_forward(neigh0, center0, p, B, N)         # (B, 3, 3)
    x_cl = jnp.einsum("bnc,bcd->bnd", x_cl, t)                  # tiny bmm: XLA

    # EdgeConv 1: conv1 (6->64) + conv2 (64->64) + max over k (one kernel).
    neigh, center = get_graph_feature(x_cl, k)
    w1 = _bf(p["conv1_w"])
    x1 = edgeconv_max(neigh, center,
                      [(w1[:3], w1[3:], p["bn1_s"], p["bn1_b"]),
                       (_bf(p["conv2_w"]), p["bn2_s"], p["bn2_b"])])   # (B*N, 64) f32

    # EdgeConv 2: conv3 (128->64) + conv4 (64->64) + max over k.
    neigh, center = get_graph_feature(x1.reshape(B, N, 64), k)
    w3 = _bf(p["conv3_w"])
    x2 = edgeconv_max(neigh, center,
                      [(w3[:64], w3[64:], p["bn3_s"], p["bn3_b"]),
                       (_bf(p["conv4_w"]), p["bn4_s"], p["bn4_b"])])

    # EdgeConv 3: conv5 (128->64) + max over k.
    neigh, center = get_graph_feature(x2.reshape(B, N, 64), k)
    w5 = _bf(p["conv5_w"])
    x3 = edgeconv_max(neigh, center,
                      [(w5[:64], w5[64:], p["bn5_s"], p["bn5_b"])])

    # Shared 192-col point-feature concat (used by conv6 AND the seg head).
    cat123 = jnp.concatenate([x1, x2, x3], axis=-1).reshape(B, N, 192)

    # conv6 (192 -> emb_dims) + global max over N (one kernel, cout chunked).
    emb = conv_globalmax(cat123, _bf(p["conv6_w"]), p["bn6_s"], p["bn6_b"])  # (B, emb)

    # Label branch (B,16)@(16,64): tiny, left to XLA.
    lf = _leaky(l.astype(jnp.float32) @ p["conv7_w"] * p["bn7_s"] + p["bn7_b"])

    # conv8 split: glob (emb+64 rows) becomes a per-batch bias; only the 192-col
    # point features are tiled through the seg head (no (B*N,1280) feat tensor).
    glob = jnp.concatenate([emb, lf], axis=-1)                  # (B, emb+64)
    emb_dims = emb.shape[-1]
    w8 = p["conv8_w"]
    gbias = glob @ w8[:emb_dims + 64]                           # (B, 256)
    w8p = _bf(w8[emb_dims + 64:])                               # (192, 256)

    seg = p["conv11_w"].shape[1]
    segpad = ((seg + 127) // 128) * 128                         # lane-dense final store
    w11 = jnp.zeros((p["conv11_w"].shape[0], segpad), jnp.float32)
    w11 = w11.at[:, :seg].set(p["conv11_w"])

    out = seg_head(cat123, gbias,
                   w8p, p["bn8_s"], p["bn8_b"],
                   _bf(p["conv9_w"]), p["bn9_s"], p["bn9_b"],
                   _bf(p["conv10_w"]), p["bn10_s"], p["bn10_b"],
                   _bf(w11))                                    # (B, N, segpad)
    out = out[..., :seg]
    return jnp.transpose(out, (0, 2, 1))                        # (B, seg, N)


# --------------------------- deterministic params -----------------------------

def make_params(key, seg_num_all=8, emb_dims=1024):
    keys = iter(jax.random.split(key, 24))

    def w(cin, cout, scale=0.05):
        return scale * jax.random.normal(next(keys), (cin, cout), jnp.float32)

    # TODO(synk): eval-mode BN folded with default running stats (mean=0, var=1);
    # real checkpoints must fold their actual running stats into scale/bias.
    bn_scale = jnp.float32(1.0 / jnp.sqrt(1.0 + BN_EPS))

    def bn(c):
        return jnp.full((c,), bn_scale, jnp.float32), jnp.zeros((c,), jnp.float32)

    p = {}
    # Transform_Net
    p["t_conv1_w"] = w(6, 64);       p["t_bn1_s"], p["t_bn1_b"] = bn(64)
    p["t_conv2_w"] = w(64, 128);     p["t_bn2_s"], p["t_bn2_b"] = bn(128)
    p["t_conv3_w"] = w(128, 1024);   p["t_bn3c_s"], p["t_bn3c_b"] = bn(1024)
    p["t_lin1_w"] = w(1024, 512);    p["t_bn3_s"], p["t_bn3_b"] = bn(512)
    p["t_lin2_w"] = w(512, 256);     p["t_bn4_s"], p["t_bn4_b"] = bn(256)
    p["t_tr_w"] = jnp.zeros((256, 9), jnp.float32)              # init.constant_(w, 0)
    p["t_tr_b"] = jnp.eye(3, dtype=jnp.float32).reshape(9)      # init.eye_(b.view(3,3))
    # DGCNN_partseg
    p["conv1_w"] = w(6, 64);         p["bn1_s"], p["bn1_b"] = bn(64)
    p["conv2_w"] = w(64, 64);        p["bn2_s"], p["bn2_b"] = bn(64)
    p["conv3_w"] = w(128, 64);       p["bn3_s"], p["bn3_b"] = bn(64)
    p["conv4_w"] = w(64, 64);        p["bn4_s"], p["bn4_b"] = bn(64)
    p["conv5_w"] = w(128, 64);       p["bn5_s"], p["bn5_b"] = bn(64)
    p["conv6_w"] = w(192, emb_dims); p["bn6_s"], p["bn6_b"] = bn(emb_dims)
    p["conv7_w"] = w(16, 64);        p["bn7_s"], p["bn7_b"] = bn(64)
    p["conv8_w"] = w(emb_dims + 64 + 192, 256); p["bn8_s"], p["bn8_b"] = bn(256)
    p["conv9_w"] = w(256, 256);      p["bn9_s"], p["bn9_b"] = bn(256)
    p["conv10_w"] = w(256, 128);     p["bn10_s"], p["bn10_b"] = bn(128)
    p["conv11_w"] = w(128, seg_num_all)
    return p


# ----------------------------------- main -------------------------------------

if __name__ == "__main__":
    B, N, K_NN, SEG = 2, 16, 4, 8    # small demo; args.emb_dims = 1024 (required by conv8)
    key = jax.random.PRNGKey(0)
    kx, kl, kp = jax.random.split(key, 3)

    x = jax.random.normal(kx, (B, 3, N), jnp.float32)                    # (B, 3, num_points)
    l = jax.nn.one_hot(jax.random.randint(kl, (B,), 0, 16), 16,
                       dtype=jnp.float32)                                # (B, 16) category label
    params = make_params(kp, seg_num_all=SEG, emb_dims=1024)

    fwd = jax.jit(lambda xx, ll: dgcnn_partseg_forward(xx, ll, params, K_NN))
    out = fwd(x, l)
    jax.block_until_ready(out)
    assert out.shape == (B, SEG, N), out.shape
    assert bool(jnp.all(jnp.isfinite(out)))
    print("KERNEL_OK")
</pallas_src>

<mosaic_0001>
module attributes {stable_mosaic.version = 11 : i64} {
  func.func @_pairwise_kernel(%arg0: i32, %arg1: i32, %arg2: i32, %arg3: memref<1x16x3xf32, #tpu.memory_space<vmem>>, %arg4: memref<1x3x16xf32, #tpu.memory_space<vmem>>, %arg5: memref<1x1x16xf32, #tpu.memory_space<vmem>>, %arg6: memref<1x16x16xf32, #tpu.memory_space<vmem>>) attributes {dimension_semantics = [#tpu.dimension_semantics<parallel>, #tpu.dimension_semantics<parallel>, #tpu.dimension_semantics<parallel>], iteration_bounds = array<i64: 1, 2, 1>, scalar_prefetch = 0 : i64, scratch_operands = 0 : i64, tpu.core_type = #tpu.core_type<tc>, window_params = [{transform_indices = @transform_0, window_bounds = array<i64: 1, 16, 3>}, {transform_indices = @transform_1, window_bounds = array<i64: 1, 3, 16>}, {transform_indices = @transform_2, window_bounds = array<i64: 1, 1, 16>}, {transform_indices = @transform_3, window_bounds = array<i64: 1, 16, 16>}]} {
    %c0 = arith.constant 0 : index
    %c0_0 = arith.constant 0 : index
    %c0_1 = arith.constant 0 : index
    %0 = vector.load %arg3[%c0, %c0_0, %c0_1] : memref<1x16x3xf32, #tpu.memory_space<vmem>>, vector<1x16x3xf32>
    %1 = vector.shape_cast %0 : vector<1x16x3xf32> to vector<16x3xf32>
    %c0_2 = arith.constant 0 : index
    %c0_3 = arith.constant 0 : index
    %c0_4 = arith.constant 0 : index
    %2 = vector.load %arg4[%c0_2, %c0_3, %c0_4] : memref<1x3x16xf32, #tpu.memory_space<vmem>>, vector<1x3x16xf32>
    %3 = vector.shape_cast %2 : vector<1x3x16xf32> to vector<3x16xf32>
    %cst = arith.constant dense<0.000000e+00> : vector<16x16xf32>
    %4 = tpu.matmul %1, %3, %cst {dimension_numbers = #tpu.dot_dimension_numbers<[1], [0], [0], [1], [0, 0, 1, 1], [], []>} : vector<16x3xf32>, vector<3x16xf32>, vector<16x16xf32> -> vector<16x16xf32>
    %cst_5 = arith.constant 2.000000e+00 : f32
    %5 = vector.broadcast %cst_5 : f32 to vector<16x16xf32>
    %6 = arith.mulf %5, %4 : vector<16x16xf32>
    %c0_6 = arith.constant 0 : index
    %c0_7 = arith.constant 0 : index
    %c0_8 = arith.constant 0 : index
    %7 = vector.load %arg5[%c0_6, %c0_7, %c0_8] : memref<1x1x16xf32, #tpu.memory_space<vmem>>, vector<1x1x16xf32>
    %8 = vector.shape_cast %7 : vector<1x1x16xf32> to vector<1x16xf32>
    %9 = vector.broadcast %8 : vector<1x16xf32> to vector<16x16xf32>
    %10 = arith.subf %6, %9 : vector<16x16xf32>
    %c0_9 = arith.constant 0 : index
    %c0_10 = arith.constant 0 : index
    %c0_11 = arith.constant 0 : index
    %11 = vector.load %arg6[%c0_9, %c0_10, %c0_11] : memref<1x16x16xf32, #tpu.memory_space<vmem>>, vector<1x16x16xf32>
    %12 = vector.shape_cast %11 : vector<1x16x16xf32> to vector<16x16xf32>
    %13 = vector.shape_cast %10 : vector<16x16xf32> to vector<1x16x16xf32>
    tpu.vector_store %arg6[%c0_9, %c0_10, %c0_11], %13 {strides = array<i32>} : memref<1x16x16xf32, #tpu.memory_space<vmem>>, vector<1x16x16xf32>,
    return
  }
  func.func @transform_0(%arg0: i32, %arg1: i32, %arg2: i32) -> (i32, i32, i32) {
    %c0_i32 = arith.constant 0 : i32
    %c0_i32_0 = arith.constant 0 : i32
    return %arg1, %arg0, %c0_i32 : i32, i32, i32
  }
  func.func @transform_1(%arg0: i32, %arg1: i32, %arg2: i32) -> (i32, i32, i32) {
    %c0_i32 = arith.constant 0 : i32
    %c0_i32_0 = arith.constant 0 : i32
    return %arg1, %c0_i32, %arg2 : i32, i32, i32
  }
  func.func @transform_2(%arg0: i32, %arg1: i32, %arg2: i32) -> (i32, i32, i32) {
    %c0_i32 = arith.constant 0 : i32
    %c0_i32_0 = arith.constant 0 : i32
    return %arg1, %c0_i32, %arg2 : i32, i32, i32
  }
  func.func @transform_3(%arg0: i32, %arg1: i32, %arg2: i32) -> (i32, i32, i32) {
    %c0_i32 = arith.constant 0 : i32
    return %arg1, %arg0, %arg2 : i32, i32, i32
  }
}

module attributes {stable_mosaic.version = 11 : i64} {
  func.func @_edgeconv_kernel(%arg0: i32, %arg1: memref<32x4x3xbf16, #tpu.memory_space<vmem>>, %arg2: memref<32x3xf32, #tpu.memory_space<vmem>>, %arg3: memref<3x64xbf16, #tpu.memory_space<vmem>>, %arg4: memref<3x64xbf16, #tpu.memory_space<vmem>>, %arg5: memref<1x64xf32, #tpu.memory_space<vmem>>, %arg6: memref<1x64xf32, #tpu.memory_space<vmem>>, %arg7: memref<64x128xbf16, #tpu.memory_space<vmem>>, %arg8: memref<1x128xf32, #tpu.memory_space<vmem>>, %arg9: memref<1x128xf32, #tpu.memory_space<vmem>>, %arg10: memref<32x128xf32, #tpu.memory_space<vmem>>) attributes {dimension_semantics = [#tpu.dimension_semantics<parallel>], iteration_bounds = array<i64: 1>, scalar_prefetch = 0 : i64, scratch_operands = 0 : i64, tpu.core_type = #tpu.core_type<tc>, window_params = [{transform_indices = @transform_0, window_bounds = array<i64: 32, 4, 3>}, {transform_indices = @transform_1, window_bounds = array<i64: 32, 3>}, {pipeline_mode = #tpu.pipeline_mode<synchronous>, transform_indices = @transform_2, window_bounds = array<i64: 3, 64>}, {pipeline_mode = #tpu.pipeline_mode<synchronous>, transform_indices = @transform_3, window_bounds = array<i64: 3, 64>}, {pipeline_mode = #tpu.pipeline_mode<synchronous>, transform_indices = @transform_4, window_bounds = array<i64: 1, 64>}, {pipeline_mode = #tpu.pipeline_mode<synchronous>, transform_indices = @transform_5, window_bounds = array<i64: 1, 64>}, {pipeline_mode = #tpu.pipeline_mode<synchronous>, transform_indices = @transform_6, window_bounds = array<i64: 64, 128>}, {pipeline_mode = #tpu.pipeline_mode<synchronous>, transform_indices = @transform_7, window_bounds = array<i64: 1, 128>}, {pipeline_mode = #tpu.pipeline_mode<synchronous>, transform_indices = @transform_8, window_bounds = array<i64: 1, 128>}, {transform_indices = @transform_9, window_bounds = array<i64: 32, 128>}]} {
    %c0 = arith.constant 0 : index
    %c0_0 = arith.constant 0 : index
    %0 = vector.load %arg2[%c0, %c0_0] : memref<32x3xf32, #tpu.memory_space<vmem>>, vector<32x3xf32>
    %c0_1 = arith.constant 0 : index
    %c0_2 = arith.constant 0 : index
    %1 = vector.load %arg3[%c0_1, %c0_2] : memref<3x64xbf16, #tpu.memory_space<vmem>>, vector<3x64xbf16>
    %c0_3 = arith.constant 0 : index
    %c0_4 = arith.constant 0 : index
    %2 = vector.load %arg4[%c0_3, %c0_4] : memref<3x64xbf16, #tpu.memory_space<vmem>>, vector<3x64xbf16>
    %c0_5 = arith.constant 0 : index
    %c0_6 = arith.constant 0 : index
    %3 = vector.load %arg5[%c0_5, %c0_6] : memref<1x64xf32, #tpu.memory_space<vmem>>, vector<1x64xf32>
    %c0_7 = arith.constant 0 : index
    %c0_8 = arith.constant 0 : index
    %4 = vector.load %arg6[%c0_7, %c0_8] : memref<1x64xf32, #tpu.memory_space<vmem>>, vector<1x64xf32>
    %c0_9 = arith.constant 0 : index
    %c0_10 = arith.constant 0 : index
    %5 = vector.load %arg7[%c0_9, %c0_10] : memref<64x128xbf16, #tpu.memory_space<vmem>>, vector<64x128xbf16>
    %c0_11 = arith.constant 0 : index
    %c0_12 = arith.constant 0 : index
    %6 = vector.load %arg8[%c0_11, %c0_12] : memref<1x128xf32, #tpu.memory_space<vmem>>, vector<1x128xf32>
    %c0_13 = arith.constant 0 : index
    %c0_14 = arith.constant 0 : index
    %7 = vector.load %arg9[%c0_13, %c0_14] : memref<1x128xf32, #tpu.memory_space<vmem>>, vector<1x128xf32>
    %8 = arith.truncf %0 : vector<32x3xf32> to vector<32x3xbf16>
    %cst = arith.constant dense<0.000000e+00> : vector<32x64xf32>
    %9 = tpu.matmul %8, %2, %cst {dimension_numbers = #tpu.dot_dimension_numbers<[1], [0], [0], [1], [0, 0, 1, 1], [], []>} : vector<32x3xbf16>, vector<3x64xbf16>, vector<32x64xf32> -> vector<32x64xf32>
    %c0_15 = arith.constant 0 : index
    %c0_16 = arith.constant 0 : index
    %c0_17 = arith.constant 0 : index
    %10 = vector.load %arg1[%c0_15, %c0_16, %c0_17] : memref<32x4x3xbf16, #tpu.memory_space<vmem>>, vector<32x4x3xbf16>
    %11 = vector.extract_strided_slice %10 {offsets = [0, 0, 0], sizes = [32, 1, 3], strides = [1, 1, 1]} : vector<32x4x3xbf16> to vector<32x1x3xbf16>
    %12 = vector.shape_cast %11 : vector<32x1x3xbf16> to vector<32x3xbf16>
    %13 = arith.extf %12 : vector<32x3xbf16> to vector<32x3xf32>
    %14 = arith.subf %13, %0 : vector<32x3xf32>
    %15 = arith.truncf %14 : vector<32x3xf32> to vector<32x3xbf16>
    %cst_18 = arith.constant dense<0.000000e+00> : vector<32x64xf32>
    %16 = tpu.matmul %15, %1, %cst_18 {dimension_numbers = #tpu.dot_dimension_numbers<[1], [0], [0], [1], [0, 0, 1, 1], [], []>} : vector<32x3xbf16>, vector<3x64xbf16>, vector<32x64xf32> -> vector<32x64xf32>
    %17 = arith.addf %16, %9 : vector<32x64xf32>
    %18 = vector.broadcast %3 : vector<1x64xf32> to vector<32x64xf32>
    %19 = arith.mulf %17, %18 : vector<32x64xf32>
    %20 = vector.broadcast %4 : vector<1x64xf32> to vector<32x64xf32>
    %21 = arith.addf %19, %20 : vector<32x64xf32>
    %cst_19 = arith.constant 0.000000e+00 : f32
    %22 = vector.broadcast %cst_19 : f32 to vector<32x64xf32>
    %23 = arith.cmpf oge, %21, %22 : vector<32x64xf32>
    %cst_20 = arith.constant 2.000000e-01 : f32
    %24 = vector.broadcast %cst_20 : f32 to vector<32x64xf32>
    %25 = arith.mulf %24, %21 : vector<32x64xf32>
    %26 = arith.select %23, %21, %25 : vector<32x64xi1>, vector<32x64xf32>
    %27 = arith.truncf %26 : vector<32x64xf32> to vector<32x64xbf16>
    %cst_21 = arith.constant dense<0.000000e+00> : vector<32x128xf32>
    %28 = tpu.matmul %27, %5, %cst_21 {dimension_numbers = #tpu.dot_dimension_numbers<[1], [0], [0], [1], [0, 0, 1, 1], [], []>} : vector<32x64xbf16>, vector<64x128xbf16>, vector<32x128xf32> -> vector<32x128xf32>
    %29 = vector.broadcast %6 : vector<1x128xf32> to vector<32x128xf32>
    %30 = arith.mulf %28, %29 : vector<32x128xf32>
    %31 = vector.broadcast %7 : vector<1x128xf32> to vector<32x128xf32>
    %32 = arith.addf %30, %31 : vector<32x128xf32>
    %cst_22 = arith.constant 0.000000e+00 : f32
    %33 = vector.broadcast %cst_22 : f32 to vector<32x128xf32>
    %34 = arith.cmpf oge, %32, %33 : vector<32x128xf32>
    %cst_23 = arith.constant 2.000000e-01 : f32
    %35 = vector.broadcast %cst_23 : f32 to vector<32x128xf32>
    %36 = arith.mulf %35, %32 : vector<32x128xf32>
    %37 = arith.select %34, %32, %36 : vector<32x128xi1>, vector<32x128xf32>
    %38 = vector.extract_strided_slice %10 {offsets = [0, 1, 0], sizes = [32, 1, 3], strides = [1, 1, 1]} : vector<32x4x3xbf16> to vector<32x1x3xbf16>
    %39 = vector.shape_cast %38 : vector<32x1x3xbf16> to vector<32x3xbf16>
    %40 = arith.extf %39 : vector<32x3xbf16> to vector<32x3xf32>
    %41 = arith.subf %40, %0 : vector<32x3xf32>
    %42 = arith.truncf %41 : vector<32x3xf32> to vector<32x3xbf16>
    %cst_24 = arith.constant dense<0.000000e+00> : vector<32x64xf32>
    %43 = tpu.matmul %42, %1, %cst_24 {dimension_numbers = #tpu.dot_dimension_numbers<[1], [0], [0], [1], [0, 0, 1, 1], [], []>} : vector<32x3xbf16>, vector<3x64xbf16>, vector<32x64xf32> -> vector<32x64xf32>
    %44 = arith.addf %43, %9 : vector<32x64xf32>
    %45 = vector.broadcast %3 : vector<1x64xf32> to vector<32x64xf32>
    %46 = arith.mulf %44, %45 : vector<32x64xf32>
    %47 = vector.broadcast %4 : vector<1x64xf32> to vector<32x64xf32>
    %48 = arith.addf %46, %47 : vector<32x64xf32>
    %cst_25 = arith.constant 0.000000e+00 : f32
    %49 = vector.broadcast %cst_25 : f32 to vector<32x64xf32>
    %50 = arith.cmpf oge, %48, %49 : vector<32x64xf32>
    %cst_26 = arith.constant 2.000000e-01 : f32
    %51 = vector.broadcast %cst_26 : f32 to vector<32x64xf32>
    %52 = arith.mulf %51, %48 : vector<32x64xf32>
    %53 = arith.select %50, %48, %52 : vector<32x64xi1>, vector<32x64xf32>
    %54 = arith.truncf %53 : vector<32x64xf32> to vector<32x64xbf16>
    %cst_27 = arith.constant dense<0.000000e+00> : vector<32x128xf32>
    %55 = tpu.matmul %54, %5, %cst_27 {dimension_numbers = #tpu.dot_dimension_numbers<[1], [0], [0], [1], [0, 0, 1, 1], [], []>} : vector<32x64xbf16>, vector<64x128xbf16>, vector<32x128xf32> -> vector<32x128xf32>
    %56 = vector.broadcast %6 : vector<1x128xf32> to vector<32x128xf32>
    %57 = arith.mulf %55, %56 : vector<32x128xf32>
    %58 = vector.broadcast %7 : vector<1x128xf32> to vector<32x128xf32>
    %59 = arith.addf %57, %58 : vector<32x128xf32>
    %cst_28 = arith.constant 0.000000e+00 : f32
    %60 = vector.broadcast %cst_28 : f32 to vector<32x128xf32>
    %61 = arith.cmpf oge, %59, %60 : vector<32x128xf32>
    %cst_29 = arith.constant 2.000000e-01 : f32
    %62 = vector.broadcast %cst_29 : f32 to vector<32x128xf32>
    %63 = arith.mulf %62, %59 : vector<32x128xf32>
    %64 = arith.select %61, %59, %63 : vector<32x128xi1>, vector<32x128xf32>
    %65 = arith.maximumf %37, %64 : vector<32x128xf32>
    %66 = vector.extract_strided_slice %10 {offsets = [0, 2, 0], sizes = [32, 1, 3], strides = [1, 1, 1]} : vector<32x4x3xbf16> to vector<32x1x3xbf16>
    %67 = vector.shape_cast %66 : vector<32x1x3xbf16> to vector<32x3xbf16>
    %68 = arith.extf %67 : vector<32x3xbf16> to vector<32x3xf32>
    %69 = arith.subf %68, %0 : vector<32x3xf32>
    %70 = arith.truncf %69 : vector<32x3xf32> to vector<32x3xbf16>
    %cst_30 = arith.constant dense<0.000000e+00> : vector<32x64xf32>
    %71 = tpu.matmul %70, %1, %cst_30 {dimension_numbers = #tpu.dot_dimension_numbers<[1], [0], [0], [1], [0, 0, 1, 1], [], []>} : vector<32x3xbf16>, vector<3x64xbf16>, vector<32x64xf32> -> vector<32x64xf32>
    %72 = arith.addf %71, %9 : vector<32x64xf32>
    %73 = vector.broadcast %3 : vector<1x64xf32> to vector<32x64xf32>
    %74 = arith.mulf %72, %73 : vector<32x64xf32>
    %75 = vector.broadcast %4 : vector<1x64xf32> to vector<32x64xf32>
    %76 = arith.addf %74, %75 : vector<32x64xf32>
    %cst_31 = arith.constant 0.000000e+00 : f32
    %77 = vector.broadcast %cst_31 : f32 to vector<32x64xf32>
    %78 = arith.cmpf oge, %76, %77 : vector<32x64xf32>
    %cst_32 = arith.constant 2.000000e-01 : f32
    %79 = vector.broadcast %cst_32 : f32 to vector<32x64xf32>
    %80 = arith.mulf %79, %76 : vector<32x64xf32>
    %81 = arith.select %78, %76, %80 : vector<32x64xi1>, vector<32x64xf32>
    %82 = arith.truncf %81 : vector<32x64xf32> to vector<32x64xbf16>
    %cst_33 = arith.constant dense<0.000000e+00> : vector<32x128xf32>
    %83 = tpu.matmul %82, %5, %cst_33 {dimension_numbers = #tpu.dot_dimension_numbers<[1], [0], [0], [1], [0, 0, 1, 1], [], []>} : vector<32x64xbf16>, vector<64x128xbf16>, vector<32x128xf32> -> vector<32x128xf32>
    %84 = vector.broadcast %6 : vector<1x128xf32> to vector<32x128xf32>
    %85 = arith.mulf %83, %84 : vector<32x128xf32>
    %86 = vector.broadcast %7 : vector<1x128xf32> to vector<32x128xf32>
    %87 = arith.addf %85, %86 : vector<32x128xf32>
    %cst_34 = arith.constant 0.000000e+00 : f32
    %88 = vector.broadcast %cst_34 : f32 to vector<32x128xf32>
    %89 = arith.cmpf oge, %87, %88 : vector<32x128xf32>
    %cst_35 = arith.constant 2.000000e-01 : f32
    %90 = vector.broadcast %cst_35 : f32 to vector<32x128xf32>
    %91 = arith.mulf %90, %87 : vector<32x128xf32>
    %92 = arith.select %89, %87, %91 : vector<32x128xi1>, vector<32x128xf32>
    %93 = arith.maximumf %65, %92 : vector<32x128xf32>
    %94 = vector.extract_strided_slice %10 {offsets = [0, 3, 0], sizes = [32, 1, 3], strides = [1, 1, 1]} : vector<32x4x3xbf16> to vector<32x1x3xbf16>
    %95 = vector.shape_cast %94 : vector<32x1x3xbf16> to vector<32x3xbf16>
    %96 = arith.extf %95 : vector<32x3xbf16> to vector<32x3xf32>
    %97 = arith.subf %96, %0 : vector<32x3xf32>
    %98 = arith.truncf %97 : vector<32x3xf32> to vector<32x3xbf16>
    %cst_36 = arith.constant dense<0.000000e+00> : vector<32x64xf32>
    %99 = tpu.matmul %98, %1, %cst_36 {dimension_numbers = #tpu.dot_dimension_numbers<[1], [0], [0], [1], [0, 0, 1, 1], [], []>} : vector<32x3xbf16>, vector<3x64xbf16>, vector<32x64xf32> -> vector<32x64xf32>
    %100 = arith.addf %99, %9 : vector<32x64xf32>
    %101 = vector.broadcast %3 : vector<1x64xf32> to vector<32x64xf32>
    %102 = arith.mulf %100, %101 : vector<32x64xf32>
    %103 = vector.broadcast %4 : vector<1x64xf32> to vector<32x64xf32>
    %104 = arith.addf %102, %103 : vector<32x64xf32>
    %cst_37 = arith.constant 0.000000e+00 : f32
    %105 = vector.broadcast %cst_37 : f32 to vector<32x64xf32>
    %106 = arith.cmpf oge, %104, %105 : vector<32x64xf32>
    %cst_38 = arith.constant 2.000000e-01 : f32
    %107 = vector.broadcast %cst_38 : f32 to vector<32x64xf32>
    %108 = arith.mulf %107, %104 : vector<32x64xf32>
    %109 = arith.select %106, %104, %108 : vector<32x64xi1>, vector<32x64xf32>
    %110 = arith.truncf %109 : vector<32x64xf32> to vector<32x64xbf16>
    %cst_39 = arith.constant dense<0.000000e+00> : vector<32x128xf32>
    %111 = tpu.matmul %110, %5, %cst_39 {dimension_numbers = #tpu.dot_dimension_numbers<[1], [0], [0], [1], [0, 0, 1, 1], [], []>} : vector<32x64xbf16>, vector<64x128xbf16>, vector<32x128xf32> -> vector<32x128xf32>
    %112 = vector.broadcast %6 : vector<1x128xf32> to vector<32x128xf32>
    %113 = arith.mulf %111, %112 : vector<32x128xf32>
    %114 = vector.broadcast %7 : vector<1x128xf32> to vector<32x128xf32>
    %115 = arith.addf %113, %114 : vector<32x128xf32>
    %cst_40 = arith.constant 0.000000e+00 : f32
    %116 = vector.broadcast %cst_40 : f32 to vector<32x128xf32>
    %117 = arith.cmpf oge, %115, %116 : vector<32x128xf32>
    %cst_41 = arith.constant 2.000000e-01 : f32
    %118 = vector.broadcast %cst_41 : f32 to vector<32x128xf32>
    %119 = arith.mulf %118, %115 : vector<32x128xf32>
    %120 = arith.select %117, %115, %119 : vector<32x128xi1>, vector<32x128xf32>
    %121 = arith.maximumf %93, %120 : vector<32x128xf32>
    %c0_42 = arith.constant 0 : index
    %c0_43 = arith.constant 0 : index
    %122 = vector.load %arg10[%c0_42, %c0_43] : memref<32x128xf32, #tpu.memory_space<vmem>>, vector<32x128xf32>
    tpu.vector_store %arg10[%c0_42, %c0_43], %121 {strides = array<i32>} : memref<32x128xf32, #tpu.memory_space<vmem>>, vector<32x128xf32>,
    return
  }
  func.func @transform_0(%arg0: i32) -> (i32, i32, i32) {
    %c0_i32 = arith.constant 0 : i32
    %c0_i32_0 = arith.constant 0 : i32
    %c0_i32_1 = arith.constant 0 : i32
    return %arg0, %c0_i32, %c0_i32_0 : i32, i32, i32
  }
  func.func @transform_1(%arg0: i32) -> (i32, i32) {
    %c0_i32 = arith.constant 0 : i32
    %c0_i32_0 = arith.constant 0 : i32
    return %arg0, %c0_i32 : i32, i32
  }
  func.func @transform_2(%arg0: i32) -> (i32, i32) {
    %c0_i32 = arith.constant 0 : i32
    %c0_i32_0 = arith.constant 0 : i32
    %c0_i32_1 = arith.constant 0 : i32
    return %c0_i32, %c0_i32_0 : i32, i32
  }
  func.func @transform_3(%arg0: i32) -> (i32, i32) {
    %c0_i32 = arith.constant 0 : i32
    %c0_i32_0 = arith.constant 0 : i32
    %c0_i32_1 = arith.constant 0 : i32
    return %c0_i32, %c0_i32_0 : i32, i32
  }
  func.func @transform_4(%arg0: i32) -> (i32, i32) {
    %c0_i32 = arith.constant 0 : i32
    %c0_i32_0 = arith.constant 0 : i32
    %c0_i32_1 = arith.constant 0 : i32
    return %c0_i32, %c0_i32_0 : i32, i32
  }
  func.func @transform_5(%arg0: i32) -> (i32, i32) {
    %c0_i32 = arith.constant 0 : i32
    %c0_i32_0 = arith.constant 0 : i32
    %c0_i32_1 = arith.constant 0 : i32
    return %c0_i32, %c0_i32_0 : i32, i32
  }
  func.func @transform_6(%arg0: i32) -> (i32, i32) {
    %c0_i32 = arith.constant 0 : i32
    %c0_i32_0 = arith.constant 0 : i32
    %c0_i32_1 = arith.constant 0 : i32
    return %c0_i32, %c0_i32_0 : i32, i32
  }
  func.func @transform_7(%arg0: i32) -> (i32, i32) {
    %c0_i32 = arith.constant 0 : i32
    %c0_i32_0 = arith.constant 0 : i32
    %c0_i32_1 = arith.constant 0 : i32
    return %c0_i32, %c0_i32_0 : i32, i32
  }
  func.func @transform_8(%arg0: i32) -> (i32, i32) {
    %c0_i32 = arith.constant 0 : i32
    %c0_i32_0 = arith.constant 0 : i32
    %c0_i32_1 = arith.constant 0 : i32
    return %c0_i32, %c0_i32_0 : i32, i32
  }
  func.func @transform_9(%arg0: i32) -> (i32, i32) {
    %c0_i32 = arith.constant 0 : i32
    %c0_i32_0 = arith.constant 0 : i32
    return %arg0, %c0_i32 : i32, i32
  }
}

module attributes {stable_mosaic.version = 11 : i64} {
  func.func @_conv_globalmax_kernel(%arg0: i32, %arg1: i32, %arg2: i32, %arg3: memref<1x16x128xf32, #tpu.memory_space<vmem>>, %arg4: memref<128x256xbf16, #tpu.memory_space<vmem>>, %arg5: memref<1x256xf32, #tpu.memory_space<vmem>>, %arg6: memref<1x256xf32, #tpu.memory_space<vmem>>, %arg7: memref<1x1x256xf32, #tpu.memory_space<vmem>>, %arg8: memref<1x256xf32, #tpu.memory_space<vmem>>) attributes {dimension_semantics = [#tpu.dimension_semantics<parallel>, #tpu.dimension_semantics<parallel>, #tpu.dimension_semantics<arbitrary>], iteration_bounds = array<i64: 2, 4, 1>, scalar_prefetch = 0 : i64, scratch_operands = 1 : i64, tpu.core_type = #tpu.core_type<tc>, window_params = [{transform_indices = @transform_0, window_bounds = array<i64: 1, 16, 128>}, {transform_indices = @transform_1, window_bounds = array<i64: 128, 256>}, {transform_indices = @transform_2, window_bounds = array<i64: 1, 256>}, {transform_indices = @transform_3, window_bounds = array<i64: 1, 256>}, {transform_indices = @transform_4, window_bounds = array<i64: 1, 1, 256>}]} {
    %c0 = arith.constant 0 : index
    %c0_0 = arith.constant 0 : index
    %0 = vector.load %arg4[%c0, %c0_0] : memref<128x256xbf16, #tpu.memory_space<vmem>>, vector<128x256xbf16>
    %c0_1 = arith.constant 0 : index
    %c0_2 = arith.constant 0 : index
    %c0_3 = arith.constant 0 : index
    %1 = vector.load %arg3[%c0_1, %c0_2, %c0_3] : memref<1x16x128xf32, #tpu.memory_space<vmem>>, vector<1x16x128xf32>
    %2 = vector.shape_cast %1 : vector<1x16x128xf32> to vector<16x128xf32>
    %3 = arith.truncf %2 : vector<16x128xf32> to vector<16x128xbf16>
    %cst = arith.constant dense<0.000000e+00> : vector<16x256xf32>
    %4 = tpu.matmul %3, %0, %cst {dimension_numbers = #tpu.dot_dimension_numbers<[1], [0], [0], [1], [0, 0, 1, 1], [], []>} : vector<16x128xbf16>, vector<128x256xbf16>, vector<16x256xf32> -> vector<16x256xf32>
    %c0_4 = arith.constant 0 : index
    %c0_5 = arith.constant 0 : index
    %5 = vector.load %arg5[%c0_4, %c0_5] : memref<1x256xf32, #tpu.memory_space<vmem>>, vector<1x256xf32>
    %6 = vector.broadcast %5 : vector<1x256xf32> to vector<16x256xf32>
    %7 = arith.mulf %4, %6 : vector<16x256xf32>
    %c0_6 = arith.constant 0 : index
    %c0_7 = arith.constant 0 : index
    %8 = vector.load %arg6[%c0_6, %c0_7] : memref<1x256xf32, #tpu.memory_space<vmem>>, vector<1x256xf32>
    %9 = vector.broadcast %8 : vector<1x256xf32> to vector<16x256xf32>
    %10 = arith.addf %7, %9 : vector<16x256xf32>
    %cst_8 = arith.constant 0.000000e+00 : f32
    %11 = vector.broadcast %cst_8 : f32 to vector<16x256xf32>
    %12 = arith.cmpf oge, %10, %11 : vector<16x256xf32>
    %cst_9 = arith.constant 2.000000e-01 : f32
    %13 = vector.broadcast %cst_9 : f32 to vector<16x256xf32>
    %14 = arith.mulf %13, %10 : vector<16x256xf32>
    %15 = arith.select %12, %10, %14 : vector<16x256xi1>, vector<16x256xf32>
    %cst_10 = arith.constant dense<0xFF800000> : vector<256xf32>
    %16 = vector.multi_reduction <maximumf>, %15, %cst_10 [0] : vector<16x256xf32> to vector<256xf32>
    %17 = vector.shape_cast %16 : vector<256xf32> to vector<1x256xf32>
    %c0_i32 = arith.constant 0 : i32
    %18 = arith.cmpi eq, %arg2, %c0_i32 : i32
    %19 = arith.extui %18 : i1 to i32
    %c0_i32_11 = arith.constant 0 : i32
    %20 = arith.cmpi ne, %19, %c0_i32_11 : i32
    scf.if %20 {
      %cst_18 = arith.constant 0xFF800000 : f32
      %27 = vector.broadcast %cst_18 : f32 to vector<1x256xf32>
      %c0_19 = arith.constant 0 : index
      %c0_20 = arith.constant 0 : index
      %28 = vector.load %arg8[%c0_19, %c0_20] : memref<1x256xf32, #tpu.memory_space<vmem>>, vector<1x256xf32>
      tpu.vector_store %arg8[%c0_19, %c0_20], %27 {strides = array<i32>} : memref<1x256xf32, #tpu.memory_space<vmem>>, vector<1x256xf32>,
    } else {
    }
    %c0_12 = arith.constant 0 : index
    %c0_13 = arith.constant 0 : index
    %21 = vector.load %arg8[%c0_12, %c0_13] : memref<1x256xf32, #tpu.memory_space<vmem>>, vector<1x256xf32>
    %22 = arith.maximumf %21, %17 : vector<1x256xf32>
    %c0_14 = arith.constant 0 : index
    %c0_15 = arith.constant 0 : index
    %23 = vector.load %arg8[%c0_14, %c0_15] : memref<1x256xf32, #tpu.memory_space<vmem>>, vector<1x256xf32>
    tpu.vector_store %arg8[%c0_14, %c0_15], %22 {strides = array<i32>} : memref<1x256xf32, #tpu.memory_space<vmem>>, vector<1x256xf32>,
    %c0_i32_16 = arith.constant 0 : i32
    %24 = arith.cmpi eq, %arg2, %c0_i32_16 : i32
    %25 = arith.extui %24 : i1 to i32
    %c0_i32_17 = arith.constant 0 : i32
    %26 = arith.cmpi ne, %25, %c0_i32_17 : i32
    scf.if %26 {
      %c0_18 = arith.constant 0 : index
      %c0_19 = arith.constant 0 : index
      %27 = vector.load %arg8[%c0_18, %c0_19] : memref<1x256xf32, #tpu.memory_space<vmem>>, vector<1x256xf32>
      %c0_20 = arith.constant 0 : index
      %c0_21 = arith.constant 0 : index
      %c0_22 = arith.constant 0 : index
      %28 = vector.load %arg7[%c0_20, %c0_21, %c0_22] : memref<1x1x256xf32, #tpu.memory_space<vmem>>, vector<1x1x256xf32>
      %29 = vector.shape_cast %28 : vector<1x1x256xf32> to vector<1x256xf32>
      %30 = vector.shape_cast %27 : vector<1x256xf32> to vector<1x1x256xf32>
      tpu.vector_store %arg7[%c0_20, %c0_21, %c0_22], %30 {strides = array<i32>} : memref<1x1x256xf32, #tpu.memory_space<vmem>>, vector<1x1x256xf32>,
    } else {
    }
    return
  }
  func.func @transform_0(%arg0: i32, %arg1: i32, %arg2: i32) -> (i32, i32, i32) {
    %c0_i32 = arith.constant 0 : i32
    %c0_i32_0 = arith.constant 0 : i32
    return %arg0, %arg2, %c0_i32 : i32, i32, i32
  }
  func.func @transform_1(%arg0: i32, %arg1: i32, %arg2: i32) -> (i32, i32) {
    %c0_i32 = arith.constant 0 : i32
    %c0_i32_0 = arith.constant 0 : i32
    return %c0_i32, %arg1 : i32, i32
  }
  func.func @transform_2(%arg0: i32, %arg1: i32, %arg2: i32) -> (i32, i32) {
    %c0_i32 = arith.constant 0 : i32
    %c0_i32_0 = arith.constant 0 : i32
    return %c0_i32, %arg1 : i32, i32
  }
  func.func @transform_3(%arg0: i32, %arg1: i32, %arg2: i32) -> (i32, i32) {
    %c0_i32 = arith.constant 0 : i32
    %c0_i32_0 = arith.constant 0 : i32
    return %c0_i32, %arg1 : i32, i32
  }
  func.func @transform_4(%arg0: i32, %arg1: i32, %arg2: i32) -> (i32, i32, i32) {
    %c0_i32 = arith.constant 0 : i32
    %c0_i32_0 = arith.constant 0 : i32
    return %arg0, %c0_i32, %arg1 : i32, i32, i32
  }
}

module attributes {stable_mosaic.version = 11 : i64} {
  func.func @_edgeconv_kernel(%arg0: i32, %arg1: memref<32x4x3xbf16, #tpu.memory_space<vmem>>, %arg2: memref<32x3xf32, #tpu.memory_space<vmem>>, %arg3: memref<3x64xbf16, #tpu.memory_space<vmem>>, %arg4: memref<3x64xbf16, #tpu.memory_space<vmem>>, %arg5: memref<1x64xf32, #tpu.memory_space<vmem>>, %arg6: memref<1x64xf32, #tpu.memory_space<vmem>>, %arg7: memref<64x64xbf16, #tpu.memory_space<vmem>>, %arg8: memref<1x64xf32, #tpu.memory_space<vmem>>, %arg9: memref<1x64xf32, #tpu.memory_space<vmem>>, %arg10: memref<32x64xf32, #tpu.memory_space<vmem>>) attributes {dimension_semantics = [#tpu.dimension_semantics<parallel>], iteration_bounds = array<i64: 1>, scalar_prefetch = 0 : i64, scratch_operands = 0 : i64, tpu.core_type = #tpu.core_type<tc>, window_params = [{transform_indices = @transform_0, window_bounds = array<i64: 32, 4, 3>}, {transform_indices = @transform_1, window_bounds = array<i64: 32, 3>}, {pipeline_mode = #tpu.pipeline_mode<synchronous>, transform_indices = @transform_2, window_bounds = array<i64: 3, 64>}, {pipeline_mode = #tpu.pipeline_mode<synchronous>, transform_indices = @transform_3, window_bounds = array<i64: 3, 64>}, {pipeline_mode = #tpu.pipeline_mode<synchronous>, transform_indices = @transform_4, window_bounds = array<i64: 1, 64>}, {pipeline_mode = #tpu.pipeline_mode<synchronous>, transform_indices = @transform_5, window_bounds = array<i64: 1, 64>}, {pipeline_mode = #tpu.pipeline_mode<synchronous>, transform_indices = @transform_6, window_bounds = array<i64: 64, 64>}, {pipeline_mode = #tpu.pipeline_mode<synchronous>, transform_indices = @transform_7, window_bounds = array<i64: 1, 64>}, {pipeline_mode = #tpu.pipeline_mode<synchronous>, transform_indices = @transform_8, window_bounds = array<i64: 1, 64>}, {transform_indices = @transform_9, window_bounds = array<i64: 32, 64>}]} {
    %c0 = arith.constant 0 : index
    %c0_0 = arith.constant 0 : index
    %0 = vector.load %arg2[%c0, %c0_0] : memref<32x3xf32, #tpu.memory_space<vmem>>, vector<32x3xf32>
    %c0_1 = arith.constant 0 : index
    %c0_2 = arith.constant 0 : index
    %1 = vector.load %arg3[%c0_1, %c0_2] : memref<3x64xbf16, #tpu.memory_space<vmem>>, vector<3x64xbf16>
    %c0_3 = arith.constant 0 : index
    %c0_4 = arith.constant 0 : index
    %2 = vector.load %arg4[%c0_3, %c0_4] : memref<3x64xbf16, #tpu.memory_space<vmem>>, vector<3x64xbf16>
    %c0_5 = arith.constant 0 : index
    %c0_6 = arith.constant 0 : index
    %3 = vector.load %arg5[%c0_5, %c0_6] : memref<1x64xf32, #tpu.memory_space<vmem>>, vector<1x64xf32>
    %c0_7 = arith.constant 0 : index
    %c0_8 = arith.constant 0 : index
    %4 = vector.load %arg6[%c0_7, %c0_8] : memref<1x64xf32, #tpu.memory_space<vmem>>, vector<1x64xf32>
    %c0_9 = arith.constant 0 : index
    %c0_10 = arith.constant 0 : index
    %5 = vector.load %arg7[%c0_9, %c0_10] : memref<64x64xbf16, #tpu.memory_space<vmem>>, vector<64x64xbf16>
    %c0_11 = arith.constant 0 : index
    %c0_12 = arith.constant 0 : index
    %6 = vector.load %arg8[%c0_11, %c0_12] : memref<1x64xf32, #tpu.memory_space<vmem>>, vector<1x64xf32>
    %c0_13 = arith.constant 0 : index
    %c0_14 = arith.constant 0 : index
    %7 = vector.load %arg9[%c0_13, %c0_14] : memref<1x64xf32, #tpu.memory_space<vmem>>, vector<1x64xf32>
    %8 = arith.truncf %0 : vector<32x3xf32> to vector<32x3xbf16>
    %cst = arith.constant dense<0.000000e+00> : vector<32x64xf32>
    %9 = tpu.matmul %8, %2, %cst {dimension_numbers = #tpu.dot_dimension_numbers<[1], [0], [0], [1], [0, 0, 1, 1], [], []>} : vector<32x3xbf16>, vector<3x64xbf16>, vector<32x64xf32> -> vector<32x64xf32>
    %c0_15 = arith.constant 0 : index
    %c0_16 = arith.constant 0 : index
    %c0_17 = arith.constant 0 : index
    %10 = vector.load %arg1[%c0_15, %c0_16, %c0_17] : memref<32x4x3xbf16, #tpu.memory_space<vmem>>, vector<32x4x3xbf16>
    %11 = vector.extract_strided_slice %10 {offsets = [0, 0, 0], sizes = [32, 1, 3], strides = [1, 1, 1]} : vector<32x4x3xbf16> to vector<32x1x3xbf16>
    %12 = vector.shape_cast %11 : vector<32x1x3xbf16> to vector<32x3xbf16>
    %13 = arith.extf %12 : vector<32x3xbf16> to vector<32x3xf32>
    %14 = arith.subf %13, %0 : vector<32x3xf32>
    %15 = arith.truncf %14 : vector<32x3xf32> to vector<32x3xbf16>
    %cst_18 = arith.constant dense<0.000000e+00> : vector<32x64xf32>
    %16 = tpu.matmul %15, %1, %cst_18 {dimension_numbers = #tpu.dot_dimension_numbers<[1], [0], [0], [1], [0, 0, 1, 1], [], []>} : vector<32x3xbf16>, vector<3x64xbf16>, vector<32x64xf32> -> vector<32x64xf32>
    %17 = arith.addf %16, %9 : vector<32x64xf32>
    %18 = vector.broadcast %3 : vector<1x64xf32> to vector<32x64xf32>
    %19 = arith.mulf %17, %18 : vector<32x64xf32>
    %20 = vector.broadcast %4 : vector<1x64xf32> to vector<32x64xf32>
    %21 = arith.addf %19, %20 : vector<32x64xf32>
    %cst_19 = arith.constant 0.000000e+00 : f32
    %22 = vector.broadcast %cst_19 : f32 to vector<32x64xf32>
    %23 = arith.cmpf oge, %21, %22 : vector<32x64xf32>
    %cst_20 = arith.constant 2.000000e-01 : f32
    %24 = vector.broadcast %cst_20 : f32 to vector<32x64xf32>
    %25 = arith.mulf %24, %21 : vector<32x64xf32>
    %26 = arith.select %23, %21, %25 : vector<32x64xi1>, vector<32x64xf32>
    %27 = arith.truncf %26 : vector<32x64xf32> to vector<32x64xbf16>
    %cst_21 = arith.constant dense<0.000000e+00> : vector<32x64xf32>
    %28 = tpu.matmul %27, %5, %cst_21 {dimension_numbers = #tpu.dot_dimension_numbers<[1], [0], [0], [1], [0, 0, 1, 1], [], []>} : vector<32x64xbf16>, vector<64x64xbf16>, vector<32x64xf32> -> vector<32x64xf32>
    %29 = vector.broadcast %6 : vector<1x64xf32> to vector<32x64xf32>
    %30 = arith.mulf %28, %29 : vector<32x64xf32>
    %31 = vector.broadcast %7 : vector<1x64xf32> to vector<32x64xf32>
    %32 = arith.addf %30, %31 : vector<32x64xf32>
    %cst_22 = arith.constant 0.000000e+00 : f32
    %33 = vector.broadcast %cst_22 : f32 to vector<32x64xf32>
    %34 = arith.cmpf oge, %32, %33 : vector<32x64xf32>
    %cst_23 = arith.constant 2.000000e-01 : f32
    %35 = vector.broadcast %cst_23 : f32 to vector<32x64xf32>
    %36 = arith.mulf %35, %32 : vector<32x64xf32>
    %37 = arith.select %34, %32, %36 : vector<32x64xi1>, vector<32x64xf32>
    %38 = vector.extract_strided_slice %10 {offsets = [0, 1, 0], sizes = [32, 1, 3], strides = [1, 1, 1]} : vector<32x4x3xbf16> to vector<32x1x3xbf16>
    %39 = vector.shape_cast %38 : vector<32x1x3xbf16> to vector<32x3xbf16>
    %40 = arith.extf %39 : vector<32x3xbf16> to vector<32x3xf32>
    %41 = arith.subf %40, %0 : vector<32x3xf32>
    %42 = arith.truncf %41 : vector<32x3xf32> to vector<32x3xbf16>
    %cst_24 = arith.constant dense<0.000000e+00> : vector<32x64xf32>
    %43 = tpu.matmul %42, %1, %cst_24 {dimension_numbers = #tpu.dot_dimension_numbers<[1], [0], [0], [1], [0, 0, 1, 1], [], []>} : vector<32x3xbf16>, vector<3x64xbf16>, vector<32x64xf32> -> vector<32x64xf32>
    %44 = arith.addf %43, %9 : vector<32x64xf32>
    %45 = vector.broadcast %3 : vector<1x64xf32> to vector<32x64xf32>
    %46 = arith.mulf %44, %45 : vector<32x64xf32>
    %47 = vector.broadcast %4 : vector<1x64xf32> to vector<32x64xf32>
    %48 = arith.addf %46, %47 : vector<32x64xf32>
    %cst_25 = arith.constant 0.000000e+00 : f32
    %49 = vector.broadcast %cst_25 : f32 to vector<32x64xf32>
    %50 = arith.cmpf oge, %48, %49 : vector<32x64xf32>
    %cst_26 = arith.constant 2.000000e-01 : f32
    %51 = vector.broadcast %cst_26 : f32 to vector<32x64xf32>
    %52 = arith.mulf %51, %48 : vector<32x64xf32>
    %53 = arith.select %50, %48, %52 : vector<32x64xi1>, vector<32x64xf32>
    %54 = arith.truncf %53 : vector<32x64xf32> to vector<32x64xbf16>
    %cst_27 = arith.constant dense<0.000000e+00> : vector<32x64xf32>
    %55 = tpu.matmul %54, %5, %cst_27 {dimension_numbers = #tpu.dot_dimension_numbers<[1], [0], [0], [1], [0, 0, 1, 1], [], []>} : vector<32x64xbf16>, vector<64x64xbf16>, vector<32x64xf32> -> vector<32x64xf32>
    %56 = vector.broadcast %6 : vector<1x64xf32> to vector<32x64xf32>
    %57 = arith.mulf %55, %56 : vector<32x64xf32>
    %58 = vector.broadcast %7 : vector<1x64xf32> to vector<32x64xf32>
    %59 = arith.addf %57, %58 : vector<32x64xf32>
    %cst_28 = arith.constant 0.000000e+00 : f32
    %60 = vector.broadcast %cst_28 : f32 to vector<32x64xf32>
    %61 = arith.cmpf oge, %59, %60 : vector<32x64xf32>
    %cst_29 = arith.constant 2.000000e-01 : f32
    %62 = vector.broadcast %cst_29 : f32 to vector<32x64xf32>
    %63 = arith.mulf %62, %59 : vector<32x64xf32>
    %64 = arith.select %61, %59, %63 : vector<32x64xi1>, vector<32x64xf32>
    %65 = arith.maximumf %37, %64 : vector<32x64xf32>
    %66 = vector.extract_strided_slice %10 {offsets = [0, 2, 0], sizes = [32, 1, 3], strides = [1, 1, 1]} : vector<32x4x3xbf16> to vector<32x1x3xbf16>
    %67 = vector.shape_cast %66 : vector<32x1x3xbf16> to vector<32x3xbf16>
    %68 = arith.extf %67 : vector<32x3xbf16> to vector<32x3xf32>
    %69 = arith.subf %68, %0 : vector<32x3xf32>
    %70 = arith.truncf %69 : vector<32x3xf32> to vector<32x3xbf16>
    %cst_30 = arith.constant dense<0.000000e+00> : vector<32x64xf32>
    %71 = tpu.matmul %70, %1, %cst_30 {dimension_numbers = #tpu.dot_dimension_numbers<[1], [0], [0], [1], [0, 0, 1, 1], [], []>} : vector<32x3xbf16>, vector<3x64xbf16>, vector<32x64xf32> -> vector<32x64xf32>
    %72 = arith.addf %71, %9 : vector<32x64xf32>
    %73 = vector.broadcast %3 : vector<1x64xf32> to vector<32x64xf32>
    %74 = arith.mulf %72, %73 : vector<32x64xf32>
    %75 = vector.broadcast %4 : vector<1x64xf32> to vector<32x64xf32>
    %76 = arith.addf %74, %75 : vector<32x64xf32>
    %cst_31 = arith.constant 0.000000e+00 : f32
    %77 = vector.broadcast %cst_31 : f32 to vector<32x64xf32>
    %78 = arith.cmpf oge, %76, %77 : vector<32x64xf32>
    %cst_32 = arith.constant 2.000000e-01 : f32
    %79 = vector.broadcast %cst_32 : f32 to vector<32x64xf32>
    %80 = arith.mulf %79, %76 : vector<32x64xf32>
    %81 = arith.select %78, %76, %80 : vector<32x64xi1>, vector<32x64xf32>
    %82 = arith.truncf %81 : vector<32x64xf32> to vector<32x64xbf16>
    %cst_33 = arith.constant dense<0.000000e+00> : vector<32x64xf32>
    %83 = tpu.matmul %82, %5, %cst_33 {dimension_numbers = #tpu.dot_dimension_numbers<[1], [0], [0], [1], [0, 0, 1, 1], [], []>} : vector<32x64xbf16>, vector<64x64xbf16>, vector<32x64xf32> -> vector<32x64xf32>
    %84 = vector.broadcast %6 : vector<1x64xf32> to vector<32x64xf32>
    %85 = arith.mulf %83, %84 : vector<32x64xf32>
    %86 = vector.broadcast %7 : vector<1x64xf32> to vector<32x64xf32>
    %87 = arith.addf %85, %86 : vector<32x64xf32>
    %cst_34 = arith.constant 0.000000e+00 : f32
    %88 = vector.broadcast %cst_34 : f32 to vector<32x64xf32>
    %89 = arith.cmpf oge, %87, %88 : vector<32x64xf32>
    %cst_35 = arith.constant 2.000000e-01 : f32
    %90 = vector.broadcast %cst_35 : f32 to vector<32x64xf32>
    %91 = arith.mulf %90, %87 : vector<32x64xf32>
    %92 = arith.select %89, %87, %91 : vector<32x64xi1>, vector<32x64xf32>
    %93 = arith.maximumf %65, %92 : vector<32x64xf32>
    %94 = vector.extract_strided_slice %10 {offsets = [0, 3, 0], sizes = [32, 1, 3], strides = [1, 1, 1]} : vector<32x4x3xbf16> to vector<32x1x3xbf16>
    %95 = vector.shape_cast %94 : vector<32x1x3xbf16> to vector<32x3xbf16>
    %96 = arith.extf %95 : vector<32x3xbf16> to vector<32x3xf32>
    %97 = arith.subf %96, %0 : vector<32x3xf32>
    %98 = arith.truncf %97 : vector<32x3xf32> to vector<32x3xbf16>
    %cst_36 = arith.constant dense<0.000000e+00> : vector<32x64xf32>
    %99 = tpu.matmul %98, %1, %cst_36 {dimension_numbers = #tpu.dot_dimension_numbers<[1], [0], [0], [1], [0, 0, 1, 1], [], []>} : vector<32x3xbf16>, vector<3x64xbf16>, vector<32x64xf32> -> vector<32x64xf32>
    %100 = arith.addf %99, %9 : vector<32x64xf32>
    %101 = vector.broadcast %3 : vector<1x64xf32> to vector<32x64xf32>
    %102 = arith.mulf %100, %101 : vector<32x64xf32>
    %103 = vector.broadcast %4 : vector<1x64xf32> to vector<32x64xf32>
    %104 = arith.addf %102, %103 : vector<32x64xf32>
    %cst_37 = arith.constant 0.000000e+00 : f32
    %105 = vector.broadcast %cst_37 : f32 to vector<32x64xf32>
    %106 = arith.cmpf oge, %104, %105 : vector<32x64xf32>
    %cst_38 = arith.constant 2.000000e-01 : f32
    %107 = vector.broadcast %cst_38 : f32 to vector<32x64xf32>
    %108 = arith.mulf %107, %104 : vector<32x64xf32>
    %109 = arith.select %106, %104, %108 : vector<32x64xi1>, vector<32x64xf32>
    %110 = arith.truncf %109 : vector<32x64xf32> to vector<32x64xbf16>
    %cst_39 = arith.constant dense<0.000000e+00> : vector<32x64xf32>
    %111 = tpu.matmul %110, %5, %cst_39 {dimension_numbers = #tpu.dot_dimension_numbers<[1], [0], [0], [1], [0, 0, 1, 1], [], []>} : vector<32x64xbf16>, vector<64x64xbf16>, vector<32x64xf32> -> vector<32x64xf32>
    %112 = vector.broadcast %6 : vector<1x64xf32> to vector<32x64xf32>
    %113 = arith.mulf %111, %112 : vector<32x64xf32>
    %114 = vector.broadcast %7 : vector<1x64xf32> to vector<32x64xf32>
    %115 = arith.addf %113, %114 : vector<32x64xf32>
    %cst_40 = arith.constant 0.000000e+00 : f32
    %116 = vector.broadcast %cst_40 : f32 to vector<32x64xf32>
    %117 = arith.cmpf oge, %115, %116 : vector<32x64xf32>
    %cst_41 = arith.constant 2.000000e-01 : f32
    %118 = vector.broadcast %cst_41 : f32 to vector<32x64xf32>
    %119 = arith.mulf %118, %115 : vector<32x64xf32>
    %120 = arith.select %117, %115, %119 : vector<32x64xi1>, vector<32x64xf32>
    %121 = arith.maximumf %93, %120 : vector<32x64xf32>
    %c0_42 = arith.constant 0 : index
    %c0_43 = arith.constant 0 : index
    %122 = vector.load %arg10[%c0_42, %c0_43] : memref<32x64xf32, #tpu.memory_space<vmem>>, vector<32x64xf32>
    tpu.vector_store %arg10[%c0_42, %c0_43], %121 {strides = array<i32>} : memref<32x64xf32, #tpu.memory_space<vmem>>, vector<32x64xf32>,
    return
  }
  func.func @transform_0(%arg0: i32) -> (i32, i32, i32) {
    %c0_i32 = arith.constant 0 : i32
    %c0_i32_0 = arith.constant 0 : i32
    %c0_i32_1 = arith.constant 0 : i32
    return %arg0, %c0_i32, %c0_i32_0 : i32, i32, i32
  }
  func.func @transform_1(%arg0: i32) -> (i32, i32) {
    %c0_i32 = arith.constant 0 : i32
    %c0_i32_0 = arith.constant 0 : i32
    return %arg0, %c0_i32 : i32, i32
  }
  func.func @transform_2(%arg0: i32) -> (i32, i32) {
    %c0_i32 = arith.constant 0 : i32
    %c0_i32_0 = arith.constant 0 : i32
    %c0_i32_1 = arith.constant 0 : i32
    return %c0_i32, %c0_i32_0 : i32, i32
  }
  func.func @transform_3(%arg0: i32) -> (i32, i32) {
    %c0_i32 = arith.constant 0 : i32
    %c0_i32_0 = arith.constant 0 : i32
    %c0_i32_1 = arith.constant 0 : i32
    return %c0_i32, %c0_i32_0 : i32, i32
  }
  func.func @transform_4(%arg0: i32) -> (i32, i32) {
    %c0_i32 = arith.constant 0 : i32
    %c0_i32_0 = arith.constant 0 : i32
    %c0_i32_1 = arith.constant 0 : i32
    return %c0_i32, %c0_i32_0 : i32, i32
  }
  func.func @transform_5(%arg0: i32) -> (i32, i32) {
    %c0_i32 = arith.constant 0 : i32
    %c0_i32_0 = arith.constant 0 : i32
    %c0_i32_1 = arith.constant 0 : i32
    return %c0_i32, %c0_i32_0 : i32, i32
  }
  func.func @transform_6(%arg0: i32) -> (i32, i32) {
    %c0_i32 = arith.constant 0 : i32
    %c0_i32_0 = arith.constant 0 : i32
    %c0_i32_1 = arith.constant 0 : i32
    return %c0_i32, %c0_i32_0 : i32, i32
  }
  func.func @transform_7(%arg0: i32) -> (i32, i32) {
    %c0_i32 = arith.constant 0 : i32
    %c0_i32_0 = arith.constant 0 : i32
    %c0_i32_1 = arith.constant 0 : i32
    return %c0_i32, %c0_i32_0 : i32, i32
  }
  func.func @transform_8(%arg0: i32) -> (i32, i32) {
    %c0_i32 = arith.constant 0 : i32
    %c0_i32_0 = arith.constant 0 : i32
    %c0_i32_1 = arith.constant 0 : i32
    return %c0_i32, %c0_i32_0 : i32, i32
  }
  func.func @transform_9(%arg0: i32) -> (i32, i32) {
    %c0_i32 = arith.constant 0 : i32
    %c0_i32_0 = arith.constant 0 : i32
    return %arg0, %c0_i32 : i32, i32
  }
}

module attributes {stable_mosaic.version = 11 : i64} {
  func.func @_pairwise_kernel(%arg0: i32, %arg1: i32, %arg2: i32, %arg3: memref<1x16x64xf32, #tpu.memory_space<vmem>>, %arg4: memref<1x64x16xf32, #tpu.memory_space<vmem>>, %arg5: memref<1x1x16xf32, #tpu.memory_space<vmem>>, %arg6: memref<1x16x16xf32, #tpu.memory_space<vmem>>) attributes {dimension_semantics = [#tpu.dimension_semantics<parallel>, #tpu.dimension_semantics<parallel>, #tpu.dimension_semantics<parallel>], iteration_bounds = array<i64: 1, 2, 1>, scalar_prefetch = 0 : i64, scratch_operands = 0 : i64, tpu.core_type = #tpu.core_type<tc>, window_params = [{transform_indices = @transform_0, window_bounds = array<i64: 1, 16, 64>}, {transform_indices = @transform_1, window_bounds = array<i64: 1, 64, 16>}, {transform_indices = @transform_2, window_bounds = array<i64: 1, 1, 16>}, {transform_indices = @transform_3, window_bounds = array<i64: 1, 16, 16>}]} {
    %c0 = arith.constant 0 : index
    %c0_0 = arith.constant 0 : index
    %c0_1 = arith.constant 0 : index
    %0 = vector.load %arg3[%c0, %c0_0, %c0_1] : memref<1x16x64xf32, #tpu.memory_space<vmem>>, vector<1x16x64xf32>
    %1 = vector.shape_cast %0 : vector<1x16x64xf32> to vector<16x64xf32>
    %c0_2 = arith.constant 0 : index
    %c0_3 = arith.constant 0 : index
    %c0_4 = arith.constant 0 : index
    %2 = vector.load %arg4[%c0_2, %c0_3, %c0_4] : memref<1x64x16xf32, #tpu.memory_space<vmem>>, vector<1x64x16xf32>
    %3 = vector.shape_cast %2 : vector<1x64x16xf32> to vector<64x16xf32>
    %cst = arith.constant dense<0.000000e+00> : vector<16x16xf32>
    %4 = tpu.matmul %1, %3, %cst {dimension_numbers = #tpu.dot_dimension_numbers<[1], [0], [0], [1], [0, 0, 1, 1], [], []>} : vector<16x64xf32>, vector<64x16xf32>, vector<16x16xf32> -> vector<16x16xf32>
    %cst_5 = arith.constant 2.000000e+00 : f32
    %5 = vector.broadcast %cst_5 : f32 to vector<16x16xf32>
    %6 = arith.mulf %5, %4 : vector<16x16xf32>
    %c0_6 = arith.constant 0 : index
    %c0_7 = arith.constant 0 : index
    %c0_8 = arith.constant 0 : index
    %7 = vector.load %arg5[%c0_6, %c0_7, %c0_8] : memref<1x1x16xf32, #tpu.memory_space<vmem>>, vector<1x1x16xf32>
    %8 = vector.shape_cast %7 : vector<1x1x16xf32> to vector<1x16xf32>
    %9 = vector.broadcast %8 : vector<1x16xf32> to vector<16x16xf32>
    %10 = arith.subf %6, %9 : vector<16x16xf32>
    %c0_9 = arith.constant 0 : index
    %c0_10 = arith.constant 0 : index
    %c0_11 = arith.constant 0 : index
    %11 = vector.load %arg6[%c0_9, %c0_10, %c0_11] : memref<1x16x16xf32, #tpu.memory_space<vmem>>, vector<1x16x16xf32>
    %12 = vector.shape_cast %11 : vector<1x16x16xf32> to vector<16x16xf32>
    %13 = vector.shape_cast %10 : vector<16x16xf32> to vector<1x16x16xf32>
    tpu.vector_store %arg6[%c0_9, %c0_10, %c0_11], %13 {strides = array<i32>} : memref<1x16x16xf32, #tpu.memory_space<vmem>>, vector<1x16x16xf32>,
    return
  }
  func.func @transform_0(%arg0: i32, %arg1: i32, %arg2: i32) -> (i32, i32, i32) {
    %c0_i32 = arith.constant 0 : i32
    %c0_i32_0 = arith.constant 0 : i32
    return %arg1, %arg0, %c0_i32 : i32, i32, i32
  }
  func.func @transform_1(%arg0: i32, %arg1: i32, %arg2: i32) -> (i32, i32, i32) {
    %c0_i32 = arith.constant 0 : i32
    %c0_i32_0 = arith.constant 0 : i32
    return %arg1, %c0_i32, %arg2 : i32, i32, i32
  }
  func.func @transform_2(%arg0: i32, %arg1: i32, %arg2: i32) -> (i32, i32, i32) {
    %c0_i32 = arith.constant 0 : i32
    %c0_i32_0 = arith.constant 0 : i32
    return %arg1, %c0_i32, %arg2 : i32, i32, i32
  }
  func.func @transform_3(%arg0: i32, %arg1: i32, %arg2: i32) -> (i32, i32, i32) {
    %c0_i32 = arith.constant 0 : i32
    return %arg1, %arg0, %arg2 : i32, i32, i32
  }
}

module attributes {stable_mosaic.version = 11 : i64} {
  func.func @_edgeconv_kernel(%arg0: i32, %arg1: memref<32x4x64xbf16, #tpu.memory_space<vmem>>, %arg2: memref<32x64xf32, #tpu.memory_space<vmem>>, %arg3: memref<64x64xbf16, #tpu.memory_space<vmem>>, %arg4: memref<64x64xbf16, #tpu.memory_space<vmem>>, %arg5: memref<1x64xf32, #tpu.memory_space<vmem>>, %arg6: memref<1x64xf32, #tpu.memory_space<vmem>>, %arg7: memref<64x64xbf16, #tpu.memory_space<vmem>>, %arg8: memref<1x64xf32, #tpu.memory_space<vmem>>, %arg9: memref<1x64xf32, #tpu.memory_space<vmem>>, %arg10: memref<32x64xf32, #tpu.memory_space<vmem>>) attributes {dimension_semantics = [#tpu.dimension_semantics<parallel>], iteration_bounds = array<i64: 1>, scalar_prefetch = 0 : i64, scratch_operands = 0 : i64, tpu.core_type = #tpu.core_type<tc>, window_params = [{transform_indices = @transform_0, window_bounds = array<i64: 32, 4, 64>}, {transform_indices = @transform_1, window_bounds = array<i64: 32, 64>}, {pipeline_mode = #tpu.pipeline_mode<synchronous>, transform_indices = @transform_2, window_bounds = array<i64: 64, 64>}, {pipeline_mode = #tpu.pipeline_mode<synchronous>, transform_indices = @transform_3, window_bounds = array<i64: 64, 64>}, {pipeline_mode = #tpu.pipeline_mode<synchronous>, transform_indices = @transform_4, window_bounds = array<i64: 1, 64>}, {pipeline_mode = #tpu.pipeline_mode<synchronous>, transform_indices = @transform_5, window_bounds = array<i64: 1, 64>}, {pipeline_mode = #tpu.pipeline_mode<synchronous>, transform_indices = @transform_6, window_bounds = array<i64: 64, 64>}, {pipeline_mode = #tpu.pipeline_mode<synchronous>, transform_indices = @transform_7, window_bounds = array<i64: 1, 64>}, {pipeline_mode = #tpu.pipeline_mode<synchronous>, transform_indices = @transform_8, window_bounds = array<i64: 1, 64>}, {transform_indices = @transform_9, window_bounds = array<i64: 32, 64>}]} {
    %c0 = arith.constant 0 : index
    %c0_0 = arith.constant 0 : index
    %0 = vector.load %arg2[%c0, %c0_0] : memref<32x64xf32, #tpu.memory_space<vmem>>, vector<32x64xf32>
    %c0_1 = arith.constant 0 : index
    %c0_2 = arith.constant 0 : index
    %1 = vector.load %arg3[%c0_1, %c0_2] : memref<64x64xbf16, #tpu.memory_space<vmem>>, vector<64x64xbf16>
    %c0_3 = arith.constant 0 : index
    %c0_4 = arith.constant 0 : index
    %2 = vector.load %arg4[%c0_3, %c0_4] : memref<64x64xbf16, #tpu.memory_space<vmem>>, vector<64x64xbf16>
    %c0_5 = arith.constant 0 : index
    %c0_6 = arith.constant 0 : index
    %3 = vector.load %arg5[%c0_5, %c0_6] : memref<1x64xf32, #tpu.memory_space<vmem>>, vector<1x64xf32>
    %c0_7 = arith.constant 0 : index
    %c0_8 = arith.constant 0 : index
    %4 = vector.load %arg6[%c0_7, %c0_8] : memref<1x64xf32, #tpu.memory_space<vmem>>, vector<1x64xf32>
    %c0_9 = arith.constant 0 : index
    %c0_10 = arith.constant 0 : index
    %5 = vector.load %arg7[%c0_9, %c0_10] : memref<64x64xbf16, #tpu.memory_space<vmem>>, vector<64x64xbf16>
    %c0_11 = arith.constant 0 : index
    %c0_12 = arith.constant 0 : index
    %6 = vector.load %arg8[%c0_11, %c0_12] : memref<1x64xf32, #tpu.memory_space<vmem>>, vector<1x64xf32>
    %c0_13 = arith.constant 0 : index
    %c0_14 = arith.constant 0 : index
    %7 = vector.load %arg9[%c0_13, %c0_14] : memref<1x64xf32, #tpu.memory_space<vmem>>, vector<1x64xf32>
    %8 = arith.truncf %0 : vector<32x64xf32> to vector<32x64xbf16>
    %cst = arith.constant dense<0.000000e+00> : vector<32x64xf32>
    %9 = tpu.matmul %8, %2, %cst {dimension_numbers = #tpu.dot_dimension_numbers<[1], [0], [0], [1], [0, 0, 1, 1], [], []>} : vector<32x64xbf16>, vector<64x64xbf16>, vector<32x64xf32> -> vector<32x64xf32>
    %c0_15 = arith.constant 0 : index
    %c0_16 = arith.constant 0 : index
    %c0_17 = arith.constant 0 : index
    %10 = vector.load %arg1[%c0_15, %c0_16, %c0_17] : memref<32x4x64xbf16, #tpu.memory_space<vmem>>, vector<32x4x64xbf16>
    %11 = vector.extract_strided_slice %10 {offsets = [0, 0, 0], sizes = [32, 1, 64], strides = [1, 1, 1]} : vector<32x4x64xbf16> to vector<32x1x64xbf16>
    %12 = vector.shape_cast %11 : vector<32x1x64xbf16> to vector<32x64xbf16>
    %13 = arith.extf %12 : vector<32x64xbf16> to vector<32x64xf32>
    %14 = arith.subf %13, %0 : vector<32x64xf32>
    %15 = arith.truncf %14 : vector<32x64xf32> to vector<32x64xbf16>
    %cst_18 = arith.constant dense<0.000000e+00> : vector<32x64xf32>
    %16 = tpu.matmul %15, %1, %cst_18 {dimension_numbers = #tpu.dot_dimension_numbers<[1], [0], [0], [1], [0, 0, 1, 1], [], []>} : vector<32x64xbf16>, vector<64x64xbf16>, vector<32x64xf32> -> vector<32x64xf32>
    %17 = arith.addf %16, %9 : vector<32x64xf32>
    %18 = vector.broadcast %3 : vector<1x64xf32> to vector<32x64xf32>
    %19 = arith.mulf %17, %18 : vector<32x64xf32>
    %20 = vector.broadcast %4 : vector<1x64xf32> to vector<32x64xf32>
    %21 = arith.addf %19, %20 : vector<32x64xf32>
    %cst_19 = arith.constant 0.000000e+00 : f32
    %22 = vector.broadcast %cst_19 : f32 to vector<32x64xf32>
    %23 = arith.cmpf oge, %21, %22 : vector<32x64xf32>
    %cst_20 = arith.constant 2.000000e-01 : f32
    %24 = vector.broadcast %cst_20 : f32 to vector<32x64xf32>
    %25 = arith.mulf %24, %21 : vector<32x64xf32>
    %26 = arith.select %23, %21, %25 : vector<32x64xi1>, vector<32x64xf32>
    %27 = arith.truncf %26 : vector<32x64xf32> to vector<32x64xbf16>
    %cst_21 = arith.constant dense<0.000000e+00> : vector<32x64xf32>
    %28 = tpu.matmul %27, %5, %cst_21 {dimension_numbers = #tpu.dot_dimension_numbers<[1], [0], [0], [1], [0, 0, 1, 1], [], []>} : vector<32x64xbf16>, vector<64x64xbf16>, vector<32x64xf32> -> vector<32x64xf32>
    %29 = vector.broadcast %6 : vector<1x64xf32> to vector<32x64xf32>
    %30 = arith.mulf %28, %29 : vector<32x64xf32>
    %31 = vector.broadcast %7 : vector<1x64xf32> to vector<32x64xf32>
    %32 = arith.addf %30, %31 : vector<32x64xf32>
    %cst_22 = arith.constant 0.000000e+00 : f32
    %33 = vector.broadcast %cst_22 : f32 to vector<32x64xf32>
    %34 = arith.cmpf oge, %32, %33 : vector<32x64xf32>
    %cst_23 = arith.constant 2.000000e-01 : f32
    %35 = vector.broadcast %cst_23 : f32 to vector<32x64xf32>
    %36 = arith.mulf %35, %32 : vector<32x64xf32>
    %37 = arith.select %34, %32, %36 : vector<32x64xi1>, vector<32x64xf32>
    %38 = vector.extract_strided_slice %10 {offsets = [0, 1, 0], sizes = [32, 1, 64], strides = [1, 1, 1]} : vector<32x4x64xbf16> to vector<32x1x64xbf16>
    %39 = vector.shape_cast %38 : vector<32x1x64xbf16> to vector<32x64xbf16>
    %40 = arith.extf %39 : vector<32x64xbf16> to vector<32x64xf32>
    %41 = arith.subf %40, %0 : vector<32x64xf32>
    %42 = arith.truncf %41 : vector<32x64xf32> to vector<32x64xbf16>
    %cst_24 = arith.constant dense<0.000000e+00> : vector<32x64xf32>
    %43 = tpu.matmul %42, %1, %cst_24 {dimension_numbers = #tpu.dot_dimension_numbers<[1], [0], [0], [1], [0, 0, 1, 1], [], []>} : vector<32x64xbf16>, vector<64x64xbf16>, vector<32x64xf32> -> vector<32x64xf32>
    %44 = arith.addf %43, %9 : vector<32x64xf32>
    %45 = vector.broadcast %3 : vector<1x64xf32> to vector<32x64xf32>
    %46 = arith.mulf %44, %45 : vector<32x64xf32>
    %47 = vector.broadcast %4 : vector<1x64xf32> to vector<32x64xf32>
    %48 = arith.addf %46, %47 : vector<32x64xf32>
    %cst_25 = arith.constant 0.000000e+00 : f32
    %49 = vector.broadcast %cst_25 : f32 to vector<32x64xf32>
    %50 = arith.cmpf oge, %48, %49 : vector<32x64xf32>
    %cst_26 = arith.constant 2.000000e-01 : f32
    %51 = vector.broadcast %cst_26 : f32 to vector<32x64xf32>
    %52 = arith.mulf %51, %48 : vector<32x64xf32>
    %53 = arith.select %50, %48, %52 : vector<32x64xi1>, vector<32x64xf32>
    %54 = arith.truncf %53 : vector<32x64xf32> to vector<32x64xbf16>
    %cst_27 = arith.constant dense<0.000000e+00> : vector<32x64xf32>
    %55 = tpu.matmul %54, %5, %cst_27 {dimension_numbers = #tpu.dot_dimension_numbers<[1], [0], [0], [1], [0, 0, 1, 1], [], []>} : vector<32x64xbf16>, vector<64x64xbf16>, vector<32x64xf32> -> vector<32x64xf32>
    %56 = vector.broadcast %6 : vector<1x64xf32> to vector<32x64xf32>
    %57 = arith.mulf %55, %56 : vector<32x64xf32>
    %58 = vector.broadcast %7 : vector<1x64xf32> to vector<32x64xf32>
    %59 = arith.addf %57, %58 : vector<32x64xf32>
    %cst_28 = arith.constant 0.000000e+00 : f32
    %60 = vector.broadcast %cst_28 : f32 to vector<32x64xf32>
    %61 = arith.cmpf oge, %59, %60 : vector<32x64xf32>
    %cst_29 = arith.constant 2.000000e-01 : f32
    %62 = vector.broadcast %cst_29 : f32 to vector<32x64xf32>
    %63 = arith.mulf %62, %59 : vector<32x64xf32>
    %64 = arith.select %61, %59, %63 : vector<32x64xi1>, vector<32x64xf32>
    %65 = arith.maximumf %37, %64 : vector<32x64xf32>
    %66 = vector.extract_strided_slice %10 {offsets = [0, 2, 0], sizes = [32, 1, 64], strides = [1, 1, 1]} : vector<32x4x64xbf16> to vector<32x1x64xbf16>
    %67 = vector.shape_cast %66 : vector<32x1x64xbf16> to vector<32x64xbf16>
    %68 = arith.extf %67 : vector<32x64xbf16> to vector<32x64xf32>
    %69 = arith.subf %68, %0 : vector<32x64xf32>
    %70 = arith.truncf %69 : vector<32x64xf32> to vector<32x64xbf16>
    %cst_30 = arith.constant dense<0.000000e+00> : vector<32x64xf32>
    %71 = tpu.matmul %70, %1, %cst_30 {dimension_numbers = #tpu.dot_dimension_numbers<[1], [0], [0], [1], [0, 0, 1, 1], [], []>} : vector<32x64xbf16>, vector<64x64xbf16>, vector<32x64xf32> -> vector<32x64xf32>
    %72 = arith.addf %71, %9 : vector<32x64xf32>
    %73 = vector.broadcast %3 : vector<1x64xf32> to vector<32x64xf32>
    %74 = arith.mulf %72, %73 : vector<32x64xf32>
    %75 = vector.broadcast %4 : vector<1x64xf32> to vector<32x64xf32>
    %76 = arith.addf %74, %75 : vector<32x64xf32>
    %cst_31 = arith.constant 0.000000e+00 : f32
    %77 = vector.broadcast %cst_31 : f32 to vector<32x64xf32>
    %78 = arith.cmpf oge, %76, %77 : vector<32x64xf32>
    %cst_32 = arith.constant 2.000000e-01 : f32
    %79 = vector.broadcast %cst_32 : f32 to vector<32x64xf32>
    %80 = arith.mulf %79, %76 : vector<32x64xf32>
    %81 = arith.select %78, %76, %80 : vector<32x64xi1>, vector<32x64xf32>
    %82 = arith.truncf %81 : vector<32x64xf32> to vector<32x64xbf16>
    %cst_33 = arith.constant dense<0.000000e+00> : vector<32x64xf32>
    %83 = tpu.matmul %82, %5, %cst_33 {dimension_numbers = #tpu.dot_dimension_numbers<[1], [0], [0], [1], [0, 0, 1, 1], [], []>} : vector<32x64xbf16>, vector<64x64xbf16>, vector<32x64xf32> -> vector<32x64xf32>
    %84 = vector.broadcast %6 : vector<1x64xf32> to vector<32x64xf32>
    %85 = arith.mulf %83, %84 : vector<32x64xf32>
    %86 = vector.broadcast %7 : vector<1x64xf32> to vector<32x64xf32>
    %87 = arith.addf %85, %86 : vector<32x64xf32>
    %cst_34 = arith.constant 0.000000e+00 : f32
    %88 = vector.broadcast %cst_34 : f32 to vector<32x64xf32>
    %89 = arith.cmpf oge, %87, %88 : vector<32x64xf32>
    %cst_35 = arith.constant 2.000000e-01 : f32
    %90 = vector.broadcast %cst_35 : f32 to vector<32x64xf32>
    %91 = arith.mulf %90, %87 : vector<32x64xf32>
    %92 = arith.select %89, %87, %91 : vector<32x64xi1>, vector<32x64xf32>
    %93 = arith.maximumf %65, %92 : vector<32x64xf32>
    %94 = vector.extract_strided_slice %10 {offsets = [0, 3, 0], sizes = [32, 1, 64], strides = [1, 1, 1]} : vector<32x4x64xbf16> to vector<32x1x64xbf16>
    %95 = vector.shape_cast %94 : vector<32x1x64xbf16> to vector<32x64xbf16>
    %96 = arith.extf %95 : vector<32x64xbf16> to vector<32x64xf32>
    %97 = arith.subf %96, %0 : vector<32x64xf32>
    %98 = arith.truncf %97 : vector<32x64xf32> to vector<32x64xbf16>
    %cst_36 = arith.constant dense<0.000000e+00> : vector<32x64xf32>
    %99 = tpu.matmul %98, %1, %cst_36 {dimension_numbers = #tpu.dot_dimension_numbers<[1], [0], [0], [1], [0, 0, 1, 1], [], []>} : vector<32x64xbf16>, vector<64x64xbf16>, vector<32x64xf32> -> vector<32x64xf32>
    %100 = arith.addf %99, %9 : vector<32x64xf32>
    %101 = vector.broadcast %3 : vector<1x64xf32> to vector<32x64xf32>
    %102 = arith.mulf %100, %101 : vector<32x64xf32>
    %103 = vector.broadcast %4 : vector<1x64xf32> to vector<32x64xf32>
    %104 = arith.addf %102, %103 : vector<32x64xf32>
    %cst_37 = arith.constant 0.000000e+00 : f32
    %105 = vector.broadcast %cst_37 : f32 to vector<32x64xf32>
    %106 = arith.cmpf oge, %104, %105 : vector<32x64xf32>
    %cst_38 = arith.constant 2.000000e-01 : f32
    %107 = vector.broadcast %cst_38 : f32 to vector<32x64xf32>
    %108 = arith.mulf %107, %104 : vector<32x64xf32>
    %109 = arith.select %106, %104, %108 : vector<32x64xi1>, vector<32x64xf32>
    %110 = arith.truncf %109 : vector<32x64xf32> to vector<32x64xbf16>
    %cst_39 = arith.constant dense<0.000000e+00> : vector<32x64xf32>
    %111 = tpu.matmul %110, %5, %cst_39 {dimension_numbers = #tpu.dot_dimension_numbers<[1], [0], [0], [1], [0, 0, 1, 1], [], []>} : vector<32x64xbf16>, vector<64x64xbf16>, vector<32x64xf32> -> vector<32x64xf32>
    %112 = vector.broadcast %6 : vector<1x64xf32> to vector<32x64xf32>
    %113 = arith.mulf %111, %112 : vector<32x64xf32>
    %114 = vector.broadcast %7 : vector<1x64xf32> to vector<32x64xf32>
    %115 = arith.addf %113, %114 : vector<32x64xf32>
    %cst_40 = arith.constant 0.000000e+00 : f32
    %116 = vector.broadcast %cst_40 : f32 to vector<32x64xf32>
    %117 = arith.cmpf oge, %115, %116 : vector<32x64xf32>
    %cst_41 = arith.constant 2.000000e-01 : f32
    %118 = vector.broadcast %cst_41 : f32 to vector<32x64xf32>
    %119 = arith.mulf %118, %115 : vector<32x64xf32>
    %120 = arith.select %117, %115, %119 : vector<32x64xi1>, vector<32x64xf32>
    %121 = arith.maximumf %93, %120 : vector<32x64xf32>
    %c0_42 = arith.constant 0 : index
    %c0_43 = arith.constant 0 : index
    %122 = vector.load %arg10[%c0_42, %c0_43] : memref<32x64xf32, #tpu.memory_space<vmem>>, vector<32x64xf32>
    tpu.vector_store %arg10[%c0_42, %c0_43], %121 {strides = array<i32>} : memref<32x64xf32, #tpu.memory_space<vmem>>, vector<32x64xf32>,
    return
  }
  func.func @transform_0(%arg0: i32) -> (i32, i32, i32) {
    %c0_i32 = arith.constant 0 : i32
    %c0_i32_0 = arith.constant 0 : i32
    %c0_i32_1 = arith.constant 0 : i32
    return %arg0, %c0_i32, %c0_i32_0 : i32, i32, i32
  }
  func.func @transform_1(%arg0: i32) -> (i32, i32) {
    %c0_i32 = arith.constant 0 : i32
    %c0_i32_0 = arith.constant 0 : i32
    return %arg0, %c0_i32 : i32, i32
  }
  func.func @transform_2(%arg0: i32) -> (i32, i32) {
    %c0_i32 = arith.constant 0 : i32
    %c0_i32_0 = arith.constant 0 : i32
    %c0_i32_1 = arith.constant 0 : i32
    return %c0_i32, %c0_i32_0 : i32, i32
  }
  func.func @transform_3(%arg0: i32) -> (i32, i32) {
    %c0_i32 = arith.constant 0 : i32
    %c0_i32_0 = arith.constant 0 : i32
    %c0_i32_1 = arith.constant 0 : i32
    return %c0_i32, %c0_i32_0 : i32, i32
  }
  func.func @transform_4(%arg0: i32) -> (i32, i32) {
    %c0_i32 = arith.constant 0 : i32
    %c0_i32_0 = arith.constant 0 : i32
    %c0_i32_1 = arith.constant 0 : i32
    return %c0_i32, %c0_i32_0 : i32, i32
  }
  func.func @transform_5(%arg0: i32) -> (i32, i32) {
    %c0_i32 = arith.constant 0 : i32
    %c0_i32_0 = arith.constant 0 : i32
    %c0_i32_1 = arith.constant 0 : i32
    return %c0_i32, %c0_i32_0 : i32, i32
  }
  func.func @transform_6(%arg0: i32) -> (i32, i32) {
    %c0_i32 = arith.constant 0 : i32
    %c0_i32_0 = arith.constant 0 : i32
    %c0_i32_1 = arith.constant 0 : i32
    return %c0_i32, %c0_i32_0 : i32, i32
  }
  func.func @transform_7(%arg0: i32) -> (i32, i32) {
    %c0_i32 = arith.constant 0 : i32
    %c0_i32_0 = arith.constant 0 : i32
    %c0_i32_1 = arith.constant 0 : i32
    return %c0_i32, %c0_i32_0 : i32, i32
  }
  func.func @transform_8(%arg0: i32) -> (i32, i32) {
    %c0_i32 = arith.constant 0 : i32
    %c0_i32_0 = arith.constant 0 : i32
    %c0_i32_1 = arith.constant 0 : i32
    return %c0_i32, %c0_i32_0 : i32, i32
  }
  func.func @transform_9(%arg0: i32) -> (i32, i32) {
    %c0_i32 = arith.constant 0 : i32
    %c0_i32_0 = arith.constant 0 : i32
    return %arg0, %c0_i32 : i32, i32
  }
}

module attributes {stable_mosaic.version = 11 : i64} {
  func.func @_edgeconv_kernel(%arg0: i32, %arg1: memref<32x4x64xbf16, #tpu.memory_space<vmem>>, %arg2: memref<32x64xf32, #tpu.memory_space<vmem>>, %arg3: memref<64x64xbf16, #tpu.memory_space<vmem>>, %arg4: memref<64x64xbf16, #tpu.memory_space<vmem>>, %arg5: memref<1x64xf32, #tpu.memory_space<vmem>>, %arg6: memref<1x64xf32, #tpu.memory_space<vmem>>, %arg7: memref<32x64xf32, #tpu.memory_space<vmem>>) attributes {dimension_semantics = [#tpu.dimension_semantics<parallel>], iteration_bounds = array<i64: 1>, scalar_prefetch = 0 : i64, scratch_operands = 0 : i64, tpu.core_type = #tpu.core_type<tc>, window_params = [{transform_indices = @transform_0, window_bounds = array<i64: 32, 4, 64>}, {transform_indices = @transform_1, window_bounds = array<i64: 32, 64>}, {pipeline_mode = #tpu.pipeline_mode<synchronous>, transform_indices = @transform_2, window_bounds = array<i64: 64, 64>}, {pipeline_mode = #tpu.pipeline_mode<synchronous>, transform_indices = @transform_3, window_bounds = array<i64: 64, 64>}, {pipeline_mode = #tpu.pipeline_mode<synchronous>, transform_indices = @transform_4, window_bounds = array<i64: 1, 64>}, {pipeline_mode = #tpu.pipeline_mode<synchronous>, transform_indices = @transform_5, window_bounds = array<i64: 1, 64>}, {transform_indices = @transform_6, window_bounds = array<i64: 32, 64>}]} {
    %c0 = arith.constant 0 : index
    %c0_0 = arith.constant 0 : index
    %0 = vector.load %arg2[%c0, %c0_0] : memref<32x64xf32, #tpu.memory_space<vmem>>, vector<32x64xf32>
    %c0_1 = arith.constant 0 : index
    %c0_2 = arith.constant 0 : index
    %1 = vector.load %arg3[%c0_1, %c0_2] : memref<64x64xbf16, #tpu.memory_space<vmem>>, vector<64x64xbf16>
    %c0_3 = arith.constant 0 : index
    %c0_4 = arith.constant 0 : index
    %2 = vector.load %arg4[%c0_3, %c0_4] : memref<64x64xbf16, #tpu.memory_space<vmem>>, vector<64x64xbf16>
    %c0_5 = arith.constant 0 : index
    %c0_6 = arith.constant 0 : index
    %3 = vector.load %arg5[%c0_5, %c0_6] : memref<1x64xf32, #tpu.memory_space<vmem>>, vector<1x64xf32>
    %c0_7 = arith.constant 0 : index
    %c0_8 = arith.constant 0 : index
    %4 = vector.load %arg6[%c0_7, %c0_8] : memref<1x64xf32, #tpu.memory_space<vmem>>, vector<1x64xf32>
    %5 = arith.truncf %0 : vector<32x64xf32> to vector<32x64xbf16>
    %cst = arith.constant dense<0.000000e+00> : vector<32x64xf32>
    %6 = tpu.matmul %5, %2, %cst {dimension_numbers = #tpu.dot_dimension_numbers<[1], [0], [0], [1], [0, 0, 1, 1], [], []>} : vector<32x64xbf16>, vector<64x64xbf16>, vector<32x64xf32> -> vector<32x64xf32>
    %c0_9 = arith.constant 0 : index
    %c0_10 = arith.constant 0 : index
    %c0_11 = arith.constant 0 : index
    %7 = vector.load %arg1[%c0_9, %c0_10, %c0_11] : memref<32x4x64xbf16, #tpu.memory_space<vmem>>, vector<32x4x64xbf16>
    %8 = vector.extract_strided_slice %7 {offsets = [0, 0, 0], sizes = [32, 1, 64], strides = [1, 1, 1]} : vector<32x4x64xbf16> to vector<32x1x64xbf16>
    %9 = vector.shape_cast %8 : vector<32x1x64xbf16> to vector<32x64xbf16>
    %10 = arith.extf %9 : vector<32x64xbf16> to vector<32x64xf32>
    %11 = arith.subf %10, %0 : vector<32x64xf32>
    %12 = arith.truncf %11 : vector<32x64xf32> to vector<32x64xbf16>
    %cst_12 = arith.constant dense<0.000000e+00> : vector<32x64xf32>
    %13 = tpu.matmul %12, %1, %cst_12 {dimension_numbers = #tpu.dot_dimension_numbers<[1], [0], [0], [1], [0, 0, 1, 1], [], []>} : vector<32x64xbf16>, vector<64x64xbf16>, vector<32x64xf32> -> vector<32x64xf32>
    %14 = arith.addf %13, %6 : vector<32x64xf32>
    %15 = vector.broadcast %3 : vector<1x64xf32> to vector<32x64xf32>
    %16 = arith.mulf %14, %15 : vector<32x64xf32>
    %17 = vector.broadcast %4 : vector<1x64xf32> to vector<32x64xf32>
    %18 = arith.addf %16, %17 : vector<32x64xf32>
    %cst_13 = arith.constant 0.000000e+00 : f32
    %19 = vector.broadcast %cst_13 : f32 to vector<32x64xf32>
    %20 = arith.cmpf oge, %18, %19 : vector<32x64xf32>
    %cst_14 = arith.constant 2.000000e-01 : f32
    %21 = vector.broadcast %cst_14 : f32 to vector<32x64xf32>
    %22 = arith.mulf %21, %18 : vector<32x64xf32>
    %23 = arith.select %20, %18, %22 : vector<32x64xi1>, vector<32x64xf32>
    %24 = vector.extract_strided_slice %7 {offsets = [0, 1, 0], sizes = [32, 1, 64], strides = [1, 1, 1]} : vector<32x4x64xbf16> to vector<32x1x64xbf16>
    %25 = vector.shape_cast %24 : vector<32x1x64xbf16> to vector<32x64xbf16>
    %26 = arith.extf %25 : vector<32x64xbf16> to vector<32x64xf32>
    %27 = arith.subf %26, %0 : vector<32x64xf32>
    %28 = arith.truncf %27 : vector<32x64xf32> to vector<32x64xbf16>
    %cst_15 = arith.constant dense<0.000000e+00> : vector<32x64xf32>
    %29 = tpu.matmul %28, %1, %cst_15 {dimension_numbers = #tpu.dot_dimension_numbers<[1], [0], [0], [1], [0, 0, 1, 1], [], []>} : vector<32x64xbf16>, vector<64x64xbf16>, vector<32x64xf32> -> vector<32x64xf32>
    %30 = arith.addf %29, %6 : vector<32x64xf32>
    %31 = vector.broadcast %3 : vector<1x64xf32> to vector<32x64xf32>
    %32 = arith.mulf %30, %31 : vector<32x64xf32>
    %33 = vector.broadcast %4 : vector<1x64xf32> to vector<32x64xf32>
    %34 = arith.addf %32, %33 : vector<32x64xf32>
    %cst_16 = arith.constant 0.000000e+00 : f32
    %35 = vector.broadcast %cst_16 : f32 to vector<32x64xf32>
    %36 = arith.cmpf oge, %34, %35 : vector<32x64xf32>
    %cst_17 = arith.constant 2.000000e-01 : f32
    %37 = vector.broadcast %cst_17 : f32 to vector<32x64xf32>
    %38 = arith.mulf %37, %34 : vector<32x64xf32>
    %39 = arith.select %36, %34, %38 : vector<32x64xi1>, vector<32x64xf32>
    %40 = arith.maximumf %23, %39 : vector<32x64xf32>
    %41 = vector.extract_strided_slice %7 {offsets = [0, 2, 0], sizes = [32, 1, 64], strides = [1, 1, 1]} : vector<32x4x64xbf16> to vector<32x1x64xbf16>
    %42 = vector.shape_cast %41 : vector<32x1x64xbf16> to vector<32x64xbf16>
    %43 = arith.extf %42 : vector<32x64xbf16> to vector<32x64xf32>
    %44 = arith.subf %43, %0 : vector<32x64xf32>
    %45 = arith.truncf %44 : vector<32x64xf32> to vector<32x64xbf16>
    %cst_18 = arith.constant dense<0.000000e+00> : vector<32x64xf32>
    %46 = tpu.matmul %45, %1, %cst_18 {dimension_numbers = #tpu.dot_dimension_numbers<[1], [0], [0], [1], [0, 0, 1, 1], [], []>} : vector<32x64xbf16>, vector<64x64xbf16>, vector<32x64xf32> -> vector<32x64xf32>
    %47 = arith.addf %46, %6 : vector<32x64xf32>
    %48 = vector.broadcast %3 : vector<1x64xf32> to vector<32x64xf32>
    %49 = arith.mulf %47, %48 : vector<32x64xf32>
    %50 = vector.broadcast %4 : vector<1x64xf32> to vector<32x64xf32>
    %51 = arith.addf %49, %50 : vector<32x64xf32>
    %cst_19 = arith.constant 0.000000e+00 : f32
    %52 = vector.broadcast %cst_19 : f32 to vector<32x64xf32>
    %53 = arith.cmpf oge, %51, %52 : vector<32x64xf32>
    %cst_20 = arith.constant 2.000000e-01 : f32
    %54 = vector.broadcast %cst_20 : f32 to vector<32x64xf32>
    %55 = arith.mulf %54, %51 : vector<32x64xf32>
    %56 = arith.select %53, %51, %55 : vector<32x64xi1>, vector<32x64xf32>
    %57 = arith.maximumf %40, %56 : vector<32x64xf32>
    %58 = vector.extract_strided_slice %7 {offsets = [0, 3, 0], sizes = [32, 1, 64], strides = [1, 1, 1]} : vector<32x4x64xbf16> to vector<32x1x64xbf16>
    %59 = vector.shape_cast %58 : vector<32x1x64xbf16> to vector<32x64xbf16>
    %60 = arith.extf %59 : vector<32x64xbf16> to vector<32x64xf32>
    %61 = arith.subf %60, %0 : vector<32x64xf32>
    %62 = arith.truncf %61 : vector<32x64xf32> to vector<32x64xbf16>
    %cst_21 = arith.constant dense<0.000000e+00> : vector<32x64xf32>
    %63 = tpu.matmul %62, %1, %cst_21 {dimension_numbers = #tpu.dot_dimension_numbers<[1], [0], [0], [1], [0, 0, 1, 1], [], []>} : vector<32x64xbf16>, vector<64x64xbf16>, vector<32x64xf32> -> vector<32x64xf32>
    %64 = arith.addf %63, %6 : vector<32x64xf32>
    %65 = vector.broadcast %3 : vector<1x64xf32> to vector<32x64xf32>
    %66 = arith.mulf %64, %65 : vector<32x64xf32>
    %67 = vector.broadcast %4 : vector<1x64xf32> to vector<32x64xf32>
    %68 = arith.addf %66, %67 : vector<32x64xf32>
    %cst_22 = arith.constant 0.000000e+00 : f32
    %69 = vector.broadcast %cst_22 : f32 to vector<32x64xf32>
    %70 = arith.cmpf oge, %68, %69 : vector<32x64xf32>
    %cst_23 = arith.constant 2.000000e-01 : f32
    %71 = vector.broadcast %cst_23 : f32 to vector<32x64xf32>
    %72 = arith.mulf %71, %68 : vector<32x64xf32>
    %73 = arith.select %70, %68, %72 : vector<32x64xi1>, vector<32x64xf32>
    %74 = arith.maximumf %57, %73 : vector<32x64xf32>
    %c0_24 = arith.constant 0 : index
    %c0_25 = arith.constant 0 : index
    %75 = vector.load %arg7[%c0_24, %c0_25] : memref<32x64xf32, #tpu.memory_space<vmem>>, vector<32x64xf32>
    tpu.vector_store %arg7[%c0_24, %c0_25], %74 {strides = array<i32>} : memref<32x64xf32, #tpu.memory_space<vmem>>, vector<32x64xf32>,
    return
  }
  func.func @transform_0(%arg0: i32) -> (i32, i32, i32) {
    %c0_i32 = arith.constant 0 : i32
    %c0_i32_0 = arith.constant 0 : i32
    %c0_i32_1 = arith.constant 0 : i32
    return %arg0, %c0_i32, %c0_i32_0 : i32, i32, i32
  }
  func.func @transform_1(%arg0: i32) -> (i32, i32) {
    %c0_i32 = arith.constant 0 : i32
    %c0_i32_0 = arith.constant 0 : i32
    return %arg0, %c0_i32 : i32, i32
  }
  func.func @transform_2(%arg0: i32) -> (i32, i32) {
    %c0_i32 = arith.constant 0 : i32
    %c0_i32_0 = arith.constant 0 : i32
    %c0_i32_1 = arith.constant 0 : i32
    return %c0_i32, %c0_i32_0 : i32, i32
  }
  func.func @transform_3(%arg0: i32) -> (i32, i32) {
    %c0_i32 = arith.constant 0 : i32
    %c0_i32_0 = arith.constant 0 : i32
    %c0_i32_1 = arith.constant 0 : i32
    return %c0_i32, %c0_i32_0 : i32, i32
  }
  func.func @transform_4(%arg0: i32) -> (i32, i32) {
    %c0_i32 = arith.constant 0 : i32
    %c0_i32_0 = arith.constant 0 : i32
    %c0_i32_1 = arith.constant 0 : i32
    return %c0_i32, %c0_i32_0 : i32, i32
  }
  func.func @transform_5(%arg0: i32) -> (i32, i32) {
    %c0_i32 = arith.constant 0 : i32
    %c0_i32_0 = arith.constant 0 : i32
    %c0_i32_1 = arith.constant 0 : i32
    return %c0_i32, %c0_i32_0 : i32, i32
  }
  func.func @transform_6(%arg0: i32) -> (i32, i32) {
    %c0_i32 = arith.constant 0 : i32
    %c0_i32_0 = arith.constant 0 : i32
    return %arg0, %c0_i32 : i32, i32
  }
}

module attributes {stable_mosaic.version = 11 : i64} {
  func.func @_conv_globalmax_kernel(%arg0: i32, %arg1: i32, %arg2: i32, %arg3: memref<1x16x192xf32, #tpu.memory_space<vmem>>, %arg4: memref<192x256xbf16, #tpu.memory_space<vmem>>, %arg5: memref<1x256xf32, #tpu.memory_space<vmem>>, %arg6: memref<1x256xf32, #tpu.memory_space<vmem>>, %arg7: memref<1x1x256xf32, #tpu.memory_space<vmem>>, %arg8: memref<1x256xf32, #tpu.memory_space<vmem>>) attributes {dimension_semantics = [#tpu.dimension_semantics<parallel>, #tpu.dimension_semantics<parallel>, #tpu.dimension_semantics<arbitrary>], iteration_bounds = array<i64: 2, 4, 1>, scalar_prefetch = 0 : i64, scratch_operands = 1 : i64, tpu.core_type = #tpu.core_type<tc>, window_params = [{transform_indices = @transform_0, window_bounds = array<i64: 1, 16, 192>}, {transform_indices = @transform_1, window_bounds = array<i64: 192, 256>}, {transform_indices = @transform_2, window_bounds = array<i64: 1, 256>}, {transform_indices = @transform_3, window_bounds = array<i64: 1, 256>}, {transform_indices = @transform_4, window_bounds = array<i64: 1, 1, 256>}]} {
    %c0 = arith.constant 0 : index
    %c0_0 = arith.constant 0 : index
    %0 = vector.load %arg4[%c0, %c0_0] : memref<192x256xbf16, #tpu.memory_space<vmem>>, vector<192x256xbf16>
    %c0_1 = arith.constant 0 : index
    %c0_2 = arith.constant 0 : index
    %c0_3 = arith.constant 0 : index
    %1 = vector.load %arg3[%c0_1, %c0_2, %c0_3] : memref<1x16x192xf32, #tpu.memory_space<vmem>>, vector<1x16x192xf32>
    %2 = vector.shape_cast %1 : vector<1x16x192xf32> to vector<16x192xf32>
    %3 = arith.truncf %2 : vector<16x192xf32> to vector<16x192xbf16>
    %cst = arith.constant dense<0.000000e+00> : vector<16x256xf32>
    %4 = tpu.matmul %3, %0, %cst {dimension_numbers = #tpu.dot_dimension_numbers<[1], [0], [0], [1], [0, 0, 1, 1], [], []>} : vector<16x192xbf16>, vector<192x256xbf16>, vector<16x256xf32> -> vector<16x256xf32>
    %c0_4 = arith.constant 0 : index
    %c0_5 = arith.constant 0 : index
    %5 = vector.load %arg5[%c0_4, %c0_5] : memref<1x256xf32, #tpu.memory_space<vmem>>, vector<1x256xf32>
    %6 = vector.broadcast %5 : vector<1x256xf32> to vector<16x256xf32>
    %7 = arith.mulf %4, %6 : vector<16x256xf32>
    %c0_6 = arith.constant 0 : index
    %c0_7 = arith.constant 0 : index
    %8 = vector.load %arg6[%c0_6, %c0_7] : memref<1x256xf32, #tpu.memory_space<vmem>>, vector<1x256xf32>
    %9 = vector.broadcast %8 : vector<1x256xf32> to vector<16x256xf32>
    %10 = arith.addf %7, %9 : vector<16x256xf32>
    %cst_8 = arith.constant 0.000000e+00 : f32
    %11 = vector.broadcast %cst_8 : f32 to vector<16x256xf32>
    %12 = arith.cmpf oge, %10, %11 : vector<16x256xf32>
    %cst_9 = arith.constant 2.000000e-01 : f32
    %13 = vector.broadcast %cst_9 : f32 to vector<16x256xf32>
    %14 = arith.mulf %13, %10 : vector<16x256xf32>
    %15 = arith.select %12, %10, %14 : vector<16x256xi1>, vector<16x256xf32>
    %cst_10 = arith.constant dense<0xFF800000> : vector<256xf32>
    %16 = vector.multi_reduction <maximumf>, %15, %cst_10 [0] : vector<16x256xf32> to vector<256xf32>
    %17 = vector.shape_cast %16 : vector<256xf32> to vector<1x256xf32>
    %c0_i32 = arith.constant 0 : i32
    %18 = arith.cmpi eq, %arg2, %c0_i32 : i32
    %19 = arith.extui %18 : i1 to i32
    %c0_i32_11 = arith.constant 0 : i32
    %20 = arith.cmpi ne, %19, %c0_i32_11 : i32
    scf.if %20 {
      %cst_18 = arith.constant 0xFF800000 : f32
      %27 = vector.broadcast %cst_18 : f32 to vector<1x256xf32>
      %c0_19 = arith.constant 0 : index
      %c0_20 = arith.constant 0 : index
      %28 = vector.load %arg8[%c0_19, %c0_20] : memref<1x256xf32, #tpu.memory_space<vmem>>, vector<1x256xf32>
      tpu.vector_store %arg8[%c0_19, %c0_20], %27 {strides = array<i32>} : memref<1x256xf32, #tpu.memory_space<vmem>>, vector<1x256xf32>,
    } else {
    }
    %c0_12 = arith.constant 0 : index
    %c0_13 = arith.constant 0 : index
    %21 = vector.load %arg8[%c0_12, %c0_13] : memref<1x256xf32, #tpu.memory_space<vmem>>, vector<1x256xf32>
    %22 = arith.maximumf %21, %17 : vector<1x256xf32>
    %c0_14 = arith.constant 0 : index
    %c0_15 = arith.constant 0 : index
    %23 = vector.load %arg8[%c0_14, %c0_15] : memref<1x256xf32, #tpu.memory_space<vmem>>, vector<1x256xf32>
    tpu.vector_store %arg8[%c0_14, %c0_15], %22 {strides = array<i32>} : memref<1x256xf32, #tpu.memory_space<vmem>>, vector<1x256xf32>,
    %c0_i32_16 = arith.constant 0 : i32
    %24 = arith.cmpi eq, %arg2, %c0_i32_16 : i32
    %25 = arith.extui %24 : i1 to i32
    %c0_i32_17 = arith.constant 0 : i32
    %26 = arith.cmpi ne, %25, %c0_i32_17 : i32
    scf.if %26 {
      %c0_18 = arith.constant 0 : index
      %c0_19 = arith.constant 0 : index
      %27 = vector.load %arg8[%c0_18, %c0_19] : memref<1x256xf32, #tpu.memory_space<vmem>>, vector<1x256xf32>
      %c0_20 = arith.constant 0 : index
      %c0_21 = arith.constant 0 : index
      %c0_22 = arith.constant 0 : index
      %28 = vector.load %arg7[%c0_20, %c0_21, %c0_22] : memref<1x1x256xf32, #tpu.memory_space<vmem>>, vector<1x1x256xf32>
      %29 = vector.shape_cast %28 : vector<1x1x256xf32> to vector<1x256xf32>
      %30 = vector.shape_cast %27 : vector<1x256xf32> to vector<1x1x256xf32>
      tpu.vector_store %arg7[%c0_20, %c0_21, %c0_22], %30 {strides = array<i32>} : memref<1x1x256xf32, #tpu.memory_space<vmem>>, vector<1x1x256xf32>,
    } else {
    }
    return
  }
  func.func @transform_0(%arg0: i32, %arg1: i32, %arg2: i32) -> (i32, i32, i32) {
    %c0_i32 = arith.constant 0 : i32
    %c0_i32_0 = arith.constant 0 : i32
    return %arg0, %arg2, %c0_i32 : i32, i32, i32
  }
  func.func @transform_1(%arg0: i32, %arg1: i32, %arg2: i32) -> (i32, i32) {
    %c0_i32 = arith.constant 0 : i32
    %c0_i32_0 = arith.constant 0 : i32
    return %c0_i32, %arg1 : i32, i32
  }
  func.func @transform_2(%arg0: i32, %arg1: i32, %arg2: i32) -> (i32, i32) {
    %c0_i32 = arith.constant 0 : i32
    %c0_i32_0 = arith.constant 0 : i32
    return %c0_i32, %arg1 : i32, i32
  }
  func.func @transform_3(%arg0: i32, %arg1: i32, %arg2: i32) -> (i32, i32) {
    %c0_i32 = arith.constant 0 : i32
    %c0_i32_0 = arith.constant 0 : i32
    return %c0_i32, %arg1 : i32, i32
  }
  func.func @transform_4(%arg0: i32, %arg1: i32, %arg2: i32) -> (i32, i32, i32) {
    %c0_i32 = arith.constant 0 : i32
    %c0_i32_0 = arith.constant 0 : i32
    return %arg0, %c0_i32, %arg1 : i32, i32, i32
  }
}

module attributes {stable_mosaic.version = 11 : i64} {
  func.func @_seghead_kernel(%arg0: i32, %arg1: i32, %arg2: memref<1x16x192xf32, #tpu.memory_space<vmem>>, %arg3: memref<1x1x256xf32, #tpu.memory_space<vmem>>, %arg4: memref<192x256xbf16, #tpu.memory_space<vmem>>, %arg5: memref<1x256xf32, #tpu.memory_space<vmem>>, %arg6: memref<1x256xf32, #tpu.memory_space<vmem>>, %arg7: memref<256x256xbf16, #tpu.memory_space<vmem>>, %arg8: memref<1x256xf32, #tpu.memory_space<vmem>>, %arg9: memref<1x256xf32, #tpu.memory_space<vmem>>, %arg10: memref<256x128xbf16, #tpu.memory_space<vmem>>, %arg11: memref<1x128xf32, #tpu.memory_space<vmem>>, %arg12: memref<1x128xf32, #tpu.memory_space<vmem>>, %arg13: memref<128x128xbf16, #tpu.memory_space<vmem>>, %arg14: memref<1x16x128xf32, #tpu.memory_space<vmem>>) attributes {dimension_semantics = [#tpu.dimension_semantics<parallel>, #tpu.dimension_semantics<parallel>], iteration_bounds = array<i64: 1, 2>, scalar_prefetch = 0 : i64, scratch_operands = 0 : i64, tpu.core_type = #tpu.core_type<tc>, window_params = [{transform_indices = @transform_0, window_bounds = array<i64: 1, 16, 192>}, {transform_indices = @transform_1, window_bounds = array<i64: 1, 1, 256>}, {pipeline_mode = #tpu.pipeline_mode<synchronous>, transform_indices = @transform_2, window_bounds = array<i64: 192, 256>}, {pipeline_mode = #tpu.pipeline_mode<synchronous>, transform_indices = @transform_3, window_bounds = array<i64: 1, 256>}, {pipeline_mode = #tpu.pipeline_mode<synchronous>, transform_indices = @transform_4, window_bounds = array<i64: 1, 256>}, {pipeline_mode = #tpu.pipeline_mode<synchronous>, transform_indices = @transform_5, window_bounds = array<i64: 256, 256>}, {pipeline_mode = #tpu.pipeline_mode<synchronous>, transform_indices = @transform_6, window_bounds = array<i64: 1, 256>}, {pipeline_mode = #tpu.pipeline_mode<synchronous>, transform_indices = @transform_7, window_bounds = array<i64: 1, 256>}, {pipeline_mode = #tpu.pipeline_mode<synchronous>, transform_indices = @transform_8, window_bounds = array<i64: 256, 128>}, {pipeline_mode = #tpu.pipeline_mode<synchronous>, transform_indices = @transform_9, window_bounds = array<i64: 1, 128>}, {pipeline_mode = #tpu.pipeline_mode<synchronous>, transform_indices = @transform_10, window_bounds = array<i64: 1, 128>}, {pipeline_mode = #tpu.pipeline_mode<synchronous>, transform_indices = @transform_11, window_bounds = array<i64: 128, 128>}, {transform_indices = @transform_12, window_bounds = array<i64: 1, 16, 128>}]} {
    %c0 = arith.constant 0 : index
    %c0_0 = arith.constant 0 : index
    %0 = vector.load %arg4[%c0, %c0_0] : memref<192x256xbf16, #tpu.memory_space<vmem>>, vector<192x256xbf16>
    %c0_1 = arith.constant 0 : index
    %c0_2 = arith.constant 0 : index
    %c0_3 = arith.constant 0 : index
    %1 = vector.load %arg2[%c0_1, %c0_2, %c0_3] : memref<1x16x192xf32, #tpu.memory_space<vmem>>, vector<1x16x192xf32>
    %2 = vector.shape_cast %1 : vector<1x16x192xf32> to vector<16x192xf32>
    %3 = arith.truncf %2 : vector<16x192xf32> to vector<16x192xbf16>
    %cst = arith.constant dense<0.000000e+00> : vector<16x256xf32>
    %4 = tpu.matmul %3, %0, %cst {dimension_numbers = #tpu.dot_dimension_numbers<[1], [0], [0], [1], [0, 0, 1, 1], [], []>} : vector<16x192xbf16>, vector<192x256xbf16>, vector<16x256xf32> -> vector<16x256xf32>
    %c0_4 = arith.constant 0 : index
    %c0_5 = arith.constant 0 : index
    %c0_6 = arith.constant 0 : index
    %5 = vector.load %arg3[%c0_4, %c0_5, %c0_6] : memref<1x1x256xf32, #tpu.memory_space<vmem>>, vector<1x1x256xf32>
    %6 = vector.shape_cast %5 : vector<1x1x256xf32> to vector<1x256xf32>
    %7 = vector.broadcast %6 : vector<1x256xf32> to vector<16x256xf32>
    %8 = arith.addf %4, %7 : vector<16x256xf32>
    %c0_7 = arith.constant 0 : index
    %c0_8 = arith.constant 0 : index
    %9 = vector.load %arg5[%c0_7, %c0_8] : memref<1x256xf32, #tpu.memory_space<vmem>>, vector<1x256xf32>
    %10 = vector.broadcast %9 : vector<1x256xf32> to vector<16x256xf32>
    %11 = arith.mulf %8, %10 : vector<16x256xf32>
    %c0_9 = arith.constant 0 : index
    %c0_10 = arith.constant 0 : index
    %12 = vector.load %arg6[%c0_9, %c0_10] : memref<1x256xf32, #tpu.memory_space<vmem>>, vector<1x256xf32>
    %13 = vector.broadcast %12 : vector<1x256xf32> to vector<16x256xf32>
    %14 = arith.addf %11, %13 : vector<16x256xf32>
    %cst_11 = arith.constant 0.000000e+00 : f32
    %15 = vector.broadcast %cst_11 : f32 to vector<16x256xf32>
    %16 = arith.cmpf oge, %14, %15 : vector<16x256xf32>
    %cst_12 = arith.constant 2.000000e-01 : f32
    %17 = vector.broadcast %cst_12 : f32 to vector<16x256xf32>
    %18 = arith.mulf %17, %14 : vector<16x256xf32>
    %19 = arith.select %16, %14, %18 : vector<16x256xi1>, vector<16x256xf32>
    %c0_13 = arith.constant 0 : index
    %c0_14 = arith.constant 0 : index
    %20 = vector.load %arg7[%c0_13, %c0_14] : memref<256x256xbf16, #tpu.memory_space<vmem>>, vector<256x256xbf16>
    %21 = arith.truncf %19 : vector<16x256xf32> to vector<16x256xbf16>
    %cst_15 = arith.constant dense<0.000000e+00> : vector<16x256xf32>
    %22 = tpu.matmul %21, %20, %cst_15 {dimension_numbers = #tpu.dot_dimension_numbers<[1], [0], [0], [1], [0, 0, 1, 1], [], []>} : vector<16x256xbf16>, vector<256x256xbf16>, vector<16x256xf32> -> vector<16x256xf32>
    %c0_16 = arith.constant 0 : index
    %c0_17 = arith.constant 0 : index
    %23 = vector.load %arg8[%c0_16, %c0_17] : memref<1x256xf32, #tpu.memory_space<vmem>>, vector<1x256xf32>
    %24 = vector.broadcast %23 : vector<1x256xf32> to vector<16x256xf32>
    %25 = arith.mulf %22, %24 : vector<16x256xf32>
    %c0_18 = arith.constant 0 : index
    %c0_19 = arith.constant 0 : index
    %26 = vector.load %arg9[%c0_18, %c0_19] : memref<1x256xf32, #tpu.memory_space<vmem>>, vector<1x256xf32>
    %27 = vector.broadcast %26 : vector<1x256xf32> to vector<16x256xf32>
    %28 = arith.addf %25, %27 : vector<16x256xf32>
    %cst_20 = arith.constant 0.000000e+00 : f32
    %29 = vector.broadcast %cst_20 : f32 to vector<16x256xf32>
    %30 = arith.cmpf oge, %28, %29 : vector<16x256xf32>
    %cst_21 = arith.constant 2.000000e-01 : f32
    %31 = vector.broadcast %cst_21 : f32 to vector<16x256xf32>
    %32 = arith.mulf %31, %28 : vector<16x256xf32>
    %33 = arith.select %30, %28, %32 : vector<16x256xi1>, vector<16x256xf32>
    %c0_22 = arith.constant 0 : index
    %c0_23 = arith.constant 0 : index
    %34 = vector.load %arg10[%c0_22, %c0_23] : memref<256x128xbf16, #tpu.memory_space<vmem>>, vector<256x128xbf16>
    %35 = arith.truncf %33 : vector<16x256xf32> to vector<16x256xbf16>
    %cst_24 = arith.constant dense<0.000000e+00> : vector<16x128xf32>
    %36 = tpu.matmul %35, %34, %cst_24 {dimension_numbers = #tpu.dot_dimension_numbers<[1], [0], [0], [1], [0, 0, 1, 1], [], []>} : vector<16x256xbf16>, vector<256x128xbf16>, vector<16x128xf32> -> vector<16x128xf32>
    %c0_25 = arith.constant 0 : index
    %c0_26 = arith.constant 0 : index
    %37 = vector.load %arg11[%c0_25, %c0_26] : memref<1x128xf32, #tpu.memory_space<vmem>>, vector<1x128xf32>
    %38 = vector.broadcast %37 : vector<1x128xf32> to vector<16x128xf32>
    %39 = arith.mulf %36, %38 : vector<16x128xf32>
    %c0_27 = arith.constant 0 : index
    %c0_28 = arith.constant 0 : index
    %40 = vector.load %arg12[%c0_27, %c0_28] : memref<1x128xf32, #tpu.memory_space<vmem>>, vector<1x128xf32>
    %41 = vector.broadcast %40 : vector<1x128xf32> to vector<16x128xf32>
    %42 = arith.addf %39, %41 : vector<16x128xf32>
    %cst_29 = arith.constant 0.000000e+00 : f32
    %43 = vector.broadcast %cst_29 : f32 to vector<16x128xf32>
    %44 = arith.cmpf oge, %42, %43 : vector<16x128xf32>
    %cst_30 = arith.constant 2.000000e-01 : f32
    %45 = vector.broadcast %cst_30 : f32 to vector<16x128xf32>
    %46 = arith.mulf %45, %42 : vector<16x128xf32>
    %47 = arith.select %44, %42, %46 : vector<16x128xi1>, vector<16x128xf32>
    %c0_31 = arith.constant 0 : index
    %c0_32 = arith.constant 0 : index
    %48 = vector.load %arg13[%c0_31, %c0_32] : memref<128x128xbf16, #tpu.memory_space<vmem>>, vector<128x128xbf16>
    %49 = arith.truncf %47 : vector<16x128xf32> to vector<16x128xbf16>
    %cst_33 = arith.constant dense<0.000000e+00> : vector<16x128xf32>
    %50 = tpu.matmul %49, %48, %cst_33 {dimension_numbers = #tpu.dot_dimension_numbers<[1], [0], [0], [1], [0, 0, 1, 1], [], []>} : vector<16x128xbf16>, vector<128x128xbf16>, vector<16x128xf32> -> vector<16x128xf32>
    %c0_34 = arith.constant 0 : index
    %c0_35 = arith.constant 0 : index
    %c0_36 = arith.constant 0 : index
    %51 = vector.load %arg14[%c0_34, %c0_35, %c0_36] : memref<1x16x128xf32, #tpu.memory_space<vmem>>, vector<1x16x128xf32>
    %52 = vector.shape_cast %51 : vector<1x16x128xf32> to vector<16x128xf32>
    %53 = vector.shape_cast %50 : vector<16x128xf32> to vector<1x16x128xf32>
    tpu.vector_store %arg14[%c0_34, %c0_35, %c0_36], %53 {strides = array<i32>} : memref<1x16x128xf32, #tpu.memory_space<vmem>>, vector<1x16x128xf32>,
    return
  }
  func.func @transform_0(%arg0: i32, %arg1: i32) -> (i32, i32, i32) {
    %c0_i32 = arith.constant 0 : i32
    %c0_i32_0 = arith.constant 0 : i32
    return %arg1, %arg0, %c0_i32 : i32, i32, i32
  }
  func.func @transform_1(%arg0: i32, %arg1: i32) -> (i32, i32, i32) {
    %c0_i32 = arith.constant 0 : i32
    %c0_i32_0 = arith.constant 0 : i32
    %c0_i32_1 = arith.constant 0 : i32
    return %arg1, %c0_i32, %c0_i32_0 : i32, i32, i32
  }
  func.func @transform_2(%arg0: i32, %arg1: i32) -> (i32, i32) {
    %c0_i32 = arith.constant 0 : i32
    %c0_i32_0 = arith.constant 0 : i32
    %c0_i32_1 = arith.constant 0 : i32
    return %c0_i32, %c0_i32_0 : i32, i32
  }
  func.func @transform_3(%arg0: i32, %arg1: i32) -> (i32, i32) {
    %c0_i32 = arith.constant 0 : i32
    %c0_i32_0 = arith.constant 0 : i32
    %c0_i32_1 = arith.constant 0 : i32
    return %c0_i32, %c0_i32_0 : i32, i32
  }
  func.func @transform_4(%arg0: i32, %arg1: i32) -> (i32, i32) {
    %c0_i32 = arith.constant 0 : i32
    %c0_i32_0 = arith.constant 0 : i32
    %c0_i32_1 = arith.constant 0 : i32
    return %c0_i32, %c0_i32_0 : i32, i32
  }
  func.func @transform_5(%arg0: i32, %arg1: i32) -> (i32, i32) {
    %c0_i32 = arith.constant 0 : i32
    %c0_i32_0 = arith.constant 0 : i32
    %c0_i32_1 = arith.constant 0 : i32
    return %c0_i32, %c0_i32_0 : i32, i32
  }
  func.func @transform_6(%arg0: i32, %arg1: i32) -> (i32, i32) {
    %c0_i32 = arith.constant 0 : i32
    %c0_i32_0 = arith.constant 0 : i32
    %c0_i32_1 = arith.constant 0 : i32
    return %c0_i32, %c0_i32_0 : i32, i32
  }
  func.func @transform_7(%arg0: i32, %arg1: i32) -> (i32, i32) {
    %c0_i32 = arith.constant 0 : i32
    %c0_i32_0 = arith.constant 0 : i32
    %c0_i32_1 = arith.constant 0 : i32
    return %c0_i32, %c0_i32_0 : i32, i32
  }
  func.func @transform_8(%arg0: i32, %arg1: i32) -> (i32, i32) {
    %c0_i32 = arith.constant 0 : i32
    %c0_i32_0 = arith.constant 0 : i32
    %c0_i32_1 = arith.constant 0 : i32
    return %c0_i32, %c0_i32_0 : i32, i32
  }
  func.func @transform_9(%arg0: i32, %arg1: i32) -> (i32, i32) {
    %c0_i32 = arith.constant 0 : i32
    %c0_i32_0 = arith.constant 0 : i32
    %c0_i32_1 = arith.constant 0 : i32
    return %c0_i32, %c0_i32_0 : i32, i32
  }
  func.func @transform_10(%arg0: i32, %arg1: i32) -> (i32, i32) {
    %c0_i32 = arith.constant 0 : i32
    %c0_i32_0 = arith.constant 0 : i32
    %c0_i32_1 = arith.constant 0 : i32
    return %c0_i32, %c0_i32_0 : i32, i32
  }
  func.func @transform_11(%arg0: i32, %arg1: i32) -> (i32, i32) {
    %c0_i32 = arith.constant 0 : i32
    %c0_i32_0 = arith.constant 0 : i32
    %c0_i32_1 = arith.constant 0 : i32
    return %c0_i32, %c0_i32_0 : i32, i32
  }
  func.func @transform_12(%arg0: i32, %arg1: i32) -> (i32, i32, i32) {
    %c0_i32 = arith.constant 0 : i32
    %c0_i32_0 = arith.constant 0 : i32
    return %arg1, %arg0, %c0_i32 : i32, i32, i32
  }
}

</mosaic_0001>

<llo_original>
// kernel: _lambda_.11
$region0: #{_lambda_.11}
  #allocation0 [shape = 'u32[]', space=smem, size = 0x4, offset = 0x4, fixed_abs, tag = 'smem constant byte address 0x4 - core index']
  #allocation1 [shape = 'u32[144,128]{1,0:T(1,128)}', space=vmem, size = 0x12000, scoped, tag = 'internal scratch']
  %s0 = inlined_call_operand.vmem [shape: f32[2,16,3], index: 0, kind: input, shape index: {}]
  %s1 = inlined_call_operand.vmem [shape: f32[2,3,16], index: 1, kind: input, shape index: {}]
  %s2 = inlined_call_operand.vmem [shape: f32[2,1,16], index: 2, kind: input, shape index: {}]
  %s3 = inlined_call_operand.vmem [shape: f32[2,16,16], index: 3, kind: output, shape index: {}]
  %s4 = sld [smem:[#allocation0]]
  $region45: #{_lambda_.11} parent=0
    _
  %s6 = ssub.s32 1, %s4
  %s7 = scalar_select 0, %s6, %s4
  loop: start=0, step=1, limit=4
  $region2: #{_lambda_.11} parent=0 // loop_pre_header
    _
  $region3: #{_lambda_.11} parent=0 // loop_header
    %s9 = sphi 0, %s13
    %p10 = scmp.ge.s32.totalorder %s9, 4
    %s16 = sphi 0, %s35
    %s17 = sphi 0, %s31
    %s18 = sphi 0, %s27
    %s19 = sphi 0, %s16
    %s20 = sphi 0, %s17
    %s21 = sphi 0, %s18
    %s22 = sphi 0, %s19
    %s23 = sphi 0, %s20
    %s24 = sphi 0, %s21
    %s40 = sphi 0, %s42
    %s43 = sphi 0, %s40
    %s44 = sphi 0, %s43
    %s60 = sphi 0, %s44
    %s68 = sphi 0, %s70
    %s71 = sphi 0, %s68
    %s72 = sphi 0, %s71
    %s88 = sphi 0, %s72
    %s96 = sphi 0, %s98
    %s99 = sphi 0, %s96
    %s100 = sphi 0, %s99
    %s116 = sphi 0, %s100
    %s126 = sphi 0, %s128
    %s129 = sphi 0, %s126
    %s130 = sphi 0, %s129
    %s146 = sphi 0, %s130
  $region4: #{_lambda_.11} parent=0 // loop_header_branch
    %12 = sbr.rel (%p10) target = $region8
  $region5: #{_lambda_.11} parent=0 // loop_body
    %s14 = ssub.s32 %s9, 1
    %s15 = ssub.s32 %s9, 2
    %s25 = sadd.s32 1, %s18
    %p26 = scmp.ge.s32.totalorder %s25, 1
    %s27 = scalar_select %p26, 0, %s25
    %s28 = sadd.s32 1, %s17
    %s29 = scalar_select %p26, %s28, %s17
    %p30 = scmp.ge.s32.totalorder %s29, 2
    %s31 = scalar_select %p30, 0, %s29
    %s32 = sadd.s32 1, %s16
    %s33 = scalar_select %p30, %s32, %s16
    %p34 = scmp.ge.s32.totalorder %s33, 1
    %s35 = scalar_select %p34, 0, %s33
    %s36 = ssub.s32 %s17, %s31
    %s37 = ssub.s32 %s16, %s35
    %s38 = sor.u32 %s36, %s37
    %p39 = scmp.eq.s32.totalorder %s38, 0
    %s41 = sadd.s32 %s40, 1
    %s42 = scalar_select %p39, %s40, %s41
    %p45 = pneg %p39
    %p46 = scmp.eq.s32.totalorder %s9, 1
    %p47 = por %p45, %p46
    %p48 = scmp.ne.s32.totalorder %s40, %s43
    %p49 = scmp.eq.s32.totalorder %s9, 0
    %p50 = por %p48, %p49
    %p51 = scmp.ne.s32.totalorder %s40, %s43
    %p52 = scmp.eq.s32.totalorder %s14, 1
    %p53 = por %p51, %p52
    %p54 = scmp.ne.s32.totalorder %s43, %s44
    %p55 = scmp.eq.s32.totalorder %s14, 0
    %p56 = por %p54, %p55
    %p57 = scmp.ne.s32.totalorder %s43, %s44
    %p58 = scmp.eq.s32.totalorder %s15, 1
    %p59 = por %p57, %p58
    %p61 = scmp.ne.s32.totalorder %s44, %s60
    %p62 = scmp.eq.s32.totalorder %s15, 0
    %p63 = por %p61, %p62
    %s64 = ssub.s32 %s17, %s31
    %s65 = ssub.s32 %s18, %s27
    %s66 = sor.u32 %s64, %s65
    %p67 = scmp.eq.s32.totalorder %s66, 0
    %s69 = sadd.s32 %s68, 1
    %s70 = scalar_select %p67, %s68, %s69
    %p73 = pneg %p67
    %p74 = scmp.eq.s32.totalorder %s9, 1
    %p75 = por %p73, %p74
    %p76 = scmp.ne.s32.totalorder %s68, %s71
    %p77 = scmp.eq.s32.totalorder %s9, 0
    %p78 = por %p76, %p77
    %p79 = scmp.ne.s32.totalorder %s68, %s71
    %p80 = scmp.eq.s32.totalorder %s14, 1
    %p81 = por %p79, %p80
    %p82 = scmp.ne.s32.totalorder %s71, %s72
    %p83 = scmp.eq.s32.totalorder %s14, 0
    %p84 = por %p82, %p83
    %p85 = scmp.ne.s32.totalorder %s71, %s72
    %p86 = scmp.eq.s32.totalorder %s15, 1
    %p87 = por %p85, %p86
    %p89 = scmp.ne.s32.totalorder %s72, %s88
    %p90 = scmp.eq.s32.totalorder %s15, 0
    %p91 = por %p89, %p90
    %s92 = ssub.s32 %s17, %s31
    %s93 = ssub.s32 %s18, %s27
    %s94 = sor.u32 %s92, %s93
    %p95 = scmp.eq.s32.totalorder %s94, 0
    %s97 = sadd.s32 %s96, 1
    %s98 = scalar_select %p95, %s96, %s97
    %p101 = pneg %p95
    %p102 = scmp.eq.s32.totalorder %s9, 1
    %p103 = por %p101, %p102
    %p104 = scmp.ne.s32.totalorder %s96, %s99
    %p105 = scmp.eq.s32.totalorder %s9, 0
    %p106 = por %p104, %p105
    %p107 = scmp.ne.s32.totalorder %s96, %s99
    %p108 = scmp.eq.s32.totalorder %s14, 1
    %p109 = por %p107, %p108
    %p110 = scmp.ne.s32.totalorder %s99, %s100
    %p111 = scmp.eq.s32.totalorder %s14, 0
    %p112 = por %p110, %p111
    %p113 = scmp.ne.s32.totalorder %s99, %s100
    %p114 = scmp.eq.s32.totalorder %s15, 1
    %p115 = por %p113, %p114
    %p117 = scmp.ne.s32.totalorder %s100, %s116
    %p118 = scmp.eq.s32.totalorder %s15, 0
    %p119 = por %p117, %p118
    %s120 = ssub.s32 %s17, %s31
    %s121 = ssub.s32 %s16, %s35
    %s122 = sor.u32 %s120, %s121
    %s123 = ssub.s32 %s18, %s27
    %s124 = sor.u32 %s122, %s123
    %p125 = scmp.eq.s32.totalorder %s124, 0
    %s127 = sadd.s32 %s126, 1
    %s128 = scalar_select %p125, %s126, %s127
    %p131 = pneg %p125
    %p132 = scmp.eq.s32.totalorder %s9, 1
    %p133 = por %p131, %p132
    %p134 = scmp.ne.s32.totalorder %s126, %s129
    %p135 = scmp.eq.s32.totalorder %s9, 0
    %p136 = por %p134, %p135
    %p137 = scmp.ne.s32.totalorder %s126, %s129
    %p138 = scmp.eq.s32.totalorder %s14, 1
    %p139 = por %p137, %p138
    %p140 = scmp.ne.s32.totalorder %s129, %s130
    %p141 = scmp.eq.s32.totalorder %s14, 0
    %p142 = por %p140, %p141
    %p143 = scmp.ne.s32.totalorder %s129, %s130
    %p144 = scmp.eq.s32.totalorder %s15, 1
    %p145 = por %p143, %p144
    %p147 = scmp.ne.s32.totalorder %s130, %s146
    %p148 = scmp.eq.s32.totalorder %s15, 0
    %p149 = por %p147, %p148
    %p150 = scmp.le.s32.totalorder 1, %s9
    %p151 = scmp.lt.s32.totalorder %s9, 3
    %p152 = pnand %p150, %p151
    %p153 = pneg %p152
    // Predicated region
    $region9: #{_lambda_.11} parent=5 // pred_check
      _
    $region10: #{_lambda_.11} parent=5 // pred_check_branch
      %155 = sbr.rel (%p152) target = $region12
    $region11: #{_lambda_.11} parent=5 // pred_region
      %s156 = ssub.s32 %s9, 1
    $region12: #{_lambda_.11} parent=5 // pred_fallthru
      _
    %p157 = scmp.lt.s32.totalorder %s9, 2
    // Predicated region
    $region13: #{_lambda_.11} parent=5 // pred_check
      %p158 = pneg %p157
    $region14: #{_lambda_.11} parent=5 // pred_check_branch
      %160 = sbr.rel (%p158) target = $region16
    $region15: #{_lambda_.11} parent=5 // pred_region
      // Predicated region
      $region17: #{_lambda_.11} parent=15 // pred_check
        %p161 = pneg %p50
      $region18: #{_lambda_.11} parent=15 // pred_check_branch
        %163 = sbr.rel (%p161) target = $region20
      $region19: #{_lambda_.11} parent=15 // pred_region
        %s164 = smul.u32 2, %s16
        %p165 = scmp.lt.s32.totalorder %s17, 1
        %s166 = scalar_select %p165, %s17, 1
        %p167 = scmp.lt.s32.totalorder %s164, 1
        %s168 = scalar_select %p167, %s164, 1
        %s169 = smul.addr %s166, 2
        %s170 = sadd.s32 %s168, %s169
        %s171 = smul.addr %s170, 8
        %s172 = scalar_lea.vmem %s0, %s171
        %s173 = smul.u32 2, %s16
      $region20: #{_lambda_.11} parent=15 // pred_fallthru
        _
      // Predicated region
      $region21: #{_lambda_.11} parent=15 // pred_check
        %p174 = pneg %p78
      $region22: #{_lambda_.11} parent=15 // pred_check_branch
        %176 = sbr.rel (%p174) target = $region24
      $region23: #{_lambda_.11} parent=15 // pred_region
        %p177 = scmp.lt.s32.totalorder %s17, 1
        %s178 = scalar_select %p177, %s17, 1
        %p179 = scmp.lt.s32.totalorder %s18, 0
        %s180 = scalar_select %p179, %s18, 0
        %s181 = sadd.s32 %s180, %s178
        %s182 = smul.addr %s181, 4
        %s183 = scalar_lea.vmem %s1, %s182
      $region24: #{_lambda_.11} parent=15 // pred_fallthru
        _
      // Predicated region
      $region25: #{_lambda_.11} parent=15 // pred_check
        %p184 = pneg %p106
      $region26: #{_lambda_.11} parent=15 // pred_check_branch
        %186 = sbr.rel (%p184) target = $region28
      $region27: #{_lambda_.11} parent=15 // pred_region
        %p187 = scmp.lt.s32.totalorder %s17, 1
        %s188 = scalar_select %p187, %s17, 1
        %p189 = scmp.lt.s32.totalorder %s18, 0
        %s190 = scalar_select %p189, %s18, 0
        %s191 = sadd.s32 %s190, %s188
        %s192 = scalar_lea.vmem %s2, %s191
      $region28: #{_lambda_.11} parent=15 // pred_fallthru
        _
    $region16: #{_lambda_.11} parent=5 // pred_fallthru
      _
    %p193 = scmp.le.s32.totalorder 1, %s9
    %p194 = scmp.lt.s32.totalorder %s9, 3
    %p195 = pnand %p193, %p194
    %p196 = pneg %p195
    // Predicated region
    $region29: #{_lambda_.11} parent=5 // pred_check
      _
    $region30: #{_lambda_.11} parent=5 // pred_check_branch
      %198 = sbr.rel (%p195) target = $region32
    $region31: #{_lambda_.11} parent=5 // pred_region
      %s199 = ssub.s32 %s9, 1
      %s200 = smul.u32 2, %s19
      %p201 = scmp.lt.s32.totalorder %s20, 1
      %s202 = scalar_select %p201, %s20, 1
      %p203 = scmp.lt.s32.totalorder %s200, 1
      %s204 = scalar_select %p203, %s200, 1
      %s205 = smul.addr %s202, 2
      %s206 = sadd.s32 %s204, %s205
      %s207 = smul.addr %s206, 8
      %s208 = scalar_lea.vmem %s0, %s207
      %p209 = pneg %p56
      %p210 = pneg %p53
      %p211 = scmp.lt.s32.totalorder %s20, 1
      %s212 = scalar_select %p211, %s20, 1
      %p213 = scmp.lt.s32.totalorder %s21, 0
      %s214 = scalar_select %p213, %s21, 0
      %s215 = sadd.s32 %s214, %s212
      %s216 = smul.addr %s215, 4
      %s217 = scalar_lea.vmem %s1, %s216
      %p218 = pneg %p84
      %p219 = pneg %p81
      %p220 = scmp.lt.s32.totalorder %s20, 1
      %s221 = scalar_select %p220, %s20, 1
      %p222 = scmp.lt.s32.totalorder %s21, 0
      %s223 = scalar_select %p222, %s21, 0
      %s224 = sadd.s32 %s223, %s221
      %s225 = scalar_lea.vmem %s2, %s224
      %p226 = pneg %p112
      %p227 = pneg %p109
      %p228 = pneg %p142
      %p229 = pneg %p139
      %s230 = smul.u32 2, %s19
      %p231 = scmp.lt.s32.totalorder %s20, 1
      %s232 = scalar_select %p231, %s20, 1
      %p233 = scmp.lt.s32.totalorder %s230, 1
      %s234 = scalar_select %p233, %s230, 1
      %p235 = scmp.lt.s32.totalorder %s21, 0
      %s236 = scalar_select %p235, %s21, 0
      %s237 = sadd.s32 %s236, %s234
      %s238 = smul.addr %s232, 2
      %s239 = sadd.s32 %s237, %s238
      %s240 = smul.addr %s239, 8
      %s241 = scalar_lea.vmem %s3, %s240
      %s242 = smul.u32 2, %s19
      %p243 = scmp.lt.s32.totalorder %s20, 1
      %s244 = scalar_select %p243, %s20, 1
      %p245 = scmp.lt.s32.totalorder %s242, 1
      %s246 = scalar_select %p245, %s242, 1
      %s247 = smul.addr %s244, 2
      %s248 = sadd.s32 %s246, %s247
      %s249 = smul.addr %s248, 8
      %s250 = scalar_lea.vmem %s0, %s249
      %s251 = smul.u32 2, %s19
      %p252 = scmp.lt.s32.totalorder %s20, 1
      %s253 = scalar_select %p252, %s20, 1
      %p254 = scmp.lt.s32.totalorder %s21, 0
      %s255 = scalar_select %p254, %s21, 0
      %s256 = sadd.s32 %s255, %s253
      %s257 = smul.addr %s256, 4
      %s258 = scalar_lea.vmem %s1, %s257
      %p259 = scmp.lt.s32.totalorder %s20, 1
      %s260 = scalar_select %p259, %s20, 1
      %p261 = scmp.lt.s32.totalorder %s21, 0
      %s262 = scalar_select %p261, %s21, 0
      %s263 = sadd.s32 %s262, %s260
      %s264 = scalar_lea.vmem %s2, %s263
      %s265 = smul.u32 2, %s19
      %p266 = scmp.lt.s32.totalorder %s20, 1
      %s267 = scalar_select %p266, %s20, 1
      %p268 = scmp.lt.s32.totalorder %s265, 1
      %s269 = scalar_select %p268, %s265, 1
      %p270 = scmp.lt.s32.totalorder %s21, 0
      %s271 = scalar_select %p270, %s21, 0
      %s272 = sadd.s32 %s271, %s269
      %s273 = smul.addr %s267, 2
      %s274 = sadd.s32 %s272, %s273
      %s275 = smul.addr %s274, 8
      %s276 = scalar_lea.vmem %s3, %s275
      %s277 = smul.u32 2, %s19
      %v278 = vld [vmem:[%s250] sm:$0xff]
      %v279 = vld [vmem:[%s250 + $0x8] sm:$0xff]
      %v280 = vld [vmem:[%s258] sm:$0x7]
      %vm281 = vcmask 23552
      %v283 = vsel %vm281, %v278, 0
      %v286 = vsel %vm281, %v279, 0
      %vm288 = vcmask 1042432
      %v290 = vsel %vm288, %v280, 0
      %292 = vmatprep.subr.mxu0 0.0
      %293 = vmatpush1.msra.mxu0 0.0
      %294 = vmatprep.subr.mxu0 0.0
      %295 = vmatpush1.msra.mxu0 0.0
      %296 = vmatprep.subr.mxu0 0.0
      %297 = vmatpush1.msra.mxu0 0.0
      %298 = vmatprep.subr.mxu0 0.0
      %299 = vmatpush1.msra.mxu0 0.0
      %300 = vmatprep.subr.mxu0 0.0
      %301 = vmatpush1.msra.mxu0 0.0
      %302 = vmatprep.subr.mxu0 0.0
      %303 = vmatpush1.msra.mxu0 0.0
      %304 = vmatprep.subr.mxu0 0.0
      %305 = vmatpush1.msra.mxu0 0.0
      %306 = vmatprep.subr.mxu0 0.0
      %307 = vmatpush1.msra.mxu0 0.0
      %308 = vmatprep.subr.mxu0 0.0
      %309 = vmatpush1.msra.mxu0 0.0
      %310 = vmatprep.subr.mxu0 0.0
      %311 = vmatpush1.msra.mxu0 0.0
      %312 = vmatprep.subr.mxu0 0.0
      %313 = vmatpush1.msra.mxu0 0.0
      %314 = vmatprep.subr.mxu0 0.0
      %315 = vmatpush1.msra.mxu0 0.0
      %316 = vmatprep.subr.mxu0 0.0
      %317 = vmatpush1.msra.mxu0 0.0
      %318 = vmatprep.subr.mxu0 0.0
      %319 = vmatpush1.msra.mxu0 0.0
      %320 = vmatprep.subr.mxu0 0.0
      %321 = vmatpush1.msra.mxu0 0.0
      %322 = vmatprep.subr.mxu0 0.0
      %323 = vmatpush1.msra.mxu0 %v290
      %324 = vmatprep.subr.mxu0 0.0
      %325 = vmatpush2.msra.mxu0 0.0
      %326 = vmatprep.subr.mxu0 0.0
      %327 = vmatpush2.msra.mxu0 0.0
      %328 = vmatprep.subr.mxu0 0.0
      %329 = vmatpush2.msra.mxu0 0.0
      %330 = vmatprep.subr.mxu0 0.0
      %331 = vmatpush2.msra.mxu0 0.0
      %332 = vmatprep.subr.mxu0 0.0
      %333 = vmatpush2.msra.mxu0 0.0
      %334 = vmatprep.subr.mxu0 0.0
      %335 = vmatpush2.msra.mxu0 0.0
      %336 = vmatprep.subr.mxu0 0.0
      %337 = vmatpush2.msra.mxu0 0.0
      %338 = vmatprep.subr.mxu0 0.0
      %339 = vmatpush2.msra.mxu0 0.0
      %340 = vmatprep.subr.mxu0 0.0
      %341 = vmatpush2.msra.mxu0 0.0
      %342 = vmatprep.subr.mxu0 0.0
      %343 = vmatpush2.msra.mxu0 0.0
      %344 = vmatprep.subr.mxu0 0.0
      %345 = vmatpush2.msra.mxu0 0.0
      %346 = vmatprep.subr.mxu0 0.0
      %347 = vmatpush2.msra.mxu0 0.0
      %348 = vmatprep.subr.mxu0 0.0
      %349 = vmatpush2.msra.mxu0 0.0
      %350 = vmatprep.subr.mxu0 0.0
      %351 = vmatpush2.msra.mxu0 0.0
      %352 = vmatprep.subr.mxu0 0.0
      %353 = vmatpush2.msra.mxu0 0.0
      %354 = vmatprep.subr.mxu0 0.0
      %355 = vmatpush2.msra.mxu0 0.0
      %356 = vmatprep.mubr.f32.mxu0 0.0
      %357 = vmatmul.mubr.f32.gmra.mxu0 %v283
      %v358 = vpop.f32.mrf.mxu0
      %v359 = vadd.f32 0.0, %v358
      %v360 = vpop.f32.mrf.mxu0
      %361 = vmatprep.mubr.f32.mxu0 0.0
      %362 = vmatmul.mubr.f32.gmra.mxu0 %v286
      %v363 = vpop.f32.mrf.mxu0
      %v364 = vadd.f32 0.0, %v363
      %v365 = vpop.f32.mrf.mxu0
      %366 = vdwg.mxu0
      %v367 = vmul.f32 %v359, 2.0
      %v368 = vmul.f32 %v364, 2.0
      %v369 = vld [vmem:[%s264] sm:$0x1]
      %v371 = vlaneseq
      %v372 = vshrl.u32 %v371, 7
      %v373 = vsub.s32 0, %v372
      %v374 = vrot.slane %v369, %v373
      %v376 = vsub.f32 %v367, %v374
      %v377 = vsub.f32 %v368, %v374
      %vm378 = vcmask 130048
      %379 = vst.msk [vmem:[%s276] sm:$0xff] %vm378, %v376
      %380 = vst.msk [vmem:[%s276 + $0x8] sm:$0xff] %vm378, %v377
      %s381 = smul.u32 2, %s19
      %p382 = scmp.lt.s32.totalorder %s20, 1
      %s383 = scalar_select %p382, %s20, 1
      %p384 = scmp.lt.s32.totalorder %s381, 1
      %s385 = scalar_select %p384, %s381, 1
      %p386 = scmp.lt.s32.totalorder %s21, 0
      %s387 = scalar_select %p386, %s21, 0
      %s388 = sadd.s32 %s387, %s385
      %s389 = smul.addr %s383, 2
      %s390 = sadd.s32 %s388, %s389
      %s391 = smul.addr %s390, 8
      %s392 = scalar_lea.vmem %s3, %s391
      // Predicated region
      $region33: #{_lambda_.11} parent=31 // pred_check
        %p393 = pneg %p139
      $region34: #{_lambda_.11} parent=31 // pred_check_branch
        %395 = sbr.rel (%p393) target = $region36
      $region35: #{_lambda_.11} parent=31 // pred_region
        %s396 = smul.u32 2, %s19
      $region36: #{_lambda_.11} parent=31 // pred_fallthru
        _
    $region32: #{_lambda_.11} parent=5 // pred_fallthru
      _
    %p397 = scmp.le.s32.totalorder 2, %s9
    // Predicated region
    $region37: #{_lambda_.11} parent=5 // pred_check
      %p398 = pneg %p397
    $region38: #{_lambda_.11} parent=5 // pred_check_branch
      %400 = sbr.rel (%p398) target = $region40
    $region39: #{_lambda_.11} parent=5 // pred_region
      %s401 = ssub.s32 %s9, 2
      // Predicated region
      $region41: #{_lambda_.11} parent=39 // pred_check
        %p402 = pneg %p145
      $region42: #{_lambda_.11} parent=39 // pred_check_branch
        %404 = sbr.rel (%p402) target = $region44
      $region43: #{_lambda_.11} parent=39 // pred_region
        %s405 = smul.u32 2, %s22
        %p406 = scmp.lt.s32.totalorder %s23, 1
        %s407 = scalar_select %p406, %s23, 1
        %p408 = scmp.lt.s32.totalorder %s405, 1
        %s409 = scalar_select %p408, %s405, 1
        %p410 = scmp.lt.s32.totalorder %s24, 0
        %s411 = scalar_select %p410, %s24, 0
        %s412 = sadd.s32 %s411, %s409
        %s413 = smul.addr %s407, 2
        %s414 = sadd.s32 %s412, %s413
        %s415 = smul.addr %s414, 8
        %s416 = scalar_lea.vmem %s3, %s415
      $region44: #{_lambda_.11} parent=39 // pred_fallthru
        _
    $region40: #{_lambda_.11} parent=5 // pred_fallthru
      _
  $region6: #{_lambda_.11} parent=0 // loop_footer
    %s13 = sadd.s32 1, %s9
  $region7: #{_lambda_.11} parent=0 // loop_footer_branch
    %8 = sbr.rel target = $region3
  $region8: #{_lambda_.11} parent=0 // loop_exit
    _

// kernel: _lambda_.13
$region0: #{_lambda_.13}
  #allocation0 [shape = 'u32[]', space=smem, size = 0x4, offset = 0x4, fixed_abs, tag = 'smem constant byte address 0x4 - core index']
  #allocation1 [shape = 'u32[144,128]{1,0:T(1,128)}', space=vmem, size = 0x12000, scoped, tag = 'internal scratch']
  #allocation2 [shape = 'f32[1,256]{1,0:T(1,128)}', space=vmem, size = 0x400, scoped, tag = 'scratch operand']
  %s0 = inlined_call_operand.vmem [shape: f32[2,16,128], index: 0, kind: input, shape index: {}]
  %s1 = inlined_call_operand.vmem [shape: bf16[128,1024], index: 1, kind: input, shape index: {}]
  %s2 = inlined_call_operand.vmem [shape: f32[1,1024], index: 2, kind: input, shape index: {}]
  %s3 = inlined_call_operand.vmem [shape: f32[1,1024], index: 3, kind: input, shape index: {}]
  %s4 = inlined_call_operand.vmem [shape: f32[2,1,1024], index: 4, kind: output, shape index: {}]
  %s5 = sld [smem:[#allocation0]]
  $region95: #{_lambda_.13} parent=0
    _
  %s7 = ssub.s32 1, %s5
  %s8 = scalar_select 0, %s7, %s5
  $region1: #{_lambda_.13} parent=0
    #allocation3 [shape = 'u8[131072]{0}', space=vmem, size = 0x20000, scoped, tag = 'input window, operand 1']
    loop: start=0, step=1, limit=10
    $region2: #{_lambda_.13} parent=1 // loop_pre_header
      _
    $region3: #{_lambda_.13} parent=1 // loop_header
      %s10 = sphi 0, %s14
      %p11 = scmp.ge.s32.totalorder %s10, 10
      %s17 = sphi 0, %s36
      %s18 = sphi 0, %s32
      %s19 = sphi 0, %s28
      %s20 = sphi 0, %s17
      %s21 = sphi 0, %s18
      %s22 = sphi 0, %s19
      %s23 = sphi 0, %s20
      %s24 = sphi 0, %s21
      %s25 = sphi 0, %s22
      %s41 = sphi 0, %s43
      %s44 = sphi 0, %s41
      %s45 = sphi 0, %s44
      %s61 = sphi 0, %s45
      %s67 = sphi 0, %s69
      %s70 = sphi 0, %s67
      %s71 = sphi 0, %s70
      %s87 = sphi 0, %s71
      %s93 = sphi 0, %s95
      %s96 = sphi 0, %s93
      %s97 = sphi 0, %s96
      %s113 = sphi 0, %s97
      %s119 = sphi 0, %s121
      %s122 = sphi 0, %s119
      %s123 = sphi 0, %s122
      %s139 = sphi 0, %s123
      %s147 = sphi 0, %s149
      %s150 = sphi 0, %s147
      %s151 = sphi 0, %s150
      %s167 = sphi 0, %s151
    $region4: #{_lambda_.13} parent=1 // loop_header_branch
      %13 = sbr.rel (%p11) target = $region8
    $region5: #{_lambda_.13} parent=1 // loop_body
      %s15 = ssub.s32 %s10, 1
      %s16 = ssub.s32 %s10, 2
      %s26 = sadd.s32 1, %s19
      %p27 = scmp.ge.s32.totalorder %s26, 1
      %s28 = scalar_select %p27, 0, %s26
      %s29 = sadd.s32 1, %s18
      %s30 = scalar_select %p27, %s29, %s18
      %p31 = scmp.ge.s32.totalorder %s30, 4
      %s32 = scalar_select %p31, 0, %s30
      %s33 = sadd.s32 1, %s17
      %s34 = scalar_select %p31, %s33, %s17
      %p35 = scmp.ge.s32.totalorder %s34, 2
      %s36 = scalar_select %p35, 0, %s34
      %s37 = ssub.s32 %s17, %s36
      %s38 = ssub.s32 %s19, %s28
      %s39 = sor.u32 %s37, %s38
      %p40 = scmp.eq.s32.totalorder %s39, 0
      %s42 = sadd.s32 %s41, 1
      %s43 = scalar_select %p40, %s41, %s42
      %p46 = pneg %p40
      %p47 = scmp.eq.s32.totalorder %s10, 7
      %p48 = por %p46, %p47
      %p49 = scmp.ne.s32.totalorder %s41, %s44
      %p50 = scmp.eq.s32.totalorder %s10, 0
      %p51 = por %p49, %p50
      %p52 = scmp.ne.s32.totalorder %s41, %s44
      %p53 = scmp.eq.s32.totalorder %s15, 7
      %p54 = por %p52, %p53
      %p55 = scmp.ne.s32.totalorder %s44, %s45
      %p56 = scmp.eq.s32.totalorder %s15, 0
      %p57 = por %p55, %p56
      %p58 = scmp.ne.s32.totalorder %s44, %s45
      %p59 = scmp.eq.s32.totalorder %s16, 7
      %p60 = por %p58, %p59
      %p62 = scmp.ne.s32.totalorder %s45, %s61
      %p63 = scmp.eq.s32.totalorder %s16, 0
      %p64 = por %p62, %p63
      %s65 = ssub.s32 %s18, %s32
      %p66 = scmp.eq.s32.totalorder %s65, 0
      %s68 = sadd.s32 %s67, 1
      %s69 = scalar_select %p66, %s67, %s68
      %p72 = pneg %p66
      %p73 = scmp.eq.s32.totalorder %s10, 7
      %p74 = por %p72, %p73
      %p75 = scmp.ne.s32.totalorder %s67, %s70
      %p76 = scmp.eq.s32.totalorder %s10, 0
      %p77 = por %p75, %p76
      %p78 = scmp.ne.s32.totalorder %s67, %s70
      %p79 = scmp.eq.s32.totalorder %s15, 7
      %p80 = por %p78, %p79
      %p81 = scmp.ne.s32.totalorder %s70, %s71
      %p82 = scmp.eq.s32.totalorder %s15, 0
      %p83 = por %p81, %p82
      %p84 = scmp.ne.s32.totalorder %s70, %s71
      %p85 = scmp.eq.s32.totalorder %s16, 7
      %p86 = por %p84, %p85
      %p88 = scmp.ne.s32.totalorder %s71, %s87
      %p89 = scmp.eq.s32.totalorder %s16, 0
      %p90 = por %p88, %p89
      %s91 = ssub.s32 %s18, %s32
      %p92 = scmp.eq.s32.totalorder %s91, 0
      %s94 = sadd.s32 %s93, 1
      %s95 = scalar_select %p92, %s93, %s94
      %p98 = pneg %p92
      %p99 = scmp.eq.s32.totalorder %s10, 7
      %p100 = por %p98, %p99
      %p101 = scmp.ne.s32.totalorder %s93, %s96
      %p102 = scmp.eq.s32.totalorder %s10, 0
      %p103 = por %p101, %p102
      %p104 = scmp.ne.s32.totalorder %s93, %s96
      %p105 = scmp.eq.s32.totalorder %s15, 7
      %p106 = por %p104, %p105
      %p107 = scmp.ne.s32.totalorder %s96, %s97
      %p108 = scmp.eq.s32.totalorder %s15, 0
      %p109 = por %p107, %p108
      %p110 = scmp.ne.s32.totalorder %s96, %s97
      %p111 = scmp.eq.s32.totalorder %s16, 7
      %p112 = por %p110, %p111
      %p114 = scmp.ne.s32.totalorder %s97, %s113
      %p115 = scmp.eq.s32.totalorder %s16, 0
      %p116 = por %p114, %p115
      %s117 = ssub.s32 %s18, %s32
      %p118 = scmp.eq.s32.totalorder %s117, 0
      %s120 = sadd.s32 %s119, 1
      %s121 = scalar_select %p118, %s119, %s120
      %p124 = pneg %p118
      %p125 = scmp.eq.s32.totalorder %s10, 7
      %p126 = por %p124, %p125
      %p127 = scmp.ne.s32.totalorder %s119, %s122
      %p128 = scmp.eq.s32.totalorder %s10, 0
      %p129 = por %p127, %p128
      %p130 = scmp.ne.s32.totalorder %s119, %s122
      %p131 = scmp.eq.s32.totalorder %s15, 7
      %p132 = por %p130, %p131
      %p133 = scmp.ne.s32.totalorder %s122, %s123
      %p134 = scmp.eq.s32.totalorder %s15, 0
      %p135 = por %p133, %p134
      %p136 = scmp.ne.s32.totalorder %s122, %s123
      %p137 = scmp.eq.s32.totalorder %s16, 7
      %p138 = por %p136, %p137
      %p140 = scmp.ne.s32.totalorder %s123, %s139
      %p141 = scmp.eq.s32.totalorder %s16, 0
      %p142 = por %p140, %p141
      %s143 = ssub.s32 %s17, %s36
      %s144 = ssub.s32 %s18, %s32
      %s145 = sor.u32 %s143, %s144
      %p146 = scmp.eq.s32.totalorder %s145, 0
      %s148 = sadd.s32 %s147, 1
      %s149 = scalar_select %p146, %s147, %s148
      %p152 = pneg %p146
      %p153 = scmp.eq.s32.totalorder %s10, 7
      %p154 = por %p152, %p153
      %p155 = scmp.ne.s32.totalorder %s147, %s150
      %p156 = scmp.eq.s32.totalorder %s10, 0
      %p157 = por %p155, %p156
      %p158 = scmp.ne.s32.totalorder %s147, %s150
      %p159 = scmp.eq.s32.totalorder %s15, 7
      %p160 = por %p158, %p159
      %p161 = scmp.ne.s32.totalorder %s150, %s151
      %p162 = scmp.eq.s32.totalorder %s15, 0
      %p163 = por %p161, %p162
      %p164 = scmp.ne.s32.totalorder %s150, %s151
      %p165 = scmp.eq.s32.totalorder %s16, 7
      %p166 = por %p164, %p165
      %p168 = scmp.ne.s32.totalorder %s151, %s167
      %p169 = scmp.eq.s32.totalorder %s16, 0
      %p170 = por %p168, %p169
      %p171 = scmp.le.s32.totalorder 1, %s10
      %p172 = scmp.lt.s32.totalorder %s10, 9
      %p173 = pnand %p171, %p172
      %p174 = pneg %p173
      // Predicated region
      $region9: #{_lambda_.13} parent=5 // pred_check
        _
      $region10: #{_lambda_.13} parent=5 // pred_check_branch
        %176 = sbr.rel (%p173) target = $region12
      $region11: #{_lambda_.13} parent=5 // pred_region
        %s177 = ssub.s32 %s10, 1
      $region12: #{_lambda_.13} parent=5 // pred_fallthru
        _
      %p178 = scmp.lt.s32.totalorder %s10, 8
      // Predicated region
      $region13: #{_lambda_.13} parent=5 // pred_check
        %p179 = pneg %p178
      $region14: #{_lambda_.13} parent=5 // pred_check_branch
        %181 = sbr.rel (%p179) target = $region16
      $region15: #{_lambda_.13} parent=5 // pred_region
        // Predicated region
        $region17: #{_lambda_.13} parent=15 // pred_check
          %p182 = pneg %p51
        $region18: #{_lambda_.13} parent=15 // pred_check_branch
          %184 = sbr.rel (%p182) target = $region20
        $region19: #{_lambda_.13} parent=15 // pred_region
          %s185 = smul.u32 2, %s19
          %p186 = scmp.lt.s32.totalorder %s17, 1
          %s187 = scalar_select %p186, %s17, 1
          %p188 = scmp.lt.s32.totalorder %s185, 1
          %s189 = scalar_select %p188, %s185, 1
          %s190 = smul.addr %s187, 2
          %s191 = sadd.s32 %s189, %s190
          %s192 = smul.addr %s191, 8
          %s193 = scalar_lea.vmem %s0, %s192
          %s194 = smul.u32 2, %s19
        $region20: #{_lambda_.13} parent=15 // pred_fallthru
          _
        // Predicated region
        $region21: #{_lambda_.13} parent=15 // pred_check
          %p195 = pneg %p77
        $region22: #{_lambda_.13} parent=15 // pred_check_branch
          %197 = sbr.rel (%p195) target = $region24
        $region23: #{_lambda_.13} parent=15 // pred_region
          %s198 = sand.u32 %s67, 1
          %s199 = sand.u32 %s67, 1
          %s200 = smul.addr %s199, 128
          %s201 = scalar_lea.vmem [#allocation3], %s200
          %s202 = smul.u32 2, %s18
          %s203 = smul.addr %s202, 4
          %s204 = scalar_lea.vmem %s1, %s203
          // Predicated region
          $region25: #{_lambda_.13} parent=23 // pred_check
            _
          $region26: #{_lambda_.13} parent=23 // pred_check_branch
            %206 = sbr.rel (0) target = $region28
          $region27: #{_lambda_.13} parent=23 // pred_region
            // Predicated region
            $region29: #{_lambda_.13} parent=27 // pred_check
              _
            $region30: #{_lambda_.13} parent=27 // pred_check_branch
              %208 = sbr.rel (0) target = $region32
            $region31: #{_lambda_.13} parent=27 // pred_region
              // Predicated region
              $region44: #{_lambda_.13} parent=31 // pred_check
                _
              $region45: #{_lambda_.13} parent=31 // pred_check_branch
                %254 = sbr.rel (0) target = $region47
              $region46: #{_lambda_.13} parent=31 // pred_region
                loop: start=0, step=1, limit=1
                $region48: #{_lambda_.13} parent=46 // loop_pre_header
                  _
                $region49: #{_lambda_.13} parent=46 // loop_header
                  %s256 = sphi 0, %s260
                  %p257 = scmp.ge.s32.totalorder %s256, 1
                  %s261 = sphi %s204, %s204
                  %s262 = sphi %s201, %s201
                $region50: #{_lambda_.13} parent=46 // loop_header_branch
                  %259 = sbr.rel (%p257) target = $region54
                $region51: #{_lambda_.13} parent=46 // loop_body
                  %v263 = vld [vmem:[%s261] sm:$0xff]
                  %264 = vst [vmem:[%s262] sm:$0xff] %v263
                  %v265 = vld [vmem:[%s261 + $0x20] sm:$0xff]
                  %266 = vst [vmem:[%s262 + $0x8] sm:$0xff] %v265
                  %v267 = vld [vmem:[%s261 + $0x40] sm:$0xff]
                  %268 = vst [vmem:[%s262 + $0x10] sm:$0xff] %v267
                  %v269 = vld [vmem:[%s261 + $0x60] sm:$0xff]
                  %270 = vst [vmem:[%s262 + $0x18] sm:$0xff] %v269
                  %v271 = vld [vmem:[%s261 + $0x80] sm:$0xff]
                  %272 = vst [vmem:[%s262 + $0x20] sm:$0xff] %v271
                  %v273 = vld [vmem:[%s261 + $0xa0] sm:$0xff]
                  %274 = vst [vmem:[%s262 + $0x28] sm:$0xff] %v273
                  %v275 = vld [vmem:[%s261 + $0xc0] sm:$0xff]
                  %276 = vst [vmem:[%s262 + $0x30] sm:$0xff] %v275
                  %v277 = vld [vmem:[%s261 + $0xe0] sm:$0xff]
                  %278 = vst [vmem:[%s262 + $0x38] sm:$0xff] %v277
                  %v279 = vld [vmem:[%s261 + $0x100] sm:$0xff]
                  %280 = vst [vmem:[%s262 + $0x40] sm:$0xff] %v279
                  %v281 = vld [vmem:[%s261 + $0x120] sm:$0xff]
                  %282 = vst [vmem:[%s262 + $0x48] sm:$0xff] %v281
                  %v283 = vld [vmem:[%s261 + $0x140] sm:$0xff]
                  %284 = vst [vmem:[%s262 + $0x50] sm:$0xff] %v283
                  %v285 = vld [vmem:[%s261 + $0x160] sm:$0xff]
                  %286 = vst [vmem:[%s262 + $0x58] sm:$0xff] %v285
                  %v287 = vld [vmem:[%s261 + $0x180] sm:$0xff]
                  %288 = vst [vmem:[%s262 + $0x60] sm:$0xff] %v287
                  %v289 = vld [vmem:[%s261 + $0x1a0] sm:$0xff]
                  %290 = vst [vmem:[%s262 + $0x68] sm:$0xff] %v289
                  %v291 = vld [vmem:[%s261 + $0x1c0] sm:$0xff]
                  %292 = vst [vmem:[%s262 + $0x70] sm:$0xff] %v291
                  %v293 = vld [vmem:[%s261 + $0x1e0] sm:$0xff]
                  %294 = vst [vmem:[%s262 + $0x78] sm:$0xff] %v293
                $region52: #{_lambda_.13} parent=46 // loop_footer
                  %s260 = sadd.s32 1, %s256
                $region53: #{_lambda_.13} parent=46 // loop_footer_branch
                  %255 = sbr.rel target = $region49
                $region54: #{_lambda_.13} parent=46 // loop_exit
                  _
              $region47: #{_lambda_.13} parent=31 // pred_fallthru
                _
              // Predicated region
              $region55: #{_lambda_.13} parent=31 // pred_check
                _
              $region56: #{_lambda_.13} parent=31 // pred_check_branch
                %296 = sbr.rel target = $region58
              $region57: #{_lambda_.13} parent=31 // pred_region
                _
              $region58: #{_lambda_.13} parent=31 // pred_fallthru
                _
            $region32: #{_lambda_.13} parent=27 // pred_fallthru
              _
            // Predicated region
            $region33: #{_lambda_.13} parent=27 // pred_check
              _
            $region34: #{_lambda_.13} parent=27 // pred_check_branch
              %210 = sbr.rel target = $region36
            $region35: #{_lambda_.13} parent=27 // pred_region
              %s212 = ssub.s32 256, 1
              loop: start=0, step=1, limit=1
              $region37: #{_lambda_.13} parent=35 // loop_pre_header
                _
              $region38: #{_lambda_.13} parent=35 // loop_header
                %s214 = sphi 0, %s218
                %p215 = scmp.ge.s32.totalorder %s214, 1
                %s219 = sphi %s204, %s204
                %s220 = sphi %s201, %s201
              $region39: #{_lambda_.13} parent=35 // loop_header_branch
                %217 = sbr.rel (%p215) target = $region43
              $region40: #{_lambda_.13} parent=35 // loop_body
                %v221 = vld [vmem:[%s219] sm:%s212]
                %222 = vst [vmem:[%s220] sm:%s212] %v221
                %v223 = vld [vmem:[%s219 + $0x20] sm:%s212]
                %224 = vst [vmem:[%s220 + $0x8] sm:%s212] %v223
                %v225 = vld [vmem:[%s219 + $0x40] sm:%s212]
                %226 = vst [vmem:[%s220 + $0x10] sm:%s212] %v225
                %v227 = vld [vmem:[%s219 + $0x60] sm:%s212]
                %228 = vst [vmem:[%s220 + $0x18] sm:%s212] %v227
                %v229 = vld [vmem:[%s219 + $0x80] sm:%s212]
                %230 = vst [vmem:[%s220 + $0x20] sm:%s212] %v229
                %v231 = vld [vmem:[%s219 + $0xa0] sm:%s212]
                %232 = vst [vmem:[%s220 + $0x28] sm:%s212] %v231
                %v233 = vld [vmem:[%s219 + $0xc0] sm:%s212]
                %234 = vst [vmem:[%s220 + $0x30] sm:%s212] %v233
                %v235 = vld [vmem:[%s219 + $0xe0] sm:%s212]
                %236 = vst [vmem:[%s220 + $0x38] sm:%s212] %v235
                %v237 = vld [vmem:[%s219 + $0x100] sm:%s212]
                %238 = vst [vmem:[%s220 + $0x40] sm:%s212] %v237
                %v239 = vld [vmem:[%s219 + $0x120] sm:%s212]
                %240 = vst [vmem:[%s220 + $0x48] sm:%s212] %v239
                %v241 = vld [vmem:[%s219 + $0x140] sm:%s212]
                %242 = vst [vmem:[%s220 + $0x50] sm:%s212] %v241
                %v243 = vld [vmem:[%s219 + $0x160] sm:%s212]
                %244 = vst [vmem:[%s220 + $0x58] sm:%s212] %v243
                %v245 = vld [vmem:[%s219 + $0x180] sm:%s212]
                %246 = vst [vmem:[%s220 + $0x60] sm:%s212] %v245
                %v247 = vld [vmem:[%s219 + $0x1a0] sm:%s212]
                %248 = vst [vmem:[%s220 + $0x68] sm:%s212] %v247
                %v249 = vld [vmem:[%s219 + $0x1c0] sm:%s212]
                %250 = vst [vmem:[%s220 + $0x70] sm:%s212] %v249
                %v251 = vld [vmem:[%s219 + $0x1e0] sm:%s212]
                %252 = vst [vmem:[%s220 + $0x78] sm:%s212] %v251
              $region41: #{_lambda_.13} parent=35 // loop_footer
                %s218 = sadd.s32 1, %s214
              $region42: #{_lambda_.13} parent=35 // loop_footer_branch
                %213 = sbr.rel target = $region38
              $region43: #{_lambda_.13} parent=35 // loop_exit
                _
            $region36: #{_lambda_.13} parent=27 // pred_fallthru
              _
          $region28: #{_lambda_.13} parent=23 // pred_fallthru
            _
          %297 = vnop
        $region24: #{_lambda_.13} parent=15 // pred_fallthru
          _
        // Predicated region
        $region59: #{_lambda_.13} parent=15 // pred_check
          %p298 = pneg %p103
        $region60: #{_lambda_.13} parent=15 // pred_check_branch
          %300 = sbr.rel (%p298) target = $region62
        $region61: #{_lambda_.13} parent=15 // pred_region
          %s301 = smul.u32 2, %s18
          %p302 = scmp.lt.s32.totalorder %s301, 7
          %s303 = scalar_select %p302, %s301, 7
          %s304 = scalar_lea.vmem %s2, %s303
          %s305 = smul.u32 2, %s18
        $region62: #{_lambda_.13} parent=15 // pred_fallthru
          _
        // Predicated region
        $region63: #{_lambda_.13} parent=15 // pred_check
          %p306 = pneg %p129
        $region64: #{_lambda_.13} parent=15 // pred_check_branch
          %308 = sbr.rel (%p306) target = $region66
        $region65: #{_lambda_.13} parent=15 // pred_region
          %s309 = smul.u32 2, %s18
          %p310 = scmp.lt.s32.totalorder %s309, 7
          %s311 = scalar_select %p310, %s309, 7
          %s312 = scalar_lea.vmem %s3, %s311
          %s313 = smul.u32 2, %s18
        $region66: #{_lambda_.13} parent=15 // pred_fallthru
          _
      $region16: #{_lambda_.13} parent=5 // pred_fallthru
        _
      %p314 = scmp.le.s32.totalorder 1, %s10
      %p315 = scmp.lt.s32.totalorder %s10, 9
      %p316 = pnand %p314, %p315
      %p317 = pneg %p316
      // Predicated region
      $region67: #{_lambda_.13} parent=5 // pred_check
        _
      $region68: #{_lambda_.13} parent=5 // pred_check_branch
        %319 = sbr.rel (%p316) target = $region70
      $region69: #{_lambda_.13} parent=5 // pred_region
        %s320 = ssub.s32 %s10, 1
        %s321 = sand.u32 %s70, 1
        %s322 = sand.u32 %s70, 1
        %s323 = smul.addr %s322, 128
        %s324 = scalar_lea.vmem [#allocation3], %s323
        // Predicated region
        $region71: #{_lambda_.13} parent=69 // pred_check
          %p325 = pneg %p83
        $region72: #{_lambda_.13} parent=69 // pred_check_branch
          %327 = sbr.rel (%p325) target = $region74
        $region73: #{_lambda_.13} parent=69 // pred_region
          _
        $region74: #{_lambda_.13} parent=69 // pred_fallthru
          _
        %s328 = smul.u32 2, %s22
        %p329 = scmp.lt.s32.totalorder %s20, 1
        %s330 = scalar_select %p329, %s20, 1
        %p331 = scmp.lt.s32.totalorder %s328, 1
        %s332 = scalar_select %p331, %s328, 1
        %s333 = smul.addr %s330, 2
        %s334 = sadd.s32 %s332, %s333
        %s335 = smul.addr %s334, 8
        %s336 = scalar_lea.vmem %s0, %s335
        %p337 = pneg %p57
        %p338 = pneg %p54
        %s339 = sand.u32 %s70, 1
        %s340 = sand.u32 %s70, 1
        %s341 = smul.addr %s340, 128
        %s342 = scalar_lea.vmem [#allocation3], %s341
        %p343 = pneg %p83
        %p344 = pneg %p80
        %s345 = smul.u32 2, %s21
        %p346 = scmp.lt.s32.totalorder %s345, 7
        %s347 = scalar_select %p346, %s345, 7
        %s348 = scalar_lea.vmem %s2, %s347
        %p349 = pneg %p109
        %p350 = pneg %p106
        %s351 = smul.u32 2, %s21
        %p352 = scmp.lt.s32.totalorder %s351, 7
        %s353 = scalar_select %p352, %s351, 7
        %s354 = scalar_lea.vmem %s3, %s353
        %p355 = pneg %p135
        %p356 = pneg %p132
        %p357 = pneg %p163
        %p358 = pneg %p160
        %s359 = smul.u32 2, %s21
        %p360 = scmp.lt.s32.totalorder %s20, 1
        %s361 = scalar_select %p360, %s20, 1
        %p362 = scmp.lt.s32.totalorder %s359, 7
        %s363 = scalar_select %p362, %s359, 7
        %s364 = smul.addr %s361, 8
        %s365 = sadd.s32 %s363, %s364
        %s366 = scalar_lea.vmem %s4, %s365
        %s367 = smul.u32 2, %s22
        %p368 = scmp.lt.s32.totalorder %s20, 1
        %s369 = scalar_select %p368, %s20, 1
        %p370 = scmp.lt.s32.totalorder %s367, 1
        %s371 = scalar_select %p370, %s367, 1
        %s372 = smul.addr %s369, 2
        %s373 = sadd.s32 %s371, %s372
        %s374 = smul.addr %s373, 8
        %s375 = scalar_lea.vmem %s0, %s374
        %s376 = smul.u32 2, %s22
        %s377 = smul.u32 2, %s21
        %s378 = smul.u32 2, %s21
        %p379 = scmp.lt.s32.totalorder %s378, 7
        %s380 = scalar_select %p379, %s378, 7
        %s381 = scalar_lea.vmem %s2, %s380
        %s382 = smul.u32 2, %s21
        %s383 = smul.u32 2, %s21
        %p384 = scmp.lt.s32.totalorder %s383, 7
        %s385 = scalar_select %p384, %s383, 7
        %s386 = scalar_lea.vmem %s3, %s385
        %s387 = smul.u32 2, %s21
        %s388 = smul.u32 2, %s21
        %p389 = scmp.lt.s32.totalorder %s20, 1
        %s390 = scalar_select %p389, %s20, 1
        %p391 = scmp.lt.s32.totalorder %s388, 7
        %s392 = scalar_select %p391, %s388, 7
        %s393 = smul.addr %s390, 8
        %s394 = sadd.s32 %s392, %s393
        %s395 = scalar_lea.vmem %s4, %s394
        %s396 = smul.u32 2, %s21
        %v398 = vld [vmem:[%s324] sm:$0xff]
        %v399 = vld [vmem:[%s324 + $0x8] sm:$0xff]
        %v400 = vld [vmem:[%s324 + $0x10] sm:$0xff]
        %v401 = vld [vmem:[%s324 + $0x18] sm:$0xff]
        %v402 = vld [vmem:[%s324 + $0x20] sm:$0xff]
        %v403 = vld [vmem:[%s324 + $0x28] sm:$0xff]
        %v404 = vld [vmem:[%s324 + $0x30] sm:$0xff]
        %v405 = vld [vmem:[%s324 + $0x38] sm:$0xff]
        %v406 = vld [vmem:[%s324 + $0x40] sm:$0xff]
        %v407 = vld [vmem:[%s324 + $0x48] sm:$0xff]
        %v408 = vld [vmem:[%s324 + $0x50] sm:$0xff]
        %v409 = vld [vmem:[%s324 + $0x58] sm:$0xff]
        %v410 = vld [vmem:[%s324 + $0x60] sm:$0xff]
        %v411 = vld [vmem:[%s324 + $0x68] sm:$0xff]
        %v412 = vld [vmem:[%s324 + $0x70] sm:$0xff]
        %v413 = vld [vmem:[%s324 + $0x78] sm:$0xff]
        %v414 = vld [vmem:[%s375] sm:$0xff]
        %v415 = vld [vmem:[%s375 + $0x8] sm:$0xff]
        %v416 = vpack.c.bf16 %v415, %v414
        %v433 = vunpack.c.l.b16 %v398
        %v434 = vunpack.c.h.b16 %v398
        %v435 = vunpack.c.l.b16 %v399
        %v436 = vunpack.c.h.b16 %v399
        %v437 = vunpack.c.l.b16 %v400
        %v438 = vunpack.c.h.b16 %v400
        %v439 = vunpack.c.l.b16 %v401
        %v440 = vunpack.c.h.b16 %v401
        %v441 = vunpack.c.l.b16 %v402
        %v442 = vunpack.c.h.b16 %v402
        %v443 = vunpack.c.l.b16 %v403
        %v444 = vunpack.c.h.b16 %v403
        %v445 = vunpack.c.l.b16 %v404
        %v446 = vunpack.c.h.b16 %v404
        %v447 = vunpack.c.l.b16 %v405
        %v448 = vunpack.c.h.b16 %v405
        %v449 = vunpack.c.l.b16 %v406
        %v450 = vunpack.c.h.b16 %v406
        %v451 = vunpack.c.l.b16 %v407
        %v452 = vunpack.c.h.b16 %v407
        %v453 = vunpack.c.l.b16 %v408
        %v454 = vunpack.c.h.b16 %v408
        %v455 = vunpack.c.l.b16 %v409
        %v456 = vunpack.c.h.b16 %v409
        %v457 = vunpack.c.l.b16 %v410
        %v458 = vunpack.c.h.b16 %v410
        %v459 = vunpack.c.l.b16 %v411
        %v460 = vunpack.c.h.b16 %v411
        %v461 = vunpack.c.l.b16 %v412
        %v462 = vunpack.c.h.b16 %v412
        %v463 = vunpack.c.l.b16 %v413
        %v464 = vunpack.c.h.b16 %v413
        %v465 = vpack.c.b16 %v435, %v433
        %v466 = vpack.c.b16 %v436, %v434
        %v467 = vpack.c.b16 %v439, %v437
        %v468 = vpack.c.b16 %v440, %v438
        %v469 = vpack.c.b16 %v443, %v441
        %v470 = vpack.c.b16 %v444, %v442
        %v471 = vpack.c.b16 %v447, %v445
        %v472 = vpack.c.b16 %v448, %v446
        %v473 = vpack.c.b16 %v451, %v449
        %v474 = vpack.c.b16 %v452, %v450
        %v475 = vpack.c.b16 %v455, %v453
        %v476 = vpack.c.b16 %v456, %v454
        %v477 = vpack.c.b16 %v459, %v457
        %v478 = vpack.c.b16 %v460, %v458
        %v479 = vpack.c.b16 %v463, %v461
        %v480 = vpack.c.b16 %v464, %v462
        %497 = vmatprep.subr.bf16.mxu0 %v480
        %498 = vmatpush1.bf16.msra.mxu0 %v479
        %499 = vmatprep.subr.bf16.mxu0 %v478
        %500 = vmatpush1.bf16.msra.mxu0 %v477
        %501 = vmatprep.subr.bf16.mxu0 %v476
        %502 = vmatpush1.bf16.msra.mxu0 %v475
        %503 = vmatprep.subr.bf16.mxu0 %v474
        %504 = vmatpush1.bf16.msra.mxu0 %v473
        %505 = vmatprep.subr.bf16.mxu0 %v472
        %506 = vmatpush1.bf16.msra.mxu0 %v471
        %507 = vmatprep.subr.bf16.mxu0 %v470
        %508 = vmatpush1.bf16.msra.mxu0 %v469
        %509 = vmatprep.subr.bf16.mxu0 %v468
        %510 = vmatpush1.bf16.msra.mxu0 %v467
        %511 = vmatprep.subr.bf16.mxu0 %v466
        %512 = vmatpush1.bf16.msra.mxu0 %v465
        %513 = vmatprep.subr.bf16.mxu0 0
        %514 = vmatpush2.bf16.msra.mxu0 0
        %515 = vmatprep.subr.bf16.mxu0 0
        %516 = vmatpush2.bf16.msra.mxu0 0
        %517 = vmatprep.subr.bf16.mxu0 0
        %518 = vmatpush2.bf16.msra.mxu0 0
        %519 = vmatprep.subr.bf16.mxu0 0
        %520 = vmatpush2.bf16.msra.mxu0 0
        %521 = vmatprep.subr.bf16.mxu0 0
        %522 = vmatpush2.bf16.msra.mxu0 0
        %523 = vmatprep.subr.bf16.mxu0 0
        %524 = vmatpush2.bf16.msra.mxu0 0
        %525 = vmatprep.subr.bf16.mxu0 0
        %526 = vmatpush2.bf16.msra.mxu0 0
        %527 = vmatprep.subr.bf16.mxu0 0
        %528 = vmatpush2.bf16.msra.mxu0 0
        %529 = vmatprep.mubr.bf16.mxu0 0
        %530 = vmatmul.mubr.bf16.gmra.mxu0 %v416
        %v531 = vpop.f32.mrf.mxu0
        %v532 = vadd.f32 0.0, %v531
        %v533 = vpop.f32.mrf.mxu0
        %v534 = vadd.f32 0.0, %v533
        %v535 = vpop.f32.mrf.mxu0
        %v536 = vadd.f32 0.0, %v535
        %v537 = vpop.f32.mrf.mxu0
        %v538 = vadd.f32 0.0, %v537
        %539 = vdwg.mxu0
        %v540 = vld [vmem:[%s381] sm:$0x3]
        %v542 = vlaneseq
        %v543 = vshrl.u32 %v542, 7
        %v544 = vsub.s32 0, %v543
        %v545 = vrot.slane %v540, %v544
        %v546 = vlaneseq
        %v547 = vshrl.u32 %v546, 7
        %v548 = vsub.s32 1, %v547
        %v549 = vrot.slane %v540, %v548
        %v552 = vmul.f32 %v532, %v545
        %v553 = vmul.f32 %v534, %v549
        %v554 = vmul.f32 %v536, %v545
        %v555 = vmul.f32 %v538, %v549
        %v556 = vld [vmem:[%s386] sm:$0x3]
        %v558 = vlaneseq
        %v559 = vshrl.u32 %v558, 7
        %v560 = vsub.s32 0, %v559
        %v561 = vrot.slane %v556, %v560
        %v562 = vlaneseq
        %v563 = vshrl.u32 %v562, 7
        %v564 = vsub.s32 1, %v563
        %v565 = vrot.slane %v556, %v564
        %v568 = vadd.f32 %v552, %v561
        %v569 = vadd.f32 %v553, %v565
        %v570 = vadd.f32 %v554, %v561
        %v571 = vadd.f32 %v555, %v565
        %vm572 = vcmp.ge.f32.partialorder %v568, 0.0
        %vm573 = vcmp.ge.f32.partialorder %v569, 0.0
        %vm574 = vcmp.ge.f32.partialorder %v570, 0.0
        %vm575 = vcmp.ge.f32.partialorder %v571, 0.0
        %v576 = vmul.f32 %v568, 0.2
        %v577 = vmul.f32 %v569, 0.2
        %v578 = vmul.f32 %v570, 0.2
        %v579 = vmul.f32 %v571, 0.2
        %v580 = vsel %vm572, %v568, %v576
        %v581 = vsel %vm573, %v569, %v577
        %v582 = vsel %vm574, %v570, %v578
        %v583 = vsel %vm575, %v571, %v579
        %v584 = vmax.f32 %v580, %v582
        %v585 = vrot.slane %v584, 4
        %v586 = vmax.f32 %v584, %v585
        %v587 = vrot.slane %v586, 2
        %v588 = vmax.f32 %v586, %v587
        %v589 = vrot.slane %v588, 1
        %v590 = vmax.f32 %v588, %v589
        %v591 = vmax.f32 %v581, %v583
        %v592 = vrot.slane %v591, 4
        %v593 = vmax.f32 %v591, %v592
        %v594 = vrot.slane %v593, 2
        %v595 = vmax.f32 %v593, %v594
        %v596 = vrot.slane %v595, 1
        %v597 = vmax.f32 %v595, %v596
        %p598 = scmp.eq.s32.totalorder %s22, 0
        // Predicated region
        $region75: #{_lambda_.13} parent=69 // pred_check
          %p599 = pneg %p598
        $region76: #{_lambda_.13} parent=69 // pred_check_branch
          %601 = sbr.rel (%p599) target = $region78
        $region77: #{_lambda_.13} parent=69 // pred_region
          %v602 = vlaneseq
          %vm603 = vcmp.ge.s32.totalorder %v602, 0
          %vm604 = vcmp.lt.s32.totalorder %v602, 256
          %vm605 = vmand %vm603, %vm604
          %606 = vst.msk [vmem:[#allocation2] sm:$0x3] %vm605, -inf
        $region78: #{_lambda_.13} parent=69 // pred_fallthru
          _
        %v607 = vld [vmem:[#allocation2] sm:$0x3]
        %v610 = vcombine.low %v590, %v597
        %v612 = vunpack.c.l.s4 1966171168
        %v613 = vunpack.c.0.s8 %v612
        %v614 = vlaneseq
        %v615 = vshrl.u32 %v614, 7
        %v616 = vsub.s32 %v613, %v615
        %v617 = vrot.slane %v610, %v616
        %v619 = vunpack.c.l.s4 1966171168
        %v620 = vunpack.c.0.s8 %v619
        %v621 = vlaneseq
        %v622 = vshrl.u32 %v621, 7
        %v623 = vsub.s32 %v620, %v622
        %v624 = vrot.slane %v617, %v623
        %v626 = vmax.f32 %v607, %v624
        %v627 = vlaneseq
        %vm628 = vcmp.ge.s32.totalorder %v627, 0
        %vm629 = vcmp.lt.s32.totalorder %v627, 256
        %vm630 = vmand %vm628, %vm629
        %631 = vst.msk [vmem:[#allocation2] sm:$0x3] %vm630, %v626
        // Predicated region
        $region79: #{_lambda_.13} parent=69 // pred_check
          %p632 = pneg %p598
        $region80: #{_lambda_.13} parent=69 // pred_check_branch
          %634 = sbr.rel (%p632) target = $region82
        $region81: #{_lambda_.13} parent=69 // pred_region
          %v635 = vld [vmem:[#allocation2] sm:$0x3]
          %636 = vst.msk [vmem:[%s395] sm:$0x3] %vm630, %v635
        $region82: #{_lambda_.13} parent=69 // pred_fallthru
          _
        %s637 = smul.u32 2, %s21
        %p638 = scmp.lt.s32.totalorder %s20, 1
        %s639 = scalar_select %p638, %s20, 1
        %p640 = scmp.lt.s32.totalorder %s637, 7
        %s641 = scalar_select %p640, %s637, 7
        %s642 = smul.addr %s639, 8
        %s643 = sadd.s32 %s641, %s642
        %s644 = scalar_lea.vmem %s4, %s643
        // Predicated region
        $region83: #{_lambda_.13} parent=69 // pred_check
          %p645 = pneg %p160
        $region84: #{_lambda_.13} parent=69 // pred_check_branch
          %647 = sbr.rel (%p645) target = $region86
        $region85: #{_lambda_.13} parent=69 // pred_region
          %s648 = smul.u32 2, %s21
        $region86: #{_lambda_.13} parent=69 // pred_fallthru
          _
      $region70: #{_lambda_.13} parent=5 // pred_fallthru
        _
      %p649 = scmp.le.s32.totalorder 2, %s10
      // Predicated region
      $region87: #{_lambda_.13} parent=5 // pred_check
        %p650 = pneg %p649
      $region88: #{_lambda_.13} parent=5 // pred_check_branch
        %652 = sbr.rel (%p650) target = $region90
      $region89: #{_lambda_.13} parent=5 // pred_region
        %s653 = ssub.s32 %s10, 2
        // Predicated region
        $region91: #{_lambda_.13} parent=89 // pred_check
          %p654 = pneg %p166
        $region92: #{_lambda_.13} parent=89 // pred_check_branch
          %656 = sbr.rel (%p654) target = $region94
        $region93: #{_lambda_.13} parent=89 // pred_region
          %s657 = smul.u32 2, %s24
          %p658 = scmp.lt.s32.totalorder %s23, 1
          %s659 = scalar_select %p658, %s23, 1
          %p660 = scmp.lt.s32.totalorder %s657, 7
          %s661 = scalar_select %p660, %s657, 7
          %s662 = smul.addr %s659, 8
          %s663 = sadd.s32 %s661, %s662
          %s664 = scalar_lea.vmem %s4, %s663
        $region94: #{_lambda_.13} parent=89 // pred_fallthru
          _
      $region90: #{_lambda_.13} parent=5 // pred_fallthru
        _
    $region6: #{_lambda_.13} parent=1 // loop_footer
      %s14 = sadd.s32 1, %s10
    $region7: #{_lambda_.13} parent=1 // loop_footer_branch
      %9 = sbr.rel target = $region3
    $region8: #{_lambda_.13} parent=1 // loop_exit
      _

// kernel: _lambda_.12
$region0: #{_lambda_.12}
  #allocation0 [shape = 'u32[]', space=smem, size = 0x4, offset = 0x4, fixed_abs, tag = 'smem constant byte address 0x4 - core index']
  #allocation1 [shape = 'u32[144,128]{1,0:T(1,128)}', space=vmem, size = 0x12000, scoped, tag = 'internal scratch']
  %s0 = inlined_call_operand.vmem [shape: bf16[32,4,3], index: 0, kind: input, shape index: {}]
  %s1 = inlined_call_operand.vmem [shape: f32[32,3], index: 1, kind: input, shape index: {}]
  %s2 = inlined_call_operand.vmem [shape: bf16[3,64], index: 2, kind: input, shape index: {}]
  %s3 = inlined_call_operand.vmem [shape: bf16[3,64], index: 3, kind: input, shape index: {}]
  %s4 = inlined_call_operand.vmem [shape: f32[1,64], index: 4, kind: input, shape index: {}]
  %s5 = inlined_call_operand.vmem [shape: f32[1,64], index: 5, kind: input, shape index: {}]
  %s6 = inlined_call_operand.vmem [shape: bf16[64,128], index: 6, kind: input, shape index: {}]
  %s7 = inlined_call_operand.vmem [shape: f32[1,128], index: 7, kind: input, shape index: {}]
  %s8 = inlined_call_operand.vmem [shape: f32[1,128], index: 8, kind: input, shape index: {}]
  %s9 = inlined_call_operand.vmem [shape: f32[32,128], index: 9, kind: output, shape index: {}]
  %s10 = sld [smem:[#allocation0]]
  $region46: #{_lambda_.12} parent=0
    _
  %s12 = ssub.s32 1, %s10
  %s13 = scalar_select 0, %s12, %s10
  // Predicated region
  $region2: #{_lambda_.12} parent=0 // pred_check
    _
  $region3: #{_lambda_.12} parent=0 // pred_check_branch
    %15 = sbr.rel (0) target = $region5
  $region4: #{_lambda_.12} parent=0 // pred_region
    _
  $region5: #{_lambda_.12} parent=0 // pred_fallthru
    _
  // Predicated region
  $region6: #{_lambda_.12} parent=0 // pred_check
    _
  $region7: #{_lambda_.12} parent=0 // pred_check_branch
    %17 = sbr.rel (0) target = $region9
  $region8: #{_lambda_.12} parent=0 // pred_region
    _
  $region9: #{_lambda_.12} parent=0 // pred_fallthru
    _
  // Predicated region
  $region10: #{_lambda_.12} parent=0 // pred_check
    _
  $region11: #{_lambda_.12} parent=0 // pred_check_branch
    %19 = sbr.rel (0) target = $region13
  $region12: #{_lambda_.12} parent=0 // pred_region
    _
  $region13: #{_lambda_.12} parent=0 // pred_fallthru
    _
  // Predicated region
  $region14: #{_lambda_.12} parent=0 // pred_check
    _
  $region15: #{_lambda_.12} parent=0 // pred_check_branch
    %21 = sbr.rel (0) target = $region17
  $region16: #{_lambda_.12} parent=0 // pred_region
    _
  $region17: #{_lambda_.12} parent=0 // pred_fallthru
    _
  // Predicated region
  $region18: #{_lambda_.12} parent=0 // pred_check
    _
  $region19: #{_lambda_.12} parent=0 // pred_check_branch
    %23 = sbr.rel (0) target = $region21
  $region20: #{_lambda_.12} parent=0 // pred_region
    _
  $region21: #{_lambda_.12} parent=0 // pred_fallthru
    _
  // Predicated region
  $region22: #{_lambda_.12} parent=0 // pred_check
    _
  $region23: #{_lambda_.12} parent=0 // pred_check_branch
    %25 = sbr.rel (0) target = $region25
  $region24: #{_lambda_.12} parent=0 // pred_region
    _
  $region25: #{_lambda_.12} parent=0 // pred_fallthru
    _
  // Predicated region
  $region26: #{_lambda_.12} parent=0 // pred_check
    _
  $region27: #{_lambda_.12} parent=0 // pred_check_branch
    %27 = sbr.rel (0) target = $region29
  $region28: #{_lambda_.12} parent=0 // pred_region
    _
  $region29: #{_lambda_.12} parent=0 // pred_fallthru
    _
  // Predicated region
  $region30: #{_lambda_.12} parent=0 // pred_check
    _
  $region31: #{_lambda_.12} parent=0 // pred_check_branch
    %29 = sbr.rel (0) target = $region33
  $region32: #{_lambda_.12} parent=0 // pred_region
    _
  $region33: #{_lambda_.12} parent=0 // pred_fallthru
    _
  // Predicated region
  $region34: #{_lambda_.12} parent=0 // pred_check
    _
  $region35: #{_lambda_.12} parent=0 // pred_check_branch
    %31 = sbr.rel (0) target = $region37
  $region36: #{_lambda_.12} parent=0 // pred_region
    _
  $region37: #{_lambda_.12} parent=0 // pred_fallthru
    _
  %v33 = vld [vmem:[%s1] sm:$0xff]
  %v34 = vld [vmem:[%s1 + $0x8] sm:$0xff]
  %v35 = vld [vmem:[%s1 + $0x10] sm:$0xff]
  %v36 = vld [vmem:[%s1 + $0x18] sm:$0xff]
  %v37 = vld [vmem:[%s2] sm:$0x3]
  %v38 = vld [vmem:[%s3] sm:$0x3]
  %v39 = vld [vmem:[%s4] sm:$0x1]
  %v40 = vld [vmem:[%s5] sm:$0x1]
  %v41 = vld [vmem:[%s6] sm:$0xf]
  %v42 = vld [vmem:[%s6 + $0x4] sm:$0xf]
  %v43 = vld [vmem:[%s6 + $0x8] sm:$0xf]
  %v44 = vld [vmem:[%s6 + $0xc] sm:$0xf]
  %v45 = vld [vmem:[%s6 + $0x10] sm:$0xf]
  %v46 = vld [vmem:[%s6 + $0x14] sm:$0xf]
  %v47 = vld [vmem:[%s6 + $0x18] sm:$0xf]
  %v48 = vld [vmem:[%s6 + $0x1c] sm:$0xf]
  %v49 = vld [vmem:[%s7] sm:$0x1]
  %v50 = vld [vmem:[%s8] sm:$0x1]
  %v51 = vpack.c.bf16 %v34, %v33
  %v52 = vpack.c.bf16 %v36, %v35
  %vm53 = vcmask 23552
  %v55 = vsel %vm53, %v51, 0
  %v58 = vsel %vm53, %v52, 0
  %vm60 = vcmask 1040384
  %vm61 = vcmask 1041408
  %v62 = vsel %vm60, 4294967295, 65535
  %v63 = vsel %vm61, %v62, 0
  %v65 = vand.u32 %v38, %v63
  %67 = vmatprep.subr.bf16.mxu0 0
  %68 = vmatpush1.bf16.msra.mxu0 0
  %69 = vmatprep.subr.bf16.mxu0 0
  %70 = vmatpush1.bf16.msra.mxu0 0
  %71 = vmatprep.subr.bf16.mxu0 0
  %72 = vmatpush1.bf16.msra.mxu0 0
  %73 = vmatprep.subr.bf16.mxu0 0
  %74 = vmatpush1.bf16.msra.mxu0 0
  %75 = vmatprep.subr.bf16.mxu0 0
  %76 = vmatpush1.bf16.msra.mxu0 0
  %77 = vmatprep.subr.bf16.mxu0 0
  %78 = vmatpush1.bf16.msra.mxu0 0
  %79 = vmatprep.subr.bf16.mxu0 0
  %80 = vmatpush1.bf16.msra.mxu0 0
  %81 = vmatprep.subr.bf16.mxu0 0
  %82 = vmatpush1.bf16.msra.mxu0 %v65
  %83 = vmatprep.subr.bf16.mxu0 0
  %84 = vmatpush2.bf16.msra.mxu0 0
  %85 = vmatprep.subr.bf16.mxu0 0
  %86 = vmatpush2.bf16.msra.mxu0 0
  %87 = vmatprep.subr.bf16.mxu0 0
  %88 = vmatpush2.bf16.msra.mxu0 0
  %89 = vmatprep.subr.bf16.mxu0 0
  %90 = vmatpush2.bf16.msra.mxu0 0
  %91 = vmatprep.subr.bf16.mxu0 0
  %92 = vmatpush2.bf16.msra.mxu0 0
  %93 = vmatprep.subr.bf16.mxu0 0
  %94 = vmatpush2.bf16.msra.mxu0 0
  %95 = vmatprep.subr.bf16.mxu0 0
  %96 = vmatpush2.bf16.msra.mxu0 0
  %97 = vmatprep.subr.bf16.mxu0 0
  %98 = vmatpush2.bf16.msra.mxu0 0
  %99 = vmatprep.mubr.bf16.mxu0 0
  %100 = vmatmul.mubr.bf16.gmra.mxu0 %v55
  %v101 = vpop.f32.mrf.mxu0
  %v102 = vadd.f32 0.0, %v101
  %v103 = vpop.f32.mrf.mxu0
  %v104 = vpop.f32.mrf.mxu0
  %v105 = vadd.f32 0.0, %v104
  %v106 = vpop.f32.mrf.mxu0
  %107 = vmatprep.mubr.bf16.mxu0 0
  %108 = vmatmul.mubr.bf16.gmra.mxu0 %v58
  %v109 = vpop.f32.mrf.mxu0
  %v110 = vadd.f32 0.0, %v109
  %v111 = vpop.f32.mrf.mxu0
  %v112 = vpop.f32.mrf.mxu0
  %v113 = vadd.f32 0.0, %v112
  %v114 = vpop.f32.mrf.mxu0
  %115 = vdwg.mxu0
  %v116 = vld [vmem:[%s0] sm:$0x3]
  %v117 = vld [vmem:[%s0 + $0x2] sm:$0x3]
  %v118 = vld [vmem:[%s0 + $0x4] sm:$0x3]
  %v119 = vld [vmem:[%s0 + $0x6] sm:$0x3]
  %v120 = vld [vmem:[%s0 + $0x8] sm:$0x3]
  %v121 = vld [vmem:[%s0 + $0xa] sm:$0x3]
  %v122 = vld [vmem:[%s0 + $0xc] sm:$0x3]
  %v123 = vld [vmem:[%s0 + $0xe] sm:$0x3]
  %v124 = vld [vmem:[%s0 + $0x10] sm:$0x3]
  %v125 = vld [vmem:[%s0 + $0x12] sm:$0x3]
  %v126 = vld [vmem:[%s0 + $0x14] sm:$0x3]
  %v127 = vld [vmem:[%s0 + $0x16] sm:$0x3]
  %v128 = vld [vmem:[%s0 + $0x18] sm:$0x3]
  %v129 = vld [vmem:[%s0 + $0x1a] sm:$0x3]
  %v130 = vld [vmem:[%s0 + $0x1c] sm:$0x3]
  %v131 = vld [vmem:[%s0 + $0x1e] sm:$0x3]
  %v132 = vld [vmem:[%s0 + $0x20] sm:$0x3]
  %v133 = vld [vmem:[%s0 + $0x22] sm:$0x3]
  %v134 = vld [vmem:[%s0 + $0x24] sm:$0x3]
  %v135 = vld [vmem:[%s0 + $0x26] sm:$0x3]
  %v136 = vld [vmem:[%s0 + $0x28] sm:$0x3]
  %v137 = vld [vmem:[%s0 + $0x2a] sm:$0x3]
  %v138 = vld [vmem:[%s0 + $0x2c] sm:$0x3]
  %v139 = vld [vmem:[%s0 + $0x2e] sm:$0x3]
  %v140 = vld [vmem:[%s0 + $0x30] sm:$0x3]
  %v141 = vld [vmem:[%s0 + $0x32] sm:$0x3]
  %v142 = vld [vmem:[%s0 + $0x34] sm:$0x3]
  %v143 = vld [vmem:[%s0 + $0x36] sm:$0x3]
  %v144 = vld [vmem:[%s0 + $0x38] sm:$0x3]
  %v145 = vld [vmem:[%s0 + $0x3a] sm:$0x3]
  %v146 = vld [vmem:[%s0 + $0x3c] sm:$0x3]
  %v147 = vld [vmem:[%s0 + $0x3e] sm:$0x3]
  %v148 = vunpack.c.l.bf16 %v116
  %v149 = vunpack.c.l.bf16 %v117
  %v150 = vunpack.c.l.bf16 %v118
  %v151 = vunpack.c.l.bf16 %v119
  %v152 = vunpack.c.l.bf16 %v120
  %v153 = vunpack.c.l.bf16 %v121
  %v154 = vunpack.c.l.bf16 %v122
  %v155 = vunpack.c.l.bf16 %v123
  %v156 = vunpack.c.l.bf16 %v124
  %v157 = vunpack.c.l.bf16 %v125
  %v158 = vunpack.c.l.bf16 %v126
  %v159 = vunpack.c.l.bf16 %v127
  %v160 = vunpack.c.l.bf16 %v128
  %v161 = vunpack.c.l.bf16 %v129
  %v162 = vunpack.c.l.bf16 %v130
  %v163 = vunpack.c.l.bf16 %v131
  %v164 = vunpack.c.l.bf16 %v132
  %v165 = vunpack.c.l.bf16 %v133
  %v166 = vunpack.c.l.bf16 %v134
  %v167 = vunpack.c.l.bf16 %v135
  %v168 = vunpack.c.l.bf16 %v136
  %v169 = vunpack.c.l.bf16 %v137
  %v170 = vunpack.c.l.bf16 %v138
  %v171 = vunpack.c.l.bf16 %v139
  %v172 = vunpack.c.l.bf16 %v140
  %v173 = vunpack.c.l.bf16 %v141
  %v174 = vunpack.c.l.bf16 %v142
  %v175 = vunpack.c.l.bf16 %v143
  %v176 = vunpack.c.l.bf16 %v144
  %v177 = vunpack.c.l.bf16 %v145
  %v178 = vunpack.c.l.bf16 %v146
  %v179 = vunpack.c.l.bf16 %v147
  %v184 = vcombine.high %v33, %v33
  %v185 = vcombine.high %v34, %v34
  %v186 = vcombine.high %v35, %v35
  %v187 = vcombine.high %v36, %v36
  %v188 = vrot.slane %v33, 1
  %v189 = vrot.slane %v33, 2
  %v190 = vrot.slane %v33, 3
  %v191 = vrot.slane %v184, 1
  %v192 = vrot.slane %v184, 2
  %v193 = vrot.slane %v184, 3
  %v194 = vrot.slane %v34, 1
  %v195 = vrot.slane %v34, 2
  %v196 = vrot.slane %v34, 3
  %v197 = vrot.slane %v185, 1
  %v198 = vrot.slane %v185, 2
  %v199 = vrot.slane %v185, 3
  %v200 = vrot.slane %v35, 1
  %v201 = vrot.slane %v35, 2
  %v202 = vrot.slane %v35, 3
  %v203 = vrot.slane %v186, 1
  %v204 = vrot.slane %v186, 2
  %v205 = vrot.slane %v186, 3
  %v206 = vrot.slane %v36, 1
  %v207 = vrot.slane %v36, 2
  %v208 = vrot.slane %v36, 3
  %v209 = vrot.slane %v187, 1
  %v210 = vrot.slane %v187, 2
  %v211 = vrot.slane %v187, 3
  %v244 = vsub.f32 %v148, %v33
  %v245 = vsub.f32 %v149, %v188
  %v246 = vsub.f32 %v150, %v189
  %v247 = vsub.f32 %v151, %v190
  %v248 = vsub.f32 %v152, %v184
  %v249 = vsub.f32 %v153, %v191
  %v250 = vsub.f32 %v154, %v192
  %v251 = vsub.f32 %v155, %v193
  %v252 = vsub.f32 %v156, %v34
  %v253 = vsub.f32 %v157, %v194
  %v254 = vsub.f32 %v158, %v195
  %v255 = vsub.f32 %v159, %v196
  %v256 = vsub.f32 %v160, %v185
  %v257 = vsub.f32 %v161, %v197
  %v258 = vsub.f32 %v162, %v198
  %v259 = vsub.f32 %v163, %v199
  %v260 = vsub.f32 %v164, %v35
  %v261 = vsub.f32 %v165, %v200
  %v262 = vsub.f32 %v166, %v201
  %v263 = vsub.f32 %v167, %v202
  %v264 = vsub.f32 %v168, %v186
  %v265 = vsub.f32 %v169, %v203
  %v266 = vsub.f32 %v170, %v204
  %v267 = vsub.f32 %v171, %v205
  %v268 = vsub.f32 %v172, %v36
  %v269 = vsub.f32 %v173, %v206
  %v270 = vsub.f32 %v174, %v207
  %v271 = vsub.f32 %v175, %v208
  %v272 = vsub.f32 %v176, %v187
  %v273 = vsub.f32 %v177, %v209
  %v274 = vsub.f32 %v178, %v210
  %v275 = vsub.f32 %v179, %v211
  %v276 = vpack.c.bf16 %v244, %v244
  %v277 = vpack.c.bf16 %v245, %v245
  %v278 = vpack.c.bf16 %v246, %v246
  %v279 = vpack.c.bf16 %v247, %v247
  %v280 = vpack.c.bf16 %v248, %v248
  %v281 = vpack.c.bf16 %v249, %v249
  %v282 = vpack.c.bf16 %v250, %v250
  %v283 = vpack.c.bf16 %v251, %v251
  %v284 = vpack.c.bf16 %v252, %v252
  %v285 = vpack.c.bf16 %v253, %v253
  %v286 = vpack.c.bf16 %v254, %v254
  %v287 = vpack.c.bf16 %v255, %v255
  %v288 = vpack.c.bf16 %v256, %v256
  %v289 = vpack.c.bf16 %v257, %v257
  %v290 = vpack.c.bf16 %v258, %v258
  %v291 = vpack.c.bf16 %v259, %v259
  %v292 = vpack.c.bf16 %v260, %v260
  %v293 = vpack.c.bf16 %v261, %v261
  %v294 = vpack.c.bf16 %v262, %v262
  %v295 = vpack.c.bf16 %v263, %v263
  %v296 = vpack.c.bf16 %v264, %v264
  %v297 = vpack.c.bf16 %v265, %v265
  %v298 = vpack.c.bf16 %v266, %v266
  %v299 = vpack.c.bf16 %v267, %v267
  %v300 = vpack.c.bf16 %v268, %v268
  %v301 = vpack.c.bf16 %v269, %v269
  %v302 = vpack.c.bf16 %v270, %v270
  %v303 = vpack.c.bf16 %v271, %v271
  %v304 = vpack.c.bf16 %v272, %v272
  %v305 = vpack.c.bf16 %v273, %v273
  %v306 = vpack.c.bf16 %v274, %v274
  %v307 = vpack.c.bf16 %v275, %v275
  %v340 = vunpack.c.l.b16 %v276
  %v341 = vunpack.c.l.b16 %v277
  %v342 = vunpack.c.l.b16 %v278
  %v343 = vunpack.c.l.b16 %v279
  %v344 = vunpack.c.l.b16 %v280
  %v345 = vunpack.c.l.b16 %v281
  %v346 = vunpack.c.l.b16 %v282
  %v347 = vunpack.c.l.b16 %v283
  %v348 = vunpack.c.l.b16 %v284
  %v349 = vunpack.c.l.b16 %v285
  %v350 = vunpack.c.l.b16 %v286
  %v351 = vunpack.c.l.b16 %v287
  %v352 = vunpack.c.l.b16 %v288
  %v353 = vunpack.c.l.b16 %v289
  %v354 = vunpack.c.l.b16 %v290
  %v355 = vunpack.c.l.b16 %v291
  %v356 = vunpack.c.l.b16 %v292
  %v357 = vunpack.c.l.b16 %v293
  %v358 = vunpack.c.l.b16 %v294
  %v359 = vunpack.c.l.b16 %v295
  %v360 = vunpack.c.l.b16 %v296
  %v361 = vunpack.c.l.b16 %v297
  %v362 = vunpack.c.l.b16 %v298
  %v363 = vunpack.c.l.b16 %v299
  %v364 = vunpack.c.l.b16 %v300
  %v365 = vunpack.c.l.b16 %v301
  %v366 = vunpack.c.l.b16 %v302
  %v367 = vunpack.c.l.b16 %v303
  %v368 = vunpack.c.l.b16 %v304
  %v369 = vunpack.c.l.b16 %v305
  %v370 = vunpack.c.l.b16 %v306
  %v371 = vunpack.c.l.b16 %v307
  %v372 = vrot.slane %v341, 7
  %vm373 = vcmask 1041409
  %v374 = vsel %vm373, %v372, %v340
  %v375 = vrot.slane %v342, 6
  %vm376 = vcmask 1042434
  %v377 = vsel %vm376, %v375, %v374
  %v378 = vrot.slane %v343, 5
  %vm379 = vcmask 1043459
  %v380 = vsel %vm379, %v378, %v377
  %v381 = vrot.slane %v344, 4
  %vm382 = vcmask 1044484
  %v383 = vsel %vm382, %v381, %v380
  %v384 = vrot.slane %v345, 3
  %vm385 = vcmask 1045509
  %v386 = vsel %vm385, %v384, %v383
  %v387 = vrot.slane %v346, 2
  %vm388 = vcmask 1046534
  %v389 = vsel %vm388, %v387, %v386
  %v390 = vrot.slane %v347, 1
  %vm391 = vcmask 1047559
  %v392 = vsel %vm391, %v390, %v389
  %v393 = vrot.slane %v349, 7
  %v394 = vsel %vm373, %v393, %v348
  %v395 = vrot.slane %v350, 6
  %v396 = vsel %vm376, %v395, %v394
  %v397 = vrot.slane %v351, 5
  %v398 = vsel %vm379, %v397, %v396
  %v399 = vrot.slane %v352, 4
  %v400 = vsel %vm382, %v399, %v398
  %v401 = vrot.slane %v353, 3
  %v402 = vsel %vm385, %v401, %v400
  %v403 = vrot.slane %v354, 2
  %v404 = vsel %vm388, %v403, %v402
  %v405 = vrot.slane %v355, 1
  %v406 = vsel %vm391, %v405, %v404
  %v407 = vrot.slane %v357, 7
  %v408 = vsel %vm373, %v407, %v356
  %v409 = vrot.slane %v358, 6
  %v410 = vsel %vm376, %v409, %v408
  %v411 = vrot.slane %v359, 5
  %v412 = vsel %vm379, %v411, %v410
  %v413 = vrot.slane %v360, 4
  %v414 = vsel %vm382, %v413, %v412
  %v415 = vrot.slane %v361, 3
  %v416 = vsel %vm385, %v415, %v414
  %v417 = vrot.slane %v362, 2
  %v418 = vsel %vm388, %v417, %v416
  %v419 = vrot.slane %v363, 1
  %v420 = vsel %vm391, %v419, %v418
  %v421 = vrot.slane %v365, 7
  %v422 = vsel %vm373, %v421, %v364
  %v423 = vrot.slane %v366, 6
  %v424 = vsel %vm376, %v423, %v422
  %v425 = vrot.slane %v367, 5
  %v426 = vsel %vm379, %v425, %v424
  %v427 = vrot.slane %v368, 4
  %v428 = vsel %vm382, %v427, %v426
  %v429 = vrot.slane %v369, 3
  %v430 = vsel %vm385, %v429, %v428
  %v431 = vrot.slane %v370, 2
  %v432 = vsel %vm388, %v431, %v430
  %v433 = vrot.slane %v371, 1
  %v434 = vsel %vm391, %v433, %v432
  %v435 = vpack.c.b16 %v406, %v392
  %v436 = vpack.c.b16 %v434, %v420
  %v438 = vsel %vm53, %v435, 0
  %v441 = vsel %vm53, %v436, 0
  %v444 = vand.u32 %v37, %v63
  %446 = vmatprep.subr.bf16.mxu0 0
  %447 = vmatpush1.bf16.msra.mxu0 0
  %448 = vmatprep.subr.bf16.mxu0 0
  %449 = vmatpush1.bf16.msra.mxu0 0
  %450 = vmatprep.subr.bf16.mxu0 0
  %451 = vmatpush1.bf16.msra.mxu0 0
  %452 = vmatprep.subr.bf16.mxu0 0
  %453 = vmatpush1.bf16.msra.mxu0 0
  %454 = vmatprep.subr.bf16.mxu0 0
  %455 = vmatpush1.bf16.msra.mxu0 0
  %456 = vmatprep.subr.bf16.mxu0 0
  %457 = vmatpush1.bf16.msra.mxu0 0
  %458 = vmatprep.subr.bf16.mxu0 0
  %459 = vmatpush1.bf16.msra.mxu0 0
  %460 = vmatprep.subr.bf16.mxu0 0
  %461 = vmatpush1.bf16.msra.mxu0 %v444
  %462 = vmatprep.subr.bf16.mxu0 0
  %463 = vmatpush2.bf16.msra.mxu0 0
  %464 = vmatprep.subr.bf16.mxu0 0
  %465 = vmatpush2.bf16.msra.mxu0 0
  %466 = vmatprep.subr.bf16.mxu0 0
  %467 = vmatpush2.bf16.msra.mxu0 0
  %468 = vmatprep.subr.bf16.mxu0 0
  %469 = vmatpush2.bf16.msra.mxu0 0
  %470 = vmatprep.subr.bf16.mxu0 0
  %471 = vmatpush2.bf16.msra.mxu0 0
  %472 = vmatprep.subr.bf16.mxu0 0
  %473 = vmatpush2.bf16.msra.mxu0 0
  %474 = vmatprep.subr.bf16.mxu0 0
  %475 = vmatpush2.bf16.msra.mxu0 0
  %476 = vmatprep.subr.bf16.mxu0 0
  %477 = vmatpush2.bf16.msra.mxu0 0
  %478 = vmatprep.mubr.bf16.mxu0 0
  %479 = vmatmul.mubr.bf16.gmra.mxu0 %v438
  %v480 = vpop.f32.mrf.mxu0
  %v481 = vadd.f32 %v102, %v480
  %v482 = vpop.f32.mrf.mxu0
  %v483 = vpop.f32.mrf.mxu0
  %v484 = vadd.f32 %v105, %v483
  %v485 = vpop.f32.mrf.mxu0
  %486 = vmatprep.mubr.bf16.mxu0 0
  %487 = vmatmul.mubr.bf16.gmra.mxu0 %v441
  %v488 = vpop.f32.mrf.mxu0
  %v489 = vadd.f32 %v110, %v488
  %v490 = vpop.f32.mrf.mxu0
  %v491 = vpop.f32.mrf.mxu0
  %v492 = vadd.f32 %v113, %v491
  %v493 = vpop.f32.mrf.mxu0
  %494 = vdwg.mxu0
  %v496 = vlaneseq
  %v497 = vshrl.u32 %v496, 7
  %v498 = vsub.s32 0, %v497
  %v499 = vrot.slane %v39, %v498
  %v501 = vmul.f32 %v481, %v499
  %v502 = vmul.f32 %v484, %v499
  %v503 = vmul.f32 %v489, %v499
  %v504 = vmul.f32 %v492, %v499
  %v506 = vlaneseq
  %v507 = vshrl.u32 %v506, 7
  %v508 = vsub.s32 0, %v507
  %v509 = vrot.slane %v40, %v508
  %v511 = vadd.f32 %v501, %v509
  %v512 = vadd.f32 %v502, %v509
  %v513 = vadd.f32 %v503, %v509
  %v514 = vadd.f32 %v504, %v509
  %vm515 = vcmp.ge.f32.partialorder %v511, 0.0
  %vm516 = vcmp.ge.f32.partialorder %v512, 0.0
  %vm517 = vcmp.ge.f32.partialorder %v513, 0.0
  %vm518 = vcmp.ge.f32.partialorder %v514, 0.0
  %v519 = vmul.f32 %v511, 0.2
  %v520 = vmul.f32 %v512, 0.2
  %v521 = vmul.f32 %v513, 0.2
  %v522 = vmul.f32 %v514, 0.2
  %v523 = vsel %vm515, %v511, %v519
  %v524 = vsel %vm516, %v512, %v520
  %v525 = vsel %vm517, %v513, %v521
  %v526 = vsel %vm518, %v514, %v522
  %v527 = vpack.c.bf16 %v524, %v523
  %v528 = vpack.c.bf16 %v526, %v525
  %v537 = vunpack.c.l.b16 %v41
  %v538 = vunpack.c.l.b16 %v42
  %v539 = vunpack.c.l.b16 %v43
  %v540 = vunpack.c.l.b16 %v44
  %v541 = vunpack.c.l.b16 %v45
  %v542 = vunpack.c.l.b16 %v46
  %v543 = vunpack.c.l.b16 %v47
  %v544 = vunpack.c.l.b16 %v48
  %v545 = vpack.c.b16 %v538, %v537
  %v546 = vpack.c.b16 %v540, %v539
  %v547 = vpack.c.b16 %v542, %v541
  %v548 = vpack.c.b16 %v544, %v543
  %vm553 = vcmask 523264
  %v555 = vsel %vm553, %v527, 0
  %v558 = vsel %vm553, %v528, 0
  %560 = vmatprep.subr.bf16.mxu0 0
  %561 = vmatpush1.bf16.msra.mxu0 0
  %562 = vmatprep.subr.bf16.mxu0 0
  %563 = vmatpush1.bf16.msra.mxu0 0
  %564 = vmatprep.subr.bf16.mxu0 0
  %565 = vmatpush1.bf16.msra.mxu0 0
  %566 = vmatprep.subr.bf16.mxu0 0
  %567 = vmatpush1.bf16.msra.mxu0 0
  %568 = vmatprep.subr.bf16.mxu0 0
  %569 = vmatpush1.bf16.msra.mxu0 %v548
  %570 = vmatprep.subr.bf16.mxu0 0
  %571 = vmatpush1.bf16.msra.mxu0 %v547
  %572 = vmatprep.subr.bf16.mxu0 0
  %573 = vmatpush1.bf16.msra.mxu0 %v546
  %574 = vmatprep.subr.bf16.mxu0 0
  %575 = vmatpush1.bf16.msra.mxu0 %v545
  %576 = vmatprep.subr.bf16.mxu0 0
  %577 = vmatpush2.bf16.msra.mxu0 0
  %578 = vmatprep.subr.bf16.mxu0 0
  %579 = vmatpush2.bf16.msra.mxu0 0
  %580 = vmatprep.subr.bf16.mxu0 0
  %581 = vmatpush2.bf16.msra.mxu0 0
  %582 = vmatprep.subr.bf16.mxu0 0
  %583 = vmatpush2.bf16.msra.mxu0 0
  %584 = vmatprep.subr.bf16.mxu0 0
  %585 = vmatpush2.bf16.msra.mxu0 0
  %586 = vmatprep.subr.bf16.mxu0 0
  %587 = vmatpush2.bf16.msra.mxu0 0
  %588 = vmatprep.subr.bf16.mxu0 0
  %589 = vmatpush2.bf16.msra.mxu0 0
  %590 = vmatprep.subr.bf16.mxu0 0
  %591 = vmatpush2.bf16.msra.mxu0 0
  %592 = vmatprep.mubr.bf16.mxu0 0
  %593 = vmatmul.mubr.bf16.gmra.mxu0 %v555
  %v594 = vpop.f32.mrf.mxu0
  %v595 = vadd.f32 0.0, %v594
  %v596 = vpop.f32.mrf.mxu0
  %v597 = vpop.f32.mrf.mxu0
  %v598 = vadd.f32 0.0, %v597
  %v599 = vpop.f32.mrf.mxu0
  %600 = vmatprep.mubr.bf16.mxu0 0
  %601 = vmatmul.mubr.bf16.gmra.mxu0 %v558
  %v602 = vpop.f32.mrf.mxu0
  %v603 = vadd.f32 0.0, %v602
  %v604 = vpop.f32.mrf.mxu0
  %v605 = vpop.f32.mrf.mxu0
  %v606 = vadd.f32 0.0, %v605
  %v607 = vpop.f32.mrf.mxu0
  %608 = vdwg.mxu0
  %v610 = vlaneseq
  %v611 = vshrl.u32 %v610, 7
  %v612 = vsub.s32 0, %v611
  %v613 = vrot.slane %v49, %v612
  %v615 = vmul.f32 %v595, %v613
  %v616 = vmul.f32 %v598, %v613
  %v617 = vmul.f32 %v603, %v613
  %v618 = vmul.f32 %v606, %v613
  %v620 = vlaneseq
  %v621 = vshrl.u32 %v620, 7
  %v622 = vsub.s32 0, %v621
  %v623 = vrot.slane %v50, %v622
  %v625 = vadd.f32 %v615, %v623
  %v626 = vadd.f32 %v616, %v623
  %v627 = vadd.f32 %v617, %v623
  %v628 = vadd.f32 %v618, %v623
  %vm629 = vcmp.ge.f32.partialorder %v625, 0.0
  %vm630 = vcmp.ge.f32.partialorder %v626, 0.0
  %vm631 = vcmp.ge.f32.partialorder %v627, 0.0
  %vm632 = vcmp.ge.f32.partialorder %v628, 0.0
  %v633 = vmul.f32 %v625, 0.2
  %v634 = vmul.f32 %v626, 0.2
  %v635 = vmul.f32 %v627, 0.2
  %v636 = vmul.f32 %v628, 0.2
  %v637 = vsel %vm629, %v625, %v633
  %v638 = vsel %vm630, %v626, %v634
  %v639 = vsel %vm631, %v627, %v635
  %v640 = vsel %vm632, %v628, %v636
  %v641 = vrot.slane %v33, 7
  %v642 = vrot.slane %v184, 7
  %v643 = vrot.slane %v34, 7
  %v644 = vrot.slane %v185, 7
  %v645 = vrot.slane %v35, 7
  %v646 = vrot.slane %v186, 7
  %v647 = vrot.slane %v36, 7
  %v648 = vrot.slane %v187, 7
  %v657 = vsub.f32 %v148, %v641
  %v658 = vsub.f32 %v149, %v33
  %v659 = vsub.f32 %v150, %v188
  %v660 = vsub.f32 %v151, %v189
  %v661 = vsub.f32 %v152, %v642
  %v662 = vsub.f32 %v153, %v184
  %v663 = vsub.f32 %v154, %v191
  %v664 = vsub.f32 %v155, %v192
  %v665 = vsub.f32 %v156, %v643
  %v666 = vsub.f32 %v157, %v34
  %v667 = vsub.f32 %v158, %v194
  %v668 = vsub.f32 %v159, %v195
  %v669 = vsub.f32 %v160, %v644
  %v670 = vsub.f32 %v161, %v185
  %v671 = vsub.f32 %v162, %v197
  %v672 = vsub.f32 %v163, %v198
  %v673 = vsub.f32 %v164, %v645
  %v674 = vsub.f32 %v165, %v35
  %v675 = vsub.f32 %v166, %v200
  %v676 = vsub.f32 %v167, %v201
  %v677 = vsub.f32 %v168, %v646
  %v678 = vsub.f32 %v169, %v186
  %v679 = vsub.f32 %v170, %v203
  %v680 = vsub.f32 %v171, %v204
  %v681 = vsub.f32 %v172, %v647
  %v682 = vsub.f32 %v173, %v36
  %v683 = vsub.f32 %v174, %v206
  %v684 = vsub.f32 %v175, %v207
  %v685 = vsub.f32 %v176, %v648
  %v686 = vsub.f32 %v177, %v187
  %v687 = vsub.f32 %v178, %v209
  %v688 = vsub.f32 %v179, %v210
  %v689 = vpack.c.bf16 %v657, %v657
  %v690 = vpack.c.bf16 %v658, %v658
  %v691 = vpack.c.bf16 %v659, %v659
  %v692 = vpack.c.bf16 %v660, %v660
  %v693 = vpack.c.bf16 %v661, %v661
  %v694 = vpack.c.bf16 %v662, %v662
  %v695 = vpack.c.bf16 %v663, %v663
  %v696 = vpack.c.bf16 %v664, %v664
  %v697 = vpack.c.bf16 %v665, %v665
  %v698 = vpack.c.bf16 %v666, %v666
  %v699 = vpack.c.bf16 %v667, %v667
  %v700 = vpack.c.bf16 %v668, %v668
  %v701 = vpack.c.bf16 %v669, %v669
  %v702 = vpack.c.bf16 %v670, %v670
  %v703 = vpack.c.bf16 %v671, %v671
  %v704 = vpack.c.bf16 %v672, %v672
  %v705 = vpack.c.bf16 %v673, %v673
  %v706 = vpack.c.bf16 %v674, %v674
  %v707 = vpack.c.bf16 %v675, %v675
  %v708 = vpack.c.bf16 %v676, %v676
  %v709 = vpack.c.bf16 %v677, %v677
  %v710 = vpack.c.bf16 %v678, %v678
  %v711 = vpack.c.bf16 %v679, %v679
  %v712 = vpack.c.bf16 %v680, %v680
  %v713 = vpack.c.bf16 %v681, %v681
  %v714 = vpack.c.bf16 %v682, %v682
  %v715 = vpack.c.bf16 %v683, %v683
  %v716 = vpack.c.bf16 %v684, %v684
  %v717 = vpack.c.bf16 %v685, %v685
  %v718 = vpack.c.bf16 %v686, %v686
  %v719 = vpack.c.bf16 %v687, %v687
  %v720 = vpack.c.bf16 %v688, %v688
  %v753 = vunpack.c.l.b16 %v689
  %v754 = vunpack.c.l.b16 %v690
  %v755 = vunpack.c.l.b16 %v691
  %v756 = vunpack.c.l.b16 %v692
  %v757 = vunpack.c.l.b16 %v693
  %v758 = vunpack.c.l.b16 %v694
  %v759 = vunpack.c.l.b16 %v695
  %v760 = vunpack.c.l.b16 %v696
  %v761 = vunpack.c.l.b16 %v697
  %v762 = vunpack.c.l.b16 %v698
  %v763 = vunpack.c.l.b16 %v699
  %v764 = vunpack.c.l.b16 %v700
  %v765 = vunpack.c.l.b16 %v701
  %v766 = vunpack.c.l.b16 %v702
  %v767 = vunpack.c.l.b16 %v703
  %v768 = vunpack.c.l.b16 %v704
  %v769 = vunpack.c.l.b16 %v705
  %v770 = vunpack.c.l.b16 %v706
  %v771 = vunpack.c.l.b16 %v707
  %v772 = vunpack.c.l.b16 %v708
  %v773 = vunpack.c.l.b16 %v709
  %v774 = vunpack.c.l.b16 %v710
  %v775 = vunpack.c.l.b16 %v711
  %v776 = vunpack.c.l.b16 %v712
  %v777 = vunpack.c.l.b16 %v713
  %v778 = vunpack.c.l.b16 %v714
  %v779 = vunpack.c.l.b16 %v715
  %v780 = vunpack.c.l.b16 %v716
  %v781 = vunpack.c.l.b16 %v717
  %v782 = vunpack.c.l.b16 %v718
  %v783 = vunpack.c.l.b16 %v719
  %v784 = vunpack.c.l.b16 %v720
  %v785 = vrot.slane %v753, 1
  %v786 = vsel %vm373, %v754, %v785
  %v787 = vrot.slane %v755, 7
  %v788 = vsel %vm376, %v787, %v786
  %v789 = vrot.slane %v756, 6
  %v790 = vsel %vm379, %v789, %v788
  %v791 = vrot.slane %v757, 5
  %v792 = vsel %vm382, %v791, %v790
  %v793 = vrot.slane %v758, 4
  %v794 = vsel %vm385, %v793, %v792
  %v795 = vrot.slane %v759, 3
  %v796 = vsel %vm388, %v795, %v794
  %v797 = vrot.slane %v760, 2
  %v798 = vsel %vm391, %v797, %v796
  %v799 = vrot.slane %v761, 1
  %v800 = vsel %vm373, %v762, %v799
  %v801 = vrot.slane %v763, 7
  %v802 = vsel %vm376, %v801, %v800
  %v803 = vrot.slane %v764, 6
  %v804 = vsel %vm379, %v803, %v802
  %v805 = vrot.slane %v765, 5
  %v806 = vsel %vm382, %v805, %v804
  %v807 = vrot.slane %v766, 4
  %v808 = vsel %vm385, %v807, %v806
  %v809 = vrot.slane %v767, 3
  %v810 = vsel %vm388, %v809, %v808
  %v811 = vrot.slane %v768, 2
  %v812 = vsel %vm391, %v811, %v810
  %v813 = vrot.slane %v769, 1
  %v814 = vsel %vm373, %v770, %v813
  %v815 = vrot.slane %v771, 7
  %v816 = vsel %vm376, %v815, %v814
  %v817 = vrot.slane %v772, 6
  %v818 = vsel %vm379, %v817, %v816
  %v819 = vrot.slane %v773, 5
  %v820 = vsel %vm382, %v819, %v818
  %v821 = vrot.slane %v774, 4
  %v822 = vsel %vm385, %v821, %v820
  %v823 = vrot.slane %v775, 3
  %v824 = vsel %vm388, %v823, %v822
  %v825 = vrot.slane %v776, 2
  %v826 = vsel %vm391, %v825, %v824
  %v827 = vrot.slane %v777, 1
  %v828 = vsel %vm373, %v778, %v827
  %v829 = vrot.slane %v779, 7
  %v830 = vsel %vm376, %v829, %v828
  %v831 = vrot.slane %v780, 6
  %v832 = vsel %vm379, %v831, %v830
  %v833 = vrot.slane %v781, 5
  %v834 = vsel %vm382, %v833, %v832
  %v835 = vrot.slane %v782, 4
  %v836 = vsel %vm385, %v835, %v834
  %v837 = vrot.slane %v783, 3
  %v838 = vsel %vm388, %v837, %v836
  %v839 = vrot.slane %v784, 2
  %v840 = vsel %vm391, %v839, %v838
  %v841 = vpack.c.b16 %v812, %v798
  %v842 = vpack.c.b16 %v840, %v826
  %v844 = vsel %vm53, %v841, 0
  %v847 = vsel %vm53, %v842, 0
  %849 = vmatprep.subr.bf16.mxu0 0
  %850 = vmatpush1.bf16.msra.mxu0 0
  %851 = vmatprep.subr.bf16.mxu0 0
  %852 = vmatpush1.bf16.msra.mxu0 0
  %853 = vmatprep.subr.bf16.mxu0 0
  %854 = vmatpush1.bf16.msra.mxu0 0
  %855 = vmatprep.subr.bf16.mxu0 0
  %856 = vmatpush1.bf16.msra.mxu0 0
  %857 = vmatprep.subr.bf16.mxu0 0
  %858 = vmatpush1.bf16.msra.mxu0 0
  %859 = vmatprep.subr.bf16.mxu0 0
  %860 = vmatpush1.bf16.msra.mxu0 0
  %861 = vmatprep.subr.bf16.mxu0 0
  %862 = vmatpush1.bf16.msra.mxu0 0
  %863 = vmatprep.subr.bf16.mxu0 0
  %864 = vmatpush1.bf16.msra.mxu0 %v444
  %865 = vmatprep.subr.bf16.mxu0 0
  %866 = vmatpush2.bf16.msra.mxu0 0
  %867 = vmatprep.subr.bf16.mxu0 0
  %868 = vmatpush2.bf16.msra.mxu0 0
  %869 = vmatprep.subr.bf16.mxu0 0
  %870 = vmatpush2.bf16.msra.mxu0 0
  %871 = vmatprep.subr.bf16.mxu0 0
  %872 = vmatpush2.bf16.msra.mxu0 0
  %873 = vmatprep.subr.bf16.mxu0 0
  %874 = vmatpush2.bf16.msra.mxu0 0
  %875 = vmatprep.subr.bf16.mxu0 0
  %876 = vmatpush2.bf16.msra.mxu0 0
  %877 = vmatprep.subr.bf16.mxu0 0
  %878 = vmatpush2.bf16.msra.mxu0 0
  %879 = vmatprep.subr.bf16.mxu0 0
  %880 = vmatpush2.bf16.msra.mxu0 0
  %881 = vmatprep.mubr.bf16.mxu0 0
  %882 = vmatmul.mubr.bf16.gmra.mxu0 %v844
  %v883 = vpop.f32.mrf.mxu0
  %v884 = vadd.f32 %v102, %v883
  %v885 = vpop.f32.mrf.mxu0
  %v886 = vpop.f32.mrf.mxu0
  %v887 = vadd.f32 %v105, %v886
  %v888 = vpop.f32.mrf.mxu0
  %889 = vmatprep.mubr.bf16.mxu0 0
  %890 = vmatmul.mubr.bf16.gmra.mxu0 %v847
  %v891 = vpop.f32.mrf.mxu0
  %v892 = vadd.f32 %v110, %v891
  %v893 = vpop.f32.mrf.mxu0
  %v894 = vpop.f32.mrf.mxu0
  %v895 = vadd.f32 %v113, %v894
  %v896 = vpop.f32.mrf.mxu0
  %897 = vdwg.mxu0
  %v898 = vmul.f32 %v884, %v499
  %v899 = vmul.f32 %v887, %v499
  %v900 = vmul.f32 %v892, %v499
  %v901 = vmul.f32 %v895, %v499
  %v902 = vadd.f32 %v898, %v509
  %v903 = vadd.f32 %v899, %v509
  %v904 = vadd.f32 %v900, %v509
  %v905 = vadd.f32 %v901, %v509
  %vm906 = vcmp.ge.f32.partialorder %v902, 0.0
  %vm907 = vcmp.ge.f32.partialorder %v903, 0.0
  %vm908 = vcmp.ge.f32.partialorder %v904, 0.0
  %vm909 = vcmp.ge.f32.partialorder %v905, 0.0
  %v910 = vmul.f32 %v902, 0.2
  %v911 = vmul.f32 %v903, 0.2
  %v912 = vmul.f32 %v904, 0.2
  %v913 = vmul.f32 %v905, 0.2
  %v914 = vsel %vm906, %v902, %v910
  %v915 = vsel %vm907, %v903, %v911
  %v916 = vsel %vm908, %v904, %v912
  %v917 = vsel %vm909, %v905, %v913
  %v918 = vpack.c.bf16 %v915, %v914
  %v919 = vpack.c.bf16 %v917, %v916
  %v921 = vsel %vm553, %v918, 0
  %v924 = vsel %vm553, %v919, 0
  %926 = vmatprep.subr.bf16.mxu0 0
  %927 = vmatpush1.bf16.msra.mxu0 0
  %928 = vmatprep.subr.bf16.mxu0 0
  %929 = vmatpush1.bf16.msra.mxu0 0
  %930 = vmatprep.subr.bf16.mxu0 0
  %931 = vmatpush1.bf16.msra.mxu0 0
  %932 = vmatprep.subr.bf16.mxu0 0
  %933 = vmatpush1.bf16.msra.mxu0 0
  %934 = vmatprep.subr.bf16.mxu0 0
  %935 = vmatpush1.bf16.msra.mxu0 %v548
  %936 = vmatprep.subr.bf16.mxu0 0
  %937 = vmatpush1.bf16.msra.mxu0 %v547
  %938 = vmatprep.subr.bf16.mxu0 0
  %939 = vmatpush1.bf16.msra.mxu0 %v546
  %940 = vmatprep.subr.bf16.mxu0 0
  %941 = vmatpush1.bf16.msra.mxu0 %v545
  %942 = vmatprep.subr.bf16.mxu0 0
  %943 = vmatpush2.bf16.msra.mxu0 0
  %944 = vmatprep.subr.bf16.mxu0 0
  %945 = vmatpush2.bf16.msra.mxu0 0
  %946 = vmatprep.subr.bf16.mxu0 0
  %947 = vmatpush2.bf16.msra.mxu0 0
  %948 = vmatprep.subr.bf16.mxu0 0
  %949 = vmatpush2.bf16.msra.mxu0 0
  %950 = vmatprep.subr.bf16.mxu0 0
  %951 = vmatpush2.bf16.msra.mxu0 0
  %952 = vmatprep.subr.bf16.mxu0 0
  %953 = vmatpush2.bf16.msra.mxu0 0
  %954 = vmatprep.subr.bf16.mxu0 0
  %955 = vmatpush2.bf16.msra.mxu0 0
  %956 = vmatprep.subr.bf16.mxu0 0
  %957 = vmatpush2.bf16.msra.mxu0 0
  %958 = vmatprep.mubr.bf16.mxu0 0
  %959 = vmatmul.mubr.bf16.gmra.mxu0 %v921
  %v960 = vpop.f32.mrf.mxu0
  %v961 = vadd.f32 0.0, %v960
  %v962 = vpop.f32.mrf.mxu0
  %v963 = vpop.f32.mrf.mxu0
  %v964 = vadd.f32 0.0, %v963
  %v965 = vpop.f32.mrf.mxu0
  %966 = vmatprep.mubr.bf16.mxu0 0
  %967 = vmatmul.mubr.bf16.gmra.mxu0 %v924
  %v968 = vpop.f32.mrf.mxu0
  %v969 = vadd.f32 0.0, %v968
  %v970 = vpop.f32.mrf.mxu0
  %v971 = vpop.f32.mrf.mxu0
  %v972 = vadd.f32 0.0, %v971
  %v973 = vpop.f32.mrf.mxu0
  %974 = vdwg.mxu0
  %v975 = vmul.f32 %v961, %v613
  %v976 = vmul.f32 %v964, %v613
  %v977 = vmul.f32 %v969, %v613
  %v978 = vmul.f32 %v972, %v613
  %v979 = vadd.f32 %v975, %v623
  %v980 = vadd.f32 %v976, %v623
  %v981 = vadd.f32 %v977, %v623
  %v982 = vadd.f32 %v978, %v623
  %vm983 = vcmp.ge.f32.partialorder %v979, 0.0
  %vm984 = vcmp.ge.f32.partialorder %v980, 0.0
  %vm985 = vcmp.ge.f32.partialorder %v981, 0.0
  %vm986 = vcmp.ge.f32.partialorder %v982, 0.0
  %v987 = vmul.f32 %v979, 0.2
  %v988 = vmul.f32 %v980, 0.2
  %v989 = vmul.f32 %v981, 0.2
  %v990 = vmul.f32 %v982, 0.2
  %v991 = vsel %vm983, %v979, %v987
  %v992 = vsel %vm984, %v980, %v988
  %v993 = vsel %vm985, %v981, %v989
  %v994 = vsel %vm986, %v982, %v990
  %v995 = vmax.f32 %v637, %v991
  %v996 = vmax.f32 %v638, %v992
  %v997 = vmax.f32 %v639, %v993
  %v998 = vmax.f32 %v640, %v994
  %v999 = vrot.slane %v33, 6
  %v1000 = vrot.slane %v184, 6
  %v1001 = vrot.slane %v34, 6
  %v1002 = vrot.slane %v185, 6
  %v1003 = vrot.slane %v35, 6
  %v1004 = vrot.slane %v186, 6
  %v1005 = vrot.slane %v36, 6
  %v1006 = vrot.slane %v187, 6
  %v1015 = vsub.f32 %v148, %v999
  %v1016 = vsub.f32 %v149, %v641
  %v1017 = vsub.f32 %v150, %v33
  %v1018 = vsub.f32 %v151, %v188
  %v1019 = vsub.f32 %v152, %v1000
  %v1020 = vsub.f32 %v153, %v642
  %v1021 = vsub.f32 %v154, %v184
  %v1022 = vsub.f32 %v155, %v191
  %v1023 = vsub.f32 %v156, %v1001
  %v1024 = vsub.f32 %v157, %v643
  %v1025 = vsub.f32 %v158, %v34
  %v1026 = vsub.f32 %v159, %v194
  %v1027 = vsub.f32 %v160, %v1002
  %v1028 = vsub.f32 %v161, %v644
  %v1029 = vsub.f32 %v162, %v185
  %v1030 = vsub.f32 %v163, %v197
  %v1031 = vsub.f32 %v164, %v1003
  %v1032 = vsub.f32 %v165, %v645
  %v1033 = vsub.f32 %v166, %v35
  %v1034 = vsub.f32 %v167, %v200
  %v1035 = vsub.f32 %v168, %v1004
  %v1036 = vsub.f32 %v169, %v646
  %v1037 = vsub.f32 %v170, %v186
  %v1038 = vsub.f32 %v171, %v203
  %v1039 = vsub.f32 %v172, %v1005
  %v1040 = vsub.f32 %v173, %v647
  %v1041 = vsub.f32 %v174, %v36
  %v1042 = vsub.f32 %v175, %v206
  %v1043 = vsub.f32 %v176, %v1006
  %v1044 = vsub.f32 %v177, %v648
  %v1045 = vsub.f32 %v178, %v187
  %v1046 = vsub.f32 %v179, %v209
  %v1047 = vpack.c.bf16 %v1015, %v1015
  %v1048 = vpack.c.bf16 %v1016, %v1016
  %v1049 = vpack.c.bf16 %v1017, %v1017
  %v1050 = vpack.c.bf16 %v1018, %v1018
  %v1051 = vpack.c.bf16 %v1019, %v1019
  %v1052 = vpack.c.bf16 %v1020, %v1020
  %v1053 = vpack.c.bf16 %v1021, %v1021
  %v1054 = vpack.c.bf16 %v1022, %v1022
  %v1055 = vpack.c.bf16 %v1023, %v1023
  %v1056 = vpack.c.bf16 %v1024, %v1024
  %v1057 = vpack.c.bf16 %v1025, %v1025
  %v1058 = vpack.c.bf16 %v1026, %v1026
  %v1059 = vpack.c.bf16 %v1027, %v1027
  %v1060 = vpack.c.bf16 %v1028, %v1028
  %v1061 = vpack.c.bf16 %v1029, %v1029
  %v1062 = vpack.c.bf16 %v1030, %v1030
  %v1063 = vpack.c.bf16 %v1031, %v1031
  %v1064 = vpack.c.bf16 %v1032, %v1032
  %v1065 = vpack.c.bf16 %v1033, %v1033
  %v1066 = vpack.c.bf16 %v1034, %v1034
  %v1067 = vpack.c.bf16 %v1035, %v1035
  %v1068 = vpack.c.bf16 %v1036, %v1036
  %v1069 = vpack.c.bf16 %v1037, %v1037
  %v1070 = vpack.c.bf16 %v1038, %v1038
  %v1071 = vpack.c.bf16 %v1039, %v1039
  %v1072 = vpack.c.bf16 %v1040, %v1040
  %v1073 = vpack.c.bf16 %v1041, %v1041
  %v1074 = vpack.c.bf16 %v1042, %v1042
  %v1075 = vpack.c.bf16 %v1043, %v1043
  %v1076 = vpack.c.bf16 %v1044, %v1044
  %v1077 = vpack.c.bf16 %v1045, %v1045
  %v1078 = vpack.c.bf16 %v1046, %v1046
  %v1111 = vunpack.c.l.b16 %v1047
  %v1112 = vunpack.c.l.b16 %v1048
  %v1113 = vunpack.c.l.b16 %v1049
  %v1114 = vunpack.c.l.b16 %v1050
  %v1115 = vunpack.c.l.b16 %v1051
  %v1116 = vunpack.c.l.b16 %v1052
  %v1117 = vunpack.c.l.b16 %v1053
  %v1118 = vunpack.c.l.b16 %v1054
  %v1119 = vunpack.c.l.b16 %v1055
  %v1120 = vunpack.c.l.b16 %v1056
  %v1121 = vunpack.c.l.b16 %v1057
  %v1122 = vunpack.c.l.b16 %v1058
  %v1123 = vunpack.c.l.b16 %v1059
  %v1124 = vunpack.c.l.b16 %v1060
  %v1125 = vunpack.c.l.b16 %v1061
  %v1126 = vunpack.c.l.b16 %v1062
  %v1127 = vunpack.c.l.b16 %v1063
  %v1128 = vunpack.c.l.b16 %v1064
  %v1129 = vunpack.c.l.b16 %v1065
  %v1130 = vunpack.c.l.b16 %v1066
  %v1131 = vunpack.c.l.b16 %v1067
  %v1132 = vunpack.c.l.b16 %v1068
  %v1133 = vunpack.c.l.b16 %v1069
  %v1134 = vunpack.c.l.b16 %v1070
  %v1135 = vunpack.c.l.b16 %v1071
  %v1136 = vunpack.c.l.b16 %v1072
  %v1137 = vunpack.c.l.b16 %v1073
  %v1138 = vunpack.c.l.b16 %v1074
  %v1139 = vunpack.c.l.b16 %v1075
  %v1140 = vunpack.c.l.b16 %v1076
  %v1141 = vunpack.c.l.b16 %v1077
  %v1142 = vunpack.c.l.b16 %v1078
  %v1143 = vrot.slane %v1111, 2
  %v1144 = vrot.slane %v1112, 1
  %v1145 = vsel %vm373, %v1144, %v1143
  %v1146 = vsel %vm376, %v1113, %v1145
  %v1147 = vrot.slane %v1114, 7
  %v1148 = vsel %vm379, %v1147, %v1146
  %v1149 = vrot.slane %v1115, 6
  %v1150 = vsel %vm382, %v1149, %v1148
  %v1151 = vrot.slane %v1116, 5
  %v1152 = vsel %vm385, %v1151, %v1150
  %v1153 = vrot.slane %v1117, 4
  %v1154 = vsel %vm388, %v1153, %v1152
  %v1155 = vrot.slane %v1118, 3
  %v1156 = vsel %vm391, %v1155, %v1154
  %v1157 = vrot.slane %v1119, 2
  %v1158 = vrot.slane %v1120, 1
  %v1159 = vsel %vm373, %v1158, %v1157
  %v1160 = vsel %vm376, %v1121, %v1159
  %v1161 = vrot.slane %v1122, 7
  %v1162 = vsel %vm379, %v1161, %v1160
  %v1163 = vrot.slane %v1123, 6
  %v1164 = vsel %vm382, %v1163, %v1162
  %v1165 = vrot.slane %v1124, 5
  %v1166 = vsel %vm385, %v1165, %v1164
  %v1167 = vrot.slane %v1125, 4
  %v1168 = vsel %vm388, %v1167, %v1166
  %v1169 = vrot.slane %v1126, 3
  %v1170 = vsel %vm391, %v1169, %v1168
  %v1171 = vrot.slane %v1127, 2
  %v1172 = vrot.slane %v1128, 1
  %v1173 = vsel %vm373, %v1172, %v1171
  %v1174 = vsel %vm376, %v1129, %v1173
  %v1175 = vrot.slane %v1130, 7
  %v1176 = vsel %vm379, %v1175, %v1174
  %v1177 = vrot.slane %v1131, 6
  %v1178 = vsel %vm382, %v1177, %v1176
  %v1179 = vrot.slane %v1132, 5
  %v1180 = vsel %vm385, %v1179, %v1178
  %v1181 = vrot.slane %v1133, 4
  %v1182 = vsel %vm388, %v1181, %v1180
  %v1183 = vrot.slane %v1134, 3
  %v1184 = vsel %vm391, %v1183, %v1182
  %v1185 = vrot.slane %v1135, 2
  %v1186 = vrot.slane %v1136, 1
  %v1187 = vsel %vm373, %v1186, %v1185
  %v1188 = vsel %vm376, %v1137, %v1187
  %v1189 = vrot.slane %v1138, 7
  %v1190 = vsel %vm379, %v1189, %v1188
  %v1191 = vrot.slane %v1139, 6
  %v1192 = vsel %vm382, %v1191, %v1190
  %v1193 = vrot.slane %v1140, 5
  %v1194 = vsel %vm385, %v1193, %v1192
  %v1195 = vrot.slane %v1141, 4
  %v1196 = vsel %vm388, %v1195, %v1194
  %v1197 = vrot.slane %v1142, 3
  %v1198 = vsel %vm391, %v1197, %v1196
  %v1199 = vpack.c.b16 %v1170, %v1156
  %v1200 = vpack.c.b16 %v1198, %v1184
  %v1202 = vsel %vm53, %v1199, 0
  %v1205 = vsel %vm53, %v1200, 0
  %1207 = vmatprep.subr.bf16.mxu0 0
  %1208 = vmatpush1.bf16.msra.mxu0 0
  %1209 = vmatprep.subr.bf16.mxu0 0
  %1210 = vmatpush1.bf16.msra.mxu0 0
  %1211 = vmatprep.subr.bf16.mxu0 0
  %1212 = vmatpush1.bf16.msra.mxu0 0
  %1213 = vmatprep.subr.bf16.mxu0 0
  %1214 = vmatpush1.bf16.msra.mxu0 0
  %1215 = vmatprep.subr.bf16.mxu0 0
  %1216 = vmatpush1.bf16.msra.mxu0 0
  %1217 = vmatprep.subr.bf16.mxu0 0
  %1218 = vmatpush1.bf16.msra.mxu0 0
  %1219 = vmatprep.subr.bf16.mxu0 0
  %1220 = vmatpush1.bf16.msra.mxu0 0
  %1221 = vmatprep.subr.bf16.mxu0 0
  %1222 = vmatpush1.bf16.msra.mxu0 %v444
  %1223 = vmatprep.subr.bf16.mxu0 0
  %1224 = vmatpush2.bf16.msra.mxu0 0
  %1225 = vmatprep.subr.bf16.mxu0 0
  %1226 = vmatpush2.bf16.msra.mxu0 0
  %1227 = vmatprep.subr.bf16.mxu0 0
  %1228 = vmatpush2.bf16.msra.mxu0 0
  %1229 = vmatprep.subr.bf16.mxu0 0
  %1230 = vmatpush2.bf16.msra.mxu0 0
  %1231 = vmatprep.subr.bf16.mxu0 0
  %1232 = vmatpush2.bf16.msra.mxu0 0
  %1233 = vmatprep.subr.bf16.mxu0 0
  %1234 = vmatpush2.bf16.msra.mxu0 0
  %1235 = vmatprep.subr.bf16.mxu0 0
  %1236 = vmatpush2.bf16.msra.mxu0 0
  %1237 = vmatprep.subr.bf16.mxu0 0
  %1238 = vmatpush2.bf16.msra.mxu0 0
  %1239 = vmatprep.mubr.bf16.mxu0 0
  %1240 = vmatmul.mubr.bf16.gmra.mxu0 %v1202
  %v1241 = vpop.f32.mrf.mxu0
  %v1242 = vadd.f32 %v102, %v1241
  %v1243 = vpop.f32.mrf.mxu0
  %v1244 = vpop.f32.mrf.mxu0
  %v1245 = vadd.f32 %v105, %v1244
  %v1246 = vpop.f32.mrf.mxu0
  %1247 = vmatprep.mubr.bf16.mxu0 0
  %1248 = vmatmul.mubr.bf16.gmra.mxu0 %v1205
  %v1249 = vpop.f32.mrf.mxu0
  %v1250 = vadd.f32 %v110, %v1249
  %v1251 = vpop.f32.mrf.mxu0
  %v1252 = vpop.f32.mrf.mxu0
  %v1253 = vadd.f32 %v113, %v1252
  %v1254 = vpop.f32.mrf.mxu0
  %1255 = vdwg.mxu0
  %v1256 = vmul.f32 %v1242, %v499
  %v1257 = vmul.f32 %v1245, %v499
  %v1258 = vmul.f32 %v1250, %v499
  %v1259 = vmul.f32 %v1253, %v499
  %v1260 = vadd.f32 %v1256, %v509
  %v1261 = vadd.f32 %v1257, %v509
  %v1262 = vadd.f32 %v1258, %v509
  %v1263 = vadd.f32 %v1259, %v509
  %vm1264 = vcmp.ge.f32.partialorder %v1260, 0.0
  %vm1265 = vcmp.ge.f32.partialorder %v1261, 0.0
  %vm1266 = vcmp.ge.f32.partialorder %v1262, 0.0
  %vm1267 = vcmp.ge.f32.partialorder %v1263, 0.0
  %v1268 = vmul.f32 %v1260, 0.2
  %v1269 = vmul.f32 %v1261, 0.2
  %v1270 = vmul.f32 %v1262, 0.2
  %v1271 = vmul.f32 %v1263, 0.2
  %v1272 = vsel %vm1264, %v1260, %v1268
  %v1273 = vsel %vm1265, %v1261, %v1269
  %v1274 = vsel %vm1266, %v1262, %v1270
  %v1275 = vsel %vm1267, %v1263, %v1271
  %v1276 = vpack.c.bf16 %v1273, %v1272
  %v1277 = vpack.c.bf16 %v1275, %v1274
  %v1279 = vsel %vm553, %v1276, 0
  %v1282 = vsel %vm553, %v1277, 0
  %1284 = vmatprep.subr.bf16.mxu0 0
  %1285 = vmatpush1.bf16.msra.mxu0 0
  %1286 = vmatprep.subr.bf16.mxu0 0
  %1287 = vmatpush1.bf16.msra.mxu0 0
  %1288 = vmatprep.subr.bf16.mxu0 0
  %1289 = vmatpush1.bf16.msra.mxu0 0
  %1290 = vmatprep.subr.bf16.mxu0 0
  %1291 = vmatpush1.bf16.msra.mxu0 0
  %1292 = vmatprep.subr.bf16.mxu0 0
  %1293 = vmatpush1.bf16.msra.mxu0 %v548
  %1294 = vmatprep.subr.bf16.mxu0 0
  %1295 = vmatpush1.bf16.msra.mxu0 %v547
  %1296 = vmatprep.subr.bf16.mxu0 0
  %1297 = vmatpush1.bf16.msra.mxu0 %v546
  %1298 = vmatprep.subr.bf16.mxu0 0
  %1299 = vmatpush1.bf16.msra.mxu0 %v545
  %1300 = vmatprep.subr.bf16.mxu0 0
  %1301 = vmatpush2.bf16.msra.mxu0 0
  %1302 = vmatprep.subr.bf16.mxu0 0
  %1303 = vmatpush2.bf16.msra.mxu0 0
  %1304 = vmatprep.subr.bf16.mxu0 0
  %1305 = vmatpush2.bf16.msra.mxu0 0
  %1306 = vmatprep.subr.bf16.mxu0 0
  %1307 = vmatpush2.bf16.msra.mxu0 0
  %1308 = vmatprep.subr.bf16.mxu0 0
  %1309 = vmatpush2.bf16.msra.mxu0 0
  %1310 = vmatprep.subr.bf16.mxu0 0
  %1311 = vmatpush2.bf16.msra.mxu0 0
  %1312 = vmatprep.subr.bf16.mxu0 0
  %1313 = vmatpush2.bf16.msra.mxu0 0
  %1314 = vmatprep.subr.bf16.mxu0 0
  %1315 = vmatpush2.bf16.msra.mxu0 0
  %1316 = vmatprep.mubr.bf16.mxu0 0
  %1317 = vmatmul.mubr.bf16.gmra.mxu0 %v1279
  %v1318 = vpop.f32.mrf.mxu0
  %v1319 = vadd.f32 0.0, %v1318
  %v1320 = vpop.f32.mrf.mxu0
  %v1321 = vpop.f32.mrf.mxu0
  %v1322 = vadd.f32 0.0, %v1321
  %v1323 = vpop.f32.mrf.mxu0
  %1324 = vmatprep.mubr.bf16.mxu0 0
  %1325 = vmatmul.mubr.bf16.gmra.mxu0 %v1282
  %v1326 = vpop.f32.mrf.mxu0
  %v1327 = vadd.f32 0.0, %v1326
  %v1328 = vpop.f32.mrf.mxu0
  %v1329 = vpop.f32.mrf.mxu0
  %v1330 = vadd.f32 0.0, %v1329
  %v1331 = vpop.f32.mrf.mxu0
  %1332 = vdwg.mxu0
  %v1333 = vmul.f32 %v1319, %v613
  %v1334 = vmul.f32 %v1322, %v613
  %v1335 = vmul.f32 %v1327, %v613
  %v1336 = vmul.f32 %v1330, %v613
  %v1337 = vadd.f32 %v1333, %v623
  %v1338 = vadd.f32 %v1334, %v623
  %v1339 = vadd.f32 %v1335, %v623
  %v1340 = vadd.f32 %v1336, %v623
  %vm1341 = vcmp.ge.f32.partialorder %v1337, 0.0
  %vm1342 = vcmp.ge.f32.partialorder %v1338, 0.0
  %vm1343 = vcmp.ge.f32.partialorder %v1339, 0.0
  %vm1344 = vcmp.ge.f32.partialorder %v1340, 0.0
  %v1345 = vmul.f32 %v1337, 0.2
  %v1346 = vmul.f32 %v1338, 0.2
  %v1347 = vmul.f32 %v1339, 0.2
  %v1348 = vmul.f32 %v1340, 0.2
  %v1349 = vsel %vm1341, %v1337, %v1345
  %v1350 = vsel %vm1342, %v1338, %v1346
  %v1351 = vsel %vm1343, %v1339, %v1347
  %v1352 = vsel %vm1344, %v1340, %v1348
  %v1353 = vmax.f32 %v995, %v1349
  %v1354 = vmax.f32 %v996, %v1350
  %v1355 = vmax.f32 %v997, %v1351
  %v1356 = vmax.f32 %v998, %v1352
  %v1357 = vrot.slane %v33, 5
  %v1358 = vrot.slane %v184, 5
  %v1359 = vrot.slane %v34, 5
  %v1360 = vrot.slane %v185, 5
  %v1361 = vrot.slane %v35, 5
  %v1362 = vrot.slane %v186, 5
  %v1363 = vrot.slane %v36, 5
  %v1364 = vrot.slane %v187, 5
  %v1373 = vsub.f32 %v148, %v1357
  %v1374 = vsub.f32 %v149, %v999
  %v1375 = vsub.f32 %v150, %v641
  %v1376 = vsub.f32 %v151, %v33
  %v1377 = vsub.f32 %v152, %v1358
  %v1378 = vsub.f32 %v153, %v1000
  %v1379 = vsub.f32 %v154, %v642
  %v1380 = vsub.f32 %v155, %v184
  %v1381 = vsub.f32 %v156, %v1359
  %v1382 = vsub.f32 %v157, %v1001
  %v1383 = vsub.f32 %v158, %v643
  %v1384 = vsub.f32 %v159, %v34
  %v1385 = vsub.f32 %v160, %v1360
  %v1386 = vsub.f32 %v161, %v1002
  %v1387 = vsub.f32 %v162, %v644
  %v1388 = vsub.f32 %v163, %v185
  %v1389 = vsub.f32 %v164, %v1361
  %v1390 = vsub.f32 %v165, %v1003
  %v1391 = vsub.f32 %v166, %v645
  %v1392 = vsub.f32 %v167, %v35
  %v1393 = vsub.f32 %v168, %v1362
  %v1394 = vsub.f32 %v169, %v1004
  %v1395 = vsub.f32 %v170, %v646
  %v1396 = vsub.f32 %v171, %v186
  %v1397 = vsub.f32 %v172, %v1363
  %v1398 = vsub.f32 %v173, %v1005
  %v1399 = vsub.f32 %v174, %v647
  %v1400 = vsub.f32 %v175, %v36
  %v1401 = vsub.f32 %v176, %v1364
  %v1402 = vsub.f32 %v177, %v1006
  %v1403 = vsub.f32 %v178, %v648
  %v1404 = vsub.f32 %v179, %v187
  %v1405 = vpack.c.bf16 %v1373, %v1373
  %v1406 = vpack.c.bf16 %v1374, %v1374
  %v1407 = vpack.c.bf16 %v1375, %v1375
  %v1408 = vpack.c.bf16 %v1376, %v1376
  %v1409 = vpack.c.bf16 %v1377, %v1377
  %v1410 = vpack.c.bf16 %v1378, %v1378
  %v1411 = vpack.c.bf16 %v1379, %v1379
  %v1412 = vpack.c.bf16 %v1380, %v1380
  %v1413 = vpack.c.bf16 %v1381, %v1381
  %v1414 = vpack.c.bf16 %v1382, %v1382
  %v1415 = vpack.c.bf16 %v1383, %v1383
  %v1416 = vpack.c.bf16 %v1384, %v1384
  %v1417 = vpack.c.bf16 %v1385, %v1385
  %v1418 = vpack.c.bf16 %v1386, %v1386
  %v1419 = vpack.c.bf16 %v1387, %v1387
  %v1420 = vpack.c.bf16 %v1388, %v1388
  %v1421 = vpack.c.bf16 %v1389, %v1389
  %v1422 = vpack.c.bf16 %v1390, %v1390
  %v1423 = vpack.c.bf16 %v1391, %v1391
  %v1424 = vpack.c.bf16 %v1392, %v1392
  %v1425 = vpack.c.bf16 %v1393, %v1393
  %v1426 = vpack.c.bf16 %v1394, %v1394
  %v1427 = vpack.c.bf16 %v1395, %v1395
  %v1428 = vpack.c.bf16 %v1396, %v1396
  %v1429 = vpack.c.bf16 %v1397, %v1397
  %v1430 = vpack.c.bf16 %v1398, %v1398
  %v1431 = vpack.c.bf16 %v1399, %v1399
  %v1432 = vpack.c.bf16 %v1400, %v1400
  %v1433 = vpack.c.bf16 %v1401, %v1401
  %v1434 = vpack.c.bf16 %v1402, %v1402
  %v1435 = vpack.c.bf16 %v1403, %v1403
  %v1436 = vpack.c.bf16 %v1404, %v1404
  %v1469 = vunpack.c.l.b16 %v1405
  %v1470 = vunpack.c.l.b16 %v1406
  %v1471 = vunpack.c.l.b16 %v1407
  %v1472 = vunpack.c.l.b16 %v1408
  %v1473 = vunpack.c.l.b16 %v1409
  %v1474 = vunpack.c.l.b16 %v1410
  %v1475 = vunpack.c.l.b16 %v1411
  %v1476 = vunpack.c.l.b16 %v1412
  %v1477 = vunpack.c.l.b16 %v1413
  %v1478 = vunpack.c.l.b16 %v1414
  %v1479 = vunpack.c.l.b16 %v1415
  %v1480 = vunpack.c.l.b16 %v1416
  %v1481 = vunpack.c.l.b16 %v1417
  %v1482 = vunpack.c.l.b16 %v1418
  %v1483 = vunpack.c.l.b16 %v1419
  %v1484 = vunpack.c.l.b16 %v1420
  %v1485 = vunpack.c.l.b16 %v1421
  %v1486 = vunpack.c.l.b16 %v1422
  %v1487 = vunpack.c.l.b16 %v1423
  %v1488 = vunpack.c.l.b16 %v1424
  %v1489 = vunpack.c.l.b16 %v1425
  %v1490 = vunpack.c.l.b16 %v1426
  %v1491 = vunpack.c.l.b16 %v1427
  %v1492 = vunpack.c.l.b16 %v1428
  %v1493 = vunpack.c.l.b16 %v1429
  %v1494 = vunpack.c.l.b16 %v1430
  %v1495 = vunpack.c.l.b16 %v1431
  %v1496 = vunpack.c.l.b16 %v1432
  %v1497 = vunpack.c.l.b16 %v1433
  %v1498 = vunpack.c.l.b16 %v1434
  %v1499 = vunpack.c.l.b16 %v1435
  %v1500 = vunpack.c.l.b16 %v1436
  %v1501 = vrot.slane %v1469, 3
  %v1502 = vrot.slane %v1470, 2
  %v1503 = vsel %vm373, %v1502, %v1501
  %v1504 = vrot.slane %v1471, 1
  %v1505 = vsel %vm376, %v1504, %v1503
  %v1506 = vsel %vm379, %v1472, %v1505
  %v1507 = vrot.slane %v1473, 7
  %v1508 = vsel %vm382, %v1507, %v1506
  %v1509 = vrot.slane %v1474, 6
  %v1510 = vsel %vm385, %v1509, %v1508
  %v1511 = vrot.slane %v1475, 5
  %v1512 = vsel %vm388, %v1511, %v1510
  %v1513 = vrot.slane %v1476, 4
  %v1514 = vsel %vm391, %v1513, %v1512
  %v1515 = vrot.slane %v1477, 3
  %v1516 = vrot.slane %v1478, 2
  %v1517 = vsel %vm373, %v1516, %v1515
  %v1518 = vrot.slane %v1479, 1
  %v1519 = vsel %vm376, %v1518, %v1517
  %v1520 = vsel %vm379, %v1480, %v1519
  %v1521 = vrot.slane %v1481, 7
  %v1522 = vsel %vm382, %v1521, %v1520
  %v1523 = vrot.slane %v1482, 6
  %v1524 = vsel %vm385, %v1523, %v1522
  %v1525 = vrot.slane %v1483, 5
  %v1526 = vsel %vm388, %v1525, %v1524
  %v1527 = vrot.slane %v1484, 4
  %v1528 = vsel %vm391, %v1527, %v1526
  %v1529 = vrot.slane %v1485, 3
  %v1530 = vrot.slane %v1486, 2
  %v1531 = vsel %vm373, %v1530, %v1529
  %v1532 = vrot.slane %v1487, 1
  %v1533 = vsel %vm376, %v1532, %v1531
  %v1534 = vsel %vm379, %v1488, %v1533
  %v1535 = vrot.slane %v1489, 7
  %v1536 = vsel %vm382, %v1535, %v1534
  %v1537 = vrot.slane %v1490, 6
  %v1538 = vsel %vm385, %v1537, %v1536
  %v1539 = vrot.slane %v1491, 5
  %v1540 = vsel %vm388, %v1539, %v1538
  %v1541 = vrot.slane %v1492, 4
  %v1542 = vsel %vm391, %v1541, %v1540
  %v1543 = vrot.slane %v1493, 3
  %v1544 = vrot.slane %v1494, 2
  %v1545 = vsel %vm373, %v1544, %v1543
  %v1546 = vrot.slane %v1495, 1
  %v1547 = vsel %vm376, %v1546, %v1545
  %v1548 = vsel %vm379, %v1496, %v1547
  %v1549 = vrot.slane %v1497, 7
  %v1550 = vsel %vm382, %v1549, %v1548
  %v1551 = vrot.slane %v1498, 6
  %v1552 = vsel %vm385, %v1551, %v1550
  %v1553 = vrot.slane %v1499, 5
  %v1554 = vsel %vm388, %v1553, %v1552
  %v1555 = vrot.slane %v1500, 4
  %v1556 = vsel %vm391, %v1555, %v1554
  %v1557 = vpack.c.b16 %v1528, %v1514
  %v1558 = vpack.c.b16 %v1556, %v1542
  %v1560 = vsel %vm53, %v1557, 0
  %v1563 = vsel %vm53, %v1558, 0
  %1565 = vmatprep.subr.bf16.mxu0 0
  %1566 = vmatpush1.bf16.msra.mxu0 0
  %1567 = vmatprep.subr.bf16.mxu0 0
  %1568 = vmatpush1.bf16.msra.mxu0 0
  %1569 = vmatprep.subr.bf16.mxu0 0
  %1570 = vmatpush1.bf16.msra.mxu0 0
  %1571 = vmatprep.subr.bf16.mxu0 0
  %1572 = vmatpush1.bf16.msra.mxu0 0
  %1573 = vmatprep.subr.bf16.mxu0 0
  %1574 = vmatpush1.bf16.msra.mxu0 0
  %1575 = vmatprep.subr.bf16.mxu0 0
  %1576 = vmatpush1.bf16.msra.mxu0 0
  %1577 = vmatprep.subr.bf16.mxu0 0
  %1578 = vmatpush1.bf16.msra.mxu0 0
  %1579 = vmatprep.subr.bf16.mxu0 0
  %1580 = vmatpush1.bf16.msra.mxu0 %v444
  %1581 = vmatprep.subr.bf16.mxu0 0
  %1582 = vmatpush2.bf16.msra.mxu0 0
  %1583 = vmatprep.subr.bf16.mxu0 0
  %1584 = vmatpush2.bf16.msra.mxu0 0
  %1585 = vmatprep.subr.bf16.mxu0 0
  %1586 = vmatpush2.bf16.msra.mxu0 0
  %1587 = vmatprep.subr.bf16.mxu0 0
  %1588 = vmatpush2.bf16.msra.mxu0 0
  %1589 = vmatprep.subr.bf16.mxu0 0
  %1590 = vmatpush2.bf16.msra.mxu0 0
  %1591 = vmatprep.subr.bf16.mxu0 0
  %1592 = vmatpush2.bf16.msra.mxu0 0
  %1593 = vmatprep.subr.bf16.mxu0 0
  %1594 = vmatpush2.bf16.msra.mxu0 0
  %1595 = vmatprep.subr.bf16.mxu0 0
  %1596 = vmatpush2.bf16.msra.mxu0 0
  %1597 = vmatprep.mubr.bf16.mxu0 0
  %1598 = vmatmul.mubr.bf16.gmra.mxu0 %v1560
  %v1599 = vpop.f32.mrf.mxu0
  %v1600 = vadd.f32 %v102, %v1599
  %v1601 = vpop.f32.mrf.mxu0
  %v1602 = vpop.f32.mrf.mxu0
  %v1603 = vadd.f32 %v105, %v1602
  %v1604 = vpop.f32.mrf.mxu0
  %1605 = vmatprep.mubr.bf16.mxu0 0
  %1606 = vmatmul.mubr.bf16.gmra.mxu0 %v1563
  %v1607 = vpop.f32.mrf.mxu0
  %v1608 = vadd.f32 %v110, %v1607
  %v1609 = vpop.f32.mrf.mxu0
  %v1610 = vpop.f32.mrf.mxu0
  %v1611 = vadd.f32 %v113, %v1610
  %v1612 = vpop.f32.mrf.mxu0
  %1613 = vdwg.mxu0
  %v1614 = vmul.f32 %v1600, %v499
  %v1615 = vmul.f32 %v1603, %v499
  %v1616 = vmul.f32 %v1608, %v499
  %v1617 = vmul.f32 %v1611, %v499
  %v1618 = vadd.f32 %v1614, %v509
  %v1619 = vadd.f32 %v1615, %v509
  %v1620 = vadd.f32 %v1616, %v509
  %v1621 = vadd.f32 %v1617, %v509
  %vm1622 = vcmp.ge.f32.partialorder %v1618, 0.0
  %vm1623 = vcmp.ge.f32.partialorder %v1619, 0.0
  %vm1624 = vcmp.ge.f32.partialorder %v1620, 0.0
  %vm1625 = vcmp.ge.f32.partialorder %v1621, 0.0
  %v1626 = vmul.f32 %v1618, 0.2
  %v1627 = vmul.f32 %v1619, 0.2
  %v1628 = vmul.f32 %v1620, 0.2
  %v1629 = vmul.f32 %v1621, 0.2
  %v1630 = vsel %vm1622, %v1618, %v1626
  %v1631 = vsel %vm1623, %v1619, %v1627
  %v1632 = vsel %vm1624, %v1620, %v1628
  %v1633 = vsel %vm1625, %v1621, %v1629
  %v1634 = vpack.c.bf16 %v1631, %v1630
  %v1635 = vpack.c.bf16 %v1633, %v1632
  %v1637 = vsel %vm553, %v1634, 0
  %v1640 = vsel %vm553, %v1635, 0
  %1642 = vmatprep.subr.bf16.mxu0 0
  %1643 = vmatpush1.bf16.msra.mxu0 0
  %1644 = vmatprep.subr.bf16.mxu0 0
  %1645 = vmatpush1.bf16.msra.mxu0 0
  %1646 = vmatprep.subr.bf16.mxu0 0
  %1647 = vmatpush1.bf16.msra.mxu0 0
  %1648 = vmatprep.subr.bf16.mxu0 0
  %1649 = vmatpush1.bf16.msra.mxu0 0
  %1650 = vmatprep.subr.bf16.mxu0 0
  %1651 = vmatpush1.bf16.msra.mxu0 %v548
  %1652 = vmatprep.subr.bf16.mxu0 0
  %1653 = vmatpush1.bf16.msra.mxu0 %v547
  %1654 = vmatprep.subr.bf16.mxu0 0
  %1655 = vmatpush1.bf16.msra.mxu0 %v546
  %1656 = vmatprep.subr.bf16.mxu0 0
  %1657 = vmatpush1.bf16.msra.mxu0 %v545
  %1658 = vmatprep.subr.bf16.mxu0 0
  %1659 = vmatpush2.bf16.msra.mxu0 0
  %1660 = vmatprep.subr.bf16.mxu0 0
  %1661 = vmatpush2.bf16.msra.mxu0 0
  %1662 = vmatprep.subr.bf16.mxu0 0
  %1663 = vmatpush2.bf16.msra.mxu0 0
  %1664 = vmatprep.subr.bf16.mxu0 0
  %1665 = vmatpush2.bf16.msra.mxu0 0
  %1666 = vmatprep.subr.bf16.mxu0 0
  %1667 = vmatpush2.bf16.msra.mxu0 0
  %1668 = vmatprep.subr.bf16.mxu0 0
  %1669 = vmatpush2.bf16.msra.mxu0 0
  %1670 = vmatprep.subr.bf16.mxu0 0
  %1671 = vmatpush2.bf16.msra.mxu0 0
  %1672 = vmatprep.subr.bf16.mxu0 0
  %1673 = vmatpush2.bf16.msra.mxu0 0
  %1674 = vmatprep.mubr.bf16.mxu0 0
  %1675 = vmatmul.mubr.bf16.gmra.mxu0 %v1637
  %v1676 = vpop.f32.mrf.mxu0
  %v1677 = vadd.f32 0.0, %v1676
  %v1678 = vpop.f32.mrf.mxu0
  %v1679 = vpop.f32.mrf.mxu0
  %v1680 = vadd.f32 0.0, %v1679
  %v1681 = vpop.f32.mrf.mxu0
  %1682 = vmatprep.mubr.bf16.mxu0 0
  %1683 = vmatmul.mubr.bf16.gmra.mxu0 %v1640
  %v1684 = vpop.f32.mrf.mxu0
  %v1685 = vadd.f32 0.0, %v1684
  %v1686 = vpop.f32.mrf.mxu0
  %v1687 = vpop.f32.mrf.mxu0
  %v1688 = vadd.f32 0.0, %v1687
  %v1689 = vpop.f32.mrf.mxu0
  %1690 = vdwg.mxu0
  %v1691 = vmul.f32 %v1677, %v613
  %v1692 = vmul.f32 %v1680, %v613
  %v1693 = vmul.f32 %v1685, %v613
  %v1694 = vmul.f32 %v1688, %v613
  %v1695 = vadd.f32 %v1691, %v623
  %v1696 = vadd.f32 %v1692, %v623
  %v1697 = vadd.f32 %v1693, %v623
  %v1698 = vadd.f32 %v1694, %v623
  %vm1699 = vcmp.ge.f32.partialorder %v1695, 0.0
  %vm1700 = vcmp.ge.f32.partialorder %v1696, 0.0
  %vm1701 = vcmp.ge.f32.partialorder %v1697, 0.0
  %vm1702 = vcmp.ge.f32.partialorder %v1698, 0.0
  %v1703 = vmul.f32 %v1695, 0.2
  %v1704 = vmul.f32 %v1696, 0.2
  %v1705 = vmul.f32 %v1697, 0.2
  %v1706 = vmul.f32 %v1698, 0.2
  %v1707 = vsel %vm1699, %v1695, %v1703
  %v1708 = vsel %vm1700, %v1696, %v1704
  %v1709 = vsel %vm1701, %v1697, %v1705
  %v1710 = vsel %vm1702, %v1698, %v1706
  %v1711 = vmax.f32 %v1353, %v1707
  %v1712 = vmax.f32 %v1354, %v1708
  %v1713 = vmax.f32 %v1355, %v1709
  %v1714 = vmax.f32 %v1356, %v1710
  %1715 = vst [vmem:[%s9] sm:$0xff] %v1711
  %1716 = vst [vmem:[%s9 + $0x8] sm:$0xff] %v1712
  %1717 = vst [vmem:[%s9 + $0x10] sm:$0xff] %v1713
  %1718 = vst [vmem:[%s9 + $0x18] sm:$0xff] %v1714
  // Predicated region
  $region38: #{_lambda_.12} parent=0 // pred_check
    _
  $region39: #{_lambda_.12} parent=0 // pred_check_branch
    %1720 = sbr.rel (0) target = $region41
  $region40: #{_lambda_.12} parent=0 // pred_region
    _
  $region41: #{_lambda_.12} parent=0 // pred_fallthru
    _
  // Predicated region
  $region42: #{_lambda_.12} parent=0 // pred_check
    _
  $region43: #{_lambda_.12} parent=0 // pred_check_branch
    %1722 = sbr.rel (0) target = $region45
  $region44: #{_lambda_.12} parent=0 // pred_region
    _
  $region45: #{_lambda_.12} parent=0 // pred_fallthru
    _

// kernel: _lambda_.16
$region0: #{_lambda_.16}
  #allocation0 [shape = 'u32[]', space=smem, size = 0x4, offset = 0x4, fixed_abs, tag = 'smem constant byte address 0x4 - core index']
  #allocation1 [shape = 'u32[144,128]{1,0:T(1,128)}', space=vmem, size = 0x12000, scoped, tag = 'internal scratch']
  %s0 = inlined_call_operand.vmem [shape: f32[2,16,64], index: 0, kind: input, shape index: {}]
  %s1 = inlined_call_operand.vmem [shape: f32[2,64,16], index: 1, kind: input, shape index: {}]
  %s2 = inlined_call_operand.vmem [shape: f32[2,1,16], index: 2, kind: input, shape index: {}]
  %s3 = inlined_call_operand.vmem [shape: f32[2,16,16], index: 3, kind: output, shape index: {}]
  %s4 = sld [smem:[#allocation0]]
  $region45: #{_lambda_.16} parent=0
    _
  %s6 = ssub.s32 1, %s4
  %s7 = scalar_select 0, %s6, %s4
  loop: start=0, step=1, limit=4
  $region2: #{_lambda_.16} parent=0 // loop_pre_header
    _
  $region3: #{_lambda_.16} parent=0 // loop_header
    %s9 = sphi 0, %s13
    %p10 = scmp.ge.s32.totalorder %s9, 4
    %s16 = sphi 0, %s35
    %s17 = sphi 0, %s31
    %s18 = sphi 0, %s27
    %s19 = sphi 0, %s16
    %s20 = sphi 0, %s17
    %s21 = sphi 0, %s18
    %s22 = sphi 0, %s19
    %s23 = sphi 0, %s20
    %s24 = sphi 0, %s21
    %s40 = sphi 0, %s42
    %s43 = sphi 0, %s40
    %s44 = sphi 0, %s43
    %s60 = sphi 0, %s44
    %s68 = sphi 0, %s70
    %s71 = sphi 0, %s68
    %s72 = sphi 0, %s71
    %s88 = sphi 0, %s72
    %s96 = sphi 0, %s98
    %s99 = sphi 0, %s96
    %s100 = sphi 0, %s99
    %s116 = sphi 0, %s100
    %s126 = sphi 0, %s128
    %s129 = sphi 0, %s126
    %s130 = sphi 0, %s129
    %s146 = sphi 0, %s130
  $region4: #{_lambda_.16} parent=0 // loop_header_branch
    %12 = sbr.rel (%p10) target = $region8
  $region5: #{_lambda_.16} parent=0 // loop_body
    %s14 = ssub.s32 %s9, 1
    %s15 = ssub.s32 %s9, 2
    %s25 = sadd.s32 1, %s18
    %p26 = scmp.ge.s32.totalorder %s25, 1
    %s27 = scalar_select %p26, 0, %s25
    %s28 = sadd.s32 1, %s17
    %s29 = scalar_select %p26, %s28, %s17
    %p30 = scmp.ge.s32.totalorder %s29, 2
    %s31 = scalar_select %p30, 0, %s29
    %s32 = sadd.s32 1, %s16
    %s33 = scalar_select %p30, %s32, %s16
    %p34 = scmp.ge.s32.totalorder %s33, 1
    %s35 = scalar_select %p34, 0, %s33
    %s36 = ssub.s32 %s17, %s31
    %s37 = ssub.s32 %s16, %s35
    %s38 = sor.u32 %s36, %s37
    %p39 = scmp.eq.s32.totalorder %s38, 0
    %s41 = sadd.s32 %s40, 1
    %s42 = scalar_select %p39, %s40, %s41
    %p45 = pneg %p39
    %p46 = scmp.eq.s32.totalorder %s9, 1
    %p47 = por %p45, %p46
    %p48 = scmp.ne.s32.totalorder %s40, %s43
    %p49 = scmp.eq.s32.totalorder %s9, 0
    %p50 = por %p48, %p49
    %p51 = scmp.ne.s32.totalorder %s40, %s43
    %p52 = scmp.eq.s32.totalorder %s14, 1
    %p53 = por %p51, %p52
    %p54 = scmp.ne.s32.totalorder %s43, %s44
    %p55 = scmp.eq.s32.totalorder %s14, 0
    %p56 = por %p54, %p55
    %p57 = scmp.ne.s32.totalorder %s43, %s44
    %p58 = scmp.eq.s32.totalorder %s15, 1
    %p59 = por %p57, %p58
    %p61 = scmp.ne.s32.totalorder %s44, %s60
    %p62 = scmp.eq.s32.totalorder %s15, 0
    %p63 = por %p61, %p62
    %s64 = ssub.s32 %s17, %s31
    %s65 = ssub.s32 %s18, %s27
    %s66 = sor.u32 %s64, %s65
    %p67 = scmp.eq.s32.totalorder %s66, 0
    %s69 = sadd.s32 %s68, 1
    %s70 = scalar_select %p67, %s68, %s69
    %p73 = pneg %p67
    %p74 = scmp.eq.s32.totalorder %s9, 1
    %p75 = por %p73, %p74
    %p76 = scmp.ne.s32.totalorder %s68, %s71
    %p77 = scmp.eq.s32.totalorder %s9, 0
    %p78 = por %p76, %p77
    %p79 = scmp.ne.s32.totalorder %s68, %s71
    %p80 = scmp.eq.s32.totalorder %s14, 1
    %p81 = por %p79, %p80
    %p82 = scmp.ne.s32.totalorder %s71, %s72
    %p83 = scmp.eq.s32.totalorder %s14, 0
    %p84 = por %p82, %p83
    %p85 = scmp.ne.s32.totalorder %s71, %s72
    %p86 = scmp.eq.s32.totalorder %s15, 1
    %p87 = por %p85, %p86
    %p89 = scmp.ne.s32.totalorder %s72, %s88
    %p90 = scmp.eq.s32.totalorder %s15, 0
    %p91 = por %p89, %p90
    %s92 = ssub.s32 %s17, %s31
    %s93 = ssub.s32 %s18, %s27
    %s94 = sor.u32 %s92, %s93
    %p95 = scmp.eq.s32.totalorder %s94, 0
    %s97 = sadd.s32 %s96, 1
    %s98 = scalar_select %p95, %s96, %s97
    %p101 = pneg %p95
    %p102 = scmp.eq.s32.totalorder %s9, 1
    %p103 = por %p101, %p102
    %p104 = scmp.ne.s32.totalorder %s96, %s99
    %p105 = scmp.eq.s32.totalorder %s9, 0
    %p106 = por %p104, %p105
    %p107 = scmp.ne.s32.totalorder %s96, %s99
    %p108 = scmp.eq.s32.totalorder %s14, 1
    %p109 = por %p107, %p108
    %p110 = scmp.ne.s32.totalorder %s99, %s100
    %p111 = scmp.eq.s32.totalorder %s14, 0
    %p112 = por %p110, %p111
    %p113 = scmp.ne.s32.totalorder %s99, %s100
    %p114 = scmp.eq.s32.totalorder %s15, 1
    %p115 = por %p113, %p114
    %p117 = scmp.ne.s32.totalorder %s100, %s116
    %p118 = scmp.eq.s32.totalorder %s15, 0
    %p119 = por %p117, %p118
    %s120 = ssub.s32 %s17, %s31
    %s121 = ssub.s32 %s16, %s35
    %s122 = sor.u32 %s120, %s121
    %s123 = ssub.s32 %s18, %s27
    %s124 = sor.u32 %s122, %s123
    %p125 = scmp.eq.s32.totalorder %s124, 0
    %s127 = sadd.s32 %s126, 1
    %s128 = scalar_select %p125, %s126, %s127
    %p131 = pneg %p125
    %p132 = scmp.eq.s32.totalorder %s9, 1
    %p133 = por %p131, %p132
    %p134 = scmp.ne.s32.totalorder %s126, %s129
    %p135 = scmp.eq.s32.totalorder %s9, 0
    %p136 = por %p134, %p135
    %p137 = scmp.ne.s32.totalorder %s126, %s129
    %p138 = scmp.eq.s32.totalorder %s14, 1
    %p139 = por %p137, %p138
    %p140 = scmp.ne.s32.totalorder %s129, %s130
    %p141 = scmp.eq.s32.totalorder %s14, 0
    %p142 = por %p140, %p141
    %p143 = scmp.ne.s32.totalorder %s129, %s130
    %p144 = scmp.eq.s32.totalorder %s15, 1
    %p145 = por %p143, %p144
    %p147 = scmp.ne.s32.totalorder %s130, %s146
    %p148 = scmp.eq.s32.totalorder %s15, 0
    %p149 = por %p147, %p148
    %p150 = scmp.le.s32.totalorder 1, %s9
    %p151 = scmp.lt.s32.totalorder %s9, 3
    %p152 = pnand %p150, %p151
    %p153 = pneg %p152
    // Predicated region
    $region9: #{_lambda_.16} parent=5 // pred_check
      _
    $region10: #{_lambda_.16} parent=5 // pred_check_branch
      %155 = sbr.rel (%p152) target = $region12
    $region11: #{_lambda_.16} parent=5 // pred_region
      %s156 = ssub.s32 %s9, 1
    $region12: #{_lambda_.16} parent=5 // pred_fallthru
      _
    %p157 = scmp.lt.s32.totalorder %s9, 2
    // Predicated region
    $region13: #{_lambda_.16} parent=5 // pred_check
      %p158 = pneg %p157
    $region14: #{_lambda_.16} parent=5 // pred_check_branch
      %160 = sbr.rel (%p158) target = $region16
    $region15: #{_lambda_.16} parent=5 // pred_region
      // Predicated region
      $region17: #{_lambda_.16} parent=15 // pred_check
        %p161 = pneg %p50
      $region18: #{_lambda_.16} parent=15 // pred_check_branch
        %163 = sbr.rel (%p161) target = $region20
      $region19: #{_lambda_.16} parent=15 // pred_region
        %s164 = smul.u32 2, %s16
        %p165 = scmp.lt.s32.totalorder %s17, 1
        %s166 = scalar_select %p165, %s17, 1
        %p167 = scmp.lt.s32.totalorder %s164, 1
        %s168 = scalar_select %p167, %s164, 1
        %s169 = smul.addr %s166, 2
        %s170 = sadd.s32 %s168, %s169
        %s171 = smul.addr %s170, 8
        %s172 = scalar_lea.vmem %s0, %s171
        %s173 = smul.u32 2, %s16
      $region20: #{_lambda_.16} parent=15 // pred_fallthru
        _
      // Predicated region
      $region21: #{_lambda_.16} parent=15 // pred_check
        %p174 = pneg %p78
      $region22: #{_lambda_.16} parent=15 // pred_check_branch
        %176 = sbr.rel (%p174) target = $region24
      $region23: #{_lambda_.16} parent=15 // pred_region
        %p177 = scmp.lt.s32.totalorder %s17, 1
        %s178 = scalar_select %p177, %s17, 1
        %p179 = scmp.lt.s32.totalorder %s18, 0
        %s180 = scalar_select %p179, %s18, 0
        %s181 = smul.addr %s178, 8
        %s182 = sadd.s32 %s180, %s181
        %s183 = smul.addr %s182, 8
        %s184 = scalar_lea.vmem %s1, %s183
      $region24: #{_lambda_.16} parent=15 // pred_fallthru
        _
      // Predicated region
      $region25: #{_lambda_.16} parent=15 // pred_check
        %p185 = pneg %p106
      $region26: #{_lambda_.16} parent=15 // pred_check_branch
        %187 = sbr.rel (%p185) target = $region28
      $region27: #{_lambda_.16} parent=15 // pred_region
        %p188 = scmp.lt.s32.totalorder %s17, 1
        %s189 = scalar_select %p188, %s17, 1
        %p190 = scmp.lt.s32.totalorder %s18, 0
        %s191 = scalar_select %p190, %s18, 0
        %s192 = sadd.s32 %s191, %s189
        %s193 = scalar_lea.vmem %s2, %s192
      $region28: #{_lambda_.16} parent=15 // pred_fallthru
        _
    $region16: #{_lambda_.16} parent=5 // pred_fallthru
      _
    %p194 = scmp.le.s32.totalorder 1, %s9
    %p195 = scmp.lt.s32.totalorder %s9, 3
    %p196 = pnand %p194, %p195
    %p197 = pneg %p196
    // Predicated region
    $region29: #{_lambda_.16} parent=5 // pred_check
      _
    $region30: #{_lambda_.16} parent=5 // pred_check_branch
      %199 = sbr.rel (%p196) target = $region32
    $region31: #{_lambda_.16} parent=5 // pred_region
      %s200 = ssub.s32 %s9, 1
      %s201 = smul.u32 2, %s19
      %p202 = scmp.lt.s32.totalorder %s20, 1
      %s203 = scalar_select %p202, %s20, 1
      %p204 = scmp.lt.s32.totalorder %s201, 1
      %s205 = scalar_select %p204, %s201, 1
      %s206 = smul.addr %s203, 2
      %s207 = sadd.s32 %s205, %s206
      %s208 = smul.addr %s207, 8
      %s209 = scalar_lea.vmem %s0, %s208
      %p210 = pneg %p56
      %p211 = pneg %p53
      %p212 = scmp.lt.s32.totalorder %s20, 1
      %s213 = scalar_select %p212, %s20, 1
      %p214 = scmp.lt.s32.totalorder %s21, 0
      %s215 = scalar_select %p214, %s21, 0
      %s216 = smul.addr %s213, 8
      %s217 = sadd.s32 %s215, %s216
      %s218 = smul.addr %s217, 8
      %s219 = scalar_lea.vmem %s1, %s218
      %p220 = pneg %p84
      %p221 = pneg %p81
      %p222 = scmp.lt.s32.totalorder %s20, 1
      %s223 = scalar_select %p222, %s20, 1
      %p224 = scmp.lt.s32.totalorder %s21, 0
      %s225 = scalar_select %p224, %s21, 0
      %s226 = sadd.s32 %s225, %s223
      %s227 = scalar_lea.vmem %s2, %s226
      %p228 = pneg %p112
      %p229 = pneg %p109
      %p230 = pneg %p142
      %p231 = pneg %p139
      %s232 = smul.u32 2, %s19
      %p233 = scmp.lt.s32.totalorder %s20, 1
      %s234 = scalar_select %p233, %s20, 1
      %p235 = scmp.lt.s32.totalorder %s232, 1
      %s236 = scalar_select %p235, %s232, 1
      %p237 = scmp.lt.s32.totalorder %s21, 0
      %s238 = scalar_select %p237, %s21, 0
      %s239 = sadd.s32 %s238, %s236
      %s240 = smul.addr %s234, 2
      %s241 = sadd.s32 %s239, %s240
      %s242 = smul.addr %s241, 8
      %s243 = scalar_lea.vmem %s3, %s242
      %s244 = smul.u32 2, %s19
      %p245 = scmp.lt.s32.totalorder %s20, 1
      %s246 = scalar_select %p245, %s20, 1
      %p247 = scmp.lt.s32.totalorder %s244, 1
      %s248 = scalar_select %p247, %s244, 1
      %s249 = smul.addr %s246, 2
      %s250 = sadd.s32 %s248, %s249
      %s251 = smul.addr %s250, 8
      %s252 = scalar_lea.vmem %s0, %s251
      %s253 = smul.u32 2, %s19
      %p254 = scmp.lt.s32.totalorder %s20, 1
      %s255 = scalar_select %p254, %s20, 1
      %p256 = scmp.lt.s32.totalorder %s21, 0
      %s257 = scalar_select %p256, %s21, 0
      %s258 = smul.addr %s255, 8
      %s259 = sadd.s32 %s257, %s258
      %s260 = smul.addr %s259, 8
      %s261 = scalar_lea.vmem %s1, %s260
      %p262 = scmp.lt.s32.totalorder %s20, 1
      %s263 = scalar_select %p262, %s20, 1
      %p264 = scmp.lt.s32.totalorder %s21, 0
      %s265 = scalar_select %p264, %s21, 0
      %s266 = sadd.s32 %s265, %s263
      %s267 = scalar_lea.vmem %s2, %s266
      %s268 = smul.u32 2, %s19
      %p269 = scmp.lt.s32.totalorder %s20, 1
      %s270 = scalar_select %p269, %s20, 1
      %p271 = scmp.lt.s32.totalorder %s268, 1
      %s272 = scalar_select %p271, %s268, 1
      %p273 = scmp.lt.s32.totalorder %s21, 0
      %s274 = scalar_select %p273, %s21, 0
      %s275 = sadd.s32 %s274, %s272
      %s276 = smul.addr %s270, 2
      %s277 = sadd.s32 %s275, %s276
      %s278 = smul.addr %s277, 8
      %s279 = scalar_lea.vmem %s3, %s278
      %s280 = smul.u32 2, %s19
      %v281 = vld [vmem:[%s252] sm:$0xff]
      %v282 = vld [vmem:[%s252 + $0x8] sm:$0xff]
      %v283 = vld [vmem:[%s261] sm:$0xff]
      %v284 = vld [vmem:[%s261 + $0x8] sm:$0xff]
      %v285 = vld [vmem:[%s261 + $0x10] sm:$0xff]
      %v286 = vld [vmem:[%s261 + $0x18] sm:$0xff]
      %v287 = vld [vmem:[%s261 + $0x20] sm:$0xff]
      %v288 = vld [vmem:[%s261 + $0x28] sm:$0xff]
      %v289 = vld [vmem:[%s261 + $0x30] sm:$0xff]
      %v290 = vld [vmem:[%s261 + $0x38] sm:$0xff]
      %vm291 = vcmask 523264
      %v293 = vsel %vm291, %v281, 0
      %v296 = vsel %vm291, %v282, 0
      %298 = vmatprep.subr.mxu0 0.0
      %299 = vmatpush1.msra.mxu0 0.0
      %300 = vmatprep.subr.mxu0 0.0
      %301 = vmatpush1.msra.mxu0 0.0
      %302 = vmatprep.subr.mxu0 0.0
      %303 = vmatpush1.msra.mxu0 0.0
      %304 = vmatprep.subr.mxu0 0.0
      %305 = vmatpush1.msra.mxu0 0.0
      %306 = vmatprep.subr.mxu0 0.0
      %307 = vmatpush1.msra.mxu0 0.0
      %308 = vmatprep.subr.mxu0 0.0
      %309 = vmatpush1.msra.mxu0 0.0
      %310 = vmatprep.subr.mxu0 0.0
      %311 = vmatpush1.msra.mxu0 0.0
      %312 = vmatprep.subr.mxu0 0.0
      %313 = vmatpush1.msra.mxu0 0.0
      %314 = vmatprep.subr.mxu0 0.0
      %315 = vmatpush1.msra.mxu0 %v290
      %316 = vmatprep.subr.mxu0 0.0
      %317 = vmatpush1.msra.mxu0 %v289
      %318 = vmatprep.subr.mxu0 0.0
      %319 = vmatpush1.msra.mxu0 %v288
      %320 = vmatprep.subr.mxu0 0.0
      %321 = vmatpush1.msra.mxu0 %v287
      %322 = vmatprep.subr.mxu0 0.0
      %323 = vmatpush1.msra.mxu0 %v286
      %324 = vmatprep.subr.mxu0 0.0
      %325 = vmatpush1.msra.mxu0 %v285
      %326 = vmatprep.subr.mxu0 0.0
      %327 = vmatpush1.msra.mxu0 %v284
      %328 = vmatprep.subr.mxu0 0.0
      %329 = vmatpush1.msra.mxu0 %v283
      %330 = vmatprep.subr.mxu0 0.0
      %331 = vmatpush2.msra.mxu0 0.0
      %332 = vmatprep.subr.mxu0 0.0
      %333 = vmatpush2.msra.mxu0 0.0
      %334 = vmatprep.subr.mxu0 0.0
      %335 = vmatpush2.msra.mxu0 0.0
      %336 = vmatprep.subr.mxu0 0.0
      %337 = vmatpush2.msra.mxu0 0.0
      %338 = vmatprep.subr.mxu0 0.0
      %339 = vmatpush2.msra.mxu0 0.0
      %340 = vmatprep.subr.mxu0 0.0
      %341 = vmatpush2.msra.mxu0 0.0
      %342 = vmatprep.subr.mxu0 0.0
      %343 = vmatpush2.msra.mxu0 0.0
      %344 = vmatprep.subr.mxu0 0.0
      %345 = vmatpush2.msra.mxu0 0.0
      %346 = vmatprep.subr.mxu0 0.0
      %347 = vmatpush2.msra.mxu0 0.0
      %348 = vmatprep.subr.mxu0 0.0
      %349 = vmatpush2.msra.mxu0 0.0
      %350 = vmatprep.subr.mxu0 0.0
      %351 = vmatpush2.msra.mxu0 0.0
      %352 = vmatprep.subr.mxu0 0.0
      %353 = vmatpush2.msra.mxu0 0.0
      %354 = vmatprep.subr.mxu0 0.0
      %355 = vmatpush2.msra.mxu0 0.0
      %356 = vmatprep.subr.mxu0 0.0
      %357 = vmatpush2.msra.mxu0 0.0
      %358 = vmatprep.subr.mxu0 0.0
      %359 = vmatpush2.msra.mxu0 0.0
      %360 = vmatprep.subr.mxu0 0.0
      %361 = vmatpush2.msra.mxu0 0.0
      %362 = vmatprep.mubr.f32.mxu0 0.0
      %363 = vmatmul.mubr.f32.gmra.mxu0 %v293
      %v364 = vpop.f32.mrf.mxu0
      %v365 = vadd.f32 0.0, %v364
      %v366 = vpop.f32.mrf.mxu0
      %367 = vmatprep.mubr.f32.mxu0 0.0
      %368 = vmatmul.mubr.f32.gmra.mxu0 %v296
      %v369 = vpop.f32.mrf.mxu0
      %v370 = vadd.f32 0.0, %v369
      %v371 = vpop.f32.mrf.mxu0
      %372 = vdwg.mxu0
      %v373 = vmul.f32 %v365, 2.0
      %v374 = vmul.f32 %v370, 2.0
      %v375 = vld [vmem:[%s267] sm:$0x1]
      %v377 = vlaneseq
      %v378 = vshrl.u32 %v377, 7
      %v379 = vsub.s32 0, %v378
      %v380 = vrot.slane %v375, %v379
      %v382 = vsub.f32 %v373, %v380
      %v383 = vsub.f32 %v374, %v380
      %vm384 = vcmask 130048
      %385 = vst.msk [vmem:[%s279] sm:$0xff] %vm384, %v382
      %386 = vst.msk [vmem:[%s279 + $0x8] sm:$0xff] %vm384, %v383
      %s387 = smul.u32 2, %s19
      %p388 = scmp.lt.s32.totalorder %s20, 1
      %s389 = scalar_select %p388, %s20, 1
      %p390 = scmp.lt.s32.totalorder %s387, 1
      %s391 = scalar_select %p390, %s387, 1
      %p392 = scmp.lt.s32.totalorder %s21, 0
      %s393 = scalar_select %p392, %s21, 0
      %s394 = sadd.s32 %s393, %s391
      %s395 = smul.addr %s389, 2
      %s396 = sadd.s32 %s394, %s395
      %s397 = smul.addr %s396, 8
      %s398 = scalar_lea.vmem %s3, %s397
      // Predicated region
      $region33: #{_lambda_.16} parent=31 // pred_check
        %p399 = pneg %p139
      $region34: #{_lambda_.16} parent=31 // pred_check_branch
        %401 = sbr.rel (%p399) target = $region36
      $region35: #{_lambda_.16} parent=31 // pred_region
        %s402 = smul.u32 2, %s19
      $region36: #{_lambda_.16} parent=31 // pred_fallthru
        _
    $region32: #{_lambda_.16} parent=5 // pred_fallthru
      _
    %p403 = scmp.le.s32.totalorder 2, %s9
    // Predicated region
    $region37: #{_lambda_.16} parent=5 // pred_check
      %p404 = pneg %p403
    $region38: #{_lambda_.16} parent=5 // pred_check_branch
      %406 = sbr.rel (%p404) target = $region40
    $region39: #{_lambda_.16} parent=5 // pred_region
      %s407 = ssub.s32 %s9, 2
      // Predicated region
      $region41: #{_lambda_.16} parent=39 // pred_check
        %p408 = pneg %p145
      $region42: #{_lambda_.16} parent=39 // pred_check_branch
        %410 = sbr.rel (%p408) target = $region44
      $region43: #{_lambda_.16} parent=39 // pred_region
        %s411 = smul.u32 2, %s22
        %p412 = scmp.lt.s32.totalorder %s23, 1
        %s413 = scalar_select %p412, %s23, 1
        %p414 = scmp.lt.s32.totalorder %s411, 1
        %s415 = scalar_select %p414, %s411, 1
        %p416 = scmp.lt.s32.totalorder %s24, 0
        %s417 = scalar_select %p416, %s24, 0
        %s418 = sadd.s32 %s417, %s415
        %s419 = smul.addr %s413, 2
        %s420 = sadd.s32 %s418, %s419
        %s421 = smul.addr %s420, 8
        %s422 = scalar_lea.vmem %s3, %s421
      $region44: #{_lambda_.16} parent=39 // pred_fallthru
        _
    $region40: #{_lambda_.16} parent=5 // pred_fallthru
      _
  $region6: #{_lambda_.16} parent=0 // loop_footer
    %s13 = sadd.s32 1, %s9
  $region7: #{_lambda_.16} parent=0 // loop_footer_branch
    %8 = sbr.rel target = $region3
  $region8: #{_lambda_.16} parent=0 // loop_exit
    _

// kernel: _lambda_.15
$region0: #{_lambda_.15}
  #allocation0 [shape = 'u32[]', space=smem, size = 0x4, offset = 0x4, fixed_abs, tag = 'smem constant byte address 0x4 - core index']
  #allocation1 [shape = 'u32[144,128]{1,0:T(1,128)}', space=vmem, size = 0x12000, scoped, tag = 'internal scratch']
  %s0 = inlined_call_operand.vmem [shape: bf16[32,4,3], index: 0, kind: input, shape index: {}]
  %s1 = inlined_call_operand.vmem [shape: f32[32,3], index: 1, kind: input, shape index: {}]
  %s2 = inlined_call_operand.vmem [shape: bf16[3,64], index: 2, kind: input, shape index: {}]
  %s3 = inlined_call_operand.vmem [shape: bf16[3,64], index: 3, kind: input, shape index: {}]
  %s4 = inlined_call_operand.vmem [shape: f32[1,64], index: 4, kind: input, shape index: {}, may-alias: {4,7}]
  %s5 = inlined_call_operand.vmem [shape: f32[1,64], index: 5, kind: input, shape index: {}, may-alias: {5,8}]
  %s6 = inlined_call_operand.vmem [shape: bf16[64,64], index: 6, kind: input, shape index: {}]
  %s7 = inlined_call_operand.vmem [shape: f32[1,64], index: 7, kind: input, shape index: {}, may-alias: {4,7}]
  %s8 = inlined_call_operand.vmem [shape: f32[1,64], index: 8, kind: input, shape index: {}, may-alias: {5,8}]
  %s9 = inlined_call_operand.vmem [shape: f32[32,64], index: 9, kind: output, shape index: {}]
  %s10 = sld [smem:[#allocation0]]
  $region46: #{_lambda_.15} parent=0
    _
  %s12 = ssub.s32 1, %s10
  %s13 = scalar_select 0, %s12, %s10
  // Predicated region
  $region2: #{_lambda_.15} parent=0 // pred_check
    _
  $region3: #{_lambda_.15} parent=0 // pred_check_branch
    %15 = sbr.rel (0) target = $region5
  $region4: #{_lambda_.15} parent=0 // pred_region
    _
  $region5: #{_lambda_.15} parent=0 // pred_fallthru
    _
  // Predicated region
  $region6: #{_lambda_.15} parent=0 // pred_check
    _
  $region7: #{_lambda_.15} parent=0 // pred_check_branch
    %17 = sbr.rel (0) target = $region9
  $region8: #{_lambda_.15} parent=0 // pred_region
    _
  $region9: #{_lambda_.15} parent=0 // pred_fallthru
    _
  // Predicated region
  $region10: #{_lambda_.15} parent=0 // pred_check
    _
  $region11: #{_lambda_.15} parent=0 // pred_check_branch
    %19 = sbr.rel (0) target = $region13
  $region12: #{_lambda_.15} parent=0 // pred_region
    _
  $region13: #{_lambda_.15} parent=0 // pred_fallthru
    _
  // Predicated region
  $region14: #{_lambda_.15} parent=0 // pred_check
    _
  $region15: #{_lambda_.15} parent=0 // pred_check_branch
    %21 = sbr.rel (0) target = $region17
  $region16: #{_lambda_.15} parent=0 // pred_region
    _
  $region17: #{_lambda_.15} parent=0 // pred_fallthru
    _
  // Predicated region
  $region18: #{_lambda_.15} parent=0 // pred_check
    _
  $region19: #{_lambda_.15} parent=0 // pred_check_branch
    %23 = sbr.rel (0) target = $region21
  $region20: #{_lambda_.15} parent=0 // pred_region
    _
  $region21: #{_lambda_.15} parent=0 // pred_fallthru
    _
  // Predicated region
  $region22: #{_lambda_.15} parent=0 // pred_check
    _
  $region23: #{_lambda_.15} parent=0 // pred_check_branch
    %25 = sbr.rel (0) target = $region25
  $region24: #{_lambda_.15} parent=0 // pred_region
    _
  $region25: #{_lambda_.15} parent=0 // pred_fallthru
    _
  // Predicated region
  $region26: #{_lambda_.15} parent=0 // pred_check
    _
  $region27: #{_lambda_.15} parent=0 // pred_check_branch
    %27 = sbr.rel (0) target = $region29
  $region28: #{_lambda_.15} parent=0 // pred_region
    _
  $region29: #{_lambda_.15} parent=0 // pred_fallthru
    _
  // Predicated region
  $region30: #{_lambda_.15} parent=0 // pred_check
    _
  $region31: #{_lambda_.15} parent=0 // pred_check_branch
    %29 = sbr.rel (0) target = $region33
  $region32: #{_lambda_.15} parent=0 // pred_region
    _
  $region33: #{_lambda_.15} parent=0 // pred_fallthru
    _
  // Predicated region
  $region34: #{_lambda_.15} parent=0 // pred_check
    _
  $region35: #{_lambda_.15} parent=0 // pred_check_branch
    %31 = sbr.rel (0) target = $region37
  $region36: #{_lambda_.15} parent=0 // pred_region
    _
  $region37: #{_lambda_.15} parent=0 // pred_fallthru
    _
  %v33 = vld [vmem:[%s1] sm:$0xff]
  %v34 = vld [vmem:[%s1 + $0x8] sm:$0xff]
  %v35 = vld [vmem:[%s1 + $0x10] sm:$0xff]
  %v36 = vld [vmem:[%s1 + $0x18] sm:$0xff]
  %v37 = vld [vmem:[%s2] sm:$0x3]
  %v38 = vld [vmem:[%s3] sm:$0x3]
  %v39 = vld [vmem:[%s4] sm:$0x1]
  %v40 = vld [vmem:[%s5] sm:$0x1]
  %v41 = vld [vmem:[%s6] sm:$0xf]
  %v42 = vld [vmem:[%s6 + $0x4] sm:$0xf]
  %v43 = vld [vmem:[%s6 + $0x8] sm:$0xf]
  %v44 = vld [vmem:[%s6 + $0xc] sm:$0xf]
  %v45 = vld [vmem:[%s6 + $0x10] sm:$0xf]
  %v46 = vld [vmem:[%s6 + $0x14] sm:$0xf]
  %v47 = vld [vmem:[%s6 + $0x18] sm:$0xf]
  %v48 = vld [vmem:[%s6 + $0x1c] sm:$0xf]
  %v49 = vld [vmem:[%s7] sm:$0x1]
  %v50 = vld [vmem:[%s8] sm:$0x1]
  %v51 = vpack.c.bf16 %v34, %v33
  %v52 = vpack.c.bf16 %v36, %v35
  %vm53 = vcmask 23552
  %v55 = vsel %vm53, %v51, 0
  %v58 = vsel %vm53, %v52, 0
  %vm60 = vcmask 1040384
  %vm61 = vcmask 1041408
  %v62 = vsel %vm60, 4294967295, 65535
  %v63 = vsel %vm61, %v62, 0
  %v65 = vand.u32 %v38, %v63
  %67 = vmatprep.subr.bf16.mxu0 0
  %68 = vmatpush1.bf16.msra.mxu0 0
  %69 = vmatprep.subr.bf16.mxu0 0
  %70 = vmatpush1.bf16.msra.mxu0 0
  %71 = vmatprep.subr.bf16.mxu0 0
  %72 = vmatpush1.bf16.msra.mxu0 0
  %73 = vmatprep.subr.bf16.mxu0 0
  %74 = vmatpush1.bf16.msra.mxu0 0
  %75 = vmatprep.subr.bf16.mxu0 0
  %76 = vmatpush1.bf16.msra.mxu0 0
  %77 = vmatprep.subr.bf16.mxu0 0
  %78 = vmatpush1.bf16.msra.mxu0 0
  %79 = vmatprep.subr.bf16.mxu0 0
  %80 = vmatpush1.bf16.msra.mxu0 0
  %81 = vmatprep.subr.bf16.mxu0 0
  %82 = vmatpush1.bf16.msra.mxu0 %v65
  %83 = vmatprep.subr.bf16.mxu0 0
  %84 = vmatpush2.bf16.msra.mxu0 0
  %85 = vmatprep.subr.bf16.mxu0 0
  %86 = vmatpush2.bf16.msra.mxu0 0
  %87 = vmatprep.subr.bf16.mxu0 0
  %88 = vmatpush2.bf16.msra.mxu0 0
  %89 = vmatprep.subr.bf16.mxu0 0
  %90 = vmatpush2.bf16.msra.mxu0 0
  %91 = vmatprep.subr.bf16.mxu0 0
  %92 = vmatpush2.bf16.msra.mxu0 0
  %93 = vmatprep.subr.bf16.mxu0 0
  %94 = vmatpush2.bf16.msra.mxu0 0
  %95 = vmatprep.subr.bf16.mxu0 0
  %96 = vmatpush2.bf16.msra.mxu0 0
  %97 = vmatprep.subr.bf16.mxu0 0
  %98 = vmatpush2.bf16.msra.mxu0 0
  %99 = vmatprep.mubr.bf16.mxu0 0
  %100 = vmatmul.mubr.bf16.gmra.mxu0 %v55
  %v101 = vpop.f32.mrf.mxu0
  %v102 = vadd.f32 0.0, %v101
  %v103 = vpop.f32.mrf.mxu0
  %v104 = vpop.f32.mrf.mxu0
  %v105 = vadd.f32 0.0, %v104
  %v106 = vpop.f32.mrf.mxu0
  %107 = vmatprep.mubr.bf16.mxu0 0
  %108 = vmatmul.mubr.bf16.gmra.mxu0 %v58
  %v109 = vpop.f32.mrf.mxu0
  %v110 = vadd.f32 0.0, %v109
  %v111 = vpop.f32.mrf.mxu0
  %v112 = vpop.f32.mrf.mxu0
  %v113 = vadd.f32 0.0, %v112
  %v114 = vpop.f32.mrf.mxu0
  %115 = vdwg.mxu0
  %v116 = vld [vmem:[%s0] sm:$0x3]
  %v117 = vld [vmem:[%s0 + $0x2] sm:$0x3]
  %v118 = vld [vmem:[%s0 + $0x4] sm:$0x3]
  %v119 = vld [vmem:[%s0 + $0x6] sm:$0x3]
  %v120 = vld [vmem:[%s0 + $0x8] sm:$0x3]
  %v121 = vld [vmem:[%s0 + $0xa] sm:$0x3]
  %v122 = vld [vmem:[%s0 + $0xc] sm:$0x3]
  %v123 = vld [vmem:[%s0 + $0xe] sm:$0x3]
  %v124 = vld [vmem:[%s0 + $0x10] sm:$0x3]
  %v125 = vld [vmem:[%s0 + $0x12] sm:$0x3]
  %v126 = vld [vmem:[%s0 + $0x14] sm:$0x3]
  %v127 = vld [vmem:[%s0 + $0x16] sm:$0x3]
  %v128 = vld [vmem:[%s0 + $0x18] sm:$0x3]
  %v129 = vld [vmem:[%s0 + $0x1a] sm:$0x3]
  %v130 = vld [vmem:[%s0 + $0x1c] sm:$0x3]
  %v131 = vld [vmem:[%s0 + $0x1e] sm:$0x3]
  %v132 = vld [vmem:[%s0 + $0x20] sm:$0x3]
  %v133 = vld [vmem:[%s0 + $0x22] sm:$0x3]
  %v134 = vld [vmem:[%s0 + $0x24] sm:$0x3]
  %v135 = vld [vmem:[%s0 + $0x26] sm:$0x3]
  %v136 = vld [vmem:[%s0 + $0x28] sm:$0x3]
  %v137 = vld [vmem:[%s0 + $0x2a] sm:$0x3]
  %v138 = vld [vmem:[%s0 + $0x2c] sm:$0x3]
  %v139 = vld [vmem:[%s0 + $0x2e] sm:$0x3]
  %v140 = vld [vmem:[%s0 + $0x30] sm:$0x3]
  %v141 = vld [vmem:[%s0 + $0x32] sm:$0x3]
  %v142 = vld [vmem:[%s0 + $0x34] sm:$0x3]
  %v143 = vld [vmem:[%s0 + $0x36] sm:$0x3]
  %v144 = vld [vmem:[%s0 + $0x38] sm:$0x3]
  %v145 = vld [vmem:[%s0 + $0x3a] sm:$0x3]
  %v146 = vld [vmem:[%s0 + $0x3c] sm:$0x3]
  %v147 = vld [vmem:[%s0 + $0x3e] sm:$0x3]
  %v148 = vunpack.c.l.bf16 %v116
  %v149 = vunpack.c.l.bf16 %v117
  %v150 = vunpack.c.l.bf16 %v118
  %v151 = vunpack.c.l.bf16 %v119
  %v152 = vunpack.c.l.bf16 %v120
  %v153 = vunpack.c.l.bf16 %v121
  %v154 = vunpack.c.l.bf16 %v122
  %v155 = vunpack.c.l.bf16 %v123
  %v156 = vunpack.c.l.bf16 %v124
  %v157 = vunpack.c.l.bf16 %v125
  %v158 = vunpack.c.l.bf16 %v126
  %v159 = vunpack.c.l.bf16 %v127
  %v160 = vunpack.c.l.bf16 %v128
  %v161 = vunpack.c.l.bf16 %v129
  %v162 = vunpack.c.l.bf16 %v130
  %v163 = vunpack.c.l.bf16 %v131
  %v164 = vunpack.c.l.bf16 %v132
  %v165 = vunpack.c.l.bf16 %v133
  %v166 = vunpack.c.l.bf16 %v134
  %v167 = vunpack.c.l.bf16 %v135
  %v168 = vunpack.c.l.bf16 %v136
  %v169 = vunpack.c.l.bf16 %v137
  %v170 = vunpack.c.l.bf16 %v138
  %v171 = vunpack.c.l.bf16 %v139
  %v172 = vunpack.c.l.bf16 %v140
  %v173 = vunpack.c.l.bf16 %v141
  %v174 = vunpack.c.l.bf16 %v142
  %v175 = vunpack.c.l.bf16 %v143
  %v176 = vunpack.c.l.bf16 %v144
  %v177 = vunpack.c.l.bf16 %v145
  %v178 = vunpack.c.l.bf16 %v146
  %v179 = vunpack.c.l.bf16 %v147
  %v184 = vcombine.high %v33, %v33
  %v185 = vcombine.high %v34, %v34
  %v186 = vcombine.high %v35, %v35
  %v187 = vcombine.high %v36, %v36
  %v188 = vrot.slane %v33, 1
  %v189 = vrot.slane %v33, 2
  %v190 = vrot.slane %v33, 3
  %v191 = vrot.slane %v184, 1
  %v192 = vrot.slane %v184, 2
  %v193 = vrot.slane %v184, 3
  %v194 = vrot.slane %v34, 1
  %v195 = vrot.slane %v34, 2
  %v196 = vrot.slane %v34, 3
  %v197 = vrot.slane %v185, 1
  %v198 = vrot.slane %v185, 2
  %v199 = vrot.slane %v185, 3
  %v200 = vrot.slane %v35, 1
  %v201 = vrot.slane %v35, 2
  %v202 = vrot.slane %v35, 3
  %v203 = vrot.slane %v186, 1
  %v204 = vrot.slane %v186, 2
  %v205 = vrot.slane %v186, 3
  %v206 = vrot.slane %v36, 1
  %v207 = vrot.slane %v36, 2
  %v208 = vrot.slane %v36, 3
  %v209 = vrot.slane %v187, 1
  %v210 = vrot.slane %v187, 2
  %v211 = vrot.slane %v187, 3
  %v244 = vsub.f32 %v148, %v33
  %v245 = vsub.f32 %v149, %v188
  %v246 = vsub.f32 %v150, %v189
  %v247 = vsub.f32 %v151, %v190
  %v248 = vsub.f32 %v152, %v184
  %v249 = vsub.f32 %v153, %v191
  %v250 = vsub.f32 %v154, %v192
  %v251 = vsub.f32 %v155, %v193
  %v252 = vsub.f32 %v156, %v34
  %v253 = vsub.f32 %v157, %v194
  %v254 = vsub.f32 %v158, %v195
  %v255 = vsub.f32 %v159, %v196
  %v256 = vsub.f32 %v160, %v185
  %v257 = vsub.f32 %v161, %v197
  %v258 = vsub.f32 %v162, %v198
  %v259 = vsub.f32 %v163, %v199
  %v260 = vsub.f32 %v164, %v35
  %v261 = vsub.f32 %v165, %v200
  %v262 = vsub.f32 %v166, %v201
  %v263 = vsub.f32 %v167, %v202
  %v264 = vsub.f32 %v168, %v186
  %v265 = vsub.f32 %v169, %v203
  %v266 = vsub.f32 %v170, %v204
  %v267 = vsub.f32 %v171, %v205
  %v268 = vsub.f32 %v172, %v36
  %v269 = vsub.f32 %v173, %v206
  %v270 = vsub.f32 %v174, %v207
  %v271 = vsub.f32 %v175, %v208
  %v272 = vsub.f32 %v176, %v187
  %v273 = vsub.f32 %v177, %v209
  %v274 = vsub.f32 %v178, %v210
  %v275 = vsub.f32 %v179, %v211
  %v276 = vpack.c.bf16 %v244, %v244
  %v277 = vpack.c.bf16 %v245, %v245
  %v278 = vpack.c.bf16 %v246, %v246
  %v279 = vpack.c.bf16 %v247, %v247
  %v280 = vpack.c.bf16 %v248, %v248
  %v281 = vpack.c.bf16 %v249, %v249
  %v282 = vpack.c.bf16 %v250, %v250
  %v283 = vpack.c.bf16 %v251, %v251
  %v284 = vpack.c.bf16 %v252, %v252
  %v285 = vpack.c.bf16 %v253, %v253
  %v286 = vpack.c.bf16 %v254, %v254
  %v287 = vpack.c.bf16 %v255, %v255
  %v288 = vpack.c.bf16 %v256, %v256
  %v289 = vpack.c.bf16 %v257, %v257
  %v290 = vpack.c.bf16 %v258, %v258
  %v291 = vpack.c.bf16 %v259, %v259
  %v292 = vpack.c.bf16 %v260, %v260
  %v293 = vpack.c.bf16 %v261, %v261
  %v294 = vpack.c.bf16 %v262, %v262
  %v295 = vpack.c.bf16 %v263, %v263
  %v296 = vpack.c.bf16 %v264, %v264
  %v297 = vpack.c.bf16 %v265, %v265
  %v298 = vpack.c.bf16 %v266, %v266
  %v299 = vpack.c.bf16 %v267, %v267
  %v300 = vpack.c.bf16 %v268, %v268
  %v301 = vpack.c.bf16 %v269, %v269
  %v302 = vpack.c.bf16 %v270, %v270
  %v303 = vpack.c.bf16 %v271, %v271
  %v304 = vpack.c.bf16 %v272, %v272
  %v305 = vpack.c.bf16 %v273, %v273
  %v306 = vpack.c.bf16 %v274, %v274
  %v307 = vpack.c.bf16 %v275, %v275
  %v340 = vunpack.c.l.b16 %v276
  %v341 = vunpack.c.l.b16 %v277
  %v342 = vunpack.c.l.b16 %v278
  %v343 = vunpack.c.l.b16 %v279
  %v344 = vunpack.c.l.b16 %v280
  %v345 = vunpack.c.l.b16 %v281
  %v346 = vunpack.c.l.b16 %v282
  %v347 = vunpack.c.l.b16 %v283
  %v348 = vunpack.c.l.b16 %v284
  %v349 = vunpack.c.l.b16 %v285
  %v350 = vunpack.c.l.b16 %v286
  %v351 = vunpack.c.l.b16 %v287
  %v352 = vunpack.c.l.b16 %v288
  %v353 = vunpack.c.l.b16 %v289
  %v354 = vunpack.c.l.b16 %v290
  %v355 = vunpack.c.l.b16 %v291
  %v356 = vunpack.c.l.b16 %v292
  %v357 = vunpack.c.l.b16 %v293
  %v358 = vunpack.c.l.b16 %v294
  %v359 = vunpack.c.l.b16 %v295
  %v360 = vunpack.c.l.b16 %v296
  %v361 = vunpack.c.l.b16 %v297
  %v362 = vunpack.c.l.b16 %v298
  %v363 = vunpack.c.l.b16 %v299
  %v364 = vunpack.c.l.b16 %v300
  %v365 = vunpack.c.l.b16 %v301
  %v366 = vunpack.c.l.b16 %v302
  %v367 = vunpack.c.l.b16 %v303
  %v368 = vunpack.c.l.b16 %v304
  %v369 = vunpack.c.l.b16 %v305
  %v370 = vunpack.c.l.b16 %v306
  %v371 = vunpack.c.l.b16 %v307
  %v372 = vrot.slane %v341, 7
  %vm373 = vcmask 1041409
  %v374 = vsel %vm373, %v372, %v340
  %v375 = vrot.slane %v342, 6
  %vm376 = vcmask 1042434
  %v377 = vsel %vm376, %v375, %v374
  %v378 = vrot.slane %v343, 5
  %vm379 = vcmask 1043459
  %v380 = vsel %vm379, %v378, %v377
  %v381 = vrot.slane %v344, 4
  %vm382 = vcmask 1044484
  %v383 = vsel %vm382, %v381, %v380
  %v384 = vrot.slane %v345, 3
  %vm385 = vcmask 1045509
  %v386 = vsel %vm385, %v384, %v383
  %v387 = vrot.slane %v346, 2
  %vm388 = vcmask 1046534
  %v389 = vsel %vm388, %v387, %v386
  %v390 = vrot.slane %v347, 1
  %vm391 = vcmask 1047559
  %v392 = vsel %vm391, %v390, %v389
  %v393 = vrot.slane %v349, 7
  %v394 = vsel %vm373, %v393, %v348
  %v395 = vrot.slane %v350, 6
  %v396 = vsel %vm376, %v395, %v394
  %v397 = vrot.slane %v351, 5
  %v398 = vsel %vm379, %v397, %v396
  %v399 = vrot.slane %v352, 4
  %v400 = vsel %vm382, %v399, %v398
  %v401 = vrot.slane %v353, 3
  %v402 = vsel %vm385, %v401, %v400
  %v403 = vrot.slane %v354, 2
  %v404 = vsel %vm388, %v403, %v402
  %v405 = vrot.slane %v355, 1
  %v406 = vsel %vm391, %v405, %v404
  %v407 = vrot.slane %v357, 7
  %v408 = vsel %vm373, %v407, %v356
  %v409 = vrot.slane %v358, 6
  %v410 = vsel %vm376, %v409, %v408
  %v411 = vrot.slane %v359, 5
  %v412 = vsel %vm379, %v411, %v410
  %v413 = vrot.slane %v360, 4
  %v414 = vsel %vm382, %v413, %v412
  %v415 = vrot.slane %v361, 3
  %v416 = vsel %vm385, %v415, %v414
  %v417 = vrot.slane %v362, 2
  %v418 = vsel %vm388, %v417, %v416
  %v419 = vrot.slane %v363, 1
  %v420 = vsel %vm391, %v419, %v418
  %v421 = vrot.slane %v365, 7
  %v422 = vsel %vm373, %v421, %v364
  %v423 = vrot.slane %v366, 6
  %v424 = vsel %vm376, %v423, %v422
  %v425 = vrot.slane %v367, 5
  %v426 = vsel %vm379, %v425, %v424
  %v427 = vrot.slane %v368, 4
  %v428 = vsel %vm382, %v427, %v426
  %v429 = vrot.slane %v369, 3
  %v430 = vsel %vm385, %v429, %v428
  %v431 = vrot.slane %v370, 2
  %v432 = vsel %vm388, %v431, %v430
  %v433 = vrot.slane %v371, 1
  %v434 = vsel %vm391, %v433, %v432
  %v435 = vpack.c.b16 %v406, %v392
  %v436 = vpack.c.b16 %v434, %v420
  %v438 = vsel %vm53, %v435, 0
  %v441 = vsel %vm53, %v436, 0
  %v444 = vand.u32 %v37, %v63
  %446 = vmatprep.subr.bf16.mxu0 0
  %447 = vmatpush1.bf16.msra.mxu0 0
  %448 = vmatprep.subr.bf16.mxu0 0
  %449 = vmatpush1.bf16.msra.mxu0 0
  %450 = vmatprep.subr.bf16.mxu0 0
  %451 = vmatpush1.bf16.msra.mxu0 0
  %452 = vmatprep.subr.bf16.mxu0 0
  %453 = vmatpush1.bf16.msra.mxu0 0
  %454 = vmatprep.subr.bf16.mxu0 0
  %455 = vmatpush1.bf16.msra.mxu0 0
  %456 = vmatprep.subr.bf16.mxu0 0
  %457 = vmatpush1.bf16.msra.mxu0 0
  %458 = vmatprep.subr.bf16.mxu0 0
  %459 = vmatpush1.bf16.msra.mxu0 0
  %460 = vmatprep.subr.bf16.mxu0 0
  %461 = vmatpush1.bf16.msra.mxu0 %v444
  %462 = vmatprep.subr.bf16.mxu0 0
  %463 = vmatpush2.bf16.msra.mxu0 0
  %464 = vmatprep.subr.bf16.mxu0 0
  %465 = vmatpush2.bf16.msra.mxu0 0
  %466 = vmatprep.subr.bf16.mxu0 0
  %467 = vmatpush2.bf16.msra.mxu0 0
  %468 = vmatprep.subr.bf16.mxu0 0
  %469 = vmatpush2.bf16.msra.mxu0 0
  %470 = vmatprep.subr.bf16.mxu0 0
  %471 = vmatpush2.bf16.msra.mxu0 0
  %472 = vmatprep.subr.bf16.mxu0 0
  %473 = vmatpush2.bf16.msra.mxu0 0
  %474 = vmatprep.subr.bf16.mxu0 0
  %475 = vmatpush2.bf16.msra.mxu0 0
  %476 = vmatprep.subr.bf16.mxu0 0
  %477 = vmatpush2.bf16.msra.mxu0 0
  %478 = vmatprep.mubr.bf16.mxu0 0
  %479 = vmatmul.mubr.bf16.gmra.mxu0 %v438
  %v480 = vpop.f32.mrf.mxu0
  %v481 = vadd.f32 %v102, %v480
  %v482 = vpop.f32.mrf.mxu0
  %v483 = vpop.f32.mrf.mxu0
  %v484 = vadd.f32 %v105, %v483
  %v485 = vpop.f32.mrf.mxu0
  %486 = vmatprep.mubr.bf16.mxu0 0
  %487 = vmatmul.mubr.bf16.gmra.mxu0 %v441
  %v488 = vpop.f32.mrf.mxu0
  %v489 = vadd.f32 %v110, %v488
  %v490 = vpop.f32.mrf.mxu0
  %v491 = vpop.f32.mrf.mxu0
  %v492 = vadd.f32 %v113, %v491
  %v493 = vpop.f32.mrf.mxu0
  %494 = vdwg.mxu0
  %v496 = vlaneseq
  %v497 = vshrl.u32 %v496, 7
  %v498 = vsub.s32 0, %v497
  %v499 = vrot.slane %v39, %v498
  %v501 = vmul.f32 %v481, %v499
  %v502 = vmul.f32 %v484, %v499
  %v503 = vmul.f32 %v489, %v499
  %v504 = vmul.f32 %v492, %v499
  %v506 = vlaneseq
  %v507 = vshrl.u32 %v506, 7
  %v508 = vsub.s32 0, %v507
  %v509 = vrot.slane %v40, %v508
  %v511 = vadd.f32 %v501, %v509
  %v512 = vadd.f32 %v502, %v509
  %v513 = vadd.f32 %v503, %v509
  %v514 = vadd.f32 %v504, %v509
  %vm515 = vcmp.ge.f32.partialorder %v511, 0.0
  %vm516 = vcmp.ge.f32.partialorder %v512, 0.0
  %vm517 = vcmp.ge.f32.partialorder %v513, 0.0
  %vm518 = vcmp.ge.f32.partialorder %v514, 0.0
  %v519 = vmul.f32 %v511, 0.2
  %v520 = vmul.f32 %v512, 0.2
  %v521 = vmul.f32 %v513, 0.2
  %v522 = vmul.f32 %v514, 0.2
  %v523 = vsel %vm515, %v511, %v519
  %v524 = vsel %vm516, %v512, %v520
  %v525 = vsel %vm517, %v513, %v521
  %v526 = vsel %vm518, %v514, %v522
  %v527 = vpack.c.bf16 %v524, %v523
  %v528 = vpack.c.bf16 %v526, %v525
  %v537 = vunpack.c.l.b16 %v41
  %v538 = vunpack.c.l.b16 %v42
  %v539 = vunpack.c.l.b16 %v43
  %v540 = vunpack.c.l.b16 %v44
  %v541 = vunpack.c.l.b16 %v45
  %v542 = vunpack.c.l.b16 %v46
  %v543 = vunpack.c.l.b16 %v47
  %v544 = vunpack.c.l.b16 %v48
  %v545 = vpack.c.b16 %v538, %v537
  %v546 = vpack.c.b16 %v540, %v539
  %v547 = vpack.c.b16 %v542, %v541
  %v548 = vpack.c.b16 %v544, %v543
  %vm553 = vcmask 523264
  %v555 = vsel %vm553, %v527, 0
  %v558 = vsel %vm553, %v528, 0
  %560 = vmatprep.subr.bf16.mxu0 0
  %561 = vmatpush1.bf16.msra.mxu0 0
  %562 = vmatprep.subr.bf16.mxu0 0
  %563 = vmatpush1.bf16.msra.mxu0 0
  %564 = vmatprep.subr.bf16.mxu0 0
  %565 = vmatpush1.bf16.msra.mxu0 0
  %566 = vmatprep.subr.bf16.mxu0 0
  %567 = vmatpush1.bf16.msra.mxu0 0
  %568 = vmatprep.subr.bf16.mxu0 0
  %569 = vmatpush1.bf16.msra.mxu0 %v548
  %570 = vmatprep.subr.bf16.mxu0 0
  %571 = vmatpush1.bf16.msra.mxu0 %v547
  %572 = vmatprep.subr.bf16.mxu0 0
  %573 = vmatpush1.bf16.msra.mxu0 %v546
  %574 = vmatprep.subr.bf16.mxu0 0
  %575 = vmatpush1.bf16.msra.mxu0 %v545
  %576 = vmatprep.subr.bf16.mxu0 0
  %577 = vmatpush2.bf16.msra.mxu0 0
  %578 = vmatprep.subr.bf16.mxu0 0
  %579 = vmatpush2.bf16.msra.mxu0 0
  %580 = vmatprep.subr.bf16.mxu0 0
  %581 = vmatpush2.bf16.msra.mxu0 0
  %582 = vmatprep.subr.bf16.mxu0 0
  %583 = vmatpush2.bf16.msra.mxu0 0
  %584 = vmatprep.subr.bf16.mxu0 0
  %585 = vmatpush2.bf16.msra.mxu0 0
  %586 = vmatprep.subr.bf16.mxu0 0
  %587 = vmatpush2.bf16.msra.mxu0 0
  %588 = vmatprep.subr.bf16.mxu0 0
  %589 = vmatpush2.bf16.msra.mxu0 0
  %590 = vmatprep.subr.bf16.mxu0 0
  %591 = vmatpush2.bf16.msra.mxu0 0
  %592 = vmatprep.mubr.bf16.mxu0 0
  %593 = vmatmul.mubr.bf16.gmra.mxu0 %v555
  %v594 = vpop.f32.mrf.mxu0
  %v595 = vadd.f32 0.0, %v594
  %v596 = vpop.f32.mrf.mxu0
  %v597 = vpop.f32.mrf.mxu0
  %v598 = vadd.f32 0.0, %v597
  %v599 = vpop.f32.mrf.mxu0
  %600 = vmatprep.mubr.bf16.mxu0 0
  %601 = vmatmul.mubr.bf16.gmra.mxu0 %v558
  %v602 = vpop.f32.mrf.mxu0
  %v603 = vadd.f32 0.0, %v602
  %v604 = vpop.f32.mrf.mxu0
  %v605 = vpop.f32.mrf.mxu0
  %v606 = vadd.f32 0.0, %v605
  %v607 = vpop.f32.mrf.mxu0
  %608 = vdwg.mxu0
  %v610 = vlaneseq
  %v611 = vshrl.u32 %v610, 7
  %v612 = vsub.s32 0, %v611
  %v613 = vrot.slane %v49, %v612
  %v615 = vmul.f32 %v595, %v613
  %v616 = vmul.f32 %v598, %v613
  %v617 = vmul.f32 %v603, %v613
  %v618 = vmul.f32 %v606, %v613
  %v620 = vlaneseq
  %v621 = vshrl.u32 %v620, 7
  %v622 = vsub.s32 0, %v621
  %v623 = vrot.slane %v50, %v622
  %v625 = vadd.f32 %v615, %v623
  %v626 = vadd.f32 %v616, %v623
  %v627 = vadd.f32 %v617, %v623
  %v628 = vadd.f32 %v618, %v623
  %vm629 = vcmp.ge.f32.partialorder %v625, 0.0
  %vm630 = vcmp.ge.f32.partialorder %v626, 0.0
  %vm631 = vcmp.ge.f32.partialorder %v627, 0.0
  %vm632 = vcmp.ge.f32.partialorder %v628, 0.0
  %v633 = vmul.f32 %v625, 0.2
  %v634 = vmul.f32 %v626, 0.2
  %v635 = vmul.f32 %v627, 0.2
  %v636 = vmul.f32 %v628, 0.2
  %v637 = vsel %vm629, %v625, %v633
  %v638 = vsel %vm630, %v626, %v634
  %v639 = vsel %vm631, %v627, %v635
  %v640 = vsel %vm632, %v628, %v636
  %v641 = vrot.slane %v33, 7
  %v642 = vrot.slane %v184, 7
  %v643 = vrot.slane %v34, 7
  %v644 = vrot.slane %v185, 7
  %v645 = vrot.slane %v35, 7
  %v646 = vrot.slane %v186, 7
  %v647 = vrot.slane %v36, 7
  %v648 = vrot.slane %v187, 7
  %v657 = vsub.f32 %v148, %v641
  %v658 = vsub.f32 %v149, %v33
  %v659 = vsub.f32 %v150, %v188
  %v660 = vsub.f32 %v151, %v189
  %v661 = vsub.f32 %v152, %v642
  %v662 = vsub.f32 %v153, %v184
  %v663 = vsub.f32 %v154, %v191
  %v664 = vsub.f32 %v155, %v192
  %v665 = vsub.f32 %v156, %v643
  %v666 = vsub.f32 %v157, %v34
  %v667 = vsub.f32 %v158, %v194
  %v668 = vsub.f32 %v159, %v195
  %v669 = vsub.f32 %v160, %v644
  %v670 = vsub.f32 %v161, %v185
  %v671 = vsub.f32 %v162, %v197
  %v672 = vsub.f32 %v163, %v198
  %v673 = vsub.f32 %v164, %v645
  %v674 = vsub.f32 %v165, %v35
  %v675 = vsub.f32 %v166, %v200
  %v676 = vsub.f32 %v167, %v201
  %v677 = vsub.f32 %v168, %v646
  %v678 = vsub.f32 %v169, %v186
  %v679 = vsub.f32 %v170, %v203
  %v680 = vsub.f32 %v171, %v204
  %v681 = vsub.f32 %v172, %v647
  %v682 = vsub.f32 %v173, %v36
  %v683 = vsub.f32 %v174, %v206
  %v684 = vsub.f32 %v175, %v207
  %v685 = vsub.f32 %v176, %v648
  %v686 = vsub.f32 %v177, %v187
  %v687 = vsub.f32 %v178, %v209
  %v688 = vsub.f32 %v179, %v210
  %v689 = vpack.c.bf16 %v657, %v657
  %v690 = vpack.c.bf16 %v658, %v658
  %v691 = vpack.c.bf16 %v659, %v659
  %v692 = vpack.c.bf16 %v660, %v660
  %v693 = vpack.c.bf16 %v661, %v661
  %v694 = vpack.c.bf16 %v662, %v662
  %v695 = vpack.c.bf16 %v663, %v663
  %v696 = vpack.c.bf16 %v664, %v664
  %v697 = vpack.c.bf16 %v665, %v665
  %v698 = vpack.c.bf16 %v666, %v666
  %v699 = vpack.c.bf16 %v667, %v667
  %v700 = vpack.c.bf16 %v668, %v668
  %v701 = vpack.c.bf16 %v669, %v669
  %v702 = vpack.c.bf16 %v670, %v670
  %v703 = vpack.c.bf16 %v671, %v671
  %v704 = vpack.c.bf16 %v672, %v672
  %v705 = vpack.c.bf16 %v673, %v673
  %v706 = vpack.c.bf16 %v674, %v674
  %v707 = vpack.c.bf16 %v675, %v675
  %v708 = vpack.c.bf16 %v676, %v676
  %v709 = vpack.c.bf16 %v677, %v677
  %v710 = vpack.c.bf16 %v678, %v678
  %v711 = vpack.c.bf16 %v679, %v679
  %v712 = vpack.c.bf16 %v680, %v680
  %v713 = vpack.c.bf16 %v681, %v681
  %v714 = vpack.c.bf16 %v682, %v682
  %v715 = vpack.c.bf16 %v683, %v683
  %v716 = vpack.c.bf16 %v684, %v684
  %v717 = vpack.c.bf16 %v685, %v685
  %v718 = vpack.c.bf16 %v686, %v686
  %v719 = vpack.c.bf16 %v687, %v687
  %v720 = vpack.c.bf16 %v688, %v688
  %v753 = vunpack.c.l.b16 %v689
  %v754 = vunpack.c.l.b16 %v690
  %v755 = vunpack.c.l.b16 %v691
  %v756 = vunpack.c.l.b16 %v692
  %v757 = vunpack.c.l.b16 %v693
  %v758 = vunpack.c.l.b16 %v694
  %v759 = vunpack.c.l.b16 %v695
  %v760 = vunpack.c.l.b16 %v696
  %v761 = vunpack.c.l.b16 %v697
  %v762 = vunpack.c.l.b16 %v698
  %v763 = vunpack.c.l.b16 %v699
  %v764 = vunpack.c.l.b16 %v700
  %v765 = vunpack.c.l.b16 %v701
  %v766 = vunpack.c.l.b16 %v702
  %v767 = vunpack.c.l.b16 %v703
  %v768 = vunpack.c.l.b16 %v704
  %v769 = vunpack.c.l.b16 %v705
  %v770 = vunpack.c.l.b16 %v706
  %v771 = vunpack.c.l.b16 %v707
  %v772 = vunpack.c.l.b16 %v708
  %v773 = vunpack.c.l.b16 %v709
  %v774 = vunpack.c.l.b16 %v710
  %v775 = vunpack.c.l.b16 %v711
  %v776 = vunpack.c.l.b16 %v712
  %v777 = vunpack.c.l.b16 %v713
  %v778 = vunpack.c.l.b16 %v714
  %v779 = vunpack.c.l.b16 %v715
  %v780 = vunpack.c.l.b16 %v716
  %v781 = vunpack.c.l.b16 %v717
  %v782 = vunpack.c.l.b16 %v718
  %v783 = vunpack.c.l.b16 %v719
  %v784 = vunpack.c.l.b16 %v720
  %v785 = vrot.slane %v753, 1
  %v786 = vsel %vm373, %v754, %v785
  %v787 = vrot.slane %v755, 7
  %v788 = vsel %vm376, %v787, %v786
  %v789 = vrot.slane %v756, 6
  %v790 = vsel %vm379, %v789, %v788
  %v791 = vrot.slane %v757, 5
  %v792 = vsel %vm382, %v791, %v790
  %v793 = vrot.slane %v758, 4
  %v794 = vsel %vm385, %v793, %v792
  %v795 = vrot.slane %v759, 3
  %v796 = vsel %vm388, %v795, %v794
  %v797 = vrot.slane %v760, 2
  %v798 = vsel %vm391, %v797, %v796
  %v799 = vrot.slane %v761, 1
  %v800 = vsel %vm373, %v762, %v799
  %v801 = vrot.slane %v763, 7
  %v802 = vsel %vm376, %v801, %v800
  %v803 = vrot.slane %v764, 6
  %v804 = vsel %vm379, %v803, %v802
  %v805 = vrot.slane %v765, 5
  %v806 = vsel %vm382, %v805, %v804
  %v807 = vrot.slane %v766, 4
  %v808 = vsel %vm385, %v807, %v806
  %v809 = vrot.slane %v767, 3
  %v810 = vsel %vm388, %v809, %v808
  %v811 = vrot.slane %v768, 2
  %v812 = vsel %vm391, %v811, %v810
  %v813 = vrot.slane %v769, 1
  %v814 = vsel %vm373, %v770, %v813
  %v815 = vrot.slane %v771, 7
  %v816 = vsel %vm376, %v815, %v814
  %v817 = vrot.slane %v772, 6
  %v818 = vsel %vm379, %v817, %v816
  %v819 = vrot.slane %v773, 5
  %v820 = vsel %vm382, %v819, %v818
  %v821 = vrot.slane %v774, 4
  %v822 = vsel %vm385, %v821, %v820
  %v823 = vrot.slane %v775, 3
  %v824 = vsel %vm388, %v823, %v822
  %v825 = vrot.slane %v776, 2
  %v826 = vsel %vm391, %v825, %v824
  %v827 = vrot.slane %v777, 1
  %v828 = vsel %vm373, %v778, %v827
  %v829 = vrot.slane %v779, 7
  %v830 = vsel %vm376, %v829, %v828
  %v831 = vrot.slane %v780, 6
  %v832 = vsel %vm379, %v831, %v830
  %v833 = vrot.slane %v781, 5
  %v834 = vsel %vm382, %v833, %v832
  %v835 = vrot.slane %v782, 4
  %v836 = vsel %vm385, %v835, %v834
  %v837 = vrot.slane %v783, 3
  %v838 = vsel %vm388, %v837, %v836
  %v839 = vrot.slane %v784, 2
  %v840 = vsel %vm391, %v839, %v838
  %v841 = vpack.c.b16 %v812, %v798
  %v842 = vpack.c.b16 %v840, %v826
  %v844 = vsel %vm53, %v841, 0
  %v847 = vsel %vm53, %v842, 0
  %849 = vmatprep.subr.bf16.mxu0 0
  %850 = vmatpush1.bf16.msra.mxu0 0
  %851 = vmatprep.subr.bf16.mxu0 0
  %852 = vmatpush1.bf16.msra.mxu0 0
  %853 = vmatprep.subr.bf16.mxu0 0
  %854 = vmatpush1.bf16.msra.mxu0 0
  %855 = vmatprep.subr.bf16.mxu0 0
  %856 = vmatpush1.bf16.msra.mxu0 0
  %857 = vmatprep.subr.bf16.mxu0 0
  %858 = vmatpush1.bf16.msra.mxu0 0
  %859 = vmatprep.subr.bf16.mxu0 0
  %860 = vmatpush1.bf16.msra.mxu0 0
  %861 = vmatprep.subr.bf16.mxu0 0
  %862 = vmatpush1.bf16.msra.mxu0 0
  %863 = vmatprep.subr.bf16.mxu0 0
  %864 = vmatpush1.bf16.msra.mxu0 %v444
  %865 = vmatprep.subr.bf16.mxu0 0
  %866 = vmatpush2.bf16.msra.mxu0 0
  %867 = vmatprep.subr.bf16.mxu0 0
  %868 = vmatpush2.bf16.msra.mxu0 0
  %869 = vmatprep.subr.bf16.mxu0 0
  %870 = vmatpush2.bf16.msra.mxu0 0
  %871 = vmatprep.subr.bf16.mxu0 0
  %872 = vmatpush2.bf16.msra.mxu0 0
  %873 = vmatprep.subr.bf16.mxu0 0
  %874 = vmatpush2.bf16.msra.mxu0 0
  %875 = vmatprep.subr.bf16.mxu0 0
  %876 = vmatpush2.bf16.msra.mxu0 0
  %877 = vmatprep.subr.bf16.mxu0 0
  %878 = vmatpush2.bf16.msra.mxu0 0
  %879 = vmatprep.subr.bf16.mxu0 0
  %880 = vmatpush2.bf16.msra.mxu0 0
  %881 = vmatprep.mubr.bf16.mxu0 0
  %882 = vmatmul.mubr.bf16.gmra.mxu0 %v844
  %v883 = vpop.f32.mrf.mxu0
  %v884 = vadd.f32 %v102, %v883
  %v885 = vpop.f32.mrf.mxu0
  %v886 = vpop.f32.mrf.mxu0
  %v887 = vadd.f32 %v105, %v886
  %v888 = vpop.f32.mrf.mxu0
  %889 = vmatprep.mubr.bf16.mxu0 0
  %890 = vmatmul.mubr.bf16.gmra.mxu0 %v847
  %v891 = vpop.f32.mrf.mxu0
  %v892 = vadd.f32 %v110, %v891
  %v893 = vpop.f32.mrf.mxu0
  %v894 = vpop.f32.mrf.mxu0
  %v895 = vadd.f32 %v113, %v894
  %v896 = vpop.f32.mrf.mxu0
  %897 = vdwg.mxu0
  %v898 = vmul.f32 %v884, %v499
  %v899 = vmul.f32 %v887, %v499
  %v900 = vmul.f32 %v892, %v499
  %v901 = vmul.f32 %v895, %v499
  %v902 = vadd.f32 %v898, %v509
  %v903 = vadd.f32 %v899, %v509
  %v904 = vadd.f32 %v900, %v509
  %v905 = vadd.f32 %v901, %v509
  %vm906 = vcmp.ge.f32.partialorder %v902, 0.0
  %vm907 = vcmp.ge.f32.partialorder %v903, 0.0
  %vm908 = vcmp.ge.f32.partialorder %v904, 0.0
  %vm909 = vcmp.ge.f32.partialorder %v905, 0.0
  %v910 = vmul.f32 %v902, 0.2
  %v911 = vmul.f32 %v903, 0.2
  %v912 = vmul.f32 %v904, 0.2
  %v913 = vmul.f32 %v905, 0.2
  %v914 = vsel %vm906, %v902, %v910
  %v915 = vsel %vm907, %v903, %v911
  %v916 = vsel %vm908, %v904, %v912
  %v917 = vsel %vm909, %v905, %v913
  %v918 = vpack.c.bf16 %v915, %v914
  %v919 = vpack.c.bf16 %v917, %v916
  %v921 = vsel %vm553, %v918, 0
  %v924 = vsel %vm553, %v919, 0
  %926 = vmatprep.subr.bf16.mxu0 0
  %927 = vmatpush1.bf16.msra.mxu0 0
  %928 = vmatprep.subr.bf16.mxu0 0
  %929 = vmatpush1.bf16.msra.mxu0 0
  %930 = vmatprep.subr.bf16.mxu0 0
  %931 = vmatpush1.bf16.msra.mxu0 0
  %932 = vmatprep.subr.bf16.mxu0 0
  %933 = vmatpush1.bf16.msra.mxu0 0
  %934 = vmatprep.subr.bf16.mxu0 0
  %935 = vmatpush1.bf16.msra.mxu0 %v548
  %936 = vmatprep.subr.bf16.mxu0 0
  %937 = vmatpush1.bf16.msra.mxu0 %v547
  %938 = vmatprep.subr.bf16.mxu0 0
  %939 = vmatpush1.bf16.msra.mxu0 %v546
  %940 = vmatprep.subr.bf16.mxu0 0
  %941 = vmatpush1.bf16.msra.mxu0 %v545
  %942 = vmatprep.subr.bf16.mxu0 0
  %943 = vmatpush2.bf16.msra.mxu0 0
  %944 = vmatprep.subr.bf16.mxu0 0
  %945 = vmatpush2.bf16.msra.mxu0 0
  %946 = vmatprep.subr.bf16.mxu0 0
  %947 = vmatpush2.bf16.msra.mxu0 0
  %948 = vmatprep.subr.bf16.mxu0 0
  %949 = vmatpush2.bf16.msra.mxu0 0
  %950 = vmatprep.subr.bf16.mxu0 0
  %951 = vmatpush2.bf16.msra.mxu0 0
  %952 = vmatprep.subr.bf16.mxu0 0
  %953 = vmatpush2.bf16.msra.mxu0 0
  %954 = vmatprep.subr.bf16.mxu0 0
  %955 = vmatpush2.bf16.msra.mxu0 0
  %956 = vmatprep.subr.bf16.mxu0 0
  %957 = vmatpush2.bf16.msra.mxu0 0
  %958 = vmatprep.mubr.bf16.mxu0 0
  %959 = vmatmul.mubr.bf16.gmra.mxu0 %v921
  %v960 = vpop.f32.mrf.mxu0
  %v961 = vadd.f32 0.0, %v960
  %v962 = vpop.f32.mrf.mxu0
  %v963 = vpop.f32.mrf.mxu0
  %v964 = vadd.f32 0.0, %v963
  %v965 = vpop.f32.mrf.mxu0
  %966 = vmatprep.mubr.bf16.mxu0 0
  %967 = vmatmul.mubr.bf16.gmra.mxu0 %v924
  %v968 = vpop.f32.mrf.mxu0
  %v969 = vadd.f32 0.0, %v968
  %v970 = vpop.f32.mrf.mxu0
  %v971 = vpop.f32.mrf.mxu0
  %v972 = vadd.f32 0.0, %v971
  %v973 = vpop.f32.mrf.mxu0
  %974 = vdwg.mxu0
  %v975 = vmul.f32 %v961, %v613
  %v976 = vmul.f32 %v964, %v613
  %v977 = vmul.f32 %v969, %v613
  %v978 = vmul.f32 %v972, %v613
  %v979 = vadd.f32 %v975, %v623
  %v980 = vadd.f32 %v976, %v623
  %v981 = vadd.f32 %v977, %v623
  %v982 = vadd.f32 %v978, %v623
  %vm983 = vcmp.ge.f32.partialorder %v979, 0.0
  %vm984 = vcmp.ge.f32.partialorder %v980, 0.0
  %vm985 = vcmp.ge.f32.partialorder %v981, 0.0
  %vm986 = vcmp.ge.f32.partialorder %v982, 0.0
  %v987 = vmul.f32 %v979, 0.2
  %v988 = vmul.f32 %v980, 0.2
  %v989 = vmul.f32 %v981, 0.2
  %v990 = vmul.f32 %v982, 0.2
  %v991 = vsel %vm983, %v979, %v987
  %v992 = vsel %vm984, %v980, %v988
  %v993 = vsel %vm985, %v981, %v989
  %v994 = vsel %vm986, %v982, %v990
  %v995 = vmax.f32 %v637, %v991
  %v996 = vmax.f32 %v638, %v992
  %v997 = vmax.f32 %v639, %v993
  %v998 = vmax.f32 %v640, %v994
  %v999 = vrot.slane %v33, 6
  %v1000 = vrot.slane %v184, 6
  %v1001 = vrot.slane %v34, 6
  %v1002 = vrot.slane %v185, 6
  %v1003 = vrot.slane %v35, 6
  %v1004 = vrot.slane %v186, 6
  %v1005 = vrot.slane %v36, 6
  %v1006 = vrot.slane %v187, 6
  %v1015 = vsub.f32 %v148, %v999
  %v1016 = vsub.f32 %v149, %v641
  %v1017 = vsub.f32 %v150, %v33
  %v1018 = vsub.f32 %v151, %v188
  %v1019 = vsub.f32 %v152, %v1000
  %v1020 = vsub.f32 %v153, %v642
  %v1021 = vsub.f32 %v154, %v184
  %v1022 = vsub.f32 %v155, %v191
  %v1023 = vsub.f32 %v156, %v1001
  %v1024 = vsub.f32 %v157, %v643
  %v1025 = vsub.f32 %v158, %v34
  %v1026 = vsub.f32 %v159, %v194
  %v1027 = vsub.f32 %v160, %v1002
  %v1028 = vsub.f32 %v161, %v644
  %v1029 = vsub.f32 %v162, %v185
  %v1030 = vsub.f32 %v163, %v197
  %v1031 = vsub.f32 %v164, %v1003
  %v1032 = vsub.f32 %v165, %v645
  %v1033 = vsub.f32 %v166, %v35
  %v1034 = vsub.f32 %v167, %v200
  %v1035 = vsub.f32 %v168, %v1004
  %v1036 = vsub.f32 %v169, %v646
  %v1037 = vsub.f32 %v170, %v186
  %v1038 = vsub.f32 %v171, %v203
  %v1039 = vsub.f32 %v172, %v1005
  %v1040 = vsub.f32 %v173, %v647
  %v1041 = vsub.f32 %v174, %v36
  %v1042 = vsub.f32 %v175, %v206
  %v1043 = vsub.f32 %v176, %v1006
  %v1044 = vsub.f32 %v177, %v648
  %v1045 = vsub.f32 %v178, %v187
  %v1046 = vsub.f32 %v179, %v209
  %v1047 = vpack.c.bf16 %v1015, %v1015
  %v1048 = vpack.c.bf16 %v1016, %v1016
  %v1049 = vpack.c.bf16 %v1017, %v1017
  %v1050 = vpack.c.bf16 %v1018, %v1018
  %v1051 = vpack.c.bf16 %v1019, %v1019
  %v1052 = vpack.c.bf16 %v1020, %v1020
  %v1053 = vpack.c.bf16 %v1021, %v1021
  %v1054 = vpack.c.bf16 %v1022, %v1022
  %v1055 = vpack.c.bf16 %v1023, %v1023
  %v1056 = vpack.c.bf16 %v1024, %v1024
  %v1057 = vpack.c.bf16 %v1025, %v1025
  %v1058 = vpack.c.bf16 %v1026, %v1026
  %v1059 = vpack.c.bf16 %v1027, %v1027
  %v1060 = vpack.c.bf16 %v1028, %v1028
  %v1061 = vpack.c.bf16 %v1029, %v1029
  %v1062 = vpack.c.bf16 %v1030, %v1030
  %v1063 = vpack.c.bf16 %v1031, %v1031
  %v1064 = vpack.c.bf16 %v1032, %v1032
  %v1065 = vpack.c.bf16 %v1033, %v1033
  %v1066 = vpack.c.bf16 %v1034, %v1034
  %v1067 = vpack.c.bf16 %v1035, %v1035
  %v1068 = vpack.c.bf16 %v1036, %v1036
  %v1069 = vpack.c.bf16 %v1037, %v1037
  %v1070 = vpack.c.bf16 %v1038, %v1038
  %v1071 = vpack.c.bf16 %v1039, %v1039
  %v1072 = vpack.c.bf16 %v1040, %v1040
  %v1073 = vpack.c.bf16 %v1041, %v1041
  %v1074 = vpack.c.bf16 %v1042, %v1042
  %v1075 = vpack.c.bf16 %v1043, %v1043
  %v1076 = vpack.c.bf16 %v1044, %v1044
  %v1077 = vpack.c.bf16 %v1045, %v1045
  %v1078 = vpack.c.bf16 %v1046, %v1046
  %v1111 = vunpack.c.l.b16 %v1047
  %v1112 = vunpack.c.l.b16 %v1048
  %v1113 = vunpack.c.l.b16 %v1049
  %v1114 = vunpack.c.l.b16 %v1050
  %v1115 = vunpack.c.l.b16 %v1051
  %v1116 = vunpack.c.l.b16 %v1052
  %v1117 = vunpack.c.l.b16 %v1053
  %v1118 = vunpack.c.l.b16 %v1054
  %v1119 = vunpack.c.l.b16 %v1055
  %v1120 = vunpack.c.l.b16 %v1056
  %v1121 = vunpack.c.l.b16 %v1057
  %v1122 = vunpack.c.l.b16 %v1058
  %v1123 = vunpack.c.l.b16 %v1059
  %v1124 = vunpack.c.l.b16 %v1060
  %v1125 = vunpack.c.l.b16 %v1061
  %v1126 = vunpack.c.l.b16 %v1062
  %v1127 = vunpack.c.l.b16 %v1063
  %v1128 = vunpack.c.l.b16 %v1064
  %v1129 = vunpack.c.l.b16 %v1065
  %v1130 = vunpack.c.l.b16 %v1066
  %v1131 = vunpack.c.l.b16 %v1067
  %v1132 = vunpack.c.l.b16 %v1068
  %v1133 = vunpack.c.l.b16 %v1069
  %v1134 = vunpack.c.l.b16 %v1070
  %v1135 = vunpack.c.l.b16 %v1071
  %v1136 = vunpack.c.l.b16 %v1072
  %v1137 = vunpack.c.l.b16 %v1073
  %v1138 = vunpack.c.l.b16 %v1074
  %v1139 = vunpack.c.l.b16 %v1075
  %v1140 = vunpack.c.l.b16 %v1076
  %v1141 = vunpack.c.l.b16 %v1077
  %v1142 = vunpack.c.l.b16 %v1078
  %v1143 = vrot.slane %v1111, 2
  %v1144 = vrot.slane %v1112, 1
  %v1145 = vsel %vm373, %v1144, %v1143
  %v1146 = vsel %vm376, %v1113, %v1145
  %v1147 = vrot.slane %v1114, 7
  %v1148 = vsel %vm379, %v1147, %v1146
  %v1149 = vrot.slane %v1115, 6
  %v1150 = vsel %vm382, %v1149, %v1148
  %v1151 = vrot.slane %v1116, 5
  %v1152 = vsel %vm385, %v1151, %v1150
  %v1153 = vrot.slane %v1117, 4
  %v1154 = vsel %vm388, %v1153, %v1152
  %v1155 = vrot.slane %v1118, 3
  %v1156 = vsel %vm391, %v1155, %v1154
  %v1157 = vrot.slane %v1119, 2
  %v1158 = vrot.slane %v1120, 1
  %v1159 = vsel %vm373, %v1158, %v1157
  %v1160 = vsel %vm376, %v1121, %v1159
  %v1161 = vrot.slane %v1122, 7
  %v1162 = vsel %vm379, %v1161, %v1160
  %v1163 = vrot.slane %v1123, 6
  %v1164 = vsel %vm382, %v1163, %v1162
  %v1165 = vrot.slane %v1124, 5
  %v1166 = vsel %vm385, %v1165, %v1164
  %v1167 = vrot.slane %v1125, 4
  %v1168 = vsel %vm388, %v1167, %v1166
  %v1169 = vrot.slane %v1126, 3
  %v1170 = vsel %vm391, %v1169, %v1168
  %v1171 = vrot.slane %v1127, 2
  %v1172 = vrot.slane %v1128, 1
  %v1173 = vsel %vm373, %v1172, %v1171
  %v1174 = vsel %vm376, %v1129, %v1173
  %v1175 = vrot.slane %v1130, 7
  %v1176 = vsel %vm379, %v1175, %v1174
  %v1177 = vrot.slane %v1131, 6
  %v1178 = vsel %vm382, %v1177, %v1176
  %v1179 = vrot.slane %v1132, 5
  %v1180 = vsel %vm385, %v1179, %v1178
  %v1181 = vrot.slane %v1133, 4
  %v1182 = vsel %vm388, %v1181, %v1180
  %v1183 = vrot.slane %v1134, 3
  %v1184 = vsel %vm391, %v1183, %v1182
  %v1185 = vrot.slane %v1135, 2
  %v1186 = vrot.slane %v1136, 1
  %v1187 = vsel %vm373, %v1186, %v1185
  %v1188 = vsel %vm376, %v1137, %v1187
  %v1189 = vrot.slane %v1138, 7
  %v1190 = vsel %vm379, %v1189, %v1188
  %v1191 = vrot.slane %v1139, 6
  %v1192 = vsel %vm382, %v1191, %v1190
  %v1193 = vrot.slane %v1140, 5
  %v1194 = vsel %vm385, %v1193, %v1192
  %v1195 = vrot.slane %v1141, 4
  %v1196 = vsel %vm388, %v1195, %v1194
  %v1197 = vrot.slane %v1142, 3
  %v1198 = vsel %vm391, %v1197, %v1196
  %v1199 = vpack.c.b16 %v1170, %v1156
  %v1200 = vpack.c.b16 %v1198, %v1184
  %v1202 = vsel %vm53, %v1199, 0
  %v1205 = vsel %vm53, %v1200, 0
  %1207 = vmatprep.subr.bf16.mxu0 0
  %1208 = vmatpush1.bf16.msra.mxu0 0
  %1209 = vmatprep.subr.bf16.mxu0 0
  %1210 = vmatpush1.bf16.msra.mxu0 0
  %1211 = vmatprep.subr.bf16.mxu0 0
  %1212 = vmatpush1.bf16.msra.mxu0 0
  %1213 = vmatprep.subr.bf16.mxu0 0
  %1214 = vmatpush1.bf16.msra.mxu0 0
  %1215 = vmatprep.subr.bf16.mxu0 0
  %1216 = vmatpush1.bf16.msra.mxu0 0
  %1217 = vmatprep.subr.bf16.mxu0 0
  %1218 = vmatpush1.bf16.msra.mxu0 0
  %1219 = vmatprep.subr.bf16.mxu0 0
  %1220 = vmatpush1.bf16.msra.mxu0 0
  %1221 = vmatprep.subr.bf16.mxu0 0
  %1222 = vmatpush1.bf16.msra.mxu0 %v444
  %1223 = vmatprep.subr.bf16.mxu0 0
  %1224 = vmatpush2.bf16.msra.mxu0 0
  %1225 = vmatprep.subr.bf16.mxu0 0
  %1226 = vmatpush2.bf16.msra.mxu0 0
  %1227 = vmatprep.subr.bf16.mxu0 0
  %1228 = vmatpush2.bf16.msra.mxu0 0
  %1229 = vmatprep.subr.bf16.mxu0 0
  %1230 = vmatpush2.bf16.msra.mxu0 0
  %1231 = vmatprep.subr.bf16.mxu0 0
  %1232 = vmatpush2.bf16.msra.mxu0 0
  %1233 = vmatprep.subr.bf16.mxu0 0
  %1234 = vmatpush2.bf16.msra.mxu0 0
  %1235 = vmatprep.subr.bf16.mxu0 0
  %1236 = vmatpush2.bf16.msra.mxu0 0
  %1237 = vmatprep.subr.bf16.mxu0 0
  %1238 = vmatpush2.bf16.msra.mxu0 0
  %1239 = vmatprep.mubr.bf16.mxu0 0
  %1240 = vmatmul.mubr.bf16.gmra.mxu0 %v1202
  %v1241 = vpop.f32.mrf.mxu0
  %v1242 = vadd.f32 %v102, %v1241
  %v1243 = vpop.f32.mrf.mxu0
  %v1244 = vpop.f32.mrf.mxu0
  %v1245 = vadd.f32 %v105, %v1244
  %v1246 = vpop.f32.mrf.mxu0
  %1247 = vmatprep.mubr.bf16.mxu0 0
  %1248 = vmatmul.mubr.bf16.gmra.mxu0 %v1205
  %v1249 = vpop.f32.mrf.mxu0
  %v1250 = vadd.f32 %v110, %v1249
  %v1251 = vpop.f32.mrf.mxu0
  %v1252 = vpop.f32.mrf.mxu0
  %v1253 = vadd.f32 %v113, %v1252
  %v1254 = vpop.f32.mrf.mxu0
  %1255 = vdwg.mxu0
  %v1256 = vmul.f32 %v1242, %v499
  %v1257 = vmul.f32 %v1245, %v499
  %v1258 = vmul.f32 %v1250, %v499
  %v1259 = vmul.f32 %v1253, %v499
  %v1260 = vadd.f32 %v1256, %v509
  %v1261 = vadd.f32 %v1257, %v509
  %v1262 = vadd.f32 %v1258, %v509
  %v1263 = vadd.f32 %v1259, %v509
  %vm1264 = vcmp.ge.f32.partialorder %v1260, 0.0
  %vm1265 = vcmp.ge.f32.partialorder %v1261, 0.0
  %vm1266 = vcmp.ge.f32.partialorder %v1262, 0.0
  %vm1267 = vcmp.ge.f32.partialorder %v1263, 0.0
  %v1268 = vmul.f32 %v1260, 0.2
  %v1269 = vmul.f32 %v1261, 0.2
  %v1270 = vmul.f32 %v1262, 0.2
  %v1271 = vmul.f32 %v1263, 0.2
  %v1272 = vsel %vm1264, %v1260, %v1268
  %v1273 = vsel %vm1265, %v1261, %v1269
  %v1274 = vsel %vm1266, %v1262, %v1270
  %v1275 = vsel %vm1267, %v1263, %v1271
  %v1276 = vpack.c.bf16 %v1273, %v1272
  %v1277 = vpack.c.bf16 %v1275, %v1274
  %v1279 = vsel %vm553, %v1276, 0
  %v1282 = vsel %vm553, %v1277, 0
  %1284 = vmatprep.subr.bf16.mxu0 0
  %1285 = vmatpush1.bf16.msra.mxu0 0
  %1286 = vmatprep.subr.bf16.mxu0 0
  %1287 = vmatpush1.bf16.msra.mxu0 0
  %1288 = vmatprep.subr.bf16.mxu0 0
  %1289 = vmatpush1.bf16.msra.mxu0 0
  %1290 = vmatprep.subr.bf16.mxu0 0
  %1291 = vmatpush1.bf16.msra.mxu0 0
  %1292 = vmatprep.subr.bf16.mxu0 0
  %1293 = vmatpush1.bf16.msra.mxu0 %v548
  %1294 = vmatprep.subr.bf16.mxu0 0
  %1295 = vmatpush1.bf16.msra.mxu0 %v547
  %1296 = vmatprep.subr.bf16.mxu0 0
  %1297 = vmatpush1.bf16.msra.mxu0 %v546
  %1298 = vmatprep.subr.bf16.mxu0 0
  %1299 = vmatpush1.bf16.msra.mxu0 %v545
  %1300 = vmatprep.subr.bf16.mxu0 0
  %1301 = vmatpush2.bf16.msra.mxu0 0
  %1302 = vmatprep.subr.bf16.mxu0 0
  %1303 = vmatpush2.bf16.msra.mxu0 0
  %1304 = vmatprep.subr.bf16.mxu0 0
  %1305 = vmatpush2.bf16.msra.mxu0 0
  %1306 = vmatprep.subr.bf16.mxu0 0
  %1307 = vmatpush2.bf16.msra.mxu0 0
  %1308 = vmatprep.subr.bf16.mxu0 0
  %1309 = vmatpush2.bf16.msra.mxu0 0
  %1310 = vmatprep.subr.bf16.mxu0 0
  %1311 = vmatpush2.bf16.msra.mxu0 0
  %1312 = vmatprep.subr.bf16.mxu0 0
  %1313 = vmatpush2.bf16.msra.mxu0 0
  %1314 = vmatprep.subr.bf16.mxu0 0
  %1315 = vmatpush2.bf16.msra.mxu0 0
  %1316 = vmatprep.mubr.bf16.mxu0 0
  %1317 = vmatmul.mubr.bf16.gmra.mxu0 %v1279
  %v1318 = vpop.f32.mrf.mxu0
  %v1319 = vadd.f32 0.0, %v1318
  %v1320 = vpop.f32.mrf.mxu0
  %v1321 = vpop.f32.mrf.mxu0
  %v1322 = vadd.f32 0.0, %v1321
  %v1323 = vpop.f32.mrf.mxu0
  %1324 = vmatprep.mubr.bf16.mxu0 0
  %1325 = vmatmul.mubr.bf16.gmra.mxu0 %v1282
  %v1326 = vpop.f32.mrf.mxu0
  %v1327 = vadd.f32 0.0, %v1326
  %v1328 = vpop.f32.mrf.mxu0
  %v1329 = vpop.f32.mrf.mxu0
  %v1330 = vadd.f32 0.0, %v1329
  %v1331 = vpop.f32.mrf.mxu0
  %1332 = vdwg.mxu0
  %v1333 = vmul.f32 %v1319, %v613
  %v1334 = vmul.f32 %v1322, %v613
  %v1335 = vmul.f32 %v1327, %v613
  %v1336 = vmul.f32 %v1330, %v613
  %v1337 = vadd.f32 %v1333, %v623
  %v1338 = vadd.f32 %v1334, %v623
  %v1339 = vadd.f32 %v1335, %v623
  %v1340 = vadd.f32 %v1336, %v623
  %vm1341 = vcmp.ge.f32.partialorder %v1337, 0.0
  %vm1342 = vcmp.ge.f32.partialorder %v1338, 0.0
  %vm1343 = vcmp.ge.f32.partialorder %v1339, 0.0
  %vm1344 = vcmp.ge.f32.partialorder %v1340, 0.0
  %v1345 = vmul.f32 %v1337, 0.2
  %v1346 = vmul.f32 %v1338, 0.2
  %v1347 = vmul.f32 %v1339, 0.2
  %v1348 = vmul.f32 %v1340, 0.2
  %v1349 = vsel %vm1341, %v1337, %v1345
  %v1350 = vsel %vm1342, %v1338, %v1346
  %v1351 = vsel %vm1343, %v1339, %v1347
  %v1352 = vsel %vm1344, %v1340, %v1348
  %v1353 = vmax.f32 %v995, %v1349
  %v1354 = vmax.f32 %v996, %v1350
  %v1355 = vmax.f32 %v997, %v1351
  %v1356 = vmax.f32 %v998, %v1352
  %v1357 = vrot.slane %v33, 5
  %v1358 = vrot.slane %v184, 5
  %v1359 = vrot.slane %v34, 5
  %v1360 = vrot.slane %v185, 5
  %v1361 = vrot.slane %v35, 5
  %v1362 = vrot.slane %v186, 5
  %v1363 = vrot.slane %v36, 5
  %v1364 = vrot.slane %v187, 5
  %v1373 = vsub.f32 %v148, %v1357
  %v1374 = vsub.f32 %v149, %v999
  %v1375 = vsub.f32 %v150, %v641
  %v1376 = vsub.f32 %v151, %v33
  %v1377 = vsub.f32 %v152, %v1358
  %v1378 = vsub.f32 %v153, %v1000
  %v1379 = vsub.f32 %v154, %v642
  %v1380 = vsub.f32 %v155, %v184
  %v1381 = vsub.f32 %v156, %v1359
  %v1382 = vsub.f32 %v157, %v1001
  %v1383 = vsub.f32 %v158, %v643
  %v1384 = vsub.f32 %v159, %v34
  %v1385 = vsub.f32 %v160, %v1360
  %v1386 = vsub.f32 %v161, %v1002
  %v1387 = vsub.f32 %v162, %v644
  %v1388 = vsub.f32 %v163, %v185
  %v1389 = vsub.f32 %v164, %v1361
  %v1390 = vsub.f32 %v165, %v1003
  %v1391 = vsub.f32 %v166, %v645
  %v1392 = vsub.f32 %v167, %v35
  %v1393 = vsub.f32 %v168, %v1362
  %v1394 = vsub.f32 %v169, %v1004
  %v1395 = vsub.f32 %v170, %v646
  %v1396 = vsub.f32 %v171, %v186
  %v1397 = vsub.f32 %v172, %v1363
  %v1398 = vsub.f32 %v173, %v1005
  %v1399 = vsub.f32 %v174, %v647
  %v1400 = vsub.f32 %v175, %v36
  %v1401 = vsub.f32 %v176, %v1364
  %v1402 = vsub.f32 %v177, %v1006
  %v1403 = vsub.f32 %v178, %v648
  %v1404 = vsub.f32 %v179, %v187
  %v1405 = vpack.c.bf16 %v1373, %v1373
  %v1406 = vpack.c.bf16 %v1374, %v1374
  %v1407 = vpack.c.bf16 %v1375, %v1375
  %v1408 = vpack.c.bf16 %v1376, %v1376
  %v1409 = vpack.c.bf16 %v1377, %v1377
  %v1410 = vpack.c.bf16 %v1378, %v1378
  %v1411 = vpack.c.bf16 %v1379, %v1379
  %v1412 = vpack.c.bf16 %v1380, %v1380
  %v1413 = vpack.c.bf16 %v1381, %v1381
  %v1414 = vpack.c.bf16 %v1382, %v1382
  %v1415 = vpack.c.bf16 %v1383, %v1383
  %v1416 = vpack.c.bf16 %v1384, %v1384
  %v1417 = vpack.c.bf16 %v1385, %v1385
  %v1418 = vpack.c.bf16 %v1386, %v1386
  %v1419 = vpack.c.bf16 %v1387, %v1387
  %v1420 = vpack.c.bf16 %v1388, %v1388
  %v1421 = vpack.c.bf16 %v1389, %v1389
  %v1422 = vpack.c.bf16 %v1390, %v1390
  %v1423 = vpack.c.bf16 %v1391, %v1391
  %v1424 = vpack.c.bf16 %v1392, %v1392
  %v1425 = vpack.c.bf16 %v1393, %v1393
  %v1426 = vpack.c.bf16 %v1394, %v1394
  %v1427 = vpack.c.bf16 %v1395, %v1395
  %v1428 = vpack.c.bf16 %v1396, %v1396
  %v1429 = vpack.c.bf16 %v1397, %v1397
  %v1430 = vpack.c.bf16 %v1398, %v1398
  %v1431 = vpack.c.bf16 %v1399, %v1399
  %v1432 = vpack.c.bf16 %v1400, %v1400
  %v1433 = vpack.c.bf16 %v1401, %v1401
  %v1434 = vpack.c.bf16 %v1402, %v1402
  %v1435 = vpack.c.bf16 %v1403, %v1403
  %v1436 = vpack.c.bf16 %v1404, %v1404
  %v1469 = vunpack.c.l.b16 %v1405
  %v1470 = vunpack.c.l.b16 %v1406
  %v1471 = vunpack.c.l.b16 %v1407
  %v1472 = vunpack.c.l.b16 %v1408
  %v1473 = vunpack.c.l.b16 %v1409
  %v1474 = vunpack.c.l.b16 %v1410
  %v1475 = vunpack.c.l.b16 %v1411
  %v1476 = vunpack.c.l.b16 %v1412
  %v1477 = vunpack.c.l.b16 %v1413
  %v1478 = vunpack.c.l.b16 %v1414
  %v1479 = vunpack.c.l.b16 %v1415
  %v1480 = vunpack.c.l.b16 %v1416
  %v1481 = vunpack.c.l.b16 %v1417
  %v1482 = vunpack.c.l.b16 %v1418
  %v1483 = vunpack.c.l.b16 %v1419
  %v1484 = vunpack.c.l.b16 %v1420
  %v1485 = vunpack.c.l.b16 %v1421
  %v1486 = vunpack.c.l.b16 %v1422
  %v1487 = vunpack.c.l.b16 %v1423
  %v1488 = vunpack.c.l.b16 %v1424
  %v1489 = vunpack.c.l.b16 %v1425
  %v1490 = vunpack.c.l.b16 %v1426
  %v1491 = vunpack.c.l.b16 %v1427
  %v1492 = vunpack.c.l.b16 %v1428
  %v1493 = vunpack.c.l.b16 %v1429
  %v1494 = vunpack.c.l.b16 %v1430
  %v1495 = vunpack.c.l.b16 %v1431
  %v1496 = vunpack.c.l.b16 %v1432
  %v1497 = vunpack.c.l.b16 %v1433
  %v1498 = vunpack.c.l.b16 %v1434
  %v1499 = vunpack.c.l.b16 %v1435
  %v1500 = vunpack.c.l.b16 %v1436
  %v1501 = vrot.slane %v1469, 3
  %v1502 = vrot.slane %v1470, 2
  %v1503 = vsel %vm373, %v1502, %v1501
  %v1504 = vrot.slane %v1471, 1
  %v1505 = vsel %vm376, %v1504, %v1503
  %v1506 = vsel %vm379, %v1472, %v1505
  %v1507 = vrot.slane %v1473, 7
  %v1508 = vsel %vm382, %v1507, %v1506
  %v1509 = vrot.slane %v1474, 6
  %v1510 = vsel %vm385, %v1509, %v1508
  %v1511 = vrot.slane %v1475, 5
  %v1512 = vsel %vm388, %v1511, %v1510
  %v1513 = vrot.slane %v1476, 4
  %v1514 = vsel %vm391, %v1513, %v1512
  %v1515 = vrot.slane %v1477, 3
  %v1516 = vrot.slane %v1478, 2
  %v1517 = vsel %vm373, %v1516, %v1515
  %v1518 = vrot.slane %v1479, 1
  %v1519 = vsel %vm376, %v1518, %v1517
  %v1520 = vsel %vm379, %v1480, %v1519
  %v1521 = vrot.slane %v1481, 7
  %v1522 = vsel %vm382, %v1521, %v1520
  %v1523 = vrot.slane %v1482, 6
  %v1524 = vsel %vm385, %v1523, %v1522
  %v1525 = vrot.slane %v1483, 5
  %v1526 = vsel %vm388, %v1525, %v1524
  %v1527 = vrot.slane %v1484, 4
  %v1528 = vsel %vm391, %v1527, %v1526
  %v1529 = vrot.slane %v1485, 3
  %v1530 = vrot.slane %v1486, 2
  %v1531 = vsel %vm373, %v1530, %v1529
  %v1532 = vrot.slane %v1487, 1
  %v1533 = vsel %vm376, %v1532, %v1531
  %v1534 = vsel %vm379, %v1488, %v1533
  %v1535 = vrot.slane %v1489, 7
  %v1536 = vsel %vm382, %v1535, %v1534
  %v1537 = vrot.slane %v1490, 6
  %v1538 = vsel %vm385, %v1537, %v1536
  %v1539 = vrot.slane %v1491, 5
  %v1540 = vsel %vm388, %v1539, %v1538
  %v1541 = vrot.slane %v1492, 4
  %v1542 = vsel %vm391, %v1541, %v1540
  %v1543 = vrot.slane %v1493, 3
  %v1544 = vrot.slane %v1494, 2
  %v1545 = vsel %vm373, %v1544, %v1543
  %v1546 = vrot.slane %v1495, 1
  %v1547 = vsel %vm376, %v1546, %v1545
  %v1548 = vsel %vm379, %v1496, %v1547
  %v1549 = vrot.slane %v1497, 7
  %v1550 = vsel %vm382, %v1549, %v1548
  %v1551 = vrot.slane %v1498, 6
  %v1552 = vsel %vm385, %v1551, %v1550
  %v1553 = vrot.slane %v1499, 5
  %v1554 = vsel %vm388, %v1553, %v1552
  %v1555 = vrot.slane %v1500, 4
  %v1556 = vsel %vm391, %v1555, %v1554
  %v1557 = vpack.c.b16 %v1528, %v1514
  %v1558 = vpack.c.b16 %v1556, %v1542
  %v1560 = vsel %vm53, %v1557, 0
  %v1563 = vsel %vm53, %v1558, 0
  %1565 = vmatprep.subr.bf16.mxu0 0
  %1566 = vmatpush1.bf16.msra.mxu0 0
  %1567 = vmatprep.subr.bf16.mxu0 0
  %1568 = vmatpush1.bf16.msra.mxu0 0
  %1569 = vmatprep.subr.bf16.mxu0 0
  %1570 = vmatpush1.bf16.msra.mxu0 0
  %1571 = vmatprep.subr.bf16.mxu0 0
  %1572 = vmatpush1.bf16.msra.mxu0 0
  %1573 = vmatprep.subr.bf16.mxu0 0
  %1574 = vmatpush1.bf16.msra.mxu0 0
  %1575 = vmatprep.subr.bf16.mxu0 0
  %1576 = vmatpush1.bf16.msra.mxu0 0
  %1577 = vmatprep.subr.bf16.mxu0 0
  %1578 = vmatpush1.bf16.msra.mxu0 0
  %1579 = vmatprep.subr.bf16.mxu0 0
  %1580 = vmatpush1.bf16.msra.mxu0 %v444
  %1581 = vmatprep.subr.bf16.mxu0 0
  %1582 = vmatpush2.bf16.msra.mxu0 0
  %1583 = vmatprep.subr.bf16.mxu0 0
  %1584 = vmatpush2.bf16.msra.mxu0 0
  %1585 = vmatprep.subr.bf16.mxu0 0
  %1586 = vmatpush2.bf16.msra.mxu0 0
  %1587 = vmatprep.subr.bf16.mxu0 0
  %1588 = vmatpush2.bf16.msra.mxu0 0
  %1589 = vmatprep.subr.bf16.mxu0 0
  %1590 = vmatpush2.bf16.msra.mxu0 0
  %1591 = vmatprep.subr.bf16.mxu0 0
  %1592 = vmatpush2.bf16.msra.mxu0 0
  %1593 = vmatprep.subr.bf16.mxu0 0
  %1594 = vmatpush2.bf16.msra.mxu0 0
  %1595 = vmatprep.subr.bf16.mxu0 0
  %1596 = vmatpush2.bf16.msra.mxu0 0
  %1597 = vmatprep.mubr.bf16.mxu0 0
  %1598 = vmatmul.mubr.bf16.gmra.mxu0 %v1560
  %v1599 = vpop.f32.mrf.mxu0
  %v1600 = vadd.f32 %v102, %v1599
  %v1601 = vpop.f32.mrf.mxu0
  %v1602 = vpop.f32.mrf.mxu0
  %v1603 = vadd.f32 %v105, %v1602
  %v1604 = vpop.f32.mrf.mxu0
  %1605 = vmatprep.mubr.bf16.mxu0 0
  %1606 = vmatmul.mubr.bf16.gmra.mxu0 %v1563
  %v1607 = vpop.f32.mrf.mxu0
  %v1608 = vadd.f32 %v110, %v1607
  %v1609 = vpop.f32.mrf.mxu0
  %v1610 = vpop.f32.mrf.mxu0
  %v1611 = vadd.f32 %v113, %v1610
  %v1612 = vpop.f32.mrf.mxu0
  %1613 = vdwg.mxu0
  %v1614 = vmul.f32 %v1600, %v499
  %v1615 = vmul.f32 %v1603, %v499
  %v1616 = vmul.f32 %v1608, %v499
  %v1617 = vmul.f32 %v1611, %v499
  %v1618 = vadd.f32 %v1614, %v509
  %v1619 = vadd.f32 %v1615, %v509
  %v1620 = vadd.f32 %v1616, %v509
  %v1621 = vadd.f32 %v1617, %v509
  %vm1622 = vcmp.ge.f32.partialorder %v1618, 0.0
  %vm1623 = vcmp.ge.f32.partialorder %v1619, 0.0
  %vm1624 = vcmp.ge.f32.partialorder %v1620, 0.0
  %vm1625 = vcmp.ge.f32.partialorder %v1621, 0.0
  %v1626 = vmul.f32 %v1618, 0.2
  %v1627 = vmul.f32 %v1619, 0.2
  %v1628 = vmul.f32 %v1620, 0.2
  %v1629 = vmul.f32 %v1621, 0.2
  %v1630 = vsel %vm1622, %v1618, %v1626
  %v1631 = vsel %vm1623, %v1619, %v1627
  %v1632 = vsel %vm1624, %v1620, %v1628
  %v1633 = vsel %vm1625, %v1621, %v1629
  %v1634 = vpack.c.bf16 %v1631, %v1630
  %v1635 = vpack.c.bf16 %v1633, %v1632
  %v1637 = vsel %vm553, %v1634, 0
  %v1640 = vsel %vm553, %v1635, 0
  %1642 = vmatprep.subr.bf16.mxu0 0
  %1643 = vmatpush1.bf16.msra.mxu0 0
  %1644 = vmatprep.subr.bf16.mxu0 0
  %1645 = vmatpush1.bf16.msra.mxu0 0
  %1646 = vmatprep.subr.bf16.mxu0 0
  %1647 = vmatpush1.bf16.msra.mxu0 0
  %1648 = vmatprep.subr.bf16.mxu0 0
  %1649 = vmatpush1.bf16.msra.mxu0 0
  %1650 = vmatprep.subr.bf16.mxu0 0
  %1651 = vmatpush1.bf16.msra.mxu0 %v548
  %1652 = vmatprep.subr.bf16.mxu0 0
  %1653 = vmatpush1.bf16.msra.mxu0 %v547
  %1654 = vmatprep.subr.bf16.mxu0 0
  %1655 = vmatpush1.bf16.msra.mxu0 %v546
  %1656 = vmatprep.subr.bf16.mxu0 0
  %1657 = vmatpush1.bf16.msra.mxu0 %v545
  %1658 = vmatprep.subr.bf16.mxu0 0
  %1659 = vmatpush2.bf16.msra.mxu0 0
  %1660 = vmatprep.subr.bf16.mxu0 0
  %1661 = vmatpush2.bf16.msra.mxu0 0
  %1662 = vmatprep.subr.bf16.mxu0 0
  %1663 = vmatpush2.bf16.msra.mxu0 0
  %1664 = vmatprep.subr.bf16.mxu0 0
  %1665 = vmatpush2.bf16.msra.mxu0 0
  %1666 = vmatprep.subr.bf16.mxu0 0
  %1667 = vmatpush2.bf16.msra.mxu0 0
  %1668 = vmatprep.subr.bf16.mxu0 0
  %1669 = vmatpush2.bf16.msra.mxu0 0
  %1670 = vmatprep.subr.bf16.mxu0 0
  %1671 = vmatpush2.bf16.msra.mxu0 0
  %1672 = vmatprep.subr.bf16.mxu0 0
  %1673 = vmatpush2.bf16.msra.mxu0 0
  %1674 = vmatprep.mubr.bf16.mxu0 0
  %1675 = vmatmul.mubr.bf16.gmra.mxu0 %v1637
  %v1676 = vpop.f32.mrf.mxu0
  %v1677 = vadd.f32 0.0, %v1676
  %v1678 = vpop.f32.mrf.mxu0
  %v1679 = vpop.f32.mrf.mxu0
  %v1680 = vadd.f32 0.0, %v1679
  %v1681 = vpop.f32.mrf.mxu0
  %1682 = vmatprep.mubr.bf16.mxu0 0
  %1683 = vmatmul.mubr.bf16.gmra.mxu0 %v1640
  %v1684 = vpop.f32.mrf.mxu0
  %v1685 = vadd.f32 0.0, %v1684
  %v1686 = vpop.f32.mrf.mxu0
  %v1687 = vpop.f32.mrf.mxu0
  %v1688 = vadd.f32 0.0, %v1687
  %v1689 = vpop.f32.mrf.mxu0
  %1690 = vdwg.mxu0
  %v1691 = vmul.f32 %v1677, %v613
  %v1692 = vmul.f32 %v1680, %v613
  %v1693 = vmul.f32 %v1685, %v613
  %v1694 = vmul.f32 %v1688, %v613
  %v1695 = vadd.f32 %v1691, %v623
  %v1696 = vadd.f32 %v1692, %v623
  %v1697 = vadd.f32 %v1693, %v623
  %v1698 = vadd.f32 %v1694, %v623
  %vm1699 = vcmp.ge.f32.partialorder %v1695, 0.0
  %vm1700 = vcmp.ge.f32.partialorder %v1696, 0.0
  %vm1701 = vcmp.ge.f32.partialorder %v1697, 0.0
  %vm1702 = vcmp.ge.f32.partialorder %v1698, 0.0
  %v1703 = vmul.f32 %v1695, 0.2
  %v1704 = vmul.f32 %v1696, 0.2
  %v1705 = vmul.f32 %v1697, 0.2
  %v1706 = vmul.f32 %v1698, 0.2
  %v1707 = vsel %vm1699, %v1695, %v1703
  %v1708 = vsel %vm1700, %v1696, %v1704
  %v1709 = vsel %vm1701, %v1697, %v1705
  %v1710 = vsel %vm1702, %v1698, %v1706
  %v1711 = vmax.f32 %v1353, %v1707
  %v1712 = vmax.f32 %v1354, %v1708
  %v1713 = vmax.f32 %v1355, %v1709
  %v1714 = vmax.f32 %v1356, %v1710
  %1715 = vst.msk [vmem:[%s9] sm:$0xff] %vm553, %v1711
  %1716 = vst.msk [vmem:[%s9 + $0x8] sm:$0xff] %vm553, %v1712
  %1717 = vst.msk [vmem:[%s9 + $0x10] sm:$0xff] %vm553, %v1713
  %1718 = vst.msk [vmem:[%s9 + $0x18] sm:$0xff] %vm553, %v1714
  // Predicated region
  $region38: #{_lambda_.15} parent=0 // pred_check
    _
  $region39: #{_lambda_.15} parent=0 // pred_check_branch
    %1720 = sbr.rel (0) target = $region41
  $region40: #{_lambda_.15} parent=0 // pred_region
    _
  $region41: #{_lambda_.15} parent=0 // pred_fallthru
    _
  // Predicated region
  $region42: #{_lambda_.15} parent=0 // pred_check
    _
  $region43: #{_lambda_.15} parent=0 // pred_check_branch
    %1722 = sbr.rel (0) target = $region45
  $region44: #{_lambda_.15} parent=0 // pred_region
    _
  $region45: #{_lambda_.15} parent=0 // pred_fallthru
    _

// kernel: _lambda_.17
$region0: #{_lambda_.17}
  #allocation0 [shape = 'u32[]', space=smem, size = 0x4, offset = 0x4, fixed_abs, tag = 'smem constant byte address 0x4 - core index']
  #allocation1 [shape = 'u32[144,128]{1,0:T(1,128)}', space=vmem, size = 0x12000, scoped, tag = 'internal scratch']
  %s0 = inlined_call_operand.vmem [shape: bf16[32,4,64], index: 0, kind: input, shape index: {}]
  %s1 = inlined_call_operand.vmem [shape: f32[32,64], index: 1, kind: input, shape index: {}]
  %s2 = inlined_call_operand.vmem [shape: bf16[64,64], index: 2, kind: input, shape index: {}]
  %s3 = inlined_call_operand.vmem [shape: bf16[64,64], index: 3, kind: input, shape index: {}]
  %s4 = inlined_call_operand.vmem [shape: f32[1,64], index: 4, kind: input, shape index: {}, may-alias: {4,7}]
  %s5 = inlined_call_operand.vmem [shape: f32[1,64], index: 5, kind: input, shape index: {}, may-alias: {5,8}]
  %s6 = inlined_call_operand.vmem [shape: bf16[64,64], index: 6, kind: input, shape index: {}]
  %s7 = inlined_call_operand.vmem [shape: f32[1,64], index: 7, kind: input, shape index: {}, may-alias: {4,7}]
  %s8 = inlined_call_operand.vmem [shape: f32[1,64], index: 8, kind: input, shape index: {}, may-alias: {5,8}]
  %s9 = inlined_call_operand.vmem [shape: f32[32,64], index: 9, kind: output, shape index: {}]
  %s10 = sld [smem:[#allocation0]]
  $region46: #{_lambda_.17} parent=0
    _
  %s12 = ssub.s32 1, %s10
  %s13 = scalar_select 0, %s12, %s10
  // Predicated region
  $region2: #{_lambda_.17} parent=0 // pred_check
    _
  $region3: #{_lambda_.17} parent=0 // pred_check_branch
    %15 = sbr.rel (0) target = $region5
  $region4: #{_lambda_.17} parent=0 // pred_region
    _
  $region5: #{_lambda_.17} parent=0 // pred_fallthru
    _
  // Predicated region
  $region6: #{_lambda_.17} parent=0 // pred_check
    _
  $region7: #{_lambda_.17} parent=0 // pred_check_branch
    %17 = sbr.rel (0) target = $region9
  $region8: #{_lambda_.17} parent=0 // pred_region
    _
  $region9: #{_lambda_.17} parent=0 // pred_fallthru
    _
  // Predicated region
  $region10: #{_lambda_.17} parent=0 // pred_check
    _
  $region11: #{_lambda_.17} parent=0 // pred_check_branch
    %19 = sbr.rel (0) target = $region13
  $region12: #{_lambda_.17} parent=0 // pred_region
    _
  $region13: #{_lambda_.17} parent=0 // pred_fallthru
    _
  // Predicated region
  $region14: #{_lambda_.17} parent=0 // pred_check
    _
  $region15: #{_lambda_.17} parent=0 // pred_check_branch
    %21 = sbr.rel (0) target = $region17
  $region16: #{_lambda_.17} parent=0 // pred_region
    _
  $region17: #{_lambda_.17} parent=0 // pred_fallthru
    _
  // Predicated region
  $region18: #{_lambda_.17} parent=0 // pred_check
    _
  $region19: #{_lambda_.17} parent=0 // pred_check_branch
    %23 = sbr.rel (0) target = $region21
  $region20: #{_lambda_.17} parent=0 // pred_region
    _
  $region21: #{_lambda_.17} parent=0 // pred_fallthru
    _
  // Predicated region
  $region22: #{_lambda_.17} parent=0 // pred_check
    _
  $region23: #{_lambda_.17} parent=0 // pred_check_branch
    %25 = sbr.rel (0) target = $region25
  $region24: #{_lambda_.17} parent=0 // pred_region
    _
  $region25: #{_lambda_.17} parent=0 // pred_fallthru
    _
  // Predicated region
  $region26: #{_lambda_.17} parent=0 // pred_check
    _
  $region27: #{_lambda_.17} parent=0 // pred_check_branch
    %27 = sbr.rel (0) target = $region29
  $region28: #{_lambda_.17} parent=0 // pred_region
    _
  $region29: #{_lambda_.17} parent=0 // pred_fallthru
    _
  // Predicated region
  $region30: #{_lambda_.17} parent=0 // pred_check
    _
  $region31: #{_lambda_.17} parent=0 // pred_check_branch
    %29 = sbr.rel (0) target = $region33
  $region32: #{_lambda_.17} parent=0 // pred_region
    _
  $region33: #{_lambda_.17} parent=0 // pred_fallthru
    _
  // Predicated region
  $region34: #{_lambda_.17} parent=0 // pred_check
    _
  $region35: #{_lambda_.17} parent=0 // pred_check_branch
    %31 = sbr.rel (0) target = $region37
  $region36: #{_lambda_.17} parent=0 // pred_region
    _
  $region37: #{_lambda_.17} parent=0 // pred_fallthru
    _
  %v33 = vld [vmem:[%s1] sm:$0xff]
  %v34 = vld [vmem:[%s1 + $0x8] sm:$0xff]
  %v35 = vld [vmem:[%s1 + $0x10] sm:$0xff]
  %v36 = vld [vmem:[%s1 + $0x18] sm:$0xff]
  %v37 = vld [vmem:[%s2] sm:$0xf]
  %v38 = vld [vmem:[%s2 + $0x4] sm:$0xf]
  %v39 = vld [vmem:[%s2 + $0x8] sm:$0xf]
  %v40 = vld [vmem:[%s2 + $0xc] sm:$0xf]
  %v41 = vld [vmem:[%s2 + $0x10] sm:$0xf]
  %v42 = vld [vmem:[%s2 + $0x14] sm:$0xf]
  %v43 = vld [vmem:[%s2 + $0x18] sm:$0xf]
  %v44 = vld [vmem:[%s2 + $0x1c] sm:$0xf]
  %v45 = vld [vmem:[%s3] sm:$0xf]
  %v46 = vld [vmem:[%s3 + $0x4] sm:$0xf]
  %v47 = vld [vmem:[%s3 + $0x8] sm:$0xf]
  %v48 = vld [vmem:[%s3 + $0xc] sm:$0xf]
  %v49 = vld [vmem:[%s3 + $0x10] sm:$0xf]
  %v50 = vld [vmem:[%s3 + $0x14] sm:$0xf]
  %v51 = vld [vmem:[%s3 + $0x18] sm:$0xf]
  %v52 = vld [vmem:[%s3 + $0x1c] sm:$0xf]
  %v53 = vld [vmem:[%s4] sm:$0x1]
  %v54 = vld [vmem:[%s5] sm:$0x1]
  %v55 = vld [vmem:[%s6] sm:$0xf]
  %v56 = vld [vmem:[%s6 + $0x4] sm:$0xf]
  %v57 = vld [vmem:[%s6 + $0x8] sm:$0xf]
  %v58 = vld [vmem:[%s6 + $0xc] sm:$0xf]
  %v59 = vld [vmem:[%s6 + $0x10] sm:$0xf]
  %v60 = vld [vmem:[%s6 + $0x14] sm:$0xf]
  %v61 = vld [vmem:[%s6 + $0x18] sm:$0xf]
  %v62 = vld [vmem:[%s6 + $0x1c] sm:$0xf]
  %v63 = vld [vmem:[%s7] sm:$0x1]
  %v64 = vld [vmem:[%s8] sm:$0x1]
  %v65 = vpack.c.bf16 %v34, %v33
  %v66 = vpack.c.bf16 %v36, %v35
  %v75 = vunpack.c.l.b16 %v45
  %v76 = vunpack.c.l.b16 %v46
  %v77 = vunpack.c.l.b16 %v47
  %v78 = vunpack.c.l.b16 %v48
  %v79 = vunpack.c.l.b16 %v49
  %v80 = vunpack.c.l.b16 %v50
  %v81 = vunpack.c.l.b16 %v51
  %v82 = vunpack.c.l.b16 %v52
  %v83 = vpack.c.b16 %v76, %v75
  %v84 = vpack.c.b16 %v78, %v77
  %v85 = vpack.c.b16 %v80, %v79
  %v86 = vpack.c.b16 %v82, %v81
  %vm91 = vcmask 523264
  %v93 = vsel %vm91, %v65, 0
  %v96 = vsel %vm91, %v66, 0
  %98 = vmatprep.subr.bf16.mxu0 0
  %99 = vmatpush1.bf16.msra.mxu0 0
  %100 = vmatprep.subr.bf16.mxu0 0
  %101 = vmatpush1.bf16.msra.mxu0 0
  %102 = vmatprep.subr.bf16.mxu0 0
  %103 = vmatpush1.bf16.msra.mxu0 0
  %104 = vmatprep.subr.bf16.mxu0 0
  %105 = vmatpush1.bf16.msra.mxu0 0
  %106 = vmatprep.subr.bf16.mxu0 0
  %107 = vmatpush1.bf16.msra.mxu0 %v86
  %108 = vmatprep.subr.bf16.mxu0 0
  %109 = vmatpush1.bf16.msra.mxu0 %v85
  %110 = vmatprep.subr.bf16.mxu0 0
  %111 = vmatpush1.bf16.msra.mxu0 %v84
  %112 = vmatprep.subr.bf16.mxu0 0
  %113 = vmatpush1.bf16.msra.mxu0 %v83
  %114 = vmatprep.subr.bf16.mxu0 0
  %115 = vmatpush2.bf16.msra.mxu0 0
  %116 = vmatprep.subr.bf16.mxu0 0
  %117 = vmatpush2.bf16.msra.mxu0 0
  %118 = vmatprep.subr.bf16.mxu0 0
  %119 = vmatpush2.bf16.msra.mxu0 0
  %120 = vmatprep.subr.bf16.mxu0 0
  %121 = vmatpush2.bf16.msra.mxu0 0
  %122 = vmatprep.subr.bf16.mxu0 0
  %123 = vmatpush2.bf16.msra.mxu0 0
  %124 = vmatprep.subr.bf16.mxu0 0
  %125 = vmatpush2.bf16.msra.mxu0 0
  %126 = vmatprep.subr.bf16.mxu0 0
  %127 = vmatpush2.bf16.msra.mxu0 0
  %128 = vmatprep.subr.bf16.mxu0 0
  %129 = vmatpush2.bf16.msra.mxu0 0
  %130 = vmatprep.mubr.bf16.mxu0 0
  %131 = vmatmul.mubr.bf16.gmra.mxu0 %v93
  %v132 = vpop.f32.mrf.mxu0
  %v133 = vadd.f32 0.0, %v132
  %v134 = vpop.f32.mrf.mxu0
  %v135 = vpop.f32.mrf.mxu0
  %v136 = vadd.f32 0.0, %v135
  %v137 = vpop.f32.mrf.mxu0
  %138 = vmatprep.mubr.bf16.mxu0 0
  %139 = vmatmul.mubr.bf16.gmra.mxu0 %v96
  %v140 = vpop.f32.mrf.mxu0
  %v141 = vadd.f32 0.0, %v140
  %v142 = vpop.f32.mrf.mxu0
  %v143 = vpop.f32.mrf.mxu0
  %v144 = vadd.f32 0.0, %v143
  %v145 = vpop.f32.mrf.mxu0
  %146 = vdwg.mxu0
  %v147 = vld [vmem:[%s0] sm:$0x3]
  %v148 = vld [vmem:[%s0 + $0x2] sm:$0x3]
  %v149 = vld [vmem:[%s0 + $0x4] sm:$0x3]
  %v150 = vld [vmem:[%s0 + $0x6] sm:$0x3]
  %v151 = vld [vmem:[%s0 + $0x8] sm:$0x3]
  %v152 = vld [vmem:[%s0 + $0xa] sm:$0x3]
  %v153 = vld [vmem:[%s0 + $0xc] sm:$0x3]
  %v154 = vld [vmem:[%s0 + $0xe] sm:$0x3]
  %v155 = vld [vmem:[%s0 + $0x10] sm:$0x3]
  %v156 = vld [vmem:[%s0 + $0x12] sm:$0x3]
  %v157 = vld [vmem:[%s0 + $0x14] sm:$0x3]
  %v158 = vld [vmem:[%s0 + $0x16] sm:$0x3]
  %v159 = vld [vmem:[%s0 + $0x18] sm:$0x3]
  %v160 = vld [vmem:[%s0 + $0x1a] sm:$0x3]
  %v161 = vld [vmem:[%s0 + $0x1c] sm:$0x3]
  %v162 = vld [vmem:[%s0 + $0x1e] sm:$0x3]
  %v163 = vld [vmem:[%s0 + $0x20] sm:$0x3]
  %v164 = vld [vmem:[%s0 + $0x22] sm:$0x3]
  %v165 = vld [vmem:[%s0 + $0x24] sm:$0x3]
  %v166 = vld [vmem:[%s0 + $0x26] sm:$0x3]
  %v167 = vld [vmem:[%s0 + $0x28] sm:$0x3]
  %v168 = vld [vmem:[%s0 + $0x2a] sm:$0x3]
  %v169 = vld [vmem:[%s0 + $0x2c] sm:$0x3]
  %v170 = vld [vmem:[%s0 + $0x2e] sm:$0x3]
  %v171 = vld [vmem:[%s0 + $0x30] sm:$0x3]
  %v172 = vld [vmem:[%s0 + $0x32] sm:$0x3]
  %v173 = vld [vmem:[%s0 + $0x34] sm:$0x3]
  %v174 = vld [vmem:[%s0 + $0x36] sm:$0x3]
  %v175 = vld [vmem:[%s0 + $0x38] sm:$0x3]
  %v176 = vld [vmem:[%s0 + $0x3a] sm:$0x3]
  %v177 = vld [vmem:[%s0 + $0x3c] sm:$0x3]
  %v178 = vld [vmem:[%s0 + $0x3e] sm:$0x3]
  %v179 = vunpack.c.l.bf16 %v147
  %v180 = vunpack.c.l.bf16 %v148
  %v181 = vunpack.c.l.bf16 %v149
  %v182 = vunpack.c.l.bf16 %v150
  %v183 = vunpack.c.l.bf16 %v151
  %v184 = vunpack.c.l.bf16 %v152
  %v185 = vunpack.c.l.bf16 %v153
  %v186 = vunpack.c.l.bf16 %v154
  %v187 = vunpack.c.l.bf16 %v155
  %v188 = vunpack.c.l.bf16 %v156
  %v189 = vunpack.c.l.bf16 %v157
  %v190 = vunpack.c.l.bf16 %v158
  %v191 = vunpack.c.l.bf16 %v159
  %v192 = vunpack.c.l.bf16 %v160
  %v193 = vunpack.c.l.bf16 %v161
  %v194 = vunpack.c.l.bf16 %v162
  %v195 = vunpack.c.l.bf16 %v163
  %v196 = vunpack.c.l.bf16 %v164
  %v197 = vunpack.c.l.bf16 %v165
  %v198 = vunpack.c.l.bf16 %v166
  %v199 = vunpack.c.l.bf16 %v167
  %v200 = vunpack.c.l.bf16 %v168
  %v201 = vunpack.c.l.bf16 %v169
  %v202 = vunpack.c.l.bf16 %v170
  %v203 = vunpack.c.l.bf16 %v171
  %v204 = vunpack.c.l.bf16 %v172
  %v205 = vunpack.c.l.bf16 %v173
  %v206 = vunpack.c.l.bf16 %v174
  %v207 = vunpack.c.l.bf16 %v175
  %v208 = vunpack.c.l.bf16 %v176
  %v209 = vunpack.c.l.bf16 %v177
  %v210 = vunpack.c.l.bf16 %v178
  %v215 = vcombine.high %v33, %v33
  %v216 = vcombine.high %v34, %v34
  %v217 = vcombine.high %v35, %v35
  %v218 = vcombine.high %v36, %v36
  %v219 = vrot.slane %v33, 1
  %v220 = vrot.slane %v33, 2
  %v221 = vrot.slane %v33, 3
  %v222 = vrot.slane %v215, 1
  %v223 = vrot.slane %v215, 2
  %v224 = vrot.slane %v215, 3
  %v225 = vrot.slane %v34, 1
  %v226 = vrot.slane %v34, 2
  %v227 = vrot.slane %v34, 3
  %v228 = vrot.slane %v216, 1
  %v229 = vrot.slane %v216, 2
  %v230 = vrot.slane %v216, 3
  %v231 = vrot.slane %v35, 1
  %v232 = vrot.slane %v35, 2
  %v233 = vrot.slane %v35, 3
  %v234 = vrot.slane %v217, 1
  %v235 = vrot.slane %v217, 2
  %v236 = vrot.slane %v217, 3
  %v237 = vrot.slane %v36, 1
  %v238 = vrot.slane %v36, 2
  %v239 = vrot.slane %v36, 3
  %v240 = vrot.slane %v218, 1
  %v241 = vrot.slane %v218, 2
  %v242 = vrot.slane %v218, 3
  %v275 = vsub.f32 %v179, %v33
  %v276 = vsub.f32 %v180, %v219
  %v277 = vsub.f32 %v181, %v220
  %v278 = vsub.f32 %v182, %v221
  %v279 = vsub.f32 %v183, %v215
  %v280 = vsub.f32 %v184, %v222
  %v281 = vsub.f32 %v185, %v223
  %v282 = vsub.f32 %v186, %v224
  %v283 = vsub.f32 %v187, %v34
  %v284 = vsub.f32 %v188, %v225
  %v285 = vsub.f32 %v189, %v226
  %v286 = vsub.f32 %v190, %v227
  %v287 = vsub.f32 %v191, %v216
  %v288 = vsub.f32 %v192, %v228
  %v289 = vsub.f32 %v193, %v229
  %v290 = vsub.f32 %v194, %v230
  %v291 = vsub.f32 %v195, %v35
  %v292 = vsub.f32 %v196, %v231
  %v293 = vsub.f32 %v197, %v232
  %v294 = vsub.f32 %v198, %v233
  %v295 = vsub.f32 %v199, %v217
  %v296 = vsub.f32 %v200, %v234
  %v297 = vsub.f32 %v201, %v235
  %v298 = vsub.f32 %v202, %v236
  %v299 = vsub.f32 %v203, %v36
  %v300 = vsub.f32 %v204, %v237
  %v301 = vsub.f32 %v205, %v238
  %v302 = vsub.f32 %v206, %v239
  %v303 = vsub.f32 %v207, %v218
  %v304 = vsub.f32 %v208, %v240
  %v305 = vsub.f32 %v209, %v241
  %v306 = vsub.f32 %v210, %v242
  %v307 = vpack.c.bf16 %v275, %v275
  %v308 = vpack.c.bf16 %v276, %v276
  %v309 = vpack.c.bf16 %v277, %v277
  %v310 = vpack.c.bf16 %v278, %v278
  %v311 = vpack.c.bf16 %v279, %v279
  %v312 = vpack.c.bf16 %v280, %v280
  %v313 = vpack.c.bf16 %v281, %v281
  %v314 = vpack.c.bf16 %v282, %v282
  %v315 = vpack.c.bf16 %v283, %v283
  %v316 = vpack.c.bf16 %v284, %v284
  %v317 = vpack.c.bf16 %v285, %v285
  %v318 = vpack.c.bf16 %v286, %v286
  %v319 = vpack.c.bf16 %v287, %v287
  %v320 = vpack.c.bf16 %v288, %v288
  %v321 = vpack.c.bf16 %v289, %v289
  %v322 = vpack.c.bf16 %v290, %v290
  %v323 = vpack.c.bf16 %v291, %v291
  %v324 = vpack.c.bf16 %v292, %v292
  %v325 = vpack.c.bf16 %v293, %v293
  %v326 = vpack.c.bf16 %v294, %v294
  %v327 = vpack.c.bf16 %v295, %v295
  %v328 = vpack.c.bf16 %v296, %v296
  %v329 = vpack.c.bf16 %v297, %v297
  %v330 = vpack.c.bf16 %v298, %v298
  %v331 = vpack.c.bf16 %v299, %v299
  %v332 = vpack.c.bf16 %v300, %v300
  %v333 = vpack.c.bf16 %v301, %v301
  %v334 = vpack.c.bf16 %v302, %v302
  %v335 = vpack.c.bf16 %v303, %v303
  %v336 = vpack.c.bf16 %v304, %v304
  %v337 = vpack.c.bf16 %v305, %v305
  %v338 = vpack.c.bf16 %v306, %v306
  %v371 = vunpack.c.l.b16 %v307
  %v372 = vunpack.c.l.b16 %v308
  %v373 = vunpack.c.l.b16 %v309
  %v374 = vunpack.c.l.b16 %v310
  %v375 = vunpack.c.l.b16 %v311
  %v376 = vunpack.c.l.b16 %v312
  %v377 = vunpack.c.l.b16 %v313
  %v378 = vunpack.c.l.b16 %v314
  %v379 = vunpack.c.l.b16 %v315
  %v380 = vunpack.c.l.b16 %v316
  %v381 = vunpack.c.l.b16 %v317
  %v382 = vunpack.c.l.b16 %v318
  %v383 = vunpack.c.l.b16 %v319
  %v384 = vunpack.c.l.b16 %v320
  %v385 = vunpack.c.l.b16 %v321
  %v386 = vunpack.c.l.b16 %v322
  %v387 = vunpack.c.l.b16 %v323
  %v388 = vunpack.c.l.b16 %v324
  %v389 = vunpack.c.l.b16 %v325
  %v390 = vunpack.c.l.b16 %v326
  %v391 = vunpack.c.l.b16 %v327
  %v392 = vunpack.c.l.b16 %v328
  %v393 = vunpack.c.l.b16 %v329
  %v394 = vunpack.c.l.b16 %v330
  %v395 = vunpack.c.l.b16 %v331
  %v396 = vunpack.c.l.b16 %v332
  %v397 = vunpack.c.l.b16 %v333
  %v398 = vunpack.c.l.b16 %v334
  %v399 = vunpack.c.l.b16 %v335
  %v400 = vunpack.c.l.b16 %v336
  %v401 = vunpack.c.l.b16 %v337
  %v402 = vunpack.c.l.b16 %v338
  %v403 = vrot.slane %v372, 7
  %vm404 = vcmask 1041409
  %v405 = vsel %vm404, %v403, %v371
  %v406 = vrot.slane %v373, 6
  %vm407 = vcmask 1042434
  %v408 = vsel %vm407, %v406, %v405
  %v409 = vrot.slane %v374, 5
  %vm410 = vcmask 1043459
  %v411 = vsel %vm410, %v409, %v408
  %v412 = vrot.slane %v375, 4
  %vm413 = vcmask 1044484
  %v414 = vsel %vm413, %v412, %v411
  %v415 = vrot.slane %v376, 3
  %vm416 = vcmask 1045509
  %v417 = vsel %vm416, %v415, %v414
  %v418 = vrot.slane %v377, 2
  %vm419 = vcmask 1046534
  %v420 = vsel %vm419, %v418, %v417
  %v421 = vrot.slane %v378, 1
  %vm422 = vcmask 1047559
  %v423 = vsel %vm422, %v421, %v420
  %v424 = vrot.slane %v380, 7
  %v425 = vsel %vm404, %v424, %v379
  %v426 = vrot.slane %v381, 6
  %v427 = vsel %vm407, %v426, %v425
  %v428 = vrot.slane %v382, 5
  %v429 = vsel %vm410, %v428, %v427
  %v430 = vrot.slane %v383, 4
  %v431 = vsel %vm413, %v430, %v429
  %v432 = vrot.slane %v384, 3
  %v433 = vsel %vm416, %v432, %v431
  %v434 = vrot.slane %v385, 2
  %v435 = vsel %vm419, %v434, %v433
  %v436 = vrot.slane %v386, 1
  %v437 = vsel %vm422, %v436, %v435
  %v438 = vrot.slane %v388, 7
  %v439 = vsel %vm404, %v438, %v387
  %v440 = vrot.slane %v389, 6
  %v441 = vsel %vm407, %v440, %v439
  %v442 = vrot.slane %v390, 5
  %v443 = vsel %vm410, %v442, %v441
  %v444 = vrot.slane %v391, 4
  %v445 = vsel %vm413, %v444, %v443
  %v446 = vrot.slane %v392, 3
  %v447 = vsel %vm416, %v446, %v445
  %v448 = vrot.slane %v393, 2
  %v449 = vsel %vm419, %v448, %v447
  %v450 = vrot.slane %v394, 1
  %v451 = vsel %vm422, %v450, %v449
  %v452 = vrot.slane %v396, 7
  %v453 = vsel %vm404, %v452, %v395
  %v454 = vrot.slane %v397, 6
  %v455 = vsel %vm407, %v454, %v453
  %v456 = vrot.slane %v398, 5
  %v457 = vsel %vm410, %v456, %v455
  %v458 = vrot.slane %v399, 4
  %v459 = vsel %vm413, %v458, %v457
  %v460 = vrot.slane %v400, 3
  %v461 = vsel %vm416, %v460, %v459
  %v462 = vrot.slane %v401, 2
  %v463 = vsel %vm419, %v462, %v461
  %v464 = vrot.slane %v402, 1
  %v465 = vsel %vm422, %v464, %v463
  %v466 = vpack.c.b16 %v437, %v423
  %v467 = vpack.c.b16 %v465, %v451
  %v476 = vunpack.c.l.b16 %v37
  %v477 = vunpack.c.l.b16 %v38
  %v478 = vunpack.c.l.b16 %v39
  %v479 = vunpack.c.l.b16 %v40
  %v480 = vunpack.c.l.b16 %v41
  %v481 = vunpack.c.l.b16 %v42
  %v482 = vunpack.c.l.b16 %v43
  %v483 = vunpack.c.l.b16 %v44
  %v484 = vpack.c.b16 %v477, %v476
  %v485 = vpack.c.b16 %v479, %v478
  %v486 = vpack.c.b16 %v481, %v480
  %v487 = vpack.c.b16 %v483, %v482
  %v493 = vsel %vm91, %v466, 0
  %v496 = vsel %vm91, %v467, 0
  %498 = vmatprep.subr.bf16.mxu0 0
  %499 = vmatpush1.bf16.msra.mxu0 0
  %500 = vmatprep.subr.bf16.mxu0 0
  %501 = vmatpush1.bf16.msra.mxu0 0
  %502 = vmatprep.subr.bf16.mxu0 0
  %503 = vmatpush1.bf16.msra.mxu0 0
  %504 = vmatprep.subr.bf16.mxu0 0
  %505 = vmatpush1.bf16.msra.mxu0 0
  %506 = vmatprep.subr.bf16.mxu0 0
  %507 = vmatpush1.bf16.msra.mxu0 %v487
  %508 = vmatprep.subr.bf16.mxu0 0
  %509 = vmatpush1.bf16.msra.mxu0 %v486
  %510 = vmatprep.subr.bf16.mxu0 0
  %511 = vmatpush1.bf16.msra.mxu0 %v485
  %512 = vmatprep.subr.bf16.mxu0 0
  %513 = vmatpush1.bf16.msra.mxu0 %v484
  %514 = vmatprep.subr.bf16.mxu0 0
  %515 = vmatpush2.bf16.msra.mxu0 0
  %516 = vmatprep.subr.bf16.mxu0 0
  %517 = vmatpush2.bf16.msra.mxu0 0
  %518 = vmatprep.subr.bf16.mxu0 0
  %519 = vmatpush2.bf16.msra.mxu0 0
  %520 = vmatprep.subr.bf16.mxu0 0
  %521 = vmatpush2.bf16.msra.mxu0 0
  %522 = vmatprep.subr.bf16.mxu0 0
  %523 = vmatpush2.bf16.msra.mxu0 0
  %524 = vmatprep.subr.bf16.mxu0 0
  %525 = vmatpush2.bf16.msra.mxu0 0
  %526 = vmatprep.subr.bf16.mxu0 0
  %527 = vmatpush2.bf16.msra.mxu0 0
  %528 = vmatprep.subr.bf16.mxu0 0
  %529 = vmatpush2.bf16.msra.mxu0 0
  %530 = vmatprep.mubr.bf16.mxu0 0
  %531 = vmatmul.mubr.bf16.gmra.mxu0 %v493
  %v532 = vpop.f32.mrf.mxu0
  %v533 = vadd.f32 %v133, %v532
  %v534 = vpop.f32.mrf.mxu0
  %v535 = vpop.f32.mrf.mxu0
  %v536 = vadd.f32 %v136, %v535
  %v537 = vpop.f32.mrf.mxu0
  %538 = vmatprep.mubr.bf16.mxu0 0
  %539 = vmatmul.mubr.bf16.gmra.mxu0 %v496
  %v540 = vpop.f32.mrf.mxu0
  %v541 = vadd.f32 %v141, %v540
  %v542 = vpop.f32.mrf.mxu0
  %v543 = vpop.f32.mrf.mxu0
  %v544 = vadd.f32 %v144, %v543
  %v545 = vpop.f32.mrf.mxu0
  %546 = vdwg.mxu0
  %v548 = vlaneseq
  %v549 = vshrl.u32 %v548, 7
  %v550 = vsub.s32 0, %v549
  %v551 = vrot.slane %v53, %v550
  %v553 = vmul.f32 %v533, %v551
  %v554 = vmul.f32 %v536, %v551
  %v555 = vmul.f32 %v541, %v551
  %v556 = vmul.f32 %v544, %v551
  %v558 = vlaneseq
  %v559 = vshrl.u32 %v558, 7
  %v560 = vsub.s32 0, %v559
  %v561 = vrot.slane %v54, %v560
  %v563 = vadd.f32 %v553, %v561
  %v564 = vadd.f32 %v554, %v561
  %v565 = vadd.f32 %v555, %v561
  %v566 = vadd.f32 %v556, %v561
  %vm567 = vcmp.ge.f32.partialorder %v563, 0.0
  %vm568 = vcmp.ge.f32.partialorder %v564, 0.0
  %vm569 = vcmp.ge.f32.partialorder %v565, 0.0
  %vm570 = vcmp.ge.f32.partialorder %v566, 0.0
  %v571 = vmul.f32 %v563, 0.2
  %v572 = vmul.f32 %v564, 0.2
  %v573 = vmul.f32 %v565, 0.2
  %v574 = vmul.f32 %v566, 0.2
  %v575 = vsel %vm567, %v563, %v571
  %v576 = vsel %vm568, %v564, %v572
  %v577 = vsel %vm569, %v565, %v573
  %v578 = vsel %vm570, %v566, %v574
  %v579 = vpack.c.bf16 %v576, %v575
  %v580 = vpack.c.bf16 %v578, %v577
  %v589 = vunpack.c.l.b16 %v55
  %v590 = vunpack.c.l.b16 %v56
  %v591 = vunpack.c.l.b16 %v57
  %v592 = vunpack.c.l.b16 %v58
  %v593 = vunpack.c.l.b16 %v59
  %v594 = vunpack.c.l.b16 %v60
  %v595 = vunpack.c.l.b16 %v61
  %v596 = vunpack.c.l.b16 %v62
  %v597 = vpack.c.b16 %v590, %v589
  %v598 = vpack.c.b16 %v592, %v591
  %v599 = vpack.c.b16 %v594, %v593
  %v600 = vpack.c.b16 %v596, %v595
  %v606 = vsel %vm91, %v579, 0
  %v609 = vsel %vm91, %v580, 0
  %611 = vmatprep.subr.bf16.mxu0 0
  %612 = vmatpush1.bf16.msra.mxu0 0
  %613 = vmatprep.subr.bf16.mxu0 0
  %614 = vmatpush1.bf16.msra.mxu0 0
  %615 = vmatprep.subr.bf16.mxu0 0
  %616 = vmatpush1.bf16.msra.mxu0 0
  %617 = vmatprep.subr.bf16.mxu0 0
  %618 = vmatpush1.bf16.msra.mxu0 0
  %619 = vmatprep.subr.bf16.mxu0 0
  %620 = vmatpush1.bf16.msra.mxu0 %v600
  %621 = vmatprep.subr.bf16.mxu0 0
  %622 = vmatpush1.bf16.msra.mxu0 %v599
  %623 = vmatprep.subr.bf16.mxu0 0
  %624 = vmatpush1.bf16.msra.mxu0 %v598
  %625 = vmatprep.subr.bf16.mxu0 0
  %626 = vmatpush1.bf16.msra.mxu0 %v597
  %627 = vmatprep.subr.bf16.mxu0 0
  %628 = vmatpush2.bf16.msra.mxu0 0
  %629 = vmatprep.subr.bf16.mxu0 0
  %630 = vmatpush2.bf16.msra.mxu0 0
  %631 = vmatprep.subr.bf16.mxu0 0
  %632 = vmatpush2.bf16.msra.mxu0 0
  %633 = vmatprep.subr.bf16.mxu0 0
  %634 = vmatpush2.bf16.msra.mxu0 0
  %635 = vmatprep.subr.bf16.mxu0 0
  %636 = vmatpush2.bf16.msra.mxu0 0
  %637 = vmatprep.subr.bf16.mxu0 0
  %638 = vmatpush2.bf16.msra.mxu0 0
  %639 = vmatprep.subr.bf16.mxu0 0
  %640 = vmatpush2.bf16.msra.mxu0 0
  %641 = vmatprep.subr.bf16.mxu0 0
  %642 = vmatpush2.bf16.msra.mxu0 0
  %643 = vmatprep.mubr.bf16.mxu0 0
  %644 = vmatmul.mubr.bf16.gmra.mxu0 %v606
  %v645 = vpop.f32.mrf.mxu0
  %v646 = vadd.f32 0.0, %v645
  %v647 = vpop.f32.mrf.mxu0
  %v648 = vpop.f32.mrf.mxu0
  %v649 = vadd.f32 0.0, %v648
  %v650 = vpop.f32.mrf.mxu0
  %651 = vmatprep.mubr.bf16.mxu0 0
  %652 = vmatmul.mubr.bf16.gmra.mxu0 %v609
  %v653 = vpop.f32.mrf.mxu0
  %v654 = vadd.f32 0.0, %v653
  %v655 = vpop.f32.mrf.mxu0
  %v656 = vpop.f32.mrf.mxu0
  %v657 = vadd.f32 0.0, %v656
  %v658 = vpop.f32.mrf.mxu0
  %659 = vdwg.mxu0
  %v661 = vlaneseq
  %v662 = vshrl.u32 %v661, 7
  %v663 = vsub.s32 0, %v662
  %v664 = vrot.slane %v63, %v663
  %v666 = vmul.f32 %v646, %v664
  %v667 = vmul.f32 %v649, %v664
  %v668 = vmul.f32 %v654, %v664
  %v669 = vmul.f32 %v657, %v664
  %v671 = vlaneseq
  %v672 = vshrl.u32 %v671, 7
  %v673 = vsub.s32 0, %v672
  %v674 = vrot.slane %v64, %v673
  %v676 = vadd.f32 %v666, %v674
  %v677 = vadd.f32 %v667, %v674
  %v678 = vadd.f32 %v668, %v674
  %v679 = vadd.f32 %v669, %v674
  %vm680 = vcmp.ge.f32.partialorder %v676, 0.0
  %vm681 = vcmp.ge.f32.partialorder %v677, 0.0
  %vm682 = vcmp.ge.f32.partialorder %v678, 0.0
  %vm683 = vcmp.ge.f32.partialorder %v679, 0.0
  %v684 = vmul.f32 %v676, 0.2
  %v685 = vmul.f32 %v677, 0.2
  %v686 = vmul.f32 %v678, 0.2
  %v687 = vmul.f32 %v679, 0.2
  %v688 = vsel %vm680, %v676, %v684
  %v689 = vsel %vm681, %v677, %v685
  %v690 = vsel %vm682, %v678, %v686
  %v691 = vsel %vm683, %v679, %v687
  %v692 = vrot.slane %v33, 7
  %v693 = vrot.slane %v215, 7
  %v694 = vrot.slane %v34, 7
  %v695 = vrot.slane %v216, 7
  %v696 = vrot.slane %v35, 7
  %v697 = vrot.slane %v217, 7
  %v698 = vrot.slane %v36, 7
  %v699 = vrot.slane %v218, 7
  %v708 = vsub.f32 %v179, %v692
  %v709 = vsub.f32 %v180, %v33
  %v710 = vsub.f32 %v181, %v219
  %v711 = vsub.f32 %v182, %v220
  %v712 = vsub.f32 %v183, %v693
  %v713 = vsub.f32 %v184, %v215
  %v714 = vsub.f32 %v185, %v222
  %v715 = vsub.f32 %v186, %v223
  %v716 = vsub.f32 %v187, %v694
  %v717 = vsub.f32 %v188, %v34
  %v718 = vsub.f32 %v189, %v225
  %v719 = vsub.f32 %v190, %v226
  %v720 = vsub.f32 %v191, %v695
  %v721 = vsub.f32 %v192, %v216
  %v722 = vsub.f32 %v193, %v228
  %v723 = vsub.f32 %v194, %v229
  %v724 = vsub.f32 %v195, %v696
  %v725 = vsub.f32 %v196, %v35
  %v726 = vsub.f32 %v197, %v231
  %v727 = vsub.f32 %v198, %v232
  %v728 = vsub.f32 %v199, %v697
  %v729 = vsub.f32 %v200, %v217
  %v730 = vsub.f32 %v201, %v234
  %v731 = vsub.f32 %v202, %v235
  %v732 = vsub.f32 %v203, %v698
  %v733 = vsub.f32 %v204, %v36
  %v734 = vsub.f32 %v205, %v237
  %v735 = vsub.f32 %v206, %v238
  %v736 = vsub.f32 %v207, %v699
  %v737 = vsub.f32 %v208, %v218
  %v738 = vsub.f32 %v209, %v240
  %v739 = vsub.f32 %v210, %v241
  %v740 = vpack.c.bf16 %v708, %v708
  %v741 = vpack.c.bf16 %v709, %v709
  %v742 = vpack.c.bf16 %v710, %v710
  %v743 = vpack.c.bf16 %v711, %v711
  %v744 = vpack.c.bf16 %v712, %v712
  %v745 = vpack.c.bf16 %v713, %v713
  %v746 = vpack.c.bf16 %v714, %v714
  %v747 = vpack.c.bf16 %v715, %v715
  %v748 = vpack.c.bf16 %v716, %v716
  %v749 = vpack.c.bf16 %v717, %v717
  %v750 = vpack.c.bf16 %v718, %v718
  %v751 = vpack.c.bf16 %v719, %v719
  %v752 = vpack.c.bf16 %v720, %v720
  %v753 = vpack.c.bf16 %v721, %v721
  %v754 = vpack.c.bf16 %v722, %v722
  %v755 = vpack.c.bf16 %v723, %v723
  %v756 = vpack.c.bf16 %v724, %v724
  %v757 = vpack.c.bf16 %v725, %v725
  %v758 = vpack.c.bf16 %v726, %v726
  %v759 = vpack.c.bf16 %v727, %v727
  %v760 = vpack.c.bf16 %v728, %v728
  %v761 = vpack.c.bf16 %v729, %v729
  %v762 = vpack.c.bf16 %v730, %v730
  %v763 = vpack.c.bf16 %v731, %v731
  %v764 = vpack.c.bf16 %v732, %v732
  %v765 = vpack.c.bf16 %v733, %v733
  %v766 = vpack.c.bf16 %v734, %v734
  %v767 = vpack.c.bf16 %v735, %v735
  %v768 = vpack.c.bf16 %v736, %v736
  %v769 = vpack.c.bf16 %v737, %v737
  %v770 = vpack.c.bf16 %v738, %v738
  %v771 = vpack.c.bf16 %v739, %v739
  %v804 = vunpack.c.l.b16 %v740
  %v805 = vunpack.c.l.b16 %v741
  %v806 = vunpack.c.l.b16 %v742
  %v807 = vunpack.c.l.b16 %v743
  %v808 = vunpack.c.l.b16 %v744
  %v809 = vunpack.c.l.b16 %v745
  %v810 = vunpack.c.l.b16 %v746
  %v811 = vunpack.c.l.b16 %v747
  %v812 = vunpack.c.l.b16 %v748
  %v813 = vunpack.c.l.b16 %v749
  %v814 = vunpack.c.l.b16 %v750
  %v815 = vunpack.c.l.b16 %v751
  %v816 = vunpack.c.l.b16 %v752
  %v817 = vunpack.c.l.b16 %v753
  %v818 = vunpack.c.l.b16 %v754
  %v819 = vunpack.c.l.b16 %v755
  %v820 = vunpack.c.l.b16 %v756
  %v821 = vunpack.c.l.b16 %v757
  %v822 = vunpack.c.l.b16 %v758
  %v823 = vunpack.c.l.b16 %v759
  %v824 = vunpack.c.l.b16 %v760
  %v825 = vunpack.c.l.b16 %v761
  %v826 = vunpack.c.l.b16 %v762
  %v827 = vunpack.c.l.b16 %v763
  %v828 = vunpack.c.l.b16 %v764
  %v829 = vunpack.c.l.b16 %v765
  %v830 = vunpack.c.l.b16 %v766
  %v831 = vunpack.c.l.b16 %v767
  %v832 = vunpack.c.l.b16 %v768
  %v833 = vunpack.c.l.b16 %v769
  %v834 = vunpack.c.l.b16 %v770
  %v835 = vunpack.c.l.b16 %v771
  %v836 = vrot.slane %v804, 1
  %v837 = vsel %vm404, %v805, %v836
  %v838 = vrot.slane %v806, 7
  %v839 = vsel %vm407, %v838, %v837
  %v840 = vrot.slane %v807, 6
  %v841 = vsel %vm410, %v840, %v839
  %v842 = vrot.slane %v808, 5
  %v843 = vsel %vm413, %v842, %v841
  %v844 = vrot.slane %v809, 4
  %v845 = vsel %vm416, %v844, %v843
  %v846 = vrot.slane %v810, 3
  %v847 = vsel %vm419, %v846, %v845
  %v848 = vrot.slane %v811, 2
  %v849 = vsel %vm422, %v848, %v847
  %v850 = vrot.slane %v812, 1
  %v851 = vsel %vm404, %v813, %v850
  %v852 = vrot.slane %v814, 7
  %v853 = vsel %vm407, %v852, %v851
  %v854 = vrot.slane %v815, 6
  %v855 = vsel %vm410, %v854, %v853
  %v856 = vrot.slane %v816, 5
  %v857 = vsel %vm413, %v856, %v855
  %v858 = vrot.slane %v817, 4
  %v859 = vsel %vm416, %v858, %v857
  %v860 = vrot.slane %v818, 3
  %v861 = vsel %vm419, %v860, %v859
  %v862 = vrot.slane %v819, 2
  %v863 = vsel %vm422, %v862, %v861
  %v864 = vrot.slane %v820, 1
  %v865 = vsel %vm404, %v821, %v864
  %v866 = vrot.slane %v822, 7
  %v867 = vsel %vm407, %v866, %v865
  %v868 = vrot.slane %v823, 6
  %v869 = vsel %vm410, %v868, %v867
  %v870 = vrot.slane %v824, 5
  %v871 = vsel %vm413, %v870, %v869
  %v872 = vrot.slane %v825, 4
  %v873 = vsel %vm416, %v872, %v871
  %v874 = vrot.slane %v826, 3
  %v875 = vsel %vm419, %v874, %v873
  %v876 = vrot.slane %v827, 2
  %v877 = vsel %vm422, %v876, %v875
  %v878 = vrot.slane %v828, 1
  %v879 = vsel %vm404, %v829, %v878
  %v880 = vrot.slane %v830, 7
  %v881 = vsel %vm407, %v880, %v879
  %v882 = vrot.slane %v831, 6
  %v883 = vsel %vm410, %v882, %v881
  %v884 = vrot.slane %v832, 5
  %v885 = vsel %vm413, %v884, %v883
  %v886 = vrot.slane %v833, 4
  %v887 = vsel %vm416, %v886, %v885
  %v888 = vrot.slane %v834, 3
  %v889 = vsel %vm419, %v888, %v887
  %v890 = vrot.slane %v835, 2
  %v891 = vsel %vm422, %v890, %v889
  %v892 = vpack.c.b16 %v863, %v849
  %v893 = vpack.c.b16 %v891, %v877
  %v895 = vsel %vm91, %v892, 0
  %v898 = vsel %vm91, %v893, 0
  %900 = vmatprep.subr.bf16.mxu0 0
  %901 = vmatpush1.bf16.msra.mxu0 0
  %902 = vmatprep.subr.bf16.mxu0 0
  %903 = vmatpush1.bf16.msra.mxu0 0
  %904 = vmatprep.subr.bf16.mxu0 0
  %905 = vmatpush1.bf16.msra.mxu0 0
  %906 = vmatprep.subr.bf16.mxu0 0
  %907 = vmatpush1.bf16.msra.mxu0 0
  %908 = vmatprep.subr.bf16.mxu0 0
  %909 = vmatpush1.bf16.msra.mxu0 %v487
  %910 = vmatprep.subr.bf16.mxu0 0
  %911 = vmatpush1.bf16.msra.mxu0 %v486
  %912 = vmatprep.subr.bf16.mxu0 0
  %913 = vmatpush1.bf16.msra.mxu0 %v485
  %914 = vmatprep.subr.bf16.mxu0 0
  %915 = vmatpush1.bf16.msra.mxu0 %v484
  %916 = vmatprep.subr.bf16.mxu0 0
  %917 = vmatpush2.bf16.msra.mxu0 0
  %918 = vmatprep.subr.bf16.mxu0 0
  %919 = vmatpush2.bf16.msra.mxu0 0
  %920 = vmatprep.subr.bf16.mxu0 0
  %921 = vmatpush2.bf16.msra.mxu0 0
  %922 = vmatprep.subr.bf16.mxu0 0
  %923 = vmatpush2.bf16.msra.mxu0 0
  %924 = vmatprep.subr.bf16.mxu0 0
  %925 = vmatpush2.bf16.msra.mxu0 0
  %926 = vmatprep.subr.bf16.mxu0 0
  %927 = vmatpush2.bf16.msra.mxu0 0
  %928 = vmatprep.subr.bf16.mxu0 0
  %929 = vmatpush2.bf16.msra.mxu0 0
  %930 = vmatprep.subr.bf16.mxu0 0
  %931 = vmatpush2.bf16.msra.mxu0 0
  %932 = vmatprep.mubr.bf16.mxu0 0
  %933 = vmatmul.mubr.bf16.gmra.mxu0 %v895
  %v934 = vpop.f32.mrf.mxu0
  %v935 = vadd.f32 %v133, %v934
  %v936 = vpop.f32.mrf.mxu0
  %v937 = vpop.f32.mrf.mxu0
  %v938 = vadd.f32 %v136, %v937
  %v939 = vpop.f32.mrf.mxu0
  %940 = vmatprep.mubr.bf16.mxu0 0
  %941 = vmatmul.mubr.bf16.gmra.mxu0 %v898
  %v942 = vpop.f32.mrf.mxu0
  %v943 = vadd.f32 %v141, %v942
  %v944 = vpop.f32.mrf.mxu0
  %v945 = vpop.f32.mrf.mxu0
  %v946 = vadd.f32 %v144, %v945
  %v947 = vpop.f32.mrf.mxu0
  %948 = vdwg.mxu0
  %v949 = vmul.f32 %v935, %v551
  %v950 = vmul.f32 %v938, %v551
  %v951 = vmul.f32 %v943, %v551
  %v952 = vmul.f32 %v946, %v551
  %v953 = vadd.f32 %v949, %v561
  %v954 = vadd.f32 %v950, %v561
  %v955 = vadd.f32 %v951, %v561
  %v956 = vadd.f32 %v952, %v561
  %vm957 = vcmp.ge.f32.partialorder %v953, 0.0
  %vm958 = vcmp.ge.f32.partialorder %v954, 0.0
  %vm959 = vcmp.ge.f32.partialorder %v955, 0.0
  %vm960 = vcmp.ge.f32.partialorder %v956, 0.0
  %v961 = vmul.f32 %v953, 0.2
  %v962 = vmul.f32 %v954, 0.2
  %v963 = vmul.f32 %v955, 0.2
  %v964 = vmul.f32 %v956, 0.2
  %v965 = vsel %vm957, %v953, %v961
  %v966 = vsel %vm958, %v954, %v962
  %v967 = vsel %vm959, %v955, %v963
  %v968 = vsel %vm960, %v956, %v964
  %v969 = vpack.c.bf16 %v966, %v965
  %v970 = vpack.c.bf16 %v968, %v967
  %v972 = vsel %vm91, %v969, 0
  %v975 = vsel %vm91, %v970, 0
  %977 = vmatprep.subr.bf16.mxu0 0
  %978 = vmatpush1.bf16.msra.mxu0 0
  %979 = vmatprep.subr.bf16.mxu0 0
  %980 = vmatpush1.bf16.msra.mxu0 0
  %981 = vmatprep.subr.bf16.mxu0 0
  %982 = vmatpush1.bf16.msra.mxu0 0
  %983 = vmatprep.subr.bf16.mxu0 0
  %984 = vmatpush1.bf16.msra.mxu0 0
  %985 = vmatprep.subr.bf16.mxu0 0
  %986 = vmatpush1.bf16.msra.mxu0 %v600
  %987 = vmatprep.subr.bf16.mxu0 0
  %988 = vmatpush1.bf16.msra.mxu0 %v599
  %989 = vmatprep.subr.bf16.mxu0 0
  %990 = vmatpush1.bf16.msra.mxu0 %v598
  %991 = vmatprep.subr.bf16.mxu0 0
  %992 = vmatpush1.bf16.msra.mxu0 %v597
  %993 = vmatprep.subr.bf16.mxu0 0
  %994 = vmatpush2.bf16.msra.mxu0 0
  %995 = vmatprep.subr.bf16.mxu0 0
  %996 = vmatpush2.bf16.msra.mxu0 0
  %997 = vmatprep.subr.bf16.mxu0 0
  %998 = vmatpush2.bf16.msra.mxu0 0
  %999 = vmatprep.subr.bf16.mxu0 0
  %1000 = vmatpush2.bf16.msra.mxu0 0
  %1001 = vmatprep.subr.bf16.mxu0 0
  %1002 = vmatpush2.bf16.msra.mxu0 0
  %1003 = vmatprep.subr.bf16.mxu0 0
  %1004 = vmatpush2.bf16.msra.mxu0 0
  %1005 = vmatprep.subr.bf16.mxu0 0
  %1006 = vmatpush2.bf16.msra.mxu0 0
  %1007 = vmatprep.subr.bf16.mxu0 0
  %1008 = vmatpush2.bf16.msra.mxu0 0
  %1009 = vmatprep.mubr.bf16.mxu0 0
  %1010 = vmatmul.mubr.bf16.gmra.mxu0 %v972
  %v1011 = vpop.f32.mrf.mxu0
  %v1012 = vadd.f32 0.0, %v1011
  %v1013 = vpop.f32.mrf.mxu0
  %v1014 = vpop.f32.mrf.mxu0
  %v1015 = vadd.f32 0.0, %v1014
  %v1016 = vpop.f32.mrf.mxu0
  %1017 = vmatprep.mubr.bf16.mxu0 0
  %1018 = vmatmul.mubr.bf16.gmra.mxu0 %v975
  %v1019 = vpop.f32.mrf.mxu0
  %v1020 = vadd.f32 0.0, %v1019
  %v1021 = vpop.f32.mrf.mxu0
  %v1022 = vpop.f32.mrf.mxu0
  %v1023 = vadd.f32 0.0, %v1022
  %v1024 = vpop.f32.mrf.mxu0
  %1025 = vdwg.mxu0
  %v1026 = vmul.f32 %v1012, %v664
  %v1027 = vmul.f32 %v1015, %v664
  %v1028 = vmul.f32 %v1020, %v664
  %v1029 = vmul.f32 %v1023, %v664
  %v1030 = vadd.f32 %v1026, %v674
  %v1031 = vadd.f32 %v1027, %v674
  %v1032 = vadd.f32 %v1028, %v674
  %v1033 = vadd.f32 %v1029, %v674
  %vm1034 = vcmp.ge.f32.partialorder %v1030, 0.0
  %vm1035 = vcmp.ge.f32.partialorder %v1031, 0.0
  %vm1036 = vcmp.ge.f32.partialorder %v1032, 0.0
  %vm1037 = vcmp.ge.f32.partialorder %v1033, 0.0
  %v1038 = vmul.f32 %v1030, 0.2
  %v1039 = vmul.f32 %v1031, 0.2
  %v1040 = vmul.f32 %v1032, 0.2
  %v1041 = vmul.f32 %v1033, 0.2
  %v1042 = vsel %vm1034, %v1030, %v1038
  %v1043 = vsel %vm1035, %v1031, %v1039
  %v1044 = vsel %vm1036, %v1032, %v1040
  %v1045 = vsel %vm1037, %v1033, %v1041
  %v1046 = vmax.f32 %v688, %v1042
  %v1047 = vmax.f32 %v689, %v1043
  %v1048 = vmax.f32 %v690, %v1044
  %v1049 = vmax.f32 %v691, %v1045
  %v1050 = vrot.slane %v33, 6
  %v1051 = vrot.slane %v215, 6
  %v1052 = vrot.slane %v34, 6
  %v1053 = vrot.slane %v216, 6
  %v1054 = vrot.slane %v35, 6
  %v1055 = vrot.slane %v217, 6
  %v1056 = vrot.slane %v36, 6
  %v1057 = vrot.slane %v218, 6
  %v1066 = vsub.f32 %v179, %v1050
  %v1067 = vsub.f32 %v180, %v692
  %v1068 = vsub.f32 %v181, %v33
  %v1069 = vsub.f32 %v182, %v219
  %v1070 = vsub.f32 %v183, %v1051
  %v1071 = vsub.f32 %v184, %v693
  %v1072 = vsub.f32 %v185, %v215
  %v1073 = vsub.f32 %v186, %v222
  %v1074 = vsub.f32 %v187, %v1052
  %v1075 = vsub.f32 %v188, %v694
  %v1076 = vsub.f32 %v189, %v34
  %v1077 = vsub.f32 %v190, %v225
  %v1078 = vsub.f32 %v191, %v1053
  %v1079 = vsub.f32 %v192, %v695
  %v1080 = vsub.f32 %v193, %v216
  %v1081 = vsub.f32 %v194, %v228
  %v1082 = vsub.f32 %v195, %v1054
  %v1083 = vsub.f32 %v196, %v696
  %v1084 = vsub.f32 %v197, %v35
  %v1085 = vsub.f32 %v198, %v231
  %v1086 = vsub.f32 %v199, %v1055
  %v1087 = vsub.f32 %v200, %v697
  %v1088 = vsub.f32 %v201, %v217
  %v1089 = vsub.f32 %v202, %v234
  %v1090 = vsub.f32 %v203, %v1056
  %v1091 = vsub.f32 %v204, %v698
  %v1092 = vsub.f32 %v205, %v36
  %v1093 = vsub.f32 %v206, %v237
  %v1094 = vsub.f32 %v207, %v1057
  %v1095 = vsub.f32 %v208, %v699
  %v1096 = vsub.f32 %v209, %v218
  %v1097 = vsub.f32 %v210, %v240
  %v1098 = vpack.c.bf16 %v1066, %v1066
  %v1099 = vpack.c.bf16 %v1067, %v1067
  %v1100 = vpack.c.bf16 %v1068, %v1068
  %v1101 = vpack.c.bf16 %v1069, %v1069
  %v1102 = vpack.c.bf16 %v1070, %v1070
  %v1103 = vpack.c.bf16 %v1071, %v1071
  %v1104 = vpack.c.bf16 %v1072, %v1072
  %v1105 = vpack.c.bf16 %v1073, %v1073
  %v1106 = vpack.c.bf16 %v1074, %v1074
  %v1107 = vpack.c.bf16 %v1075, %v1075
  %v1108 = vpack.c.bf16 %v1076, %v1076
  %v1109 = vpack.c.bf16 %v1077, %v1077
  %v1110 = vpack.c.bf16 %v1078, %v1078
  %v1111 = vpack.c.bf16 %v1079, %v1079
  %v1112 = vpack.c.bf16 %v1080, %v1080
  %v1113 = vpack.c.bf16 %v1081, %v1081
  %v1114 = vpack.c.bf16 %v1082, %v1082
  %v1115 = vpack.c.bf16 %v1083, %v1083
  %v1116 = vpack.c.bf16 %v1084, %v1084
  %v1117 = vpack.c.bf16 %v1085, %v1085
  %v1118 = vpack.c.bf16 %v1086, %v1086
  %v1119 = vpack.c.bf16 %v1087, %v1087
  %v1120 = vpack.c.bf16 %v1088, %v1088
  %v1121 = vpack.c.bf16 %v1089, %v1089
  %v1122 = vpack.c.bf16 %v1090, %v1090
  %v1123 = vpack.c.bf16 %v1091, %v1091
  %v1124 = vpack.c.bf16 %v1092, %v1092
  %v1125 = vpack.c.bf16 %v1093, %v1093
  %v1126 = vpack.c.bf16 %v1094, %v1094
  %v1127 = vpack.c.bf16 %v1095, %v1095
  %v1128 = vpack.c.bf16 %v1096, %v1096
  %v1129 = vpack.c.bf16 %v1097, %v1097
  %v1162 = vunpack.c.l.b16 %v1098
  %v1163 = vunpack.c.l.b16 %v1099
  %v1164 = vunpack.c.l.b16 %v1100
  %v1165 = vunpack.c.l.b16 %v1101
  %v1166 = vunpack.c.l.b16 %v1102
  %v1167 = vunpack.c.l.b16 %v1103
  %v1168 = vunpack.c.l.b16 %v1104
  %v1169 = vunpack.c.l.b16 %v1105
  %v1170 = vunpack.c.l.b16 %v1106
  %v1171 = vunpack.c.l.b16 %v1107
  %v1172 = vunpack.c.l.b16 %v1108
  %v1173 = vunpack.c.l.b16 %v1109
  %v1174 = vunpack.c.l.b16 %v1110
  %v1175 = vunpack.c.l.b16 %v1111
  %v1176 = vunpack.c.l.b16 %v1112
  %v1177 = vunpack.c.l.b16 %v1113
  %v1178 = vunpack.c.l.b16 %v1114
  %v1179 = vunpack.c.l.b16 %v1115
  %v1180 = vunpack.c.l.b16 %v1116
  %v1181 = vunpack.c.l.b16 %v1117
  %v1182 = vunpack.c.l.b16 %v1118
  %v1183 = vunpack.c.l.b16 %v1119
  %v1184 = vunpack.c.l.b16 %v1120
  %v1185 = vunpack.c.l.b16 %v1121
  %v1186 = vunpack.c.l.b16 %v1122
  %v1187 = vunpack.c.l.b16 %v1123
  %v1188 = vunpack.c.l.b16 %v1124
  %v1189 = vunpack.c.l.b16 %v1125
  %v1190 = vunpack.c.l.b16 %v1126
  %v1191 = vunpack.c.l.b16 %v1127
  %v1192 = vunpack.c.l.b16 %v1128
  %v1193 = vunpack.c.l.b16 %v1129
  %v1194 = vrot.slane %v1162, 2
  %v1195 = vrot.slane %v1163, 1
  %v1196 = vsel %vm404, %v1195, %v1194
  %v1197 = vsel %vm407, %v1164, %v1196
  %v1198 = vrot.slane %v1165, 7
  %v1199 = vsel %vm410, %v1198, %v1197
  %v1200 = vrot.slane %v1166, 6
  %v1201 = vsel %vm413, %v1200, %v1199
  %v1202 = vrot.slane %v1167, 5
  %v1203 = vsel %vm416, %v1202, %v1201
  %v1204 = vrot.slane %v1168, 4
  %v1205 = vsel %vm419, %v1204, %v1203
  %v1206 = vrot.slane %v1169, 3
  %v1207 = vsel %vm422, %v1206, %v1205
  %v1208 = vrot.slane %v1170, 2
  %v1209 = vrot.slane %v1171, 1
  %v1210 = vsel %vm404, %v1209, %v1208
  %v1211 = vsel %vm407, %v1172, %v1210
  %v1212 = vrot.slane %v1173, 7
  %v1213 = vsel %vm410, %v1212, %v1211
  %v1214 = vrot.slane %v1174, 6
  %v1215 = vsel %vm413, %v1214, %v1213
  %v1216 = vrot.slane %v1175, 5
  %v1217 = vsel %vm416, %v1216, %v1215
  %v1218 = vrot.slane %v1176, 4
  %v1219 = vsel %vm419, %v1218, %v1217
  %v1220 = vrot.slane %v1177, 3
  %v1221 = vsel %vm422, %v1220, %v1219
  %v1222 = vrot.slane %v1178, 2
  %v1223 = vrot.slane %v1179, 1
  %v1224 = vsel %vm404, %v1223, %v1222
  %v1225 = vsel %vm407, %v1180, %v1224
  %v1226 = vrot.slane %v1181, 7
  %v1227 = vsel %vm410, %v1226, %v1225
  %v1228 = vrot.slane %v1182, 6
  %v1229 = vsel %vm413, %v1228, %v1227
  %v1230 = vrot.slane %v1183, 5
  %v1231 = vsel %vm416, %v1230, %v1229
  %v1232 = vrot.slane %v1184, 4
  %v1233 = vsel %vm419, %v1232, %v1231
  %v1234 = vrot.slane %v1185, 3
  %v1235 = vsel %vm422, %v1234, %v1233
  %v1236 = vrot.slane %v1186, 2
  %v1237 = vrot.slane %v1187, 1
  %v1238 = vsel %vm404, %v1237, %v1236
  %v1239 = vsel %vm407, %v1188, %v1238
  %v1240 = vrot.slane %v1189, 7
  %v1241 = vsel %vm410, %v1240, %v1239
  %v1242 = vrot.slane %v1190, 6
  %v1243 = vsel %vm413, %v1242, %v1241
  %v1244 = vrot.slane %v1191, 5
  %v1245 = vsel %vm416, %v1244, %v1243
  %v1246 = vrot.slane %v1192, 4
  %v1247 = vsel %vm419, %v1246, %v1245
  %v1248 = vrot.slane %v1193, 3
  %v1249 = vsel %vm422, %v1248, %v1247
  %v1250 = vpack.c.b16 %v1221, %v1207
  %v1251 = vpack.c.b16 %v1249, %v1235
  %v1253 = vsel %vm91, %v1250, 0
  %v1256 = vsel %vm91, %v1251, 0
  %1258 = vmatprep.subr.bf16.mxu0 0
  %1259 = vmatpush1.bf16.msra.mxu0 0
  %1260 = vmatprep.subr.bf16.mxu0 0
  %1261 = vmatpush1.bf16.msra.mxu0 0
  %1262 = vmatprep.subr.bf16.mxu0 0
  %1263 = vmatpush1.bf16.msra.mxu0 0
  %1264 = vmatprep.subr.bf16.mxu0 0
  %1265 = vmatpush1.bf16.msra.mxu0 0
  %1266 = vmatprep.subr.bf16.mxu0 0
  %1267 = vmatpush1.bf16.msra.mxu0 %v487
  %1268 = vmatprep.subr.bf16.mxu0 0
  %1269 = vmatpush1.bf16.msra.mxu0 %v486
  %1270 = vmatprep.subr.bf16.mxu0 0
  %1271 = vmatpush1.bf16.msra.mxu0 %v485
  %1272 = vmatprep.subr.bf16.mxu0 0
  %1273 = vmatpush1.bf16.msra.mxu0 %v484
  %1274 = vmatprep.subr.bf16.mxu0 0
  %1275 = vmatpush2.bf16.msra.mxu0 0
  %1276 = vmatprep.subr.bf16.mxu0 0
  %1277 = vmatpush2.bf16.msra.mxu0 0
  %1278 = vmatprep.subr.bf16.mxu0 0
  %1279 = vmatpush2.bf16.msra.mxu0 0
  %1280 = vmatprep.subr.bf16.mxu0 0
  %1281 = vmatpush2.bf16.msra.mxu0 0
  %1282 = vmatprep.subr.bf16.mxu0 0
  %1283 = vmatpush2.bf16.msra.mxu0 0
  %1284 = vmatprep.subr.bf16.mxu0 0
  %1285 = vmatpush2.bf16.msra.mxu0 0
  %1286 = vmatprep.subr.bf16.mxu0 0
  %1287 = vmatpush2.bf16.msra.mxu0 0
  %1288 = vmatprep.subr.bf16.mxu0 0
  %1289 = vmatpush2.bf16.msra.mxu0 0
  %1290 = vmatprep.mubr.bf16.mxu0 0
  %1291 = vmatmul.mubr.bf16.gmra.mxu0 %v1253
  %v1292 = vpop.f32.mrf.mxu0
  %v1293 = vadd.f32 %v133, %v1292
  %v1294 = vpop.f32.mrf.mxu0
  %v1295 = vpop.f32.mrf.mxu0
  %v1296 = vadd.f32 %v136, %v1295
  %v1297 = vpop.f32.mrf.mxu0
  %1298 = vmatprep.mubr.bf16.mxu0 0
  %1299 = vmatmul.mubr.bf16.gmra.mxu0 %v1256
  %v1300 = vpop.f32.mrf.mxu0
  %v1301 = vadd.f32 %v141, %v1300
  %v1302 = vpop.f32.mrf.mxu0
  %v1303 = vpop.f32.mrf.mxu0
  %v1304 = vadd.f32 %v144, %v1303
  %v1305 = vpop.f32.mrf.mxu0
  %1306 = vdwg.mxu0
  %v1307 = vmul.f32 %v1293, %v551
  %v1308 = vmul.f32 %v1296, %v551
  %v1309 = vmul.f32 %v1301, %v551
  %v1310 = vmul.f32 %v1304, %v551
  %v1311 = vadd.f32 %v1307, %v561
  %v1312 = vadd.f32 %v1308, %v561
  %v1313 = vadd.f32 %v1309, %v561
  %v1314 = vadd.f32 %v1310, %v561
  %vm1315 = vcmp.ge.f32.partialorder %v1311, 0.0
  %vm1316 = vcmp.ge.f32.partialorder %v1312, 0.0
  %vm1317 = vcmp.ge.f32.partialorder %v1313, 0.0
  %vm1318 = vcmp.ge.f32.partialorder %v1314, 0.0
  %v1319 = vmul.f32 %v1311, 0.2
  %v1320 = vmul.f32 %v1312, 0.2
  %v1321 = vmul.f32 %v1313, 0.2
  %v1322 = vmul.f32 %v1314, 0.2
  %v1323 = vsel %vm1315, %v1311, %v1319
  %v1324 = vsel %vm1316, %v1312, %v1320
  %v1325 = vsel %vm1317, %v1313, %v1321
  %v1326 = vsel %vm1318, %v1314, %v1322
  %v1327 = vpack.c.bf16 %v1324, %v1323
  %v1328 = vpack.c.bf16 %v1326, %v1325
  %v1330 = vsel %vm91, %v1327, 0
  %v1333 = vsel %vm91, %v1328, 0
  %1335 = vmatprep.subr.bf16.mxu0 0
  %1336 = vmatpush1.bf16.msra.mxu0 0
  %1337 = vmatprep.subr.bf16.mxu0 0
  %1338 = vmatpush1.bf16.msra.mxu0 0
  %1339 = vmatprep.subr.bf16.mxu0 0
  %1340 = vmatpush1.bf16.msra.mxu0 0
  %1341 = vmatprep.subr.bf16.mxu0 0
  %1342 = vmatpush1.bf16.msra.mxu0 0
  %1343 = vmatprep.subr.bf16.mxu0 0
  %1344 = vmatpush1.bf16.msra.mxu0 %v600
  %1345 = vmatprep.subr.bf16.mxu0 0
  %1346 = vmatpush1.bf16.msra.mxu0 %v599
  %1347 = vmatprep.subr.bf16.mxu0 0
  %1348 = vmatpush1.bf16.msra.mxu0 %v598
  %1349 = vmatprep.subr.bf16.mxu0 0
  %1350 = vmatpush1.bf16.msra.mxu0 %v597
  %1351 = vmatprep.subr.bf16.mxu0 0
  %1352 = vmatpush2.bf16.msra.mxu0 0
  %1353 = vmatprep.subr.bf16.mxu0 0
  %1354 = vmatpush2.bf16.msra.mxu0 0
  %1355 = vmatprep.subr.bf16.mxu0 0
  %1356 = vmatpush2.bf16.msra.mxu0 0
  %1357 = vmatprep.subr.bf16.mxu0 0
  %1358 = vmatpush2.bf16.msra.mxu0 0
  %1359 = vmatprep.subr.bf16.mxu0 0
  %1360 = vmatpush2.bf16.msra.mxu0 0
  %1361 = vmatprep.subr.bf16.mxu0 0
  %1362 = vmatpush2.bf16.msra.mxu0 0
  %1363 = vmatprep.subr.bf16.mxu0 0
  %1364 = vmatpush2.bf16.msra.mxu0 0
  %1365 = vmatprep.subr.bf16.mxu0 0
  %1366 = vmatpush2.bf16.msra.mxu0 0
  %1367 = vmatprep.mubr.bf16.mxu0 0
  %1368 = vmatmul.mubr.bf16.gmra.mxu0 %v1330
  %v1369 = vpop.f32.mrf.mxu0
  %v1370 = vadd.f32 0.0, %v1369
  %v1371 = vpop.f32.mrf.mxu0
  %v1372 = vpop.f32.mrf.mxu0
  %v1373 = vadd.f32 0.0, %v1372
  %v1374 = vpop.f32.mrf.mxu0
  %1375 = vmatprep.mubr.bf16.mxu0 0
  %1376 = vmatmul.mubr.bf16.gmra.mxu0 %v1333
  %v1377 = vpop.f32.mrf.mxu0
  %v1378 = vadd.f32 0.0, %v1377
  %v1379 = vpop.f32.mrf.mxu0
  %v1380 = vpop.f32.mrf.mxu0
  %v1381 = vadd.f32 0.0, %v1380
  %v1382 = vpop.f32.mrf.mxu0
  %1383 = vdwg.mxu0
  %v1384 = vmul.f32 %v1370, %v664
  %v1385 = vmul.f32 %v1373, %v664
  %v1386 = vmul.f32 %v1378, %v664
  %v1387 = vmul.f32 %v1381, %v664
  %v1388 = vadd.f32 %v1384, %v674
  %v1389 = vadd.f32 %v1385, %v674
  %v1390 = vadd.f32 %v1386, %v674
  %v1391 = vadd.f32 %v1387, %v674
  %vm1392 = vcmp.ge.f32.partialorder %v1388, 0.0
  %vm1393 = vcmp.ge.f32.partialorder %v1389, 0.0
  %vm1394 = vcmp.ge.f32.partialorder %v1390, 0.0
  %vm1395 = vcmp.ge.f32.partialorder %v1391, 0.0
  %v1396 = vmul.f32 %v1388, 0.2
  %v1397 = vmul.f32 %v1389, 0.2
  %v1398 = vmul.f32 %v1390, 0.2
  %v1399 = vmul.f32 %v1391, 0.2
  %v1400 = vsel %vm1392, %v1388, %v1396
  %v1401 = vsel %vm1393, %v1389, %v1397
  %v1402 = vsel %vm1394, %v1390, %v1398
  %v1403 = vsel %vm1395, %v1391, %v1399
  %v1404 = vmax.f32 %v1046, %v1400
  %v1405 = vmax.f32 %v1047, %v1401
  %v1406 = vmax.f32 %v1048, %v1402
  %v1407 = vmax.f32 %v1049, %v1403
  %v1408 = vrot.slane %v33, 5
  %v1409 = vrot.slane %v215, 5
  %v1410 = vrot.slane %v34, 5
  %v1411 = vrot.slane %v216, 5
  %v1412 = vrot.slane %v35, 5
  %v1413 = vrot.slane %v217, 5
  %v1414 = vrot.slane %v36, 5
  %v1415 = vrot.slane %v218, 5
  %v1424 = vsub.f32 %v179, %v1408
  %v1425 = vsub.f32 %v180, %v1050
  %v1426 = vsub.f32 %v181, %v692
  %v1427 = vsub.f32 %v182, %v33
  %v1428 = vsub.f32 %v183, %v1409
  %v1429 = vsub.f32 %v184, %v1051
  %v1430 = vsub.f32 %v185, %v693
  %v1431 = vsub.f32 %v186, %v215
  %v1432 = vsub.f32 %v187, %v1410
  %v1433 = vsub.f32 %v188, %v1052
  %v1434 = vsub.f32 %v189, %v694
  %v1435 = vsub.f32 %v190, %v34
  %v1436 = vsub.f32 %v191, %v1411
  %v1437 = vsub.f32 %v192, %v1053
  %v1438 = vsub.f32 %v193, %v695
  %v1439 = vsub.f32 %v194, %v216
  %v1440 = vsub.f32 %v195, %v1412
  %v1441 = vsub.f32 %v196, %v1054
  %v1442 = vsub.f32 %v197, %v696
  %v1443 = vsub.f32 %v198, %v35
  %v1444 = vsub.f32 %v199, %v1413
  %v1445 = vsub.f32 %v200, %v1055
  %v1446 = vsub.f32 %v201, %v697
  %v1447 = vsub.f32 %v202, %v217
  %v1448 = vsub.f32 %v203, %v1414
  %v1449 = vsub.f32 %v204, %v1056
  %v1450 = vsub.f32 %v205, %v698
  %v1451 = vsub.f32 %v206, %v36
  %v1452 = vsub.f32 %v207, %v1415
  %v1453 = vsub.f32 %v208, %v1057
  %v1454 = vsub.f32 %v209, %v699
  %v1455 = vsub.f32 %v210, %v218
  %v1456 = vpack.c.bf16 %v1424, %v1424
  %v1457 = vpack.c.bf16 %v1425, %v1425
  %v1458 = vpack.c.bf16 %v1426, %v1426
  %v1459 = vpack.c.bf16 %v1427, %v1427
  %v1460 = vpack.c.bf16 %v1428, %v1428
  %v1461 = vpack.c.bf16 %v1429, %v1429
  %v1462 = vpack.c.bf16 %v1430, %v1430
  %v1463 = vpack.c.bf16 %v1431, %v1431
  %v1464 = vpack.c.bf16 %v1432, %v1432
  %v1465 = vpack.c.bf16 %v1433, %v1433
  %v1466 = vpack.c.bf16 %v1434, %v1434
  %v1467 = vpack.c.bf16 %v1435, %v1435
  %v1468 = vpack.c.bf16 %v1436, %v1436
  %v1469 = vpack.c.bf16 %v1437, %v1437
  %v1470 = vpack.c.bf16 %v1438, %v1438
  %v1471 = vpack.c.bf16 %v1439, %v1439
  %v1472 = vpack.c.bf16 %v1440, %v1440
  %v1473 = vpack.c.bf16 %v1441, %v1441
  %v1474 = vpack.c.bf16 %v1442, %v1442
  %v1475 = vpack.c.bf16 %v1443, %v1443
  %v1476 = vpack.c.bf16 %v1444, %v1444
  %v1477 = vpack.c.bf16 %v1445, %v1445
  %v1478 = vpack.c.bf16 %v1446, %v1446
  %v1479 = vpack.c.bf16 %v1447, %v1447
  %v1480 = vpack.c.bf16 %v1448, %v1448
  %v1481 = vpack.c.bf16 %v1449, %v1449
  %v1482 = vpack.c.bf16 %v1450, %v1450
  %v1483 = vpack.c.bf16 %v1451, %v1451
  %v1484 = vpack.c.bf16 %v1452, %v1452
  %v1485 = vpack.c.bf16 %v1453, %v1453
  %v1486 = vpack.c.bf16 %v1454, %v1454
  %v1487 = vpack.c.bf16 %v1455, %v1455
  %v1520 = vunpack.c.l.b16 %v1456
  %v1521 = vunpack.c.l.b16 %v1457
  %v1522 = vunpack.c.l.b16 %v1458
  %v1523 = vunpack.c.l.b16 %v1459
  %v1524 = vunpack.c.l.b16 %v1460
  %v1525 = vunpack.c.l.b16 %v1461
  %v1526 = vunpack.c.l.b16 %v1462
  %v1527 = vunpack.c.l.b16 %v1463
  %v1528 = vunpack.c.l.b16 %v1464
  %v1529 = vunpack.c.l.b16 %v1465
  %v1530 = vunpack.c.l.b16 %v1466
  %v1531 = vunpack.c.l.b16 %v1467
  %v1532 = vunpack.c.l.b16 %v1468
  %v1533 = vunpack.c.l.b16 %v1469
  %v1534 = vunpack.c.l.b16 %v1470
  %v1535 = vunpack.c.l.b16 %v1471
  %v1536 = vunpack.c.l.b16 %v1472
  %v1537 = vunpack.c.l.b16 %v1473
  %v1538 = vunpack.c.l.b16 %v1474
  %v1539 = vunpack.c.l.b16 %v1475
  %v1540 = vunpack.c.l.b16 %v1476
  %v1541 = vunpack.c.l.b16 %v1477
  %v1542 = vunpack.c.l.b16 %v1478
  %v1543 = vunpack.c.l.b16 %v1479
  %v1544 = vunpack.c.l.b16 %v1480
  %v1545 = vunpack.c.l.b16 %v1481
  %v1546 = vunpack.c.l.b16 %v1482
  %v1547 = vunpack.c.l.b16 %v1483
  %v1548 = vunpack.c.l.b16 %v1484
  %v1549 = vunpack.c.l.b16 %v1485
  %v1550 = vunpack.c.l.b16 %v1486
  %v1551 = vunpack.c.l.b16 %v1487
  %v1552 = vrot.slane %v1520, 3
  %v1553 = vrot.slane %v1521, 2
  %v1554 = vsel %vm404, %v1553, %v1552
  %v1555 = vrot.slane %v1522, 1
  %v1556 = vsel %vm407, %v1555, %v1554
  %v1557 = vsel %vm410, %v1523, %v1556
  %v1558 = vrot.slane %v1524, 7
  %v1559 = vsel %vm413, %v1558, %v1557
  %v1560 = vrot.slane %v1525, 6
  %v1561 = vsel %vm416, %v1560, %v1559
  %v1562 = vrot.slane %v1526, 5
  %v1563 = vsel %vm419, %v1562, %v1561
  %v1564 = vrot.slane %v1527, 4
  %v1565 = vsel %vm422, %v1564, %v1563
  %v1566 = vrot.slane %v1528, 3
  %v1567 = vrot.slane %v1529, 2
  %v1568 = vsel %vm404, %v1567, %v1566
  %v1569 = vrot.slane %v1530, 1
  %v1570 = vsel %vm407, %v1569, %v1568
  %v1571 = vsel %vm410, %v1531, %v1570
  %v1572 = vrot.slane %v1532, 7
  %v1573 = vsel %vm413, %v1572, %v1571
  %v1574 = vrot.slane %v1533, 6
  %v1575 = vsel %vm416, %v1574, %v1573
  %v1576 = vrot.slane %v1534, 5
  %v1577 = vsel %vm419, %v1576, %v1575
  %v1578 = vrot.slane %v1535, 4
  %v1579 = vsel %vm422, %v1578, %v1577
  %v1580 = vrot.slane %v1536, 3
  %v1581 = vrot.slane %v1537, 2
  %v1582 = vsel %vm404, %v1581, %v1580
  %v1583 = vrot.slane %v1538, 1
  %v1584 = vsel %vm407, %v1583, %v1582
  %v1585 = vsel %vm410, %v1539, %v1584
  %v1586 = vrot.slane %v1540, 7
  %v1587 = vsel %vm413, %v1586, %v1585
  %v1588 = vrot.slane %v1541, 6
  %v1589 = vsel %vm416, %v1588, %v1587
  %v1590 = vrot.slane %v1542, 5
  %v1591 = vsel %vm419, %v1590, %v1589
  %v1592 = vrot.slane %v1543, 4
  %v1593 = vsel %vm422, %v1592, %v1591
  %v1594 = vrot.slane %v1544, 3
  %v1595 = vrot.slane %v1545, 2
  %v1596 = vsel %vm404, %v1595, %v1594
  %v1597 = vrot.slane %v1546, 1
  %v1598 = vsel %vm407, %v1597, %v1596
  %v1599 = vsel %vm410, %v1547, %v1598
  %v1600 = vrot.slane %v1548, 7
  %v1601 = vsel %vm413, %v1600, %v1599
  %v1602 = vrot.slane %v1549, 6
  %v1603 = vsel %vm416, %v1602, %v1601
  %v1604 = vrot.slane %v1550, 5
  %v1605 = vsel %vm419, %v1604, %v1603
  %v1606 = vrot.slane %v1551, 4
  %v1607 = vsel %vm422, %v1606, %v1605
  %v1608 = vpack.c.b16 %v1579, %v1565
  %v1609 = vpack.c.b16 %v1607, %v1593
  %v1611 = vsel %vm91, %v1608, 0
  %v1614 = vsel %vm91, %v1609, 0
  %1616 = vmatprep.subr.bf16.mxu0 0
  %1617 = vmatpush1.bf16.msra.mxu0 0
  %1618 = vmatprep.subr.bf16.mxu0 0
  %1619 = vmatpush1.bf16.msra.mxu0 0
  %1620 = vmatprep.subr.bf16.mxu0 0
  %1621 = vmatpush1.bf16.msra.mxu0 0
  %1622 = vmatprep.subr.bf16.mxu0 0
  %1623 = vmatpush1.bf16.msra.mxu0 0
  %1624 = vmatprep.subr.bf16.mxu0 0
  %1625 = vmatpush1.bf16.msra.mxu0 %v487
  %1626 = vmatprep.subr.bf16.mxu0 0
  %1627 = vmatpush1.bf16.msra.mxu0 %v486
  %1628 = vmatprep.subr.bf16.mxu0 0
  %1629 = vmatpush1.bf16.msra.mxu0 %v485
  %1630 = vmatprep.subr.bf16.mxu0 0
  %1631 = vmatpush1.bf16.msra.mxu0 %v484
  %1632 = vmatprep.subr.bf16.mxu0 0
  %1633 = vmatpush2.bf16.msra.mxu0 0
  %1634 = vmatprep.subr.bf16.mxu0 0
  %1635 = vmatpush2.bf16.msra.mxu0 0
  %1636 = vmatprep.subr.bf16.mxu0 0
  %1637 = vmatpush2.bf16.msra.mxu0 0
  %1638 = vmatprep.subr.bf16.mxu0 0
  %1639 = vmatpush2.bf16.msra.mxu0 0
  %1640 = vmatprep.subr.bf16.mxu0 0
  %1641 = vmatpush2.bf16.msra.mxu0 0
  %1642 = vmatprep.subr.bf16.mxu0 0
  %1643 = vmatpush2.bf16.msra.mxu0 0
  %1644 = vmatprep.subr.bf16.mxu0 0
  %1645 = vmatpush2.bf16.msra.mxu0 0
  %1646 = vmatprep.subr.bf16.mxu0 0
  %1647 = vmatpush2.bf16.msra.mxu0 0
  %1648 = vmatprep.mubr.bf16.mxu0 0
  %1649 = vmatmul.mubr.bf16.gmra.mxu0 %v1611
  %v1650 = vpop.f32.mrf.mxu0
  %v1651 = vadd.f32 %v133, %v1650
  %v1652 = vpop.f32.mrf.mxu0
  %v1653 = vpop.f32.mrf.mxu0
  %v1654 = vadd.f32 %v136, %v1653
  %v1655 = vpop.f32.mrf.mxu0
  %1656 = vmatprep.mubr.bf16.mxu0 0
  %1657 = vmatmul.mubr.bf16.gmra.mxu0 %v1614
  %v1658 = vpop.f32.mrf.mxu0
  %v1659 = vadd.f32 %v141, %v1658
  %v1660 = vpop.f32.mrf.mxu0
  %v1661 = vpop.f32.mrf.mxu0
  %v1662 = vadd.f32 %v144, %v1661
  %v1663 = vpop.f32.mrf.mxu0
  %1664 = vdwg.mxu0
  %v1665 = vmul.f32 %v1651, %v551
  %v1666 = vmul.f32 %v1654, %v551
  %v1667 = vmul.f32 %v1659, %v551
  %v1668 = vmul.f32 %v1662, %v551
  %v1669 = vadd.f32 %v1665, %v561
  %v1670 = vadd.f32 %v1666, %v561
  %v1671 = vadd.f32 %v1667, %v561
  %v1672 = vadd.f32 %v1668, %v561
  %vm1673 = vcmp.ge.f32.partialorder %v1669, 0.0
  %vm1674 = vcmp.ge.f32.partialorder %v1670, 0.0
  %vm1675 = vcmp.ge.f32.partialorder %v1671, 0.0
  %vm1676 = vcmp.ge.f32.partialorder %v1672, 0.0
  %v1677 = vmul.f32 %v1669, 0.2
  %v1678 = vmul.f32 %v1670, 0.2
  %v1679 = vmul.f32 %v1671, 0.2
  %v1680 = vmul.f32 %v1672, 0.2
  %v1681 = vsel %vm1673, %v1669, %v1677
  %v1682 = vsel %vm1674, %v1670, %v1678
  %v1683 = vsel %vm1675, %v1671, %v1679
  %v1684 = vsel %vm1676, %v1672, %v1680
  %v1685 = vpack.c.bf16 %v1682, %v1681
  %v1686 = vpack.c.bf16 %v1684, %v1683
  %v1688 = vsel %vm91, %v1685, 0
  %v1691 = vsel %vm91, %v1686, 0
  %1693 = vmatprep.subr.bf16.mxu0 0
  %1694 = vmatpush1.bf16.msra.mxu0 0
  %1695 = vmatprep.subr.bf16.mxu0 0
  %1696 = vmatpush1.bf16.msra.mxu0 0
  %1697 = vmatprep.subr.bf16.mxu0 0
  %1698 = vmatpush1.bf16.msra.mxu0 0
  %1699 = vmatprep.subr.bf16.mxu0 0
  %1700 = vmatpush1.bf16.msra.mxu0 0
  %1701 = vmatprep.subr.bf16.mxu0 0
  %1702 = vmatpush1.bf16.msra.mxu0 %v600
  %1703 = vmatprep.subr.bf16.mxu0 0
  %1704 = vmatpush1.bf16.msra.mxu0 %v599
  %1705 = vmatprep.subr.bf16.mxu0 0
  %1706 = vmatpush1.bf16.msra.mxu0 %v598
  %1707 = vmatprep.subr.bf16.mxu0 0
  %1708 = vmatpush1.bf16.msra.mxu0 %v597
  %1709 = vmatprep.subr.bf16.mxu0 0
  %1710 = vmatpush2.bf16.msra.mxu0 0
  %1711 = vmatprep.subr.bf16.mxu0 0
  %1712 = vmatpush2.bf16.msra.mxu0 0
  %1713 = vmatprep.subr.bf16.mxu0 0
  %1714 = vmatpush2.bf16.msra.mxu0 0
  %1715 = vmatprep.subr.bf16.mxu0 0
  %1716 = vmatpush2.bf16.msra.mxu0 0
  %1717 = vmatprep.subr.bf16.mxu0 0
  %1718 = vmatpush2.bf16.msra.mxu0 0
  %1719 = vmatprep.subr.bf16.mxu0 0
  %1720 = vmatpush2.bf16.msra.mxu0 0
  %1721 = vmatprep.subr.bf16.mxu0 0
  %1722 = vmatpush2.bf16.msra.mxu0 0
  %1723 = vmatprep.subr.bf16.mxu0 0
  %1724 = vmatpush2.bf16.msra.mxu0 0
  %1725 = vmatprep.mubr.bf16.mxu0 0
  %1726 = vmatmul.mubr.bf16.gmra.mxu0 %v1688
  %v1727 = vpop.f32.mrf.mxu0
  %v1728 = vadd.f32 0.0, %v1727
  %v1729 = vpop.f32.mrf.mxu0
  %v1730 = vpop.f32.mrf.mxu0
  %v1731 = vadd.f32 0.0, %v1730
  %v1732 = vpop.f32.mrf.mxu0
  %1733 = vmatprep.mubr.bf16.mxu0 0
  %1734 = vmatmul.mubr.bf16.gmra.mxu0 %v1691
  %v1735 = vpop.f32.mrf.mxu0
  %v1736 = vadd.f32 0.0, %v1735
  %v1737 = vpop.f32.mrf.mxu0
  %v1738 = vpop.f32.mrf.mxu0
  %v1739 = vadd.f32 0.0, %v1738
  %v1740 = vpop.f32.mrf.mxu0
  %1741 = vdwg.mxu0
  %v1742 = vmul.f32 %v1728, %v664
  %v1743 = vmul.f32 %v1731, %v664
  %v1744 = vmul.f32 %v1736, %v664
  %v1745 = vmul.f32 %v1739, %v664
  %v1746 = vadd.f32 %v1742, %v674
  %v1747 = vadd.f32 %v1743, %v674
  %v1748 = vadd.f32 %v1744, %v674
  %v1749 = vadd.f32 %v1745, %v674
  %vm1750 = vcmp.ge.f32.partialorder %v1746, 0.0
  %vm1751 = vcmp.ge.f32.partialorder %v1747, 0.0
  %vm1752 = vcmp.ge.f32.partialorder %v1748, 0.0
  %vm1753 = vcmp.ge.f32.partialorder %v1749, 0.0
  %v1754 = vmul.f32 %v1746, 0.2
  %v1755 = vmul.f32 %v1747, 0.2
  %v1756 = vmul.f32 %v1748, 0.2
  %v1757 = vmul.f32 %v1749, 0.2
  %v1758 = vsel %vm1750, %v1746, %v1754
  %v1759 = vsel %vm1751, %v1747, %v1755
  %v1760 = vsel %vm1752, %v1748, %v1756
  %v1761 = vsel %vm1753, %v1749, %v1757
  %v1762 = vmax.f32 %v1404, %v1758
  %v1763 = vmax.f32 %v1405, %v1759
  %v1764 = vmax.f32 %v1406, %v1760
  %v1765 = vmax.f32 %v1407, %v1761
  %1766 = vst.msk [vmem:[%s9] sm:$0xff] %vm91, %v1762
  %1767 = vst.msk [vmem:[%s9 + $0x8] sm:$0xff] %vm91, %v1763
  %1768 = vst.msk [vmem:[%s9 + $0x10] sm:$0xff] %vm91, %v1764
  %1769 = vst.msk [vmem:[%s9 + $0x18] sm:$0xff] %vm91, %v1765
  // Predicated region
  $region38: #{_lambda_.17} parent=0 // pred_check
    _
  $region39: #{_lambda_.17} parent=0 // pred_check_branch
    %1771 = sbr.rel (0) target = $region41
  $region40: #{_lambda_.17} parent=0 // pred_region
    _
  $region41: #{_lambda_.17} parent=0 // pred_fallthru
    _
  // Predicated region
  $region42: #{_lambda_.17} parent=0 // pred_check
    _
  $region43: #{_lambda_.17} parent=0 // pred_check_branch
    %1773 = sbr.rel (0) target = $region45
  $region44: #{_lambda_.17} parent=0 // pred_region
    _
  $region45: #{_lambda_.17} parent=0 // pred_fallthru
    _

// kernel: _lambda_.20
$region0: #{_lambda_.20}
  #allocation0 [shape = 'u32[]', space=smem, size = 0x4, offset = 0x4, fixed_abs, tag = 'smem constant byte address 0x4 - core index']
  #allocation1 [shape = 'u32[144,128]{1,0:T(1,128)}', space=vmem, size = 0x12000, scoped, tag = 'internal scratch']
  #allocation2 [shape = 'f32[1,256]{1,0:T(1,128)}', space=vmem, size = 0x400, scoped, tag = 'scratch operand']
  %s0 = inlined_call_operand.vmem [shape: f32[2,16,192], index: 0, kind: input, shape index: {}]
  %s1 = inlined_call_operand.vmem [shape: bf16[192,1024], index: 1, kind: input, shape index: {}]
  %s2 = inlined_call_operand.vmem [shape: f32[1,1024], index: 2, kind: input, shape index: {}]
  %s3 = inlined_call_operand.vmem [shape: f32[1,1024], index: 3, kind: input, shape index: {}]
  %s4 = inlined_call_operand.vmem [shape: f32[2,1,1024], index: 4, kind: output, shape index: {}]
  %s5 = sld [smem:[#allocation0]]
  $region95: #{_lambda_.20} parent=0
    _
  %s7 = ssub.s32 1, %s5
  %s8 = scalar_select 0, %s7, %s5
  $region1: #{_lambda_.20} parent=0
    #allocation3 [shape = 'u8[196608]{0}', space=vmem, size = 0x30000, scoped, tag = 'input window, operand 1']
    loop: start=0, step=1, limit=10
    $region2: #{_lambda_.20} parent=1 // loop_pre_header
      _
    $region3: #{_lambda_.20} parent=1 // loop_header
      %s10 = sphi 0, %s14
      %p11 = scmp.ge.s32.totalorder %s10, 10
      %s17 = sphi 0, %s36
      %s18 = sphi 0, %s32
      %s19 = sphi 0, %s28
      %s20 = sphi 0, %s17
      %s21 = sphi 0, %s18
      %s22 = sphi 0, %s19
      %s23 = sphi 0, %s20
      %s24 = sphi 0, %s21
      %s25 = sphi 0, %s22
      %s41 = sphi 0, %s43
      %s44 = sphi 0, %s41
      %s45 = sphi 0, %s44
      %s61 = sphi 0, %s45
      %s67 = sphi 0, %s69
      %s70 = sphi 0, %s67
      %s71 = sphi 0, %s70
      %s87 = sphi 0, %s71
      %s93 = sphi 0, %s95
      %s96 = sphi 0, %s93
      %s97 = sphi 0, %s96
      %s113 = sphi 0, %s97
      %s119 = sphi 0, %s121
      %s122 = sphi 0, %s119
      %s123 = sphi 0, %s122
      %s139 = sphi 0, %s123
      %s147 = sphi 0, %s149
      %s150 = sphi 0, %s147
      %s151 = sphi 0, %s150
      %s167 = sphi 0, %s151
    $region4: #{_lambda_.20} parent=1 // loop_header_branch
      %13 = sbr.rel (%p11) target = $region8
    $region5: #{_lambda_.20} parent=1 // loop_body
      %s15 = ssub.s32 %s10, 1
      %s16 = ssub.s32 %s10, 2
      %s26 = sadd.s32 1, %s19
      %p27 = scmp.ge.s32.totalorder %s26, 1
      %s28 = scalar_select %p27, 0, %s26
      %s29 = sadd.s32 1, %s18
      %s30 = scalar_select %p27, %s29, %s18
      %p31 = scmp.ge.s32.totalorder %s30, 4
      %s32 = scalar_select %p31, 0, %s30
      %s33 = sadd.s32 1, %s17
      %s34 = scalar_select %p31, %s33, %s17
      %p35 = scmp.ge.s32.totalorder %s34, 2
      %s36 = scalar_select %p35, 0, %s34
      %s37 = ssub.s32 %s17, %s36
      %s38 = ssub.s32 %s19, %s28
      %s39 = sor.u32 %s37, %s38
      %p40 = scmp.eq.s32.totalorder %s39, 0
      %s42 = sadd.s32 %s41, 1
      %s43 = scalar_select %p40, %s41, %s42
      %p46 = pneg %p40
      %p47 = scmp.eq.s32.totalorder %s10, 7
      %p48 = por %p46, %p47
      %p49 = scmp.ne.s32.totalorder %s41, %s44
      %p50 = scmp.eq.s32.totalorder %s10, 0
      %p51 = por %p49, %p50
      %p52 = scmp.ne.s32.totalorder %s41, %s44
      %p53 = scmp.eq.s32.totalorder %s15, 7
      %p54 = por %p52, %p53
      %p55 = scmp.ne.s32.totalorder %s44, %s45
      %p56 = scmp.eq.s32.totalorder %s15, 0
      %p57 = por %p55, %p56
      %p58 = scmp.ne.s32.totalorder %s44, %s45
      %p59 = scmp.eq.s32.totalorder %s16, 7
      %p60 = por %p58, %p59
      %p62 = scmp.ne.s32.totalorder %s45, %s61
      %p63 = scmp.eq.s32.totalorder %s16, 0
      %p64 = por %p62, %p63
      %s65 = ssub.s32 %s18, %s32
      %p66 = scmp.eq.s32.totalorder %s65, 0
      %s68 = sadd.s32 %s67, 1
      %s69 = scalar_select %p66, %s67, %s68
      %p72 = pneg %p66
      %p73 = scmp.eq.s32.totalorder %s10, 7
      %p74 = por %p72, %p73
      %p75 = scmp.ne.s32.totalorder %s67, %s70
      %p76 = scmp.eq.s32.totalorder %s10, 0
      %p77 = por %p75, %p76
      %p78 = scmp.ne.s32.totalorder %s67, %s70
      %p79 = scmp.eq.s32.totalorder %s15, 7
      %p80 = por %p78, %p79
      %p81 = scmp.ne.s32.totalorder %s70, %s71
      %p82 = scmp.eq.s32.totalorder %s15, 0
      %p83 = por %p81, %p82
      %p84 = scmp.ne.s32.totalorder %s70, %s71
      %p85 = scmp.eq.s32.totalorder %s16, 7
      %p86 = por %p84, %p85
      %p88 = scmp.ne.s32.totalorder %s71, %s87
      %p89 = scmp.eq.s32.totalorder %s16, 0
      %p90 = por %p88, %p89
      %s91 = ssub.s32 %s18, %s32
      %p92 = scmp.eq.s32.totalorder %s91, 0
      %s94 = sadd.s32 %s93, 1
      %s95 = scalar_select %p92, %s93, %s94
      %p98 = pneg %p92
      %p99 = scmp.eq.s32.totalorder %s10, 7
      %p100 = por %p98, %p99
      %p101 = scmp.ne.s32.totalorder %s93, %s96
      %p102 = scmp.eq.s32.totalorder %s10, 0
      %p103 = por %p101, %p102
      %p104 = scmp.ne.s32.totalorder %s93, %s96
      %p105 = scmp.eq.s32.totalorder %s15, 7
      %p106 = por %p104, %p105
      %p107 = scmp.ne.s32.totalorder %s96, %s97
      %p108 = scmp.eq.s32.totalorder %s15, 0
      %p109 = por %p107, %p108
      %p110 = scmp.ne.s32.totalorder %s96, %s97
      %p111 = scmp.eq.s32.totalorder %s16, 7
      %p112 = por %p110, %p111
      %p114 = scmp.ne.s32.totalorder %s97, %s113
      %p115 = scmp.eq.s32.totalorder %s16, 0
      %p116 = por %p114, %p115
      %s117 = ssub.s32 %s18, %s32
      %p118 = scmp.eq.s32.totalorder %s117, 0
      %s120 = sadd.s32 %s119, 1
      %s121 = scalar_select %p118, %s119, %s120
      %p124 = pneg %p118
      %p125 = scmp.eq.s32.totalorder %s10, 7
      %p126 = por %p124, %p125
      %p127 = scmp.ne.s32.totalorder %s119, %s122
      %p128 = scmp.eq.s32.totalorder %s10, 0
      %p129 = por %p127, %p128
      %p130 = scmp.ne.s32.totalorder %s119, %s122
      %p131 = scmp.eq.s32.totalorder %s15, 7
      %p132 = por %p130, %p131
      %p133 = scmp.ne.s32.totalorder %s122, %s123
      %p134 = scmp.eq.s32.totalorder %s15, 0
      %p135 = por %p133, %p134
      %p136 = scmp.ne.s32.totalorder %s122, %s123
      %p137 = scmp.eq.s32.totalorder %s16, 7
      %p138 = por %p136, %p137
      %p140 = scmp.ne.s32.totalorder %s123, %s139
      %p141 = scmp.eq.s32.totalorder %s16, 0
      %p142 = por %p140, %p141
      %s143 = ssub.s32 %s17, %s36
      %s144 = ssub.s32 %s18, %s32
      %s145 = sor.u32 %s143, %s144
      %p146 = scmp.eq.s32.totalorder %s145, 0
      %s148 = sadd.s32 %s147, 1
      %s149 = scalar_select %p146, %s147, %s148
      %p152 = pneg %p146
      %p153 = scmp.eq.s32.totalorder %s10, 7
      %p154 = por %p152, %p153
      %p155 = scmp.ne.s32.totalorder %s147, %s150
      %p156 = scmp.eq.s32.totalorder %s10, 0
      %p157 = por %p155, %p156
      %p158 = scmp.ne.s32.totalorder %s147, %s150
      %p159 = scmp.eq.s32.totalorder %s15, 7
      %p160 = por %p158, %p159
      %p161 = scmp.ne.s32.totalorder %s150, %s151
      %p162 = scmp.eq.s32.totalorder %s15, 0
      %p163 = por %p161, %p162
      %p164 = scmp.ne.s32.totalorder %s150, %s151
      %p165 = scmp.eq.s32.totalorder %s16, 7
      %p166 = por %p164, %p165
      %p168 = scmp.ne.s32.totalorder %s151, %s167
      %p169 = scmp.eq.s32.totalorder %s16, 0
      %p170 = por %p168, %p169
      %p171 = scmp.le.s32.totalorder 1, %s10
      %p172 = scmp.lt.s32.totalorder %s10, 9
      %p173 = pnand %p171, %p172
      %p174 = pneg %p173
      // Predicated region
      $region9: #{_lambda_.20} parent=5 // pred_check
        _
      $region10: #{_lambda_.20} parent=5 // pred_check_branch
        %176 = sbr.rel (%p173) target = $region12
      $region11: #{_lambda_.20} parent=5 // pred_region
        %s177 = ssub.s32 %s10, 1
      $region12: #{_lambda_.20} parent=5 // pred_fallthru
        _
      %p178 = scmp.lt.s32.totalorder %s10, 8
      // Predicated region
      $region13: #{_lambda_.20} parent=5 // pred_check
        %p179 = pneg %p178
      $region14: #{_lambda_.20} parent=5 // pred_check_branch
        %181 = sbr.rel (%p179) target = $region16
      $region15: #{_lambda_.20} parent=5 // pred_region
        // Predicated region
        $region17: #{_lambda_.20} parent=15 // pred_check
          %p182 = pneg %p51
        $region18: #{_lambda_.20} parent=15 // pred_check_branch
          %184 = sbr.rel (%p182) target = $region20
        $region19: #{_lambda_.20} parent=15 // pred_region
          %s185 = smul.u32 2, %s19
          %p186 = scmp.lt.s32.totalorder %s17, 1
          %s187 = scalar_select %p186, %s17, 1
          %p188 = scmp.lt.s32.totalorder %s185, 1
          %s189 = scalar_select %p188, %s185, 1
          %s190 = smul.addr %s189, 2
          %s191 = smul.addr %s187, 4
          %s192 = sadd.s32 %s190, %s191
          %s193 = smul.addr %s192, 8
          %s194 = scalar_lea.vmem %s0, %s193
          %s195 = smul.u32 2, %s19
        $region20: #{_lambda_.20} parent=15 // pred_fallthru
          _
        // Predicated region
        $region21: #{_lambda_.20} parent=15 // pred_check
          %p196 = pneg %p77
        $region22: #{_lambda_.20} parent=15 // pred_check_branch
          %198 = sbr.rel (%p196) target = $region24
        $region23: #{_lambda_.20} parent=15 // pred_region
          %s199 = sand.u32 %s67, 1
          %s200 = sand.u32 %s67, 1
          %s201 = smul.addr %s200, 192
          %s202 = scalar_lea.vmem [#allocation3], %s201
          %s203 = smul.u32 2, %s18
          %s204 = smul.addr %s203, 4
          %s205 = scalar_lea.vmem %s1, %s204
          // Predicated region
          $region25: #{_lambda_.20} parent=23 // pred_check
            _
          $region26: #{_lambda_.20} parent=23 // pred_check_branch
            %207 = sbr.rel (0) target = $region28
          $region27: #{_lambda_.20} parent=23 // pred_region
            // Predicated region
            $region29: #{_lambda_.20} parent=27 // pred_check
              _
            $region30: #{_lambda_.20} parent=27 // pred_check_branch
              %209 = sbr.rel (0) target = $region32
            $region31: #{_lambda_.20} parent=27 // pred_region
              // Predicated region
              $region44: #{_lambda_.20} parent=31 // pred_check
                _
              $region45: #{_lambda_.20} parent=31 // pred_check_branch
                %271 = sbr.rel (0) target = $region47
              $region46: #{_lambda_.20} parent=31 // pred_region
                loop: start=0, step=1, limit=1
                $region48: #{_lambda_.20} parent=46 // loop_pre_header
                  _
                $region49: #{_lambda_.20} parent=46 // loop_header
                  %s273 = sphi 0, %s277
                  %p274 = scmp.ge.s32.totalorder %s273, 1
                  %s278 = sphi %s205, %s205
                  %s279 = sphi %s202, %s202
                $region50: #{_lambda_.20} parent=46 // loop_header_branch
                  %276 = sbr.rel (%p274) target = $region54
                $region51: #{_lambda_.20} parent=46 // loop_body
                  %v280 = vld [vmem:[%s278] sm:$0xff]
                  %281 = vst [vmem:[%s279] sm:$0xff] %v280
                  %v282 = vld [vmem:[%s278 + $0x20] sm:$0xff]
                  %283 = vst [vmem:[%s279 + $0x8] sm:$0xff] %v282
                  %v284 = vld [vmem:[%s278 + $0x40] sm:$0xff]
                  %285 = vst [vmem:[%s279 + $0x10] sm:$0xff] %v284
                  %v286 = vld [vmem:[%s278 + $0x60] sm:$0xff]
                  %287 = vst [vmem:[%s279 + $0x18] sm:$0xff] %v286
                  %v288 = vld [vmem:[%s278 + $0x80] sm:$0xff]
                  %289 = vst [vmem:[%s279 + $0x20] sm:$0xff] %v288
                  %v290 = vld [vmem:[%s278 + $0xa0] sm:$0xff]
                  %291 = vst [vmem:[%s279 + $0x28] sm:$0xff] %v290
                  %v292 = vld [vmem:[%s278 + $0xc0] sm:$0xff]
                  %293 = vst [vmem:[%s279 + $0x30] sm:$0xff] %v292
                  %v294 = vld [vmem:[%s278 + $0xe0] sm:$0xff]
                  %295 = vst [vmem:[%s279 + $0x38] sm:$0xff] %v294
                  %v296 = vld [vmem:[%s278 + $0x100] sm:$0xff]
                  %297 = vst [vmem:[%s279 + $0x40] sm:$0xff] %v296
                  %v298 = vld [vmem:[%s278 + $0x120] sm:$0xff]
                  %299 = vst [vmem:[%s279 + $0x48] sm:$0xff] %v298
                  %v300 = vld [vmem:[%s278 + $0x140] sm:$0xff]
                  %301 = vst [vmem:[%s279 + $0x50] sm:$0xff] %v300
                  %v302 = vld [vmem:[%s278 + $0x160] sm:$0xff]
                  %303 = vst [vmem:[%s279 + $0x58] sm:$0xff] %v302
                  %v304 = vld [vmem:[%s278 + $0x180] sm:$0xff]
                  %305 = vst [vmem:[%s279 + $0x60] sm:$0xff] %v304
                  %v306 = vld [vmem:[%s278 + $0x1a0] sm:$0xff]
                  %307 = vst [vmem:[%s279 + $0x68] sm:$0xff] %v306
                  %v308 = vld [vmem:[%s278 + $0x1c0] sm:$0xff]
                  %309 = vst [vmem:[%s279 + $0x70] sm:$0xff] %v308
                  %v310 = vld [vmem:[%s278 + $0x1e0] sm:$0xff]
                  %311 = vst [vmem:[%s279 + $0x78] sm:$0xff] %v310
                  %v312 = vld [vmem:[%s278 + $0x200] sm:$0xff]
                  %313 = vst [vmem:[%s279 + $0x80] sm:$0xff] %v312
                  %v314 = vld [vmem:[%s278 + $0x220] sm:$0xff]
                  %315 = vst [vmem:[%s279 + $0x88] sm:$0xff] %v314
                  %v316 = vld [vmem:[%s278 + $0x240] sm:$0xff]
                  %317 = vst [vmem:[%s279 + $0x90] sm:$0xff] %v316
                  %v318 = vld [vmem:[%s278 + $0x260] sm:$0xff]
                  %319 = vst [vmem:[%s279 + $0x98] sm:$0xff] %v318
                  %v320 = vld [vmem:[%s278 + $0x280] sm:$0xff]
                  %321 = vst [vmem:[%s279 + $0xa0] sm:$0xff] %v320
                  %v322 = vld [vmem:[%s278 + $0x2a0] sm:$0xff]
                  %323 = vst [vmem:[%s279 + $0xa8] sm:$0xff] %v322
                  %v324 = vld [vmem:[%s278 + $0x2c0] sm:$0xff]
                  %325 = vst [vmem:[%s279 + $0xb0] sm:$0xff] %v324
                  %v326 = vld [vmem:[%s278 + $0x2e0] sm:$0xff]
                  %327 = vst [vmem:[%s279 + $0xb8] sm:$0xff] %v326
                $region52: #{_lambda_.20} parent=46 // loop_footer
                  %s277 = sadd.s32 1, %s273
                $region53: #{_lambda_.20} parent=46 // loop_footer_branch
                  %272 = sbr.rel target = $region49
                $region54: #{_lambda_.20} parent=46 // loop_exit
                  _
              $region47: #{_lambda_.20} parent=31 // pred_fallthru
                _
              // Predicated region
              $region55: #{_lambda_.20} parent=31 // pred_check
                _
              $region56: #{_lambda_.20} parent=31 // pred_check_branch
                %329 = sbr.rel target = $region58
              $region57: #{_lambda_.20} parent=31 // pred_region
                _
              $region58: #{_lambda_.20} parent=31 // pred_fallthru
                _
            $region32: #{_lambda_.20} parent=27 // pred_fallthru
              _
            // Predicated region
            $region33: #{_lambda_.20} parent=27 // pred_check
              _
            $region34: #{_lambda_.20} parent=27 // pred_check_branch
              %211 = sbr.rel target = $region36
            $region35: #{_lambda_.20} parent=27 // pred_region
              %s213 = ssub.s32 256, 1
              loop: start=0, step=1, limit=1
              $region37: #{_lambda_.20} parent=35 // loop_pre_header
                _
              $region38: #{_lambda_.20} parent=35 // loop_header
                %s215 = sphi 0, %s219
                %p216 = scmp.ge.s32.totalorder %s215, 1
                %s220 = sphi %s205, %s205
                %s221 = sphi %s202, %s202
              $region39: #{_lambda_.20} parent=35 // loop_header_branch
                %218 = sbr.rel (%p216) target = $region43
              $region40: #{_lambda_.20} parent=35 // loop_body
                %v222 = vld [vmem:[%s220] sm:%s213]
                %223 = vst [vmem:[%s221] sm:%s213] %v222
                %v224 = vld [vmem:[%s220 + $0x20] sm:%s213]
                %225 = vst [vmem:[%s221 + $0x8] sm:%s213] %v224
                %v226 = vld [vmem:[%s220 + $0x40] sm:%s213]
                %227 = vst [vmem:[%s221 + $0x10] sm:%s213] %v226
                %v228 = vld [vmem:[%s220 + $0x60] sm:%s213]
                %229 = vst [vmem:[%s221 + $0x18] sm:%s213] %v228
                %v230 = vld [vmem:[%s220 + $0x80] sm:%s213]
                %231 = vst [vmem:[%s221 + $0x20] sm:%s213] %v230
                %v232 = vld [vmem:[%s220 + $0xa0] sm:%s213]
                %233 = vst [vmem:[%s221 + $0x28] sm:%s213] %v232
                %v234 = vld [vmem:[%s220 + $0xc0] sm:%s213]
                %235 = vst [vmem:[%s221 + $0x30] sm:%s213] %v234
                %v236 = vld [vmem:[%s220 + $0xe0] sm:%s213]
                %237 = vst [vmem:[%s221 + $0x38] sm:%s213] %v236
                %v238 = vld [vmem:[%s220 + $0x100] sm:%s213]
                %239 = vst [vmem:[%s221 + $0x40] sm:%s213] %v238
                %v240 = vld [vmem:[%s220 + $0x120] sm:%s213]
                %241 = vst [vmem:[%s221 + $0x48] sm:%s213] %v240
                %v242 = vld [vmem:[%s220 + $0x140] sm:%s213]
                %243 = vst [vmem:[%s221 + $0x50] sm:%s213] %v242
                %v244 = vld [vmem:[%s220 + $0x160] sm:%s213]
                %245 = vst [vmem:[%s221 + $0x58] sm:%s213] %v244
                %v246 = vld [vmem:[%s220 + $0x180] sm:%s213]
                %247 = vst [vmem:[%s221 + $0x60] sm:%s213] %v246
                %v248 = vld [vmem:[%s220 + $0x1a0] sm:%s213]
                %249 = vst [vmem:[%s221 + $0x68] sm:%s213] %v248
                %v250 = vld [vmem:[%s220 + $0x1c0] sm:%s213]
                %251 = vst [vmem:[%s221 + $0x70] sm:%s213] %v250
                %v252 = vld [vmem:[%s220 + $0x1e0] sm:%s213]
                %253 = vst [vmem:[%s221 + $0x78] sm:%s213] %v252
                %v254 = vld [vmem:[%s220 + $0x200] sm:%s213]
                %255 = vst [vmem:[%s221 + $0x80] sm:%s213] %v254
                %v256 = vld [vmem:[%s220 + $0x220] sm:%s213]
                %257 = vst [vmem:[%s221 + $0x88] sm:%s213] %v256
                %v258 = vld [vmem:[%s220 + $0x240] sm:%s213]
                %259 = vst [vmem:[%s221 + $0x90] sm:%s213] %v258
                %v260 = vld [vmem:[%s220 + $0x260] sm:%s213]
                %261 = vst [vmem:[%s221 + $0x98] sm:%s213] %v260
                %v262 = vld [vmem:[%s220 + $0x280] sm:%s213]
                %263 = vst [vmem:[%s221 + $0xa0] sm:%s213] %v262
                %v264 = vld [vmem:[%s220 + $0x2a0] sm:%s213]
                %265 = vst [vmem:[%s221 + $0xa8] sm:%s213] %v264
                %v266 = vld [vmem:[%s220 + $0x2c0] sm:%s213]
                %267 = vst [vmem:[%s221 + $0xb0] sm:%s213] %v266
                %v268 = vld [vmem:[%s220 + $0x2e0] sm:%s213]
                %269 = vst [vmem:[%s221 + $0xb8] sm:%s213] %v268
              $region41: #{_lambda_.20} parent=35 // loop_footer
                %s219 = sadd.s32 1, %s215
              $region42: #{_lambda_.20} parent=35 // loop_footer_branch
                %214 = sbr.rel target = $region38
              $region43: #{_lambda_.20} parent=35 // loop_exit
                _
            $region36: #{_lambda_.20} parent=27 // pred_fallthru
              _
          $region28: #{_lambda_.20} parent=23 // pred_fallthru
            _
          %330 = vnop
        $region24: #{_lambda_.20} parent=15 // pred_fallthru
          _
        // Predicated region
        $region59: #{_lambda_.20} parent=15 // pred_check
          %p331 = pneg %p103
        $region60: #{_lambda_.20} parent=15 // pred_check_branch
          %333 = sbr.rel (%p331) target = $region62
        $region61: #{_lambda_.20} parent=15 // pred_region
          %s334 = smul.u32 2, %s18
          %p335 = scmp.lt.s32.totalorder %s334, 7
          %s336 = scalar_select %p335, %s334, 7
          %s337 = scalar_lea.vmem %s2, %s336
          %s338 = smul.u32 2, %s18
        $region62: #{_lambda_.20} parent=15 // pred_fallthru
          _
        // Predicated region
        $region63: #{_lambda_.20} parent=15 // pred_check
          %p339 = pneg %p129
        $region64: #{_lambda_.20} parent=15 // pred_check_branch
          %341 = sbr.rel (%p339) target = $region66
        $region65: #{_lambda_.20} parent=15 // pred_region
          %s342 = smul.u32 2, %s18
          %p343 = scmp.lt.s32.totalorder %s342, 7
          %s344 = scalar_select %p343, %s342, 7
          %s345 = scalar_lea.vmem %s3, %s344
          %s346 = smul.u32 2, %s18
        $region66: #{_lambda_.20} parent=15 // pred_fallthru
          _
      $region16: #{_lambda_.20} parent=5 // pred_fallthru
        _
      %p347 = scmp.le.s32.totalorder 1, %s10
      %p348 = scmp.lt.s32.totalorder %s10, 9
      %p349 = pnand %p347, %p348
      %p350 = pneg %p349
      // Predicated region
      $region67: #{_lambda_.20} parent=5 // pred_check
        _
      $region68: #{_lambda_.20} parent=5 // pred_check_branch
        %352 = sbr.rel (%p349) target = $region70
      $region69: #{_lambda_.20} parent=5 // pred_region
        %s353 = ssub.s32 %s10, 1
        %s354 = sand.u32 %s70, 1
        %s355 = sand.u32 %s70, 1
        %s356 = smul.addr %s355, 192
        %s357 = scalar_lea.vmem [#allocation3], %s356
        // Predicated region
        $region71: #{_lambda_.20} parent=69 // pred_check
          %p358 = pneg %p83
        $region72: #{_lambda_.20} parent=69 // pred_check_branch
          %360 = sbr.rel (%p358) target = $region74
        $region73: #{_lambda_.20} parent=69 // pred_region
          _
        $region74: #{_lambda_.20} parent=69 // pred_fallthru
          _
        %s361 = smul.u32 2, %s22
        %p362 = scmp.lt.s32.totalorder %s20, 1
        %s363 = scalar_select %p362, %s20, 1
        %p364 = scmp.lt.s32.totalorder %s361, 1
        %s365 = scalar_select %p364, %s361, 1
        %s366 = smul.addr %s365, 2
        %s367 = smul.addr %s363, 4
        %s368 = sadd.s32 %s366, %s367
        %s369 = smul.addr %s368, 8
        %s370 = scalar_lea.vmem %s0, %s369
        %p371 = pneg %p57
        %p372 = pneg %p54
        %s373 = sand.u32 %s70, 1
        %s374 = sand.u32 %s70, 1
        %s375 = smul.addr %s374, 192
        %s376 = scalar_lea.vmem [#allocation3], %s375
        %p377 = pneg %p83
        %p378 = pneg %p80
        %s379 = smul.u32 2, %s21
        %p380 = scmp.lt.s32.totalorder %s379, 7
        %s381 = scalar_select %p380, %s379, 7
        %s382 = scalar_lea.vmem %s2, %s381
        %p383 = pneg %p109
        %p384 = pneg %p106
        %s385 = smul.u32 2, %s21
        %p386 = scmp.lt.s32.totalorder %s385, 7
        %s387 = scalar_select %p386, %s385, 7
        %s388 = scalar_lea.vmem %s3, %s387
        %p389 = pneg %p135
        %p390 = pneg %p132
        %p391 = pneg %p163
        %p392 = pneg %p160
        %s393 = smul.u32 2, %s21
        %p394 = scmp.lt.s32.totalorder %s20, 1
        %s395 = scalar_select %p394, %s20, 1
        %p396 = scmp.lt.s32.totalorder %s393, 7
        %s397 = scalar_select %p396, %s393, 7
        %s398 = smul.addr %s395, 8
        %s399 = sadd.s32 %s397, %s398
        %s400 = scalar_lea.vmem %s4, %s399
        %s401 = smul.u32 2, %s22
        %p402 = scmp.lt.s32.totalorder %s20, 1
        %s403 = scalar_select %p402, %s20, 1
        %p404 = scmp.lt.s32.totalorder %s401, 1
        %s405 = scalar_select %p404, %s401, 1
        %s406 = smul.addr %s405, 2
        %s407 = smul.addr %s403, 4
        %s408 = sadd.s32 %s406, %s407
        %s409 = smul.addr %s408, 8
        %s410 = scalar_lea.vmem %s0, %s409
        %s411 = smul.u32 2, %s22
        %s412 = smul.u32 2, %s21
        %s413 = smul.u32 2, %s21
        %p414 = scmp.lt.s32.totalorder %s413, 7
        %s415 = scalar_select %p414, %s413, 7
        %s416 = scalar_lea.vmem %s2, %s415
        %s417 = smul.u32 2, %s21
        %s418 = smul.u32 2, %s21
        %p419 = scmp.lt.s32.totalorder %s418, 7
        %s420 = scalar_select %p419, %s418, 7
        %s421 = scalar_lea.vmem %s3, %s420
        %s422 = smul.u32 2, %s21
        %s423 = smul.u32 2, %s21
        %p424 = scmp.lt.s32.totalorder %s20, 1
        %s425 = scalar_select %p424, %s20, 1
        %p426 = scmp.lt.s32.totalorder %s423, 7
        %s427 = scalar_select %p426, %s423, 7
        %s428 = smul.addr %s425, 8
        %s429 = sadd.s32 %s427, %s428
        %s430 = scalar_lea.vmem %s4, %s429
        %s431 = smul.u32 2, %s21
        %v433 = vld [vmem:[%s357] sm:$0xff]
        %v434 = vld [vmem:[%s357 + $0x8] sm:$0xff]
        %v435 = vld [vmem:[%s357 + $0x10] sm:$0xff]
        %v436 = vld [vmem:[%s357 + $0x18] sm:$0xff]
        %v437 = vld [vmem:[%s357 + $0x20] sm:$0xff]
        %v438 = vld [vmem:[%s357 + $0x28] sm:$0xff]
        %v439 = vld [vmem:[%s357 + $0x30] sm:$0xff]
        %v440 = vld [vmem:[%s357 + $0x38] sm:$0xff]
        %v441 = vld [vmem:[%s357 + $0x40] sm:$0xff]
        %v442 = vld [vmem:[%s357 + $0x48] sm:$0xff]
        %v443 = vld [vmem:[%s357 + $0x50] sm:$0xff]
        %v444 = vld [vmem:[%s357 + $0x58] sm:$0xff]
        %v445 = vld [vmem:[%s357 + $0x60] sm:$0xff]
        %v446 = vld [vmem:[%s357 + $0x68] sm:$0xff]
        %v447 = vld [vmem:[%s357 + $0x70] sm:$0xff]
        %v448 = vld [vmem:[%s357 + $0x78] sm:$0xff]
        %v449 = vld [vmem:[%s357 + $0x80] sm:$0xff]
        %v450 = vld [vmem:[%s357 + $0x88] sm:$0xff]
        %v451 = vld [vmem:[%s357 + $0x90] sm:$0xff]
        %v452 = vld [vmem:[%s357 + $0x98] sm:$0xff]
        %v453 = vld [vmem:[%s357 + $0xa0] sm:$0xff]
        %v454 = vld [vmem:[%s357 + $0xa8] sm:$0xff]
        %v455 = vld [vmem:[%s357 + $0xb0] sm:$0xff]
        %v456 = vld [vmem:[%s357 + $0xb8] sm:$0xff]
        %v457 = vld [vmem:[%s410] sm:$0xff]
        %v458 = vld [vmem:[%s410 + $0x8] sm:$0xff]
        %v459 = vld [vmem:[%s410 + $0x10] sm:$0xff]
        %v460 = vld [vmem:[%s410 + $0x18] sm:$0xff]
        %v461 = vpack.c.bf16 %v459, %v457
        %v462 = vpack.c.bf16 %v460, %v458
        %v487 = vunpack.c.l.b16 %v433
        %v488 = vunpack.c.h.b16 %v433
        %v489 = vunpack.c.l.b16 %v434
        %v490 = vunpack.c.h.b16 %v434
        %v491 = vunpack.c.l.b16 %v435
        %v492 = vunpack.c.h.b16 %v435
        %v493 = vunpack.c.l.b16 %v436
        %v494 = vunpack.c.h.b16 %v436
        %v495 = vunpack.c.l.b16 %v437
        %v496 = vunpack.c.h.b16 %v437
        %v497 = vunpack.c.l.b16 %v438
        %v498 = vunpack.c.h.b16 %v438
        %v499 = vunpack.c.l.b16 %v439
        %v500 = vunpack.c.h.b16 %v439
        %v501 = vunpack.c.l.b16 %v440
        %v502 = vunpack.c.h.b16 %v440
        %v503 = vunpack.c.l.b16 %v441
        %v504 = vunpack.c.h.b16 %v441
        %v505 = vunpack.c.l.b16 %v442
        %v506 = vunpack.c.h.b16 %v442
        %v507 = vunpack.c.l.b16 %v443
        %v508 = vunpack.c.h.b16 %v443
        %v509 = vunpack.c.l.b16 %v444
        %v510 = vunpack.c.h.b16 %v444
        %v511 = vunpack.c.l.b16 %v445
        %v512 = vunpack.c.h.b16 %v445
        %v513 = vunpack.c.l.b16 %v446
        %v514 = vunpack.c.h.b16 %v446
        %v515 = vunpack.c.l.b16 %v447
        %v516 = vunpack.c.h.b16 %v447
        %v517 = vunpack.c.l.b16 %v448
        %v518 = vunpack.c.h.b16 %v448
        %v519 = vunpack.c.l.b16 %v449
        %v520 = vunpack.c.h.b16 %v449
        %v521 = vunpack.c.l.b16 %v450
        %v522 = vunpack.c.h.b16 %v450
        %v523 = vunpack.c.l.b16 %v451
        %v524 = vunpack.c.h.b16 %v451
        %v525 = vunpack.c.l.b16 %v452
        %v526 = vunpack.c.h.b16 %v452
        %v527 = vunpack.c.l.b16 %v453
        %v528 = vunpack.c.h.b16 %v453
        %v529 = vunpack.c.l.b16 %v454
        %v530 = vunpack.c.h.b16 %v454
        %v531 = vunpack.c.l.b16 %v455
        %v532 = vunpack.c.h.b16 %v455
        %v533 = vunpack.c.l.b16 %v456
        %v534 = vunpack.c.h.b16 %v456
        %v535 = vpack.c.b16 %v489, %v487
        %v536 = vpack.c.b16 %v490, %v488
        %v537 = vpack.c.b16 %v493, %v491
        %v538 = vpack.c.b16 %v494, %v492
        %v539 = vpack.c.b16 %v497, %v495
        %v540 = vpack.c.b16 %v498, %v496
        %v541 = vpack.c.b16 %v501, %v499
        %v542 = vpack.c.b16 %v502, %v500
        %v543 = vpack.c.b16 %v505, %v503
        %v544 = vpack.c.b16 %v506, %v504
        %v545 = vpack.c.b16 %v509, %v507
        %v546 = vpack.c.b16 %v510, %v508
        %v547 = vpack.c.b16 %v513, %v511
        %v548 = vpack.c.b16 %v514, %v512
        %v549 = vpack.c.b16 %v517, %v515
        %v550 = vpack.c.b16 %v518, %v516
        %v551 = vpack.c.b16 %v521, %v519
        %v552 = vpack.c.b16 %v522, %v520
        %v553 = vpack.c.b16 %v525, %v523
        %v554 = vpack.c.b16 %v526, %v524
        %v555 = vpack.c.b16 %v529, %v527
        %v556 = vpack.c.b16 %v530, %v528
        %v557 = vpack.c.b16 %v533, %v531
        %v558 = vpack.c.b16 %v534, %v532
        %vm583 = vcmask 523264
        %v585 = vsel %vm583, %v462, 0
        %587 = vmatprep.subr.bf16.mxu0 %v550
        %588 = vmatpush1.bf16.msra.mxu0 %v549
        %589 = vmatprep.subr.bf16.mxu0 %v548
        %590 = vmatpush1.bf16.msra.mxu0 %v547
        %591 = vmatprep.subr.bf16.mxu0 %v546
        %592 = vmatpush1.bf16.msra.mxu0 %v545
        %593 = vmatprep.subr.bf16.mxu0 %v544
        %594 = vmatpush1.bf16.msra.mxu0 %v543
        %595 = vmatprep.subr.bf16.mxu0 %v542
        %596 = vmatpush1.bf16.msra.mxu0 %v541
        %597 = vmatprep.subr.bf16.mxu0 %v540
        %598 = vmatpush1.bf16.msra.mxu0 %v539
        %599 = vmatprep.subr.bf16.mxu0 %v538
        %600 = vmatpush1.bf16.msra.mxu0 %v537
        %601 = vmatprep.subr.bf16.mxu0 %v536
        %602 = vmatpush1.bf16.msra.mxu0 %v535
        %603 = vmatprep.subr.bf16.mxu0 0
        %604 = vmatpush2.bf16.msra.mxu0 0
        %605 = vmatprep.subr.bf16.mxu0 0
        %606 = vmatpush2.bf16.msra.mxu0 0
        %607 = vmatprep.subr.bf16.mxu0 0
        %608 = vmatpush2.bf16.msra.mxu0 0
        %609 = vmatprep.subr.bf16.mxu0 0
        %610 = vmatpush2.bf16.msra.mxu0 0
        %611 = vmatprep.subr.bf16.mxu0 %v558
        %612 = vmatpush2.bf16.msra.mxu0 %v557
        %613 = vmatprep.subr.bf16.mxu0 %v556
        %614 = vmatpush2.bf16.msra.mxu0 %v555
        %615 = vmatprep.subr.bf16.mxu0 %v554
        %616 = vmatpush2.bf16.msra.mxu0 %v553
        %617 = vmatprep.subr.bf16.mxu0 %v552
        %618 = vmatpush2.bf16.msra.mxu0 %v551
        %619 = vmatprep.mubr.bf16.mxu0 %v585
        %620 = vmatmul.mubr.bf16.gmra.mxu0 %v461
        %v621 = vpop.f32.mrf.mxu0
        %v622 = vadd.f32 0.0, %v621
        %v623 = vpop.f32.mrf.mxu0
        %v624 = vadd.f32 0.0, %v623
        %v625 = vpop.f32.mrf.mxu0
        %v626 = vadd.f32 0.0, %v625
        %v627 = vpop.f32.mrf.mxu0
        %v628 = vadd.f32 0.0, %v627
        %629 = vdwg.mxu0
        %v630 = vld [vmem:[%s416] sm:$0x3]
        %v632 = vlaneseq
        %v633 = vshrl.u32 %v632, 7
        %v634 = vsub.s32 0, %v633
        %v635 = vrot.slane %v630, %v634
        %v636 = vlaneseq
        %v637 = vshrl.u32 %v636, 7
        %v638 = vsub.s32 1, %v637
        %v639 = vrot.slane %v630, %v638
        %v642 = vmul.f32 %v622, %v635
        %v643 = vmul.f32 %v624, %v639
        %v644 = vmul.f32 %v626, %v635
        %v645 = vmul.f32 %v628, %v639
        %v646 = vld [vmem:[%s421] sm:$0x3]
        %v648 = vlaneseq
        %v649 = vshrl.u32 %v648, 7
        %v650 = vsub.s32 0, %v649
        %v651 = vrot.slane %v646, %v650
        %v652 = vlaneseq
        %v653 = vshrl.u32 %v652, 7
        %v654 = vsub.s32 1, %v653
        %v655 = vrot.slane %v646, %v654
        %v658 = vadd.f32 %v642, %v651
        %v659 = vadd.f32 %v643, %v655
        %v660 = vadd.f32 %v644, %v651
        %v661 = vadd.f32 %v645, %v655
        %vm662 = vcmp.ge.f32.partialorder %v658, 0.0
        %vm663 = vcmp.ge.f32.partialorder %v659, 0.0
        %vm664 = vcmp.ge.f32.partialorder %v660, 0.0
        %vm665 = vcmp.ge.f32.partialorder %v661, 0.0
        %v666 = vmul.f32 %v658, 0.2
        %v667 = vmul.f32 %v659, 0.2
        %v668 = vmul.f32 %v660, 0.2
        %v669 = vmul.f32 %v661, 0.2
        %v670 = vsel %vm662, %v658, %v666
        %v671 = vsel %vm663, %v659, %v667
        %v672 = vsel %vm664, %v660, %v668
        %v673 = vsel %vm665, %v661, %v669
        %v674 = vmax.f32 %v670, %v672
        %v675 = vrot.slane %v674, 4
        %v676 = vmax.f32 %v674, %v675
        %v677 = vrot.slane %v676, 2
        %v678 = vmax.f32 %v676, %v677
        %v679 = vrot.slane %v678, 1
        %v680 = vmax.f32 %v678, %v679
        %v681 = vmax.f32 %v671, %v673
        %v682 = vrot.slane %v681, 4
        %v683 = vmax.f32 %v681, %v682
        %v684 = vrot.slane %v683, 2
        %v685 = vmax.f32 %v683, %v684
        %v686 = vrot.slane %v685, 1
        %v687 = vmax.f32 %v685, %v686
        %p688 = scmp.eq.s32.totalorder %s22, 0
        // Predicated region
        $region75: #{_lambda_.20} parent=69 // pred_check
          %p689 = pneg %p688
        $region76: #{_lambda_.20} parent=69 // pred_check_branch
          %691 = sbr.rel (%p689) target = $region78
        $region77: #{_lambda_.20} parent=69 // pred_region
          %v692 = vlaneseq
          %vm693 = vcmp.ge.s32.totalorder %v692, 0
          %vm694 = vcmp.lt.s32.totalorder %v692, 256
          %vm695 = vmand %vm693, %vm694
          %696 = vst.msk [vmem:[#allocation2] sm:$0x3] %vm695, -inf
        $region78: #{_lambda_.20} parent=69 // pred_fallthru
          _
        %v697 = vld [vmem:[#allocation2] sm:$0x3]
        %v700 = vcombine.low %v680, %v687
        %v702 = vunpack.c.l.s4 1966171168
        %v703 = vunpack.c.0.s8 %v702
        %v704 = vlaneseq
        %v705 = vshrl.u32 %v704, 7
        %v706 = vsub.s32 %v703, %v705
        %v707 = vrot.slane %v700, %v706
        %v709 = vunpack.c.l.s4 1966171168
        %v710 = vunpack.c.0.s8 %v709
        %v711 = vlaneseq
        %v712 = vshrl.u32 %v711, 7
        %v713 = vsub.s32 %v710, %v712
        %v714 = vrot.slane %v707, %v713
        %v716 = vmax.f32 %v697, %v714
        %v717 = vlaneseq
        %vm718 = vcmp.ge.s32.totalorder %v717, 0
        %vm719 = vcmp.lt.s32.totalorder %v717, 256
        %vm720 = vmand %vm718, %vm719
        %721 = vst.msk [vmem:[#allocation2] sm:$0x3] %vm720, %v716
        // Predicated region
        $region79: #{_lambda_.20} parent=69 // pred_check
          %p722 = pneg %p688
        $region80: #{_lambda_.20} parent=69 // pred_check_branch
          %724 = sbr.rel (%p722) target = $region82
        $region81: #{_lambda_.20} parent=69 // pred_region
          %v725 = vld [vmem:[#allocation2] sm:$0x3]
          %726 = vst.msk [vmem:[%s430] sm:$0x3] %vm720, %v725
        $region82: #{_lambda_.20} parent=69 // pred_fallthru
          _
        %s727 = smul.u32 2, %s21
        %p728 = scmp.lt.s32.totalorder %s20, 1
        %s729 = scalar_select %p728, %s20, 1
        %p730 = scmp.lt.s32.totalorder %s727, 7
        %s731 = scalar_select %p730, %s727, 7
        %s732 = smul.addr %s729, 8
        %s733 = sadd.s32 %s731, %s732
        %s734 = scalar_lea.vmem %s4, %s733
        // Predicated region
        $region83: #{_lambda_.20} parent=69 // pred_check
          %p735 = pneg %p160
        $region84: #{_lambda_.20} parent=69 // pred_check_branch
          %737 = sbr.rel (%p735) target = $region86
        $region85: #{_lambda_.20} parent=69 // pred_region
          %s738 = smul.u32 2, %s21
        $region86: #{_lambda_.20} parent=69 // pred_fallthru
          _
      $region70: #{_lambda_.20} parent=5 // pred_fallthru
        _
      %p739 = scmp.le.s32.totalorder 2, %s10
      // Predicated region
      $region87: #{_lambda_.20} parent=5 // pred_check
        %p740 = pneg %p739
      $region88: #{_lambda_.20} parent=5 // pred_check_branch
        %742 = sbr.rel (%p740) target = $region90
      $region89: #{_lambda_.20} parent=5 // pred_region
        %s743 = ssub.s32 %s10, 2
        // Predicated region
        $region91: #{_lambda_.20} parent=89 // pred_check
          %p744 = pneg %p166
        $region92: #{_lambda_.20} parent=89 // pred_check_branch
          %746 = sbr.rel (%p744) target = $region94
        $region93: #{_lambda_.20} parent=89 // pred_region
          %s747 = smul.u32 2, %s24
          %p748 = scmp.lt.s32.totalorder %s23, 1
          %s749 = scalar_select %p748, %s23, 1
          %p750 = scmp.lt.s32.totalorder %s747, 7
          %s751 = scalar_select %p750, %s747, 7
          %s752 = smul.addr %s749, 8
          %s753 = sadd.s32 %s751, %s752
          %s754 = scalar_lea.vmem %s4, %s753
        $region94: #{_lambda_.20} parent=89 // pred_fallthru
          _
      $region90: #{_lambda_.20} parent=5 // pred_fallthru
        _
    $region6: #{_lambda_.20} parent=1 // loop_footer
      %s14 = sadd.s32 1, %s10
    $region7: #{_lambda_.20} parent=1 // loop_footer_branch
      %9 = sbr.rel target = $region3
    $region8: #{_lambda_.20} parent=1 // loop_exit
      _

// kernel: _lambda_.19
$region0: #{_lambda_.19}
  #allocation0 [shape = 'u32[]', space=smem, size = 0x4, offset = 0x4, fixed_abs, tag = 'smem constant byte address 0x4 - core index']
  #allocation1 [shape = 'u32[144,128]{1,0:T(1,128)}', space=vmem, size = 0x12000, scoped, tag = 'internal scratch']
  %s0 = inlined_call_operand.vmem [shape: bf16[32,4,64], index: 0, kind: input, shape index: {}]
  %s1 = inlined_call_operand.vmem [shape: f32[32,64], index: 1, kind: input, shape index: {}]
  %s2 = inlined_call_operand.vmem [shape: bf16[64,64], index: 2, kind: input, shape index: {}]
  %s3 = inlined_call_operand.vmem [shape: bf16[64,64], index: 3, kind: input, shape index: {}]
  %s4 = inlined_call_operand.vmem [shape: f32[1,64], index: 4, kind: input, shape index: {}]
  %s5 = inlined_call_operand.vmem [shape: f32[1,64], index: 5, kind: input, shape index: {}]
  %s6 = inlined_call_operand.vmem [shape: f32[32,64], index: 6, kind: output, shape index: {}]
  %s7 = sld [smem:[#allocation0]]
  $region34: #{_lambda_.19} parent=0
    _
  %s9 = ssub.s32 1, %s7
  %s10 = scalar_select 0, %s9, %s7
  // Predicated region
  $region2: #{_lambda_.19} parent=0 // pred_check
    _
  $region3: #{_lambda_.19} parent=0 // pred_check_branch
    %12 = sbr.rel (0) target = $region5
  $region4: #{_lambda_.19} parent=0 // pred_region
    _
  $region5: #{_lambda_.19} parent=0 // pred_fallthru
    _
  // Predicated region
  $region6: #{_lambda_.19} parent=0 // pred_check
    _
  $region7: #{_lambda_.19} parent=0 // pred_check_branch
    %14 = sbr.rel (0) target = $region9
  $region8: #{_lambda_.19} parent=0 // pred_region
    _
  $region9: #{_lambda_.19} parent=0 // pred_fallthru
    _
  // Predicated region
  $region10: #{_lambda_.19} parent=0 // pred_check
    _
  $region11: #{_lambda_.19} parent=0 // pred_check_branch
    %16 = sbr.rel (0) target = $region13
  $region12: #{_lambda_.19} parent=0 // pred_region
    _
  $region13: #{_lambda_.19} parent=0 // pred_fallthru
    _
  // Predicated region
  $region14: #{_lambda_.19} parent=0 // pred_check
    _
  $region15: #{_lambda_.19} parent=0 // pred_check_branch
    %18 = sbr.rel (0) target = $region17
  $region16: #{_lambda_.19} parent=0 // pred_region
    _
  $region17: #{_lambda_.19} parent=0 // pred_fallthru
    _
  // Predicated region
  $region18: #{_lambda_.19} parent=0 // pred_check
    _
  $region19: #{_lambda_.19} parent=0 // pred_check_branch
    %20 = sbr.rel (0) target = $region21
  $region20: #{_lambda_.19} parent=0 // pred_region
    _
  $region21: #{_lambda_.19} parent=0 // pred_fallthru
    _
  // Predicated region
  $region22: #{_lambda_.19} parent=0 // pred_check
    _
  $region23: #{_lambda_.19} parent=0 // pred_check_branch
    %22 = sbr.rel (0) target = $region25
  $region24: #{_lambda_.19} parent=0 // pred_region
    _
  $region25: #{_lambda_.19} parent=0 // pred_fallthru
    _
  %v24 = vld [vmem:[%s1] sm:$0xff]
  %v25 = vld [vmem:[%s1 + $0x8] sm:$0xff]
  %v26 = vld [vmem:[%s1 + $0x10] sm:$0xff]
  %v27 = vld [vmem:[%s1 + $0x18] sm:$0xff]
  %v28 = vld [vmem:[%s2] sm:$0xf]
  %v29 = vld [vmem:[%s2 + $0x4] sm:$0xf]
  %v30 = vld [vmem:[%s2 + $0x8] sm:$0xf]
  %v31 = vld [vmem:[%s2 + $0xc] sm:$0xf]
  %v32 = vld [vmem:[%s2 + $0x10] sm:$0xf]
  %v33 = vld [vmem:[%s2 + $0x14] sm:$0xf]
  %v34 = vld [vmem:[%s2 + $0x18] sm:$0xf]
  %v35 = vld [vmem:[%s2 + $0x1c] sm:$0xf]
  %v36 = vld [vmem:[%s3] sm:$0xf]
  %v37 = vld [vmem:[%s3 + $0x4] sm:$0xf]
  %v38 = vld [vmem:[%s3 + $0x8] sm:$0xf]
  %v39 = vld [vmem:[%s3 + $0xc] sm:$0xf]
  %v40 = vld [vmem:[%s3 + $0x10] sm:$0xf]
  %v41 = vld [vmem:[%s3 + $0x14] sm:$0xf]
  %v42 = vld [vmem:[%s3 + $0x18] sm:$0xf]
  %v43 = vld [vmem:[%s3 + $0x1c] sm:$0xf]
  %v44 = vld [vmem:[%s4] sm:$0x1]
  %v45 = vld [vmem:[%s5] sm:$0x1]
  %v46 = vpack.c.bf16 %v25, %v24
  %v47 = vpack.c.bf16 %v27, %v26
  %v56 = vunpack.c.l.b16 %v36
  %v57 = vunpack.c.l.b16 %v37
  %v58 = vunpack.c.l.b16 %v38
  %v59 = vunpack.c.l.b16 %v39
  %v60 = vunpack.c.l.b16 %v40
  %v61 = vunpack.c.l.b16 %v41
  %v62 = vunpack.c.l.b16 %v42
  %v63 = vunpack.c.l.b16 %v43
  %v64 = vpack.c.b16 %v57, %v56
  %v65 = vpack.c.b16 %v59, %v58
  %v66 = vpack.c.b16 %v61, %v60
  %v67 = vpack.c.b16 %v63, %v62
  %vm72 = vcmask 523264
  %v74 = vsel %vm72, %v46, 0
  %v77 = vsel %vm72, %v47, 0
  %79 = vmatprep.subr.bf16.mxu0 0
  %80 = vmatpush1.bf16.msra.mxu0 0
  %81 = vmatprep.subr.bf16.mxu0 0
  %82 = vmatpush1.bf16.msra.mxu0 0
  %83 = vmatprep.subr.bf16.mxu0 0
  %84 = vmatpush1.bf16.msra.mxu0 0
  %85 = vmatprep.subr.bf16.mxu0 0
  %86 = vmatpush1.bf16.msra.mxu0 0
  %87 = vmatprep.subr.bf16.mxu0 0
  %88 = vmatpush1.bf16.msra.mxu0 %v67
  %89 = vmatprep.subr.bf16.mxu0 0
  %90 = vmatpush1.bf16.msra.mxu0 %v66
  %91 = vmatprep.subr.bf16.mxu0 0
  %92 = vmatpush1.bf16.msra.mxu0 %v65
  %93 = vmatprep.subr.bf16.mxu0 0
  %94 = vmatpush1.bf16.msra.mxu0 %v64
  %95 = vmatprep.subr.bf16.mxu0 0
  %96 = vmatpush2.bf16.msra.mxu0 0
  %97 = vmatprep.subr.bf16.mxu0 0
  %98 = vmatpush2.bf16.msra.mxu0 0
  %99 = vmatprep.subr.bf16.mxu0 0
  %100 = vmatpush2.bf16.msra.mxu0 0
  %101 = vmatprep.subr.bf16.mxu0 0
  %102 = vmatpush2.bf16.msra.mxu0 0
  %103 = vmatprep.subr.bf16.mxu0 0
  %104 = vmatpush2.bf16.msra.mxu0 0
  %105 = vmatprep.subr.bf16.mxu0 0
  %106 = vmatpush2.bf16.msra.mxu0 0
  %107 = vmatprep.subr.bf16.mxu0 0
  %108 = vmatpush2.bf16.msra.mxu0 0
  %109 = vmatprep.subr.bf16.mxu0 0
  %110 = vmatpush2.bf16.msra.mxu0 0
  %111 = vmatprep.mubr.bf16.mxu0 0
  %112 = vmatmul.mubr.bf16.gmra.mxu0 %v74
  %v113 = vpop.f32.mrf.mxu0
  %v114 = vadd.f32 0.0, %v113
  %v115 = vpop.f32.mrf.mxu0
  %v116 = vpop.f32.mrf.mxu0
  %v117 = vadd.f32 0.0, %v116
  %v118 = vpop.f32.mrf.mxu0
  %119 = vmatprep.mubr.bf16.mxu0 0
  %120 = vmatmul.mubr.bf16.gmra.mxu0 %v77
  %v121 = vpop.f32.mrf.mxu0
  %v122 = vadd.f32 0.0, %v121
  %v123 = vpop.f32.mrf.mxu0
  %v124 = vpop.f32.mrf.mxu0
  %v125 = vadd.f32 0.0, %v124
  %v126 = vpop.f32.mrf.mxu0
  %127 = vdwg.mxu0
  %v128 = vld [vmem:[%s0] sm:$0x3]
  %v129 = vld [vmem:[%s0 + $0x2] sm:$0x3]
  %v130 = vld [vmem:[%s0 + $0x4] sm:$0x3]
  %v131 = vld [vmem:[%s0 + $0x6] sm:$0x3]
  %v132 = vld [vmem:[%s0 + $0x8] sm:$0x3]
  %v133 = vld [vmem:[%s0 + $0xa] sm:$0x3]
  %v134 = vld [vmem:[%s0 + $0xc] sm:$0x3]
  %v135 = vld [vmem:[%s0 + $0xe] sm:$0x3]
  %v136 = vld [vmem:[%s0 + $0x10] sm:$0x3]
  %v137 = vld [vmem:[%s0 + $0x12] sm:$0x3]
  %v138 = vld [vmem:[%s0 + $0x14] sm:$0x3]
  %v139 = vld [vmem:[%s0 + $0x16] sm:$0x3]
  %v140 = vld [vmem:[%s0 + $0x18] sm:$0x3]
  %v141 = vld [vmem:[%s0 + $0x1a] sm:$0x3]
  %v142 = vld [vmem:[%s0 + $0x1c] sm:$0x3]
  %v143 = vld [vmem:[%s0 + $0x1e] sm:$0x3]
  %v144 = vld [vmem:[%s0 + $0x20] sm:$0x3]
  %v145 = vld [vmem:[%s0 + $0x22] sm:$0x3]
  %v146 = vld [vmem:[%s0 + $0x24] sm:$0x3]
  %v147 = vld [vmem:[%s0 + $0x26] sm:$0x3]
  %v148 = vld [vmem:[%s0 + $0x28] sm:$0x3]
  %v149 = vld [vmem:[%s0 + $0x2a] sm:$0x3]
  %v150 = vld [vmem:[%s0 + $0x2c] sm:$0x3]
  %v151 = vld [vmem:[%s0 + $0x2e] sm:$0x3]
  %v152 = vld [vmem:[%s0 + $0x30] sm:$0x3]
  %v153 = vld [vmem:[%s0 + $0x32] sm:$0x3]
  %v154 = vld [vmem:[%s0 + $0x34] sm:$0x3]
  %v155 = vld [vmem:[%s0 + $0x36] sm:$0x3]
  %v156 = vld [vmem:[%s0 + $0x38] sm:$0x3]
  %v157 = vld [vmem:[%s0 + $0x3a] sm:$0x3]
  %v158 = vld [vmem:[%s0 + $0x3c] sm:$0x3]
  %v159 = vld [vmem:[%s0 + $0x3e] sm:$0x3]
  %v160 = vunpack.c.l.bf16 %v128
  %v161 = vunpack.c.l.bf16 %v129
  %v162 = vunpack.c.l.bf16 %v130
  %v163 = vunpack.c.l.bf16 %v131
  %v164 = vunpack.c.l.bf16 %v132
  %v165 = vunpack.c.l.bf16 %v133
  %v166 = vunpack.c.l.bf16 %v134
  %v167 = vunpack.c.l.bf16 %v135
  %v168 = vunpack.c.l.bf16 %v136
  %v169 = vunpack.c.l.bf16 %v137
  %v170 = vunpack.c.l.bf16 %v138
  %v171 = vunpack.c.l.bf16 %v139
  %v172 = vunpack.c.l.bf16 %v140
  %v173 = vunpack.c.l.bf16 %v141
  %v174 = vunpack.c.l.bf16 %v142
  %v175 = vunpack.c.l.bf16 %v143
  %v176 = vunpack.c.l.bf16 %v144
  %v177 = vunpack.c.l.bf16 %v145
  %v178 = vunpack.c.l.bf16 %v146
  %v179 = vunpack.c.l.bf16 %v147
  %v180 = vunpack.c.l.bf16 %v148
  %v181 = vunpack.c.l.bf16 %v149
  %v182 = vunpack.c.l.bf16 %v150
  %v183 = vunpack.c.l.bf16 %v151
  %v184 = vunpack.c.l.bf16 %v152
  %v185 = vunpack.c.l.bf16 %v153
  %v186 = vunpack.c.l.bf16 %v154
  %v187 = vunpack.c.l.bf16 %v155
  %v188 = vunpack.c.l.bf16 %v156
  %v189 = vunpack.c.l.bf16 %v157
  %v190 = vunpack.c.l.bf16 %v158
  %v191 = vunpack.c.l.bf16 %v159
  %v196 = vcombine.high %v24, %v24
  %v197 = vcombine.high %v25, %v25
  %v198 = vcombine.high %v26, %v26
  %v199 = vcombine.high %v27, %v27
  %v200 = vrot.slane %v24, 1
  %v201 = vrot.slane %v24, 2
  %v202 = vrot.slane %v24, 3
  %v203 = vrot.slane %v196, 1
  %v204 = vrot.slane %v196, 2
  %v205 = vrot.slane %v196, 3
  %v206 = vrot.slane %v25, 1
  %v207 = vrot.slane %v25, 2
  %v208 = vrot.slane %v25, 3
  %v209 = vrot.slane %v197, 1
  %v210 = vrot.slane %v197, 2
  %v211 = vrot.slane %v197, 3
  %v212 = vrot.slane %v26, 1
  %v213 = vrot.slane %v26, 2
  %v214 = vrot.slane %v26, 3
  %v215 = vrot.slane %v198, 1
  %v216 = vrot.slane %v198, 2
  %v217 = vrot.slane %v198, 3
  %v218 = vrot.slane %v27, 1
  %v219 = vrot.slane %v27, 2
  %v220 = vrot.slane %v27, 3
  %v221 = vrot.slane %v199, 1
  %v222 = vrot.slane %v199, 2
  %v223 = vrot.slane %v199, 3
  %v256 = vsub.f32 %v160, %v24
  %v257 = vsub.f32 %v161, %v200
  %v258 = vsub.f32 %v162, %v201
  %v259 = vsub.f32 %v163, %v202
  %v260 = vsub.f32 %v164, %v196
  %v261 = vsub.f32 %v165, %v203
  %v262 = vsub.f32 %v166, %v204
  %v263 = vsub.f32 %v167, %v205
  %v264 = vsub.f32 %v168, %v25
  %v265 = vsub.f32 %v169, %v206
  %v266 = vsub.f32 %v170, %v207
  %v267 = vsub.f32 %v171, %v208
  %v268 = vsub.f32 %v172, %v197
  %v269 = vsub.f32 %v173, %v209
  %v270 = vsub.f32 %v174, %v210
  %v271 = vsub.f32 %v175, %v211
  %v272 = vsub.f32 %v176, %v26
  %v273 = vsub.f32 %v177, %v212
  %v274 = vsub.f32 %v178, %v213
  %v275 = vsub.f32 %v179, %v214
  %v276 = vsub.f32 %v180, %v198
  %v277 = vsub.f32 %v181, %v215
  %v278 = vsub.f32 %v182, %v216
  %v279 = vsub.f32 %v183, %v217
  %v280 = vsub.f32 %v184, %v27
  %v281 = vsub.f32 %v185, %v218
  %v282 = vsub.f32 %v186, %v219
  %v283 = vsub.f32 %v187, %v220
  %v284 = vsub.f32 %v188, %v199
  %v285 = vsub.f32 %v189, %v221
  %v286 = vsub.f32 %v190, %v222
  %v287 = vsub.f32 %v191, %v223
  %v288 = vpack.c.bf16 %v256, %v256
  %v289 = vpack.c.bf16 %v257, %v257
  %v290 = vpack.c.bf16 %v258, %v258
  %v291 = vpack.c.bf16 %v259, %v259
  %v292 = vpack.c.bf16 %v260, %v260
  %v293 = vpack.c.bf16 %v261, %v261
  %v294 = vpack.c.bf16 %v262, %v262
  %v295 = vpack.c.bf16 %v263, %v263
  %v296 = vpack.c.bf16 %v264, %v264
  %v297 = vpack.c.bf16 %v265, %v265
  %v298 = vpack.c.bf16 %v266, %v266
  %v299 = vpack.c.bf16 %v267, %v267
  %v300 = vpack.c.bf16 %v268, %v268
  %v301 = vpack.c.bf16 %v269, %v269
  %v302 = vpack.c.bf16 %v270, %v270
  %v303 = vpack.c.bf16 %v271, %v271
  %v304 = vpack.c.bf16 %v272, %v272
  %v305 = vpack.c.bf16 %v273, %v273
  %v306 = vpack.c.bf16 %v274, %v274
  %v307 = vpack.c.bf16 %v275, %v275
  %v308 = vpack.c.bf16 %v276, %v276
  %v309 = vpack.c.bf16 %v277, %v277
  %v310 = vpack.c.bf16 %v278, %v278
  %v311 = vpack.c.bf16 %v279, %v279
  %v312 = vpack.c.bf16 %v280, %v280
  %v313 = vpack.c.bf16 %v281, %v281
  %v314 = vpack.c.bf16 %v282, %v282
  %v315 = vpack.c.bf16 %v283, %v283
  %v316 = vpack.c.bf16 %v284, %v284
  %v317 = vpack.c.bf16 %v285, %v285
  %v318 = vpack.c.bf16 %v286, %v286
  %v319 = vpack.c.bf16 %v287, %v287
  %v352 = vunpack.c.l.b16 %v288
  %v353 = vunpack.c.l.b16 %v289
  %v354 = vunpack.c.l.b16 %v290
  %v355 = vunpack.c.l.b16 %v291
  %v356 = vunpack.c.l.b16 %v292
  %v357 = vunpack.c.l.b16 %v293
  %v358 = vunpack.c.l.b16 %v294
  %v359 = vunpack.c.l.b16 %v295
  %v360 = vunpack.c.l.b16 %v296
  %v361 = vunpack.c.l.b16 %v297
  %v362 = vunpack.c.l.b16 %v298
  %v363 = vunpack.c.l.b16 %v299
  %v364 = vunpack.c.l.b16 %v300
  %v365 = vunpack.c.l.b16 %v301
  %v366 = vunpack.c.l.b16 %v302
  %v367 = vunpack.c.l.b16 %v303
  %v368 = vunpack.c.l.b16 %v304
  %v369 = vunpack.c.l.b16 %v305
  %v370 = vunpack.c.l.b16 %v306
  %v371 = vunpack.c.l.b16 %v307
  %v372 = vunpack.c.l.b16 %v308
  %v373 = vunpack.c.l.b16 %v309
  %v374 = vunpack.c.l.b16 %v310
  %v375 = vunpack.c.l.b16 %v311
  %v376 = vunpack.c.l.b16 %v312
  %v377 = vunpack.c.l.b16 %v313
  %v378 = vunpack.c.l.b16 %v314
  %v379 = vunpack.c.l.b16 %v315
  %v380 = vunpack.c.l.b16 %v316
  %v381 = vunpack.c.l.b16 %v317
  %v382 = vunpack.c.l.b16 %v318
  %v383 = vunpack.c.l.b16 %v319
  %v384 = vrot.slane %v353, 7
  %vm385 = vcmask 1041409
  %v386 = vsel %vm385, %v384, %v352
  %v387 = vrot.slane %v354, 6
  %vm388 = vcmask 1042434
  %v389 = vsel %vm388, %v387, %v386
  %v390 = vrot.slane %v355, 5
  %vm391 = vcmask 1043459
  %v392 = vsel %vm391, %v390, %v389
  %v393 = vrot.slane %v356, 4
  %vm394 = vcmask 1044484
  %v395 = vsel %vm394, %v393, %v392
  %v396 = vrot.slane %v357, 3
  %vm397 = vcmask 1045509
  %v398 = vsel %vm397, %v396, %v395
  %v399 = vrot.slane %v358, 2
  %vm400 = vcmask 1046534
  %v401 = vsel %vm400, %v399, %v398
  %v402 = vrot.slane %v359, 1
  %vm403 = vcmask 1047559
  %v404 = vsel %vm403, %v402, %v401
  %v405 = vrot.slane %v361, 7
  %v406 = vsel %vm385, %v405, %v360
  %v407 = vrot.slane %v362, 6
  %v408 = vsel %vm388, %v407, %v406
  %v409 = vrot.slane %v363, 5
  %v410 = vsel %vm391, %v409, %v408
  %v411 = vrot.slane %v364, 4
  %v412 = vsel %vm394, %v411, %v410
  %v413 = vrot.slane %v365, 3
  %v414 = vsel %vm397, %v413, %v412
  %v415 = vrot.slane %v366, 2
  %v416 = vsel %vm400, %v415, %v414
  %v417 = vrot.slane %v367, 1
  %v418 = vsel %vm403, %v417, %v416
  %v419 = vrot.slane %v369, 7
  %v420 = vsel %vm385, %v419, %v368
  %v421 = vrot.slane %v370, 6
  %v422 = vsel %vm388, %v421, %v420
  %v423 = vrot.slane %v371, 5
  %v424 = vsel %vm391, %v423, %v422
  %v425 = vrot.slane %v372, 4
  %v426 = vsel %vm394, %v425, %v424
  %v427 = vrot.slane %v373, 3
  %v428 = vsel %vm397, %v427, %v426
  %v429 = vrot.slane %v374, 2
  %v430 = vsel %vm400, %v429, %v428
  %v431 = vrot.slane %v375, 1
  %v432 = vsel %vm403, %v431, %v430
  %v433 = vrot.slane %v377, 7
  %v434 = vsel %vm385, %v433, %v376
  %v435 = vrot.slane %v378, 6
  %v436 = vsel %vm388, %v435, %v434
  %v437 = vrot.slane %v379, 5
  %v438 = vsel %vm391, %v437, %v436
  %v439 = vrot.slane %v380, 4
  %v440 = vsel %vm394, %v439, %v438
  %v441 = vrot.slane %v381, 3
  %v442 = vsel %vm397, %v441, %v440
  %v443 = vrot.slane %v382, 2
  %v444 = vsel %vm400, %v443, %v442
  %v445 = vrot.slane %v383, 1
  %v446 = vsel %vm403, %v445, %v444
  %v447 = vpack.c.b16 %v418, %v404
  %v448 = vpack.c.b16 %v446, %v432
  %v457 = vunpack.c.l.b16 %v28
  %v458 = vunpack.c.l.b16 %v29
  %v459 = vunpack.c.l.b16 %v30
  %v460 = vunpack.c.l.b16 %v31
  %v461 = vunpack.c.l.b16 %v32
  %v462 = vunpack.c.l.b16 %v33
  %v463 = vunpack.c.l.b16 %v34
  %v464 = vunpack.c.l.b16 %v35
  %v465 = vpack.c.b16 %v458, %v457
  %v466 = vpack.c.b16 %v460, %v459
  %v467 = vpack.c.b16 %v462, %v461
  %v468 = vpack.c.b16 %v464, %v463
  %v474 = vsel %vm72, %v447, 0
  %v477 = vsel %vm72, %v448, 0
  %479 = vmatprep.subr.bf16.mxu0 0
  %480 = vmatpush1.bf16.msra.mxu0 0
  %481 = vmatprep.subr.bf16.mxu0 0
  %482 = vmatpush1.bf16.msra.mxu0 0
  %483 = vmatprep.subr.bf16.mxu0 0
  %484 = vmatpush1.bf16.msra.mxu0 0
  %485 = vmatprep.subr.bf16.mxu0 0
  %486 = vmatpush1.bf16.msra.mxu0 0
  %487 = vmatprep.subr.bf16.mxu0 0
  %488 = vmatpush1.bf16.msra.mxu0 %v468
  %489 = vmatprep.subr.bf16.mxu0 0
  %490 = vmatpush1.bf16.msra.mxu0 %v467
  %491 = vmatprep.subr.bf16.mxu0 0
  %492 = vmatpush1.bf16.msra.mxu0 %v466
  %493 = vmatprep.subr.bf16.mxu0 0
  %494 = vmatpush1.bf16.msra.mxu0 %v465
  %495 = vmatprep.subr.bf16.mxu0 0
  %496 = vmatpush2.bf16.msra.mxu0 0
  %497 = vmatprep.subr.bf16.mxu0 0
  %498 = vmatpush2.bf16.msra.mxu0 0
  %499 = vmatprep.subr.bf16.mxu0 0
  %500 = vmatpush2.bf16.msra.mxu0 0
  %501 = vmatprep.subr.bf16.mxu0 0
  %502 = vmatpush2.bf16.msra.mxu0 0
  %503 = vmatprep.subr.bf16.mxu0 0
  %504 = vmatpush2.bf16.msra.mxu0 0
  %505 = vmatprep.subr.bf16.mxu0 0
  %506 = vmatpush2.bf16.msra.mxu0 0
  %507 = vmatprep.subr.bf16.mxu0 0
  %508 = vmatpush2.bf16.msra.mxu0 0
  %509 = vmatprep.subr.bf16.mxu0 0
  %510 = vmatpush2.bf16.msra.mxu0 0
  %511 = vmatprep.mubr.bf16.mxu0 0
  %512 = vmatmul.mubr.bf16.gmra.mxu0 %v474
  %v513 = vpop.f32.mrf.mxu0
  %v514 = vadd.f32 %v114, %v513
  %v515 = vpop.f32.mrf.mxu0
  %v516 = vpop.f32.mrf.mxu0
  %v517 = vadd.f32 %v117, %v516
  %v518 = vpop.f32.mrf.mxu0
  %519 = vmatprep.mubr.bf16.mxu0 0
  %520 = vmatmul.mubr.bf16.gmra.mxu0 %v477
  %v521 = vpop.f32.mrf.mxu0
  %v522 = vadd.f32 %v122, %v521
  %v523 = vpop.f32.mrf.mxu0
  %v524 = vpop.f32.mrf.mxu0
  %v525 = vadd.f32 %v125, %v524
  %v526 = vpop.f32.mrf.mxu0
  %527 = vdwg.mxu0
  %v529 = vlaneseq
  %v530 = vshrl.u32 %v529, 7
  %v531 = vsub.s32 0, %v530
  %v532 = vrot.slane %v44, %v531
  %v534 = vmul.f32 %v514, %v532
  %v535 = vmul.f32 %v517, %v532
  %v536 = vmul.f32 %v522, %v532
  %v537 = vmul.f32 %v525, %v532
  %v539 = vlaneseq
  %v540 = vshrl.u32 %v539, 7
  %v541 = vsub.s32 0, %v540
  %v542 = vrot.slane %v45, %v541
  %v544 = vadd.f32 %v534, %v542
  %v545 = vadd.f32 %v535, %v542
  %v546 = vadd.f32 %v536, %v542
  %v547 = vadd.f32 %v537, %v542
  %vm548 = vcmp.ge.f32.partialorder %v544, 0.0
  %vm549 = vcmp.ge.f32.partialorder %v545, 0.0
  %vm550 = vcmp.ge.f32.partialorder %v546, 0.0
  %vm551 = vcmp.ge.f32.partialorder %v547, 0.0
  %v552 = vmul.f32 %v544, 0.2
  %v553 = vmul.f32 %v545, 0.2
  %v554 = vmul.f32 %v546, 0.2
  %v555 = vmul.f32 %v547, 0.2
  %v556 = vsel %vm548, %v544, %v552
  %v557 = vsel %vm549, %v545, %v553
  %v558 = vsel %vm550, %v546, %v554
  %v559 = vsel %vm551, %v547, %v555
  %v560 = vrot.slane %v24, 7
  %v561 = vrot.slane %v196, 7
  %v562 = vrot.slane %v25, 7
  %v563 = vrot.slane %v197, 7
  %v564 = vrot.slane %v26, 7
  %v565 = vrot.slane %v198, 7
  %v566 = vrot.slane %v27, 7
  %v567 = vrot.slane %v199, 7
  %v576 = vsub.f32 %v160, %v560
  %v577 = vsub.f32 %v161, %v24
  %v578 = vsub.f32 %v162, %v200
  %v579 = vsub.f32 %v163, %v201
  %v580 = vsub.f32 %v164, %v561
  %v581 = vsub.f32 %v165, %v196
  %v582 = vsub.f32 %v166, %v203
  %v583 = vsub.f32 %v167, %v204
  %v584 = vsub.f32 %v168, %v562
  %v585 = vsub.f32 %v169, %v25
  %v586 = vsub.f32 %v170, %v206
  %v587 = vsub.f32 %v171, %v207
  %v588 = vsub.f32 %v172, %v563
  %v589 = vsub.f32 %v173, %v197
  %v590 = vsub.f32 %v174, %v209
  %v591 = vsub.f32 %v175, %v210
  %v592 = vsub.f32 %v176, %v564
  %v593 = vsub.f32 %v177, %v26
  %v594 = vsub.f32 %v178, %v212
  %v595 = vsub.f32 %v179, %v213
  %v596 = vsub.f32 %v180, %v565
  %v597 = vsub.f32 %v181, %v198
  %v598 = vsub.f32 %v182, %v215
  %v599 = vsub.f32 %v183, %v216
  %v600 = vsub.f32 %v184, %v566
  %v601 = vsub.f32 %v185, %v27
  %v602 = vsub.f32 %v186, %v218
  %v603 = vsub.f32 %v187, %v219
  %v604 = vsub.f32 %v188, %v567
  %v605 = vsub.f32 %v189, %v199
  %v606 = vsub.f32 %v190, %v221
  %v607 = vsub.f32 %v191, %v222
  %v608 = vpack.c.bf16 %v576, %v576
  %v609 = vpack.c.bf16 %v577, %v577
  %v610 = vpack.c.bf16 %v578, %v578
  %v611 = vpack.c.bf16 %v579, %v579
  %v612 = vpack.c.bf16 %v580, %v580
  %v613 = vpack.c.bf16 %v581, %v581
  %v614 = vpack.c.bf16 %v582, %v582
  %v615 = vpack.c.bf16 %v583, %v583
  %v616 = vpack.c.bf16 %v584, %v584
  %v617 = vpack.c.bf16 %v585, %v585
  %v618 = vpack.c.bf16 %v586, %v586
  %v619 = vpack.c.bf16 %v587, %v587
  %v620 = vpack.c.bf16 %v588, %v588
  %v621 = vpack.c.bf16 %v589, %v589
  %v622 = vpack.c.bf16 %v590, %v590
  %v623 = vpack.c.bf16 %v591, %v591
  %v624 = vpack.c.bf16 %v592, %v592
  %v625 = vpack.c.bf16 %v593, %v593
  %v626 = vpack.c.bf16 %v594, %v594
  %v627 = vpack.c.bf16 %v595, %v595
  %v628 = vpack.c.bf16 %v596, %v596
  %v629 = vpack.c.bf16 %v597, %v597
  %v630 = vpack.c.bf16 %v598, %v598
  %v631 = vpack.c.bf16 %v599, %v599
  %v632 = vpack.c.bf16 %v600, %v600
  %v633 = vpack.c.bf16 %v601, %v601
  %v634 = vpack.c.bf16 %v602, %v602
  %v635 = vpack.c.bf16 %v603, %v603
  %v636 = vpack.c.bf16 %v604, %v604
  %v637 = vpack.c.bf16 %v605, %v605
  %v638 = vpack.c.bf16 %v606, %v606
  %v639 = vpack.c.bf16 %v607, %v607
  %v672 = vunpack.c.l.b16 %v608
  %v673 = vunpack.c.l.b16 %v609
  %v674 = vunpack.c.l.b16 %v610
  %v675 = vunpack.c.l.b16 %v611
  %v676 = vunpack.c.l.b16 %v612
  %v677 = vunpack.c.l.b16 %v613
  %v678 = vunpack.c.l.b16 %v614
  %v679 = vunpack.c.l.b16 %v615
  %v680 = vunpack.c.l.b16 %v616
  %v681 = vunpack.c.l.b16 %v617
  %v682 = vunpack.c.l.b16 %v618
  %v683 = vunpack.c.l.b16 %v619
  %v684 = vunpack.c.l.b16 %v620
  %v685 = vunpack.c.l.b16 %v621
  %v686 = vunpack.c.l.b16 %v622
  %v687 = vunpack.c.l.b16 %v623
  %v688 = vunpack.c.l.b16 %v624
  %v689 = vunpack.c.l.b16 %v625
  %v690 = vunpack.c.l.b16 %v626
  %v691 = vunpack.c.l.b16 %v627
  %v692 = vunpack.c.l.b16 %v628
  %v693 = vunpack.c.l.b16 %v629
  %v694 = vunpack.c.l.b16 %v630
  %v695 = vunpack.c.l.b16 %v631
  %v696 = vunpack.c.l.b16 %v632
  %v697 = vunpack.c.l.b16 %v633
  %v698 = vunpack.c.l.b16 %v634
  %v699 = vunpack.c.l.b16 %v635
  %v700 = vunpack.c.l.b16 %v636
  %v701 = vunpack.c.l.b16 %v637
  %v702 = vunpack.c.l.b16 %v638
  %v703 = vunpack.c.l.b16 %v639
  %v704 = vrot.slane %v672, 1
  %v705 = vsel %vm385, %v673, %v704
  %v706 = vrot.slane %v674, 7
  %v707 = vsel %vm388, %v706, %v705
  %v708 = vrot.slane %v675, 6
  %v709 = vsel %vm391, %v708, %v707
  %v710 = vrot.slane %v676, 5
  %v711 = vsel %vm394, %v710, %v709
  %v712 = vrot.slane %v677, 4
  %v713 = vsel %vm397, %v712, %v711
  %v714 = vrot.slane %v678, 3
  %v715 = vsel %vm400, %v714, %v713
  %v716 = vrot.slane %v679, 2
  %v717 = vsel %vm403, %v716, %v715
  %v718 = vrot.slane %v680, 1
  %v719 = vsel %vm385, %v681, %v718
  %v720 = vrot.slane %v682, 7
  %v721 = vsel %vm388, %v720, %v719
  %v722 = vrot.slane %v683, 6
  %v723 = vsel %vm391, %v722, %v721
  %v724 = vrot.slane %v684, 5
  %v725 = vsel %vm394, %v724, %v723
  %v726 = vrot.slane %v685, 4
  %v727 = vsel %vm397, %v726, %v725
  %v728 = vrot.slane %v686, 3
  %v729 = vsel %vm400, %v728, %v727
  %v730 = vrot.slane %v687, 2
  %v731 = vsel %vm403, %v730, %v729
  %v732 = vrot.slane %v688, 1
  %v733 = vsel %vm385, %v689, %v732
  %v734 = vrot.slane %v690, 7
  %v735 = vsel %vm388, %v734, %v733
  %v736 = vrot.slane %v691, 6
  %v737 = vsel %vm391, %v736, %v735
  %v738 = vrot.slane %v692, 5
  %v739 = vsel %vm394, %v738, %v737
  %v740 = vrot.slane %v693, 4
  %v741 = vsel %vm397, %v740, %v739
  %v742 = vrot.slane %v694, 3
  %v743 = vsel %vm400, %v742, %v741
  %v744 = vrot.slane %v695, 2
  %v745 = vsel %vm403, %v744, %v743
  %v746 = vrot.slane %v696, 1
  %v747 = vsel %vm385, %v697, %v746
  %v748 = vrot.slane %v698, 7
  %v749 = vsel %vm388, %v748, %v747
  %v750 = vrot.slane %v699, 6
  %v751 = vsel %vm391, %v750, %v749
  %v752 = vrot.slane %v700, 5
  %v753 = vsel %vm394, %v752, %v751
  %v754 = vrot.slane %v701, 4
  %v755 = vsel %vm397, %v754, %v753
  %v756 = vrot.slane %v702, 3
  %v757 = vsel %vm400, %v756, %v755
  %v758 = vrot.slane %v703, 2
  %v759 = vsel %vm403, %v758, %v757
  %v760 = vpack.c.b16 %v731, %v717
  %v761 = vpack.c.b16 %v759, %v745
  %v763 = vsel %vm72, %v760, 0
  %v766 = vsel %vm72, %v761, 0
  %768 = vmatprep.subr.bf16.mxu0 0
  %769 = vmatpush1.bf16.msra.mxu0 0
  %770 = vmatprep.subr.bf16.mxu0 0
  %771 = vmatpush1.bf16.msra.mxu0 0
  %772 = vmatprep.subr.bf16.mxu0 0
  %773 = vmatpush1.bf16.msra.mxu0 0
  %774 = vmatprep.subr.bf16.mxu0 0
  %775 = vmatpush1.bf16.msra.mxu0 0
  %776 = vmatprep.subr.bf16.mxu0 0
  %777 = vmatpush1.bf16.msra.mxu0 %v468
  %778 = vmatprep.subr.bf16.mxu0 0
  %779 = vmatpush1.bf16.msra.mxu0 %v467
  %780 = vmatprep.subr.bf16.mxu0 0
  %781 = vmatpush1.bf16.msra.mxu0 %v466
  %782 = vmatprep.subr.bf16.mxu0 0
  %783 = vmatpush1.bf16.msra.mxu0 %v465
  %784 = vmatprep.subr.bf16.mxu0 0
  %785 = vmatpush2.bf16.msra.mxu0 0
  %786 = vmatprep.subr.bf16.mxu0 0
  %787 = vmatpush2.bf16.msra.mxu0 0
  %788 = vmatprep.subr.bf16.mxu0 0
  %789 = vmatpush2.bf16.msra.mxu0 0
  %790 = vmatprep.subr.bf16.mxu0 0
  %791 = vmatpush2.bf16.msra.mxu0 0
  %792 = vmatprep.subr.bf16.mxu0 0
  %793 = vmatpush2.bf16.msra.mxu0 0
  %794 = vmatprep.subr.bf16.mxu0 0
  %795 = vmatpush2.bf16.msra.mxu0 0
  %796 = vmatprep.subr.bf16.mxu0 0
  %797 = vmatpush2.bf16.msra.mxu0 0
  %798 = vmatprep.subr.bf16.mxu0 0
  %799 = vmatpush2.bf16.msra.mxu0 0
  %800 = vmatprep.mubr.bf16.mxu0 0
  %801 = vmatmul.mubr.bf16.gmra.mxu0 %v763
  %v802 = vpop.f32.mrf.mxu0
  %v803 = vadd.f32 %v114, %v802
  %v804 = vpop.f32.mrf.mxu0
  %v805 = vpop.f32.mrf.mxu0
  %v806 = vadd.f32 %v117, %v805
  %v807 = vpop.f32.mrf.mxu0
  %808 = vmatprep.mubr.bf16.mxu0 0
  %809 = vmatmul.mubr.bf16.gmra.mxu0 %v766
  %v810 = vpop.f32.mrf.mxu0
  %v811 = vadd.f32 %v122, %v810
  %v812 = vpop.f32.mrf.mxu0
  %v813 = vpop.f32.mrf.mxu0
  %v814 = vadd.f32 %v125, %v813
  %v815 = vpop.f32.mrf.mxu0
  %816 = vdwg.mxu0
  %v817 = vmul.f32 %v803, %v532
  %v818 = vmul.f32 %v806, %v532
  %v819 = vmul.f32 %v811, %v532
  %v820 = vmul.f32 %v814, %v532
  %v821 = vadd.f32 %v817, %v542
  %v822 = vadd.f32 %v818, %v542
  %v823 = vadd.f32 %v819, %v542
  %v824 = vadd.f32 %v820, %v542
  %vm825 = vcmp.ge.f32.partialorder %v821, 0.0
  %vm826 = vcmp.ge.f32.partialorder %v822, 0.0
  %vm827 = vcmp.ge.f32.partialorder %v823, 0.0
  %vm828 = vcmp.ge.f32.partialorder %v824, 0.0
  %v829 = vmul.f32 %v821, 0.2
  %v830 = vmul.f32 %v822, 0.2
  %v831 = vmul.f32 %v823, 0.2
  %v832 = vmul.f32 %v824, 0.2
  %v833 = vsel %vm825, %v821, %v829
  %v834 = vsel %vm826, %v822, %v830
  %v835 = vsel %vm827, %v823, %v831
  %v836 = vsel %vm828, %v824, %v832
  %v837 = vmax.f32 %v556, %v833
  %v838 = vmax.f32 %v557, %v834
  %v839 = vmax.f32 %v558, %v835
  %v840 = vmax.f32 %v559, %v836
  %v841 = vrot.slane %v24, 6
  %v842 = vrot.slane %v196, 6
  %v843 = vrot.slane %v25, 6
  %v844 = vrot.slane %v197, 6
  %v845 = vrot.slane %v26, 6
  %v846 = vrot.slane %v198, 6
  %v847 = vrot.slane %v27, 6
  %v848 = vrot.slane %v199, 6
  %v857 = vsub.f32 %v160, %v841
  %v858 = vsub.f32 %v161, %v560
  %v859 = vsub.f32 %v162, %v24
  %v860 = vsub.f32 %v163, %v200
  %v861 = vsub.f32 %v164, %v842
  %v862 = vsub.f32 %v165, %v561
  %v863 = vsub.f32 %v166, %v196
  %v864 = vsub.f32 %v167, %v203
  %v865 = vsub.f32 %v168, %v843
  %v866 = vsub.f32 %v169, %v562
  %v867 = vsub.f32 %v170, %v25
  %v868 = vsub.f32 %v171, %v206
  %v869 = vsub.f32 %v172, %v844
  %v870 = vsub.f32 %v173, %v563
  %v871 = vsub.f32 %v174, %v197
  %v872 = vsub.f32 %v175, %v209
  %v873 = vsub.f32 %v176, %v845
  %v874 = vsub.f32 %v177, %v564
  %v875 = vsub.f32 %v178, %v26
  %v876 = vsub.f32 %v179, %v212
  %v877 = vsub.f32 %v180, %v846
  %v878 = vsub.f32 %v181, %v565
  %v879 = vsub.f32 %v182, %v198
  %v880 = vsub.f32 %v183, %v215
  %v881 = vsub.f32 %v184, %v847
  %v882 = vsub.f32 %v185, %v566
  %v883 = vsub.f32 %v186, %v27
  %v884 = vsub.f32 %v187, %v218
  %v885 = vsub.f32 %v188, %v848
  %v886 = vsub.f32 %v189, %v567
  %v887 = vsub.f32 %v190, %v199
  %v888 = vsub.f32 %v191, %v221
  %v889 = vpack.c.bf16 %v857, %v857
  %v890 = vpack.c.bf16 %v858, %v858
  %v891 = vpack.c.bf16 %v859, %v859
  %v892 = vpack.c.bf16 %v860, %v860
  %v893 = vpack.c.bf16 %v861, %v861
  %v894 = vpack.c.bf16 %v862, %v862
  %v895 = vpack.c.bf16 %v863, %v863
  %v896 = vpack.c.bf16 %v864, %v864
  %v897 = vpack.c.bf16 %v865, %v865
  %v898 = vpack.c.bf16 %v866, %v866
  %v899 = vpack.c.bf16 %v867, %v867
  %v900 = vpack.c.bf16 %v868, %v868
  %v901 = vpack.c.bf16 %v869, %v869
  %v902 = vpack.c.bf16 %v870, %v870
  %v903 = vpack.c.bf16 %v871, %v871
  %v904 = vpack.c.bf16 %v872, %v872
  %v905 = vpack.c.bf16 %v873, %v873
  %v906 = vpack.c.bf16 %v874, %v874
  %v907 = vpack.c.bf16 %v875, %v875
  %v908 = vpack.c.bf16 %v876, %v876
  %v909 = vpack.c.bf16 %v877, %v877
  %v910 = vpack.c.bf16 %v878, %v878
  %v911 = vpack.c.bf16 %v879, %v879
  %v912 = vpack.c.bf16 %v880, %v880
  %v913 = vpack.c.bf16 %v881, %v881
  %v914 = vpack.c.bf16 %v882, %v882
  %v915 = vpack.c.bf16 %v883, %v883
  %v916 = vpack.c.bf16 %v884, %v884
  %v917 = vpack.c.bf16 %v885, %v885
  %v918 = vpack.c.bf16 %v886, %v886
  %v919 = vpack.c.bf16 %v887, %v887
  %v920 = vpack.c.bf16 %v888, %v888
  %v953 = vunpack.c.l.b16 %v889
  %v954 = vunpack.c.l.b16 %v890
  %v955 = vunpack.c.l.b16 %v891
  %v956 = vunpack.c.l.b16 %v892
  %v957 = vunpack.c.l.b16 %v893
  %v958 = vunpack.c.l.b16 %v894
  %v959 = vunpack.c.l.b16 %v895
  %v960 = vunpack.c.l.b16 %v896
  %v961 = vunpack.c.l.b16 %v897
  %v962 = vunpack.c.l.b16 %v898
  %v963 = vunpack.c.l.b16 %v899
  %v964 = vunpack.c.l.b16 %v900
  %v965 = vunpack.c.l.b16 %v901
  %v966 = vunpack.c.l.b16 %v902
  %v967 = vunpack.c.l.b16 %v903
  %v968 = vunpack.c.l.b16 %v904
  %v969 = vunpack.c.l.b16 %v905
  %v970 = vunpack.c.l.b16 %v906
  %v971 = vunpack.c.l.b16 %v907
  %v972 = vunpack.c.l.b16 %v908
  %v973 = vunpack.c.l.b16 %v909
  %v974 = vunpack.c.l.b16 %v910
  %v975 = vunpack.c.l.b16 %v911
  %v976 = vunpack.c.l.b16 %v912
  %v977 = vunpack.c.l.b16 %v913
  %v978 = vunpack.c.l.b16 %v914
  %v979 = vunpack.c.l.b16 %v915
  %v980 = vunpack.c.l.b16 %v916
  %v981 = vunpack.c.l.b16 %v917
  %v982 = vunpack.c.l.b16 %v918
  %v983 = vunpack.c.l.b16 %v919
  %v984 = vunpack.c.l.b16 %v920
  %v985 = vrot.slane %v953, 2
  %v986 = vrot.slane %v954, 1
  %v987 = vsel %vm385, %v986, %v985
  %v988 = vsel %vm388, %v955, %v987
  %v989 = vrot.slane %v956, 7
  %v990 = vsel %vm391, %v989, %v988
  %v991 = vrot.slane %v957, 6
  %v992 = vsel %vm394, %v991, %v990
  %v993 = vrot.slane %v958, 5
  %v994 = vsel %vm397, %v993, %v992
  %v995 = vrot.slane %v959, 4
  %v996 = vsel %vm400, %v995, %v994
  %v997 = vrot.slane %v960, 3
  %v998 = vsel %vm403, %v997, %v996
  %v999 = vrot.slane %v961, 2
  %v1000 = vrot.slane %v962, 1
  %v1001 = vsel %vm385, %v1000, %v999
  %v1002 = vsel %vm388, %v963, %v1001
  %v1003 = vrot.slane %v964, 7
  %v1004 = vsel %vm391, %v1003, %v1002
  %v1005 = vrot.slane %v965, 6
  %v1006 = vsel %vm394, %v1005, %v1004
  %v1007 = vrot.slane %v966, 5
  %v1008 = vsel %vm397, %v1007, %v1006
  %v1009 = vrot.slane %v967, 4
  %v1010 = vsel %vm400, %v1009, %v1008
  %v1011 = vrot.slane %v968, 3
  %v1012 = vsel %vm403, %v1011, %v1010
  %v1013 = vrot.slane %v969, 2
  %v1014 = vrot.slane %v970, 1
  %v1015 = vsel %vm385, %v1014, %v1013
  %v1016 = vsel %vm388, %v971, %v1015
  %v1017 = vrot.slane %v972, 7
  %v1018 = vsel %vm391, %v1017, %v1016
  %v1019 = vrot.slane %v973, 6
  %v1020 = vsel %vm394, %v1019, %v1018
  %v1021 = vrot.slane %v974, 5
  %v1022 = vsel %vm397, %v1021, %v1020
  %v1023 = vrot.slane %v975, 4
  %v1024 = vsel %vm400, %v1023, %v1022
  %v1025 = vrot.slane %v976, 3
  %v1026 = vsel %vm403, %v1025, %v1024
  %v1027 = vrot.slane %v977, 2
  %v1028 = vrot.slane %v978, 1
  %v1029 = vsel %vm385, %v1028, %v1027
  %v1030 = vsel %vm388, %v979, %v1029
  %v1031 = vrot.slane %v980, 7
  %v1032 = vsel %vm391, %v1031, %v1030
  %v1033 = vrot.slane %v981, 6
  %v1034 = vsel %vm394, %v1033, %v1032
  %v1035 = vrot.slane %v982, 5
  %v1036 = vsel %vm397, %v1035, %v1034
  %v1037 = vrot.slane %v983, 4
  %v1038 = vsel %vm400, %v1037, %v1036
  %v1039 = vrot.slane %v984, 3
  %v1040 = vsel %vm403, %v1039, %v1038
  %v1041 = vpack.c.b16 %v1012, %v998
  %v1042 = vpack.c.b16 %v1040, %v1026
  %v1044 = vsel %vm72, %v1041, 0
  %v1047 = vsel %vm72, %v1042, 0
  %1049 = vmatprep.subr.bf16.mxu0 0
  %1050 = vmatpush1.bf16.msra.mxu0 0
  %1051 = vmatprep.subr.bf16.mxu0 0
  %1052 = vmatpush1.bf16.msra.mxu0 0
  %1053 = vmatprep.subr.bf16.mxu0 0
  %1054 = vmatpush1.bf16.msra.mxu0 0
  %1055 = vmatprep.subr.bf16.mxu0 0
  %1056 = vmatpush1.bf16.msra.mxu0 0
  %1057 = vmatprep.subr.bf16.mxu0 0
  %1058 = vmatpush1.bf16.msra.mxu0 %v468
  %1059 = vmatprep.subr.bf16.mxu0 0
  %1060 = vmatpush1.bf16.msra.mxu0 %v467
  %1061 = vmatprep.subr.bf16.mxu0 0
  %1062 = vmatpush1.bf16.msra.mxu0 %v466
  %1063 = vmatprep.subr.bf16.mxu0 0
  %1064 = vmatpush1.bf16.msra.mxu0 %v465
  %1065 = vmatprep.subr.bf16.mxu0 0
  %1066 = vmatpush2.bf16.msra.mxu0 0
  %1067 = vmatprep.subr.bf16.mxu0 0
  %1068 = vmatpush2.bf16.msra.mxu0 0
  %1069 = vmatprep.subr.bf16.mxu0 0
  %1070 = vmatpush2.bf16.msra.mxu0 0
  %1071 = vmatprep.subr.bf16.mxu0 0
  %1072 = vmatpush2.bf16.msra.mxu0 0
  %1073 = vmatprep.subr.bf16.mxu0 0
  %1074 = vmatpush2.bf16.msra.mxu0 0
  %1075 = vmatprep.subr.bf16.mxu0 0
  %1076 = vmatpush2.bf16.msra.mxu0 0
  %1077 = vmatprep.subr.bf16.mxu0 0
  %1078 = vmatpush2.bf16.msra.mxu0 0
  %1079 = vmatprep.subr.bf16.mxu0 0
  %1080 = vmatpush2.bf16.msra.mxu0 0
  %1081 = vmatprep.mubr.bf16.mxu0 0
  %1082 = vmatmul.mubr.bf16.gmra.mxu0 %v1044
  %v1083 = vpop.f32.mrf.mxu0
  %v1084 = vadd.f32 %v114, %v1083
  %v1085 = vpop.f32.mrf.mxu0
  %v1086 = vpop.f32.mrf.mxu0
  %v1087 = vadd.f32 %v117, %v1086
  %v1088 = vpop.f32.mrf.mxu0
  %1089 = vmatprep.mubr.bf16.mxu0 0
  %1090 = vmatmul.mubr.bf16.gmra.mxu0 %v1047
  %v1091 = vpop.f32.mrf.mxu0
  %v1092 = vadd.f32 %v122, %v1091
  %v1093 = vpop.f32.mrf.mxu0
  %v1094 = vpop.f32.mrf.mxu0
  %v1095 = vadd.f32 %v125, %v1094
  %v1096 = vpop.f32.mrf.mxu0
  %1097 = vdwg.mxu0
  %v1098 = vmul.f32 %v1084, %v532
  %v1099 = vmul.f32 %v1087, %v532
  %v1100 = vmul.f32 %v1092, %v532
  %v1101 = vmul.f32 %v1095, %v532
  %v1102 = vadd.f32 %v1098, %v542
  %v1103 = vadd.f32 %v1099, %v542
  %v1104 = vadd.f32 %v1100, %v542
  %v1105 = vadd.f32 %v1101, %v542
  %vm1106 = vcmp.ge.f32.partialorder %v1102, 0.0
  %vm1107 = vcmp.ge.f32.partialorder %v1103, 0.0
  %vm1108 = vcmp.ge.f32.partialorder %v1104, 0.0
  %vm1109 = vcmp.ge.f32.partialorder %v1105, 0.0
  %v1110 = vmul.f32 %v1102, 0.2
  %v1111 = vmul.f32 %v1103, 0.2
  %v1112 = vmul.f32 %v1104, 0.2
  %v1113 = vmul.f32 %v1105, 0.2
  %v1114 = vsel %vm1106, %v1102, %v1110
  %v1115 = vsel %vm1107, %v1103, %v1111
  %v1116 = vsel %vm1108, %v1104, %v1112
  %v1117 = vsel %vm1109, %v1105, %v1113
  %v1118 = vmax.f32 %v837, %v1114
  %v1119 = vmax.f32 %v838, %v1115
  %v1120 = vmax.f32 %v839, %v1116
  %v1121 = vmax.f32 %v840, %v1117
  %v1122 = vrot.slane %v24, 5
  %v1123 = vrot.slane %v196, 5
  %v1124 = vrot.slane %v25, 5
  %v1125 = vrot.slane %v197, 5
  %v1126 = vrot.slane %v26, 5
  %v1127 = vrot.slane %v198, 5
  %v1128 = vrot.slane %v27, 5
  %v1129 = vrot.slane %v199, 5
  %v1138 = vsub.f32 %v160, %v1122
  %v1139 = vsub.f32 %v161, %v841
  %v1140 = vsub.f32 %v162, %v560
  %v1141 = vsub.f32 %v163, %v24
  %v1142 = vsub.f32 %v164, %v1123
  %v1143 = vsub.f32 %v165, %v842
  %v1144 = vsub.f32 %v166, %v561
  %v1145 = vsub.f32 %v167, %v196
  %v1146 = vsub.f32 %v168, %v1124
  %v1147 = vsub.f32 %v169, %v843
  %v1148 = vsub.f32 %v170, %v562
  %v1149 = vsub.f32 %v171, %v25
  %v1150 = vsub.f32 %v172, %v1125
  %v1151 = vsub.f32 %v173, %v844
  %v1152 = vsub.f32 %v174, %v563
  %v1153 = vsub.f32 %v175, %v197
  %v1154 = vsub.f32 %v176, %v1126
  %v1155 = vsub.f32 %v177, %v845
  %v1156 = vsub.f32 %v178, %v564
  %v1157 = vsub.f32 %v179, %v26
  %v1158 = vsub.f32 %v180, %v1127
  %v1159 = vsub.f32 %v181, %v846
  %v1160 = vsub.f32 %v182, %v565
  %v1161 = vsub.f32 %v183, %v198
  %v1162 = vsub.f32 %v184, %v1128
  %v1163 = vsub.f32 %v185, %v847
  %v1164 = vsub.f32 %v186, %v566
  %v1165 = vsub.f32 %v187, %v27
  %v1166 = vsub.f32 %v188, %v1129
  %v1167 = vsub.f32 %v189, %v848
  %v1168 = vsub.f32 %v190, %v567
  %v1169 = vsub.f32 %v191, %v199
  %v1170 = vpack.c.bf16 %v1138, %v1138
  %v1171 = vpack.c.bf16 %v1139, %v1139
  %v1172 = vpack.c.bf16 %v1140, %v1140
  %v1173 = vpack.c.bf16 %v1141, %v1141
  %v1174 = vpack.c.bf16 %v1142, %v1142
  %v1175 = vpack.c.bf16 %v1143, %v1143
  %v1176 = vpack.c.bf16 %v1144, %v1144
  %v1177 = vpack.c.bf16 %v1145, %v1145
  %v1178 = vpack.c.bf16 %v1146, %v1146
  %v1179 = vpack.c.bf16 %v1147, %v1147
  %v1180 = vpack.c.bf16 %v1148, %v1148
  %v1181 = vpack.c.bf16 %v1149, %v1149
  %v1182 = vpack.c.bf16 %v1150, %v1150
  %v1183 = vpack.c.bf16 %v1151, %v1151
  %v1184 = vpack.c.bf16 %v1152, %v1152
  %v1185 = vpack.c.bf16 %v1153, %v1153
  %v1186 = vpack.c.bf16 %v1154, %v1154
  %v1187 = vpack.c.bf16 %v1155, %v1155
  %v1188 = vpack.c.bf16 %v1156, %v1156
  %v1189 = vpack.c.bf16 %v1157, %v1157
  %v1190 = vpack.c.bf16 %v1158, %v1158
  %v1191 = vpack.c.bf16 %v1159, %v1159
  %v1192 = vpack.c.bf16 %v1160, %v1160
  %v1193 = vpack.c.bf16 %v1161, %v1161
  %v1194 = vpack.c.bf16 %v1162, %v1162
  %v1195 = vpack.c.bf16 %v1163, %v1163
  %v1196 = vpack.c.bf16 %v1164, %v1164
  %v1197 = vpack.c.bf16 %v1165, %v1165
  %v1198 = vpack.c.bf16 %v1166, %v1166
  %v1199 = vpack.c.bf16 %v1167, %v1167
  %v1200 = vpack.c.bf16 %v1168, %v1168
  %v1201 = vpack.c.bf16 %v1169, %v1169
  %v1234 = vunpack.c.l.b16 %v1170
  %v1235 = vunpack.c.l.b16 %v1171
  %v1236 = vunpack.c.l.b16 %v1172
  %v1237 = vunpack.c.l.b16 %v1173
  %v1238 = vunpack.c.l.b16 %v1174
  %v1239 = vunpack.c.l.b16 %v1175
  %v1240 = vunpack.c.l.b16 %v1176
  %v1241 = vunpack.c.l.b16 %v1177
  %v1242 = vunpack.c.l.b16 %v1178
  %v1243 = vunpack.c.l.b16 %v1179
  %v1244 = vunpack.c.l.b16 %v1180
  %v1245 = vunpack.c.l.b16 %v1181
  %v1246 = vunpack.c.l.b16 %v1182
  %v1247 = vunpack.c.l.b16 %v1183
  %v1248 = vunpack.c.l.b16 %v1184
  %v1249 = vunpack.c.l.b16 %v1185
  %v1250 = vunpack.c.l.b16 %v1186
  %v1251 = vunpack.c.l.b16 %v1187
  %v1252 = vunpack.c.l.b16 %v1188
  %v1253 = vunpack.c.l.b16 %v1189
  %v1254 = vunpack.c.l.b16 %v1190
  %v1255 = vunpack.c.l.b16 %v1191
  %v1256 = vunpack.c.l.b16 %v1192
  %v1257 = vunpack.c.l.b16 %v1193
  %v1258 = vunpack.c.l.b16 %v1194
  %v1259 = vunpack.c.l.b16 %v1195
  %v1260 = vunpack.c.l.b16 %v1196
  %v1261 = vunpack.c.l.b16 %v1197
  %v1262 = vunpack.c.l.b16 %v1198
  %v1263 = vunpack.c.l.b16 %v1199
  %v1264 = vunpack.c.l.b16 %v1200
  %v1265 = vunpack.c.l.b16 %v1201
  %v1266 = vrot.slane %v1234, 3
  %v1267 = vrot.slane %v1235, 2
  %v1268 = vsel %vm385, %v1267, %v1266
  %v1269 = vrot.slane %v1236, 1
  %v1270 = vsel %vm388, %v1269, %v1268
  %v1271 = vsel %vm391, %v1237, %v1270
  %v1272 = vrot.slane %v1238, 7
  %v1273 = vsel %vm394, %v1272, %v1271
  %v1274 = vrot.slane %v1239, 6
  %v1275 = vsel %vm397, %v1274, %v1273
  %v1276 = vrot.slane %v1240, 5
  %v1277 = vsel %vm400, %v1276, %v1275
  %v1278 = vrot.slane %v1241, 4
  %v1279 = vsel %vm403, %v1278, %v1277
  %v1280 = vrot.slane %v1242, 3
  %v1281 = vrot.slane %v1243, 2
  %v1282 = vsel %vm385, %v1281, %v1280
  %v1283 = vrot.slane %v1244, 1
  %v1284 = vsel %vm388, %v1283, %v1282
  %v1285 = vsel %vm391, %v1245, %v1284
  %v1286 = vrot.slane %v1246, 7
  %v1287 = vsel %vm394, %v1286, %v1285
  %v1288 = vrot.slane %v1247, 6
  %v1289 = vsel %vm397, %v1288, %v1287
  %v1290 = vrot.slane %v1248, 5
  %v1291 = vsel %vm400, %v1290, %v1289
  %v1292 = vrot.slane %v1249, 4
  %v1293 = vsel %vm403, %v1292, %v1291
  %v1294 = vrot.slane %v1250, 3
  %v1295 = vrot.slane %v1251, 2
  %v1296 = vsel %vm385, %v1295, %v1294
  %v1297 = vrot.slane %v1252, 1
  %v1298 = vsel %vm388, %v1297, %v1296
  %v1299 = vsel %vm391, %v1253, %v1298
  %v1300 = vrot.slane %v1254, 7
  %v1301 = vsel %vm394, %v1300, %v1299
  %v1302 = vrot.slane %v1255, 6
  %v1303 = vsel %vm397, %v1302, %v1301
  %v1304 = vrot.slane %v1256, 5
  %v1305 = vsel %vm400, %v1304, %v1303
  %v1306 = vrot.slane %v1257, 4
  %v1307 = vsel %vm403, %v1306, %v1305
  %v1308 = vrot.slane %v1258, 3
  %v1309 = vrot.slane %v1259, 2
  %v1310 = vsel %vm385, %v1309, %v1308
  %v1311 = vrot.slane %v1260, 1
  %v1312 = vsel %vm388, %v1311, %v1310
  %v1313 = vsel %vm391, %v1261, %v1312
  %v1314 = vrot.slane %v1262, 7
  %v1315 = vsel %vm394, %v1314, %v1313
  %v1316 = vrot.slane %v1263, 6
  %v1317 = vsel %vm397, %v1316, %v1315
  %v1318 = vrot.slane %v1264, 5
  %v1319 = vsel %vm400, %v1318, %v1317
  %v1320 = vrot.slane %v1265, 4
  %v1321 = vsel %vm403, %v1320, %v1319
  %v1322 = vpack.c.b16 %v1293, %v1279
  %v1323 = vpack.c.b16 %v1321, %v1307
  %v1325 = vsel %vm72, %v1322, 0
  %v1328 = vsel %vm72, %v1323, 0
  %1330 = vmatprep.subr.bf16.mxu0 0
  %1331 = vmatpush1.bf16.msra.mxu0 0
  %1332 = vmatprep.subr.bf16.mxu0 0
  %1333 = vmatpush1.bf16.msra.mxu0 0
  %1334 = vmatprep.subr.bf16.mxu0 0
  %1335 = vmatpush1.bf16.msra.mxu0 0
  %1336 = vmatprep.subr.bf16.mxu0 0
  %1337 = vmatpush1.bf16.msra.mxu0 0
  %1338 = vmatprep.subr.bf16.mxu0 0
  %1339 = vmatpush1.bf16.msra.mxu0 %v468
  %1340 = vmatprep.subr.bf16.mxu0 0
  %1341 = vmatpush1.bf16.msra.mxu0 %v467
  %1342 = vmatprep.subr.bf16.mxu0 0
  %1343 = vmatpush1.bf16.msra.mxu0 %v466
  %1344 = vmatprep.subr.bf16.mxu0 0
  %1345 = vmatpush1.bf16.msra.mxu0 %v465
  %1346 = vmatprep.subr.bf16.mxu0 0
  %1347 = vmatpush2.bf16.msra.mxu0 0
  %1348 = vmatprep.subr.bf16.mxu0 0
  %1349 = vmatpush2.bf16.msra.mxu0 0
  %1350 = vmatprep.subr.bf16.mxu0 0
  %1351 = vmatpush2.bf16.msra.mxu0 0
  %1352 = vmatprep.subr.bf16.mxu0 0
  %1353 = vmatpush2.bf16.msra.mxu0 0
  %1354 = vmatprep.subr.bf16.mxu0 0
  %1355 = vmatpush2.bf16.msra.mxu0 0
  %1356 = vmatprep.subr.bf16.mxu0 0
  %1357 = vmatpush2.bf16.msra.mxu0 0
  %1358 = vmatprep.subr.bf16.mxu0 0
  %1359 = vmatpush2.bf16.msra.mxu0 0
  %1360 = vmatprep.subr.bf16.mxu0 0
  %1361 = vmatpush2.bf16.msra.mxu0 0
  %1362 = vmatprep.mubr.bf16.mxu0 0
  %1363 = vmatmul.mubr.bf16.gmra.mxu0 %v1325
  %v1364 = vpop.f32.mrf.mxu0
  %v1365 = vadd.f32 %v114, %v1364
  %v1366 = vpop.f32.mrf.mxu0
  %v1367 = vpop.f32.mrf.mxu0
  %v1368 = vadd.f32 %v117, %v1367
  %v1369 = vpop.f32.mrf.mxu0
  %1370 = vmatprep.mubr.bf16.mxu0 0
  %1371 = vmatmul.mubr.bf16.gmra.mxu0 %v1328
  %v1372 = vpop.f32.mrf.mxu0
  %v1373 = vadd.f32 %v122, %v1372
  %v1374 = vpop.f32.mrf.mxu0
  %v1375 = vpop.f32.mrf.mxu0
  %v1376 = vadd.f32 %v125, %v1375
  %v1377 = vpop.f32.mrf.mxu0
  %1378 = vdwg.mxu0
  %v1379 = vmul.f32 %v1365, %v532
  %v1380 = vmul.f32 %v1368, %v532
  %v1381 = vmul.f32 %v1373, %v532
  %v1382 = vmul.f32 %v1376, %v532
  %v1383 = vadd.f32 %v1379, %v542
  %v1384 = vadd.f32 %v1380, %v542
  %v1385 = vadd.f32 %v1381, %v542
  %v1386 = vadd.f32 %v1382, %v542
  %vm1387 = vcmp.ge.f32.partialorder %v1383, 0.0
  %vm1388 = vcmp.ge.f32.partialorder %v1384, 0.0
  %vm1389 = vcmp.ge.f32.partialorder %v1385, 0.0
  %vm1390 = vcmp.ge.f32.partialorder %v1386, 0.0
  %v1391 = vmul.f32 %v1383, 0.2
  %v1392 = vmul.f32 %v1384, 0.2
  %v1393 = vmul.f32 %v1385, 0.2
  %v1394 = vmul.f32 %v1386, 0.2
  %v1395 = vsel %vm1387, %v1383, %v1391
  %v1396 = vsel %vm1388, %v1384, %v1392
  %v1397 = vsel %vm1389, %v1385, %v1393
  %v1398 = vsel %vm1390, %v1386, %v1394
  %v1399 = vmax.f32 %v1118, %v1395
  %v1400 = vmax.f32 %v1119, %v1396
  %v1401 = vmax.f32 %v1120, %v1397
  %v1402 = vmax.f32 %v1121, %v1398
  %1403 = vst.msk [vmem:[%s6] sm:$0xff] %vm72, %v1399
  %1404 = vst.msk [vmem:[%s6 + $0x8] sm:$0xff] %vm72, %v1400
  %1405 = vst.msk [vmem:[%s6 + $0x10] sm:$0xff] %vm72, %v1401
  %1406 = vst.msk [vmem:[%s6 + $0x18] sm:$0xff] %vm72, %v1402
  // Predicated region
  $region26: #{_lambda_.19} parent=0 // pred_check
    _
  $region27: #{_lambda_.19} parent=0 // pred_check_branch
    %1408 = sbr.rel (0) target = $region29
  $region28: #{_lambda_.19} parent=0 // pred_region
    _
  $region29: #{_lambda_.19} parent=0 // pred_fallthru
    _
  // Predicated region
  $region30: #{_lambda_.19} parent=0 // pred_check
    _
  $region31: #{_lambda_.19} parent=0 // pred_check_branch
    %1410 = sbr.rel (0) target = $region33
  $region32: #{_lambda_.19} parent=0 // pred_region
    _
  $region33: #{_lambda_.19} parent=0 // pred_fallthru
    _

// kernel: _lambda_.21
$region0: #{_lambda_.21}
  #allocation0 [shape = 'u32[]', space=smem, size = 0x4, offset = 0x4, fixed_abs, tag = 'smem constant byte address 0x4 - core index']
  #allocation1 [shape = 'u32[144,128]{1,0:T(1,128)}', space=vmem, size = 0x12000, scoped, tag = 'internal scratch']
  %s0 = inlined_call_operand.vmem [shape: f32[2,16,192], index: 0, kind: input, shape index: {}]
  %s1 = inlined_call_operand.vmem [shape: f32[2,1,256], index: 1, kind: input, shape index: {}]
  %s2 = inlined_call_operand.vmem [shape: bf16[192,256], index: 2, kind: input, shape index: {}]
  %s3 = inlined_call_operand.vmem [shape: f32[1,256], index: 3, kind: input, shape index: {}, may-alias: {3,6}]
  %s4 = inlined_call_operand.vmem [shape: f32[1,256], index: 4, kind: input, shape index: {}, may-alias: {4,7}]
  %s5 = inlined_call_operand.vmem [shape: bf16[256,256], index: 5, kind: input, shape index: {}]
  %s6 = inlined_call_operand.vmem [shape: f32[1,256], index: 6, kind: input, shape index: {}, may-alias: {3,6}]
  %s7 = inlined_call_operand.vmem [shape: f32[1,256], index: 7, kind: input, shape index: {}, may-alias: {4,7}]
  %s8 = inlined_call_operand.vmem [shape: bf16[256,128], index: 8, kind: input, shape index: {}]
  %s9 = inlined_call_operand.vmem [shape: f32[1,128], index: 9, kind: input, shape index: {}]
  %s10 = inlined_call_operand.vmem [shape: f32[1,128], index: 10, kind: input, shape index: {}]
  %s11 = inlined_call_operand.vmem [shape: bf16[128,128], index: 11, kind: input, shape index: {}]
  %s12 = inlined_call_operand.vmem [shape: f32[2,16,128], index: 12, kind: output, shape index: {}]
  %s13 = sld [smem:[#allocation0]]
  $region81: #{_lambda_.21} parent=0
    _
  %s15 = ssub.s32 1, %s13
  %s16 = scalar_select 0, %s15, %s13
  loop: start=0, step=1, limit=4
  $region2: #{_lambda_.21} parent=0 // loop_pre_header
    _
  $region3: #{_lambda_.21} parent=0 // loop_header
    %s18 = sphi 0, %s22
    %p19 = scmp.ge.s32.totalorder %s18, 4
    %s25 = sphi 0, %s37
    %s26 = sphi 0, %s33
    %s27 = sphi 0, %s25
    %s28 = sphi 0, %s26
    %s29 = sphi 0, %s27
    %s30 = sphi 0, %s28
    %s42 = sphi 0, %s44
    %s45 = sphi 0, %s42
    %s46 = sphi 0, %s45
    %s62 = sphi 0, %s46
    %s68 = sphi 0, %s70
    %s71 = sphi 0, %s68
    %s72 = sphi 0, %s71
    %s88 = sphi 0, %s72
    %s92 = sphi 0, %s92
    %s94 = sphi 0, %s92
    %s95 = sphi 0, %s94
    %s109 = sphi 0, %s95
    %s113 = sphi 0, %s113
    %s115 = sphi 0, %s113
    %s116 = sphi 0, %s115
    %s130 = sphi 0, %s116
    %s134 = sphi 0, %s134
    %s136 = sphi 0, %s134
    %s137 = sphi 0, %s136
    %s151 = sphi 0, %s137
    %s155 = sphi 0, %s155
    %s157 = sphi 0, %s155
    %s158 = sphi 0, %s157
    %s172 = sphi 0, %s158
    %s176 = sphi 0, %s176
    %s178 = sphi 0, %s176
    %s179 = sphi 0, %s178
    %s193 = sphi 0, %s179
    %s197 = sphi 0, %s197
    %s199 = sphi 0, %s197
    %s200 = sphi 0, %s199
    %s214 = sphi 0, %s200
    %s218 = sphi 0, %s218
    %s220 = sphi 0, %s218
    %s221 = sphi 0, %s220
    %s235 = sphi 0, %s221
    %s239 = sphi 0, %s239
    %s241 = sphi 0, %s239
    %s242 = sphi 0, %s241
    %s256 = sphi 0, %s242
    %s260 = sphi 0, %s260
    %s262 = sphi 0, %s260
    %s263 = sphi 0, %s262
    %s277 = sphi 0, %s263
    %s281 = sphi 0, %s281
    %s283 = sphi 0, %s281
    %s284 = sphi 0, %s283
    %s298 = sphi 0, %s284
    %s306 = sphi 0, %s308
    %s309 = sphi 0, %s306
    %s310 = sphi 0, %s309
    %s326 = sphi 0, %s310
  $region4: #{_lambda_.21} parent=0 // loop_header_branch
    %21 = sbr.rel (%p19) target = $region8
  $region5: #{_lambda_.21} parent=0 // loop_body
    %s23 = ssub.s32 %s18, 1
    %s24 = ssub.s32 %s18, 2
    %s31 = sadd.s32 1, %s26
    %p32 = scmp.ge.s32.totalorder %s31, 2
    %s33 = scalar_select %p32, 0, %s31
    %s34 = sadd.s32 1, %s25
    %s35 = scalar_select %p32, %s34, %s25
    %p36 = scmp.ge.s32.totalorder %s35, 1
    %s37 = scalar_select %p36, 0, %s35
    %s38 = ssub.s32 %s26, %s33
    %s39 = ssub.s32 %s25, %s37
    %s40 = sor.u32 %s38, %s39
    %p41 = scmp.eq.s32.totalorder %s40, 0
    %s43 = sadd.s32 %s42, 1
    %s44 = scalar_select %p41, %s42, %s43
    %p47 = pneg %p41
    %p48 = scmp.eq.s32.totalorder %s18, 1
    %p49 = por %p47, %p48
    %p50 = scmp.ne.s32.totalorder %s42, %s45
    %p51 = scmp.eq.s32.totalorder %s18, 0
    %p52 = por %p50, %p51
    %p53 = scmp.ne.s32.totalorder %s42, %s45
    %p54 = scmp.eq.s32.totalorder %s23, 1
    %p55 = por %p53, %p54
    %p56 = scmp.ne.s32.totalorder %s45, %s46
    %p57 = scmp.eq.s32.totalorder %s23, 0
    %p58 = por %p56, %p57
    %p59 = scmp.ne.s32.totalorder %s45, %s46
    %p60 = scmp.eq.s32.totalorder %s24, 1
    %p61 = por %p59, %p60
    %p63 = scmp.ne.s32.totalorder %s46, %s62
    %p64 = scmp.eq.s32.totalorder %s24, 0
    %p65 = por %p63, %p64
    %s66 = ssub.s32 %s26, %s33
    %p67 = scmp.eq.s32.totalorder %s66, 0
    %s69 = sadd.s32 %s68, 1
    %s70 = scalar_select %p67, %s68, %s69
    %p73 = pneg %p67
    %p74 = scmp.eq.s32.totalorder %s18, 1
    %p75 = por %p73, %p74
    %p76 = scmp.ne.s32.totalorder %s68, %s71
    %p77 = scmp.eq.s32.totalorder %s18, 0
    %p78 = por %p76, %p77
    %p79 = scmp.ne.s32.totalorder %s68, %s71
    %p80 = scmp.eq.s32.totalorder %s23, 1
    %p81 = por %p79, %p80
    %p82 = scmp.ne.s32.totalorder %s71, %s72
    %p83 = scmp.eq.s32.totalorder %s23, 0
    %p84 = por %p82, %p83
    %p85 = scmp.ne.s32.totalorder %s71, %s72
    %p86 = scmp.eq.s32.totalorder %s24, 1
    %p87 = por %p85, %p86
    %p89 = scmp.ne.s32.totalorder %s72, %s88
    %p90 = scmp.eq.s32.totalorder %s24, 0
    %p91 = por %p89, %p90
    %s93 = sadd.s32 %s92, 1
    %p96 = scmp.eq.s32.totalorder %s18, 1
    %p97 = scmp.ne.s32.totalorder %s92, %s94
    %p98 = scmp.eq.s32.totalorder %s18, 0
    %p99 = por %p97, %p98
    %p100 = scmp.ne.s32.totalorder %s92, %s94
    %p101 = scmp.eq.s32.totalorder %s23, 1
    %p102 = por %p100, %p101
    %p103 = scmp.ne.s32.totalorder %s94, %s95
    %p104 = scmp.eq.s32.totalorder %s23, 0
    %p105 = por %p103, %p104
    %p106 = scmp.ne.s32.totalorder %s94, %s95
    %p107 = scmp.eq.s32.totalorder %s24, 1
    %p108 = por %p106, %p107
    %p110 = scmp.ne.s32.totalorder %s95, %s109
    %p111 = scmp.eq.s32.totalorder %s24, 0
    %p112 = por %p110, %p111
    %s114 = sadd.s32 %s113, 1
    %p117 = scmp.eq.s32.totalorder %s18, 1
    %p118 = scmp.ne.s32.totalorder %s113, %s115
    %p119 = scmp.eq.s32.totalorder %s18, 0
    %p120 = por %p118, %p119
    %p121 = scmp.ne.s32.totalorder %s113, %s115
    %p122 = scmp.eq.s32.totalorder %s23, 1
    %p123 = por %p121, %p122
    %p124 = scmp.ne.s32.totalorder %s115, %s116
    %p125 = scmp.eq.s32.totalorder %s23, 0
    %p126 = por %p124, %p125
    %p127 = scmp.ne.s32.totalorder %s115, %s116
    %p128 = scmp.eq.s32.totalorder %s24, 1
    %p129 = por %p127, %p128
    %p131 = scmp.ne.s32.totalorder %s116, %s130
    %p132 = scmp.eq.s32.totalorder %s24, 0
    %p133 = por %p131, %p132
    %s135 = sadd.s32 %s134, 1
    %p138 = scmp.eq.s32.totalorder %s18, 1
    %p139 = scmp.ne.s32.totalorder %s134, %s136
    %p140 = scmp.eq.s32.totalorder %s18, 0
    %p141 = por %p139, %p140
    %p142 = scmp.ne.s32.totalorder %s134, %s136
    %p143 = scmp.eq.s32.totalorder %s23, 1
    %p144 = por %p142, %p143
    %p145 = scmp.ne.s32.totalorder %s136, %s137
    %p146 = scmp.eq.s32.totalorder %s23, 0
    %p147 = por %p145, %p146
    %p148 = scmp.ne.s32.totalorder %s136, %s137
    %p149 = scmp.eq.s32.totalorder %s24, 1
    %p150 = por %p148, %p149
    %p152 = scmp.ne.s32.totalorder %s137, %s151
    %p153 = scmp.eq.s32.totalorder %s24, 0
    %p154 = por %p152, %p153
    %s156 = sadd.s32 %s155, 1
    %p159 = scmp.eq.s32.totalorder %s18, 1
    %p160 = scmp.ne.s32.totalorder %s155, %s157
    %p161 = scmp.eq.s32.totalorder %s18, 0
    %p162 = por %p160, %p161
    %p163 = scmp.ne.s32.totalorder %s155, %s157
    %p164 = scmp.eq.s32.totalorder %s23, 1
    %p165 = por %p163, %p164
    %p166 = scmp.ne.s32.totalorder %s157, %s158
    %p167 = scmp.eq.s32.totalorder %s23, 0
    %p168 = por %p166, %p167
    %p169 = scmp.ne.s32.totalorder %s157, %s158
    %p170 = scmp.eq.s32.totalorder %s24, 1
    %p171 = por %p169, %p170
    %p173 = scmp.ne.s32.totalorder %s158, %s172
    %p174 = scmp.eq.s32.totalorder %s24, 0
    %p175 = por %p173, %p174
    %s177 = sadd.s32 %s176, 1
    %p180 = scmp.eq.s32.totalorder %s18, 1
    %p181 = scmp.ne.s32.totalorder %s176, %s178
    %p182 = scmp.eq.s32.totalorder %s18, 0
    %p183 = por %p181, %p182
    %p184 = scmp.ne.s32.totalorder %s176, %s178
    %p185 = scmp.eq.s32.totalorder %s23, 1
    %p186 = por %p184, %p185
    %p187 = scmp.ne.s32.totalorder %s178, %s179
    %p188 = scmp.eq.s32.totalorder %s23, 0
    %p189 = por %p187, %p188
    %p190 = scmp.ne.s32.totalorder %s178, %s179
    %p191 = scmp.eq.s32.totalorder %s24, 1
    %p192 = por %p190, %p191
    %p194 = scmp.ne.s32.totalorder %s179, %s193
    %p195 = scmp.eq.s32.totalorder %s24, 0
    %p196 = por %p194, %p195
    %s198 = sadd.s32 %s197, 1
    %p201 = scmp.eq.s32.totalorder %s18, 1
    %p202 = scmp.ne.s32.totalorder %s197, %s199
    %p203 = scmp.eq.s32.totalorder %s18, 0
    %p204 = por %p202, %p203
    %p205 = scmp.ne.s32.totalorder %s197, %s199
    %p206 = scmp.eq.s32.totalorder %s23, 1
    %p207 = por %p205, %p206
    %p208 = scmp.ne.s32.totalorder %s199, %s200
    %p209 = scmp.eq.s32.totalorder %s23, 0
    %p210 = por %p208, %p209
    %p211 = scmp.ne.s32.totalorder %s199, %s200
    %p212 = scmp.eq.s32.totalorder %s24, 1
    %p213 = por %p211, %p212
    %p215 = scmp.ne.s32.totalorder %s200, %s214
    %p216 = scmp.eq.s32.totalorder %s24, 0
    %p217 = por %p215, %p216
    %s219 = sadd.s32 %s218, 1
    %p222 = scmp.eq.s32.totalorder %s18, 1
    %p223 = scmp.ne.s32.totalorder %s218, %s220
    %p224 = scmp.eq.s32.totalorder %s18, 0
    %p225 = por %p223, %p224
    %p226 = scmp.ne.s32.totalorder %s218, %s220
    %p227 = scmp.eq.s32.totalorder %s23, 1
    %p228 = por %p226, %p227
    %p229 = scmp.ne.s32.totalorder %s220, %s221
    %p230 = scmp.eq.s32.totalorder %s23, 0
    %p231 = por %p229, %p230
    %p232 = scmp.ne.s32.totalorder %s220, %s221
    %p233 = scmp.eq.s32.totalorder %s24, 1
    %p234 = por %p232, %p233
    %p236 = scmp.ne.s32.totalorder %s221, %s235
    %p237 = scmp.eq.s32.totalorder %s24, 0
    %p238 = por %p236, %p237
    %s240 = sadd.s32 %s239, 1
    %p243 = scmp.eq.s32.totalorder %s18, 1
    %p244 = scmp.ne.s32.totalorder %s239, %s241
    %p245 = scmp.eq.s32.totalorder %s18, 0
    %p246 = por %p244, %p245
    %p247 = scmp.ne.s32.totalorder %s239, %s241
    %p248 = scmp.eq.s32.totalorder %s23, 1
    %p249 = por %p247, %p248
    %p250 = scmp.ne.s32.totalorder %s241, %s242
    %p251 = scmp.eq.s32.totalorder %s23, 0
    %p252 = por %p250, %p251
    %p253 = scmp.ne.s32.totalorder %s241, %s242
    %p254 = scmp.eq.s32.totalorder %s24, 1
    %p255 = por %p253, %p254
    %p257 = scmp.ne.s32.totalorder %s242, %s256
    %p258 = scmp.eq.s32.totalorder %s24, 0
    %p259 = por %p257, %p258
    %s261 = sadd.s32 %s260, 1
    %p264 = scmp.eq.s32.totalorder %s18, 1
    %p265 = scmp.ne.s32.totalorder %s260, %s262
    %p266 = scmp.eq.s32.totalorder %s18, 0
    %p267 = por %p265, %p266
    %p268 = scmp.ne.s32.totalorder %s260, %s262
    %p269 = scmp.eq.s32.totalorder %s23, 1
    %p270 = por %p268, %p269
    %p271 = scmp.ne.s32.totalorder %s262, %s263
    %p272 = scmp.eq.s32.totalorder %s23, 0
    %p273 = por %p271, %p272
    %p274 = scmp.ne.s32.totalorder %s262, %s263
    %p275 = scmp.eq.s32.totalorder %s24, 1
    %p276 = por %p274, %p275
    %p278 = scmp.ne.s32.totalorder %s263, %s277
    %p279 = scmp.eq.s32.totalorder %s24, 0
    %p280 = por %p278, %p279
    %s282 = sadd.s32 %s281, 1
    %p285 = scmp.eq.s32.totalorder %s18, 1
    %p286 = scmp.ne.s32.totalorder %s281, %s283
    %p287 = scmp.eq.s32.totalorder %s18, 0
    %p288 = por %p286, %p287
    %p289 = scmp.ne.s32.totalorder %s281, %s283
    %p290 = scmp.eq.s32.totalorder %s23, 1
    %p291 = por %p289, %p290
    %p292 = scmp.ne.s32.totalorder %s283, %s284
    %p293 = scmp.eq.s32.totalorder %s23, 0
    %p294 = por %p292, %p293
    %p295 = scmp.ne.s32.totalorder %s283, %s284
    %p296 = scmp.eq.s32.totalorder %s24, 1
    %p297 = por %p295, %p296
    %p299 = scmp.ne.s32.totalorder %s284, %s298
    %p300 = scmp.eq.s32.totalorder %s24, 0
    %p301 = por %p299, %p300
    %s302 = ssub.s32 %s26, %s33
    %s303 = ssub.s32 %s25, %s37
    %s304 = sor.u32 %s302, %s303
    %p305 = scmp.eq.s32.totalorder %s304, 0
    %s307 = sadd.s32 %s306, 1
    %s308 = scalar_select %p305, %s306, %s307
    %p311 = pneg %p305
    %p312 = scmp.eq.s32.totalorder %s18, 1
    %p313 = por %p311, %p312
    %p314 = scmp.ne.s32.totalorder %s306, %s309
    %p315 = scmp.eq.s32.totalorder %s18, 0
    %p316 = por %p314, %p315
    %p317 = scmp.ne.s32.totalorder %s306, %s309
    %p318 = scmp.eq.s32.totalorder %s23, 1
    %p319 = por %p317, %p318
    %p320 = scmp.ne.s32.totalorder %s309, %s310
    %p321 = scmp.eq.s32.totalorder %s23, 0
    %p322 = por %p320, %p321
    %p323 = scmp.ne.s32.totalorder %s309, %s310
    %p324 = scmp.eq.s32.totalorder %s24, 1
    %p325 = por %p323, %p324
    %p327 = scmp.ne.s32.totalorder %s310, %s326
    %p328 = scmp.eq.s32.totalorder %s24, 0
    %p329 = por %p327, %p328
    %p330 = scmp.le.s32.totalorder 1, %s18
    %p331 = scmp.lt.s32.totalorder %s18, 3
    %p332 = pnand %p330, %p331
    %p333 = pneg %p332
    // Predicated region
    $region9: #{_lambda_.21} parent=5 // pred_check
      _
    $region10: #{_lambda_.21} parent=5 // pred_check_branch
      %335 = sbr.rel (%p332) target = $region12
    $region11: #{_lambda_.21} parent=5 // pred_region
      %s336 = ssub.s32 %s18, 1
      // Predicated region
      $region13: #{_lambda_.21} parent=11 // pred_check
        %p337 = pneg %p105
      $region14: #{_lambda_.21} parent=11 // pred_check_branch
        %339 = sbr.rel (%p337) target = $region16
      $region15: #{_lambda_.21} parent=11 // pred_region
        _
      $region16: #{_lambda_.21} parent=11 // pred_fallthru
        _
      // Predicated region
      $region17: #{_lambda_.21} parent=11 // pred_check
        %p340 = pneg %p126
      $region18: #{_lambda_.21} parent=11 // pred_check_branch
        %342 = sbr.rel (%p340) target = $region20
      $region19: #{_lambda_.21} parent=11 // pred_region
        _
      $region20: #{_lambda_.21} parent=11 // pred_fallthru
        _
      // Predicated region
      $region21: #{_lambda_.21} parent=11 // pred_check
        %p343 = pneg %p147
      $region22: #{_lambda_.21} parent=11 // pred_check_branch
        %345 = sbr.rel (%p343) target = $region24
      $region23: #{_lambda_.21} parent=11 // pred_region
        _
      $region24: #{_lambda_.21} parent=11 // pred_fallthru
        _
      // Predicated region
      $region25: #{_lambda_.21} parent=11 // pred_check
        %p346 = pneg %p168
      $region26: #{_lambda_.21} parent=11 // pred_check_branch
        %348 = sbr.rel (%p346) target = $region28
      $region27: #{_lambda_.21} parent=11 // pred_region
        _
      $region28: #{_lambda_.21} parent=11 // pred_fallthru
        _
      // Predicated region
      $region29: #{_lambda_.21} parent=11 // pred_check
        %p349 = pneg %p189
      $region30: #{_lambda_.21} parent=11 // pred_check_branch
        %351 = sbr.rel (%p349) target = $region32
      $region31: #{_lambda_.21} parent=11 // pred_region
        _
      $region32: #{_lambda_.21} parent=11 // pred_fallthru
        _
      // Predicated region
      $region33: #{_lambda_.21} parent=11 // pred_check
        %p352 = pneg %p210
      $region34: #{_lambda_.21} parent=11 // pred_check_branch
        %354 = sbr.rel (%p352) target = $region36
      $region35: #{_lambda_.21} parent=11 // pred_region
        _
      $region36: #{_lambda_.21} parent=11 // pred_fallthru
        _
      // Predicated region
      $region37: #{_lambda_.21} parent=11 // pred_check
        %p355 = pneg %p231
      $region38: #{_lambda_.21} parent=11 // pred_check_branch
        %357 = sbr.rel (%p355) target = $region40
      $region39: #{_lambda_.21} parent=11 // pred_region
        _
      $region40: #{_lambda_.21} parent=11 // pred_fallthru
        _
      // Predicated region
      $region41: #{_lambda_.21} parent=11 // pred_check
        %p358 = pneg %p252
      $region42: #{_lambda_.21} parent=11 // pred_check_branch
        %360 = sbr.rel (%p358) target = $region44
      $region43: #{_lambda_.21} parent=11 // pred_region
        _
      $region44: #{_lambda_.21} parent=11 // pred_fallthru
        _
      // Predicated region
      $region45: #{_lambda_.21} parent=11 // pred_check
        %p361 = pneg %p273
      $region46: #{_lambda_.21} parent=11 // pred_check_branch
        %363 = sbr.rel (%p361) target = $region48
      $region47: #{_lambda_.21} parent=11 // pred_region
        _
      $region48: #{_lambda_.21} parent=11 // pred_fallthru
        _
      // Predicated region
      $region49: #{_lambda_.21} parent=11 // pred_check
        %p364 = pneg %p294
      $region50: #{_lambda_.21} parent=11 // pred_check_branch
        %366 = sbr.rel (%p364) target = $region52
      $region51: #{_lambda_.21} parent=11 // pred_region
        _
      $region52: #{_lambda_.21} parent=11 // pred_fallthru
        _
    $region12: #{_lambda_.21} parent=5 // pred_fallthru
      _
    %p367 = scmp.lt.s32.totalorder %s18, 2
    // Predicated region
    $region53: #{_lambda_.21} parent=5 // pred_check
      %p368 = pneg %p367
    $region54: #{_lambda_.21} parent=5 // pred_check_branch
      %370 = sbr.rel (%p368) target = $region56
    $region55: #{_lambda_.21} parent=5 // pred_region
      // Predicated region
      $region57: #{_lambda_.21} parent=55 // pred_check
        %p371 = pneg %p52
      $region58: #{_lambda_.21} parent=55 // pred_check_branch
        %373 = sbr.rel (%p371) target = $region60
      $region59: #{_lambda_.21} parent=55 // pred_region
        %s374 = smul.u32 2, %s25
        %p375 = scmp.lt.s32.totalorder %s26, 1
        %s376 = scalar_select %p375, %s26, 1
        %p377 = scmp.lt.s32.totalorder %s374, 1
        %s378 = scalar_select %p377, %s374, 1
        %s379 = smul.addr %s378, 2
        %s380 = smul.addr %s376, 4
        %s381 = sadd.s32 %s379, %s380
        %s382 = smul.addr %s381, 8
        %s383 = scalar_lea.vmem %s0, %s382
        %s384 = smul.u32 2, %s25
      $region60: #{_lambda_.21} parent=55 // pred_fallthru
        _
      // Predicated region
      $region61: #{_lambda_.21} parent=55 // pred_check
        %p385 = pneg %p78
      $region62: #{_lambda_.21} parent=55 // pred_check_branch
        %387 = sbr.rel (%p385) target = $region64
      $region63: #{_lambda_.21} parent=55 // pred_region
        %p388 = scmp.lt.s32.totalorder %s26, 1
        %s389 = scalar_select %p388, %s26, 1
        %s390 = smul.addr %s389, 2
        %s391 = scalar_lea.vmem %s1, %s390
      $region64: #{_lambda_.21} parent=55 // pred_fallthru
        _
    $region56: #{_lambda_.21} parent=5 // pred_fallthru
      _
    %p392 = scmp.le.s32.totalorder 1, %s18
    %p393 = scmp.lt.s32.totalorder %s18, 3
    %p394 = pnand %p392, %p393
    %p395 = pneg %p394
    // Predicated region
    $region65: #{_lambda_.21} parent=5 // pred_check
      _
    $region66: #{_lambda_.21} parent=5 // pred_check_branch
      %397 = sbr.rel (%p394) target = $region68
    $region67: #{_lambda_.21} parent=5 // pred_region
      %s398 = ssub.s32 %s18, 1
      %s399 = smul.u32 2, %s27
      %p400 = scmp.lt.s32.totalorder %s28, 1
      %s401 = scalar_select %p400, %s28, 1
      %p402 = scmp.lt.s32.totalorder %s399, 1
      %s403 = scalar_select %p402, %s399, 1
      %s404 = smul.addr %s403, 2
      %s405 = smul.addr %s401, 4
      %s406 = sadd.s32 %s404, %s405
      %s407 = smul.addr %s406, 8
      %s408 = scalar_lea.vmem %s0, %s407
      %p409 = pneg %p58
      %p410 = pneg %p55
      %p411 = scmp.lt.s32.totalorder %s28, 1
      %s412 = scalar_select %p411, %s28, 1
      %s413 = smul.addr %s412, 2
      %s414 = scalar_lea.vmem %s1, %s413
      %p415 = pneg %p84
      %p416 = pneg %p81
      %p417 = pneg %p105
      %p418 = pneg %p102
      %p419 = pneg %p126
      %p420 = pneg %p123
      %p421 = pneg %p147
      %p422 = pneg %p144
      %p423 = pneg %p168
      %p424 = pneg %p165
      %p425 = pneg %p189
      %p426 = pneg %p186
      %p427 = pneg %p210
      %p428 = pneg %p207
      %p429 = pneg %p231
      %p430 = pneg %p228
      %p431 = pneg %p252
      %p432 = pneg %p249
      %p433 = pneg %p273
      %p434 = pneg %p270
      %p435 = pneg %p294
      %p436 = pneg %p291
      %p437 = pneg %p322
      %p438 = pneg %p319
      %s439 = smul.u32 2, %s27
      %p440 = scmp.lt.s32.totalorder %s28, 1
      %s441 = scalar_select %p440, %s28, 1
      %p442 = scmp.lt.s32.totalorder %s439, 1
      %s443 = scalar_select %p442, %s439, 1
      %s444 = smul.addr %s441, 2
      %s445 = sadd.s32 %s443, %s444
      %s446 = smul.addr %s445, 8
      %s447 = scalar_lea.vmem %s12, %s446
      %s448 = smul.u32 2, %s27
      %p449 = scmp.lt.s32.totalorder %s28, 1
      %s450 = scalar_select %p449, %s28, 1
      %p451 = scmp.lt.s32.totalorder %s448, 1
      %s452 = scalar_select %p451, %s448, 1
      %s453 = smul.addr %s452, 2
      %s454 = smul.addr %s450, 4
      %s455 = sadd.s32 %s453, %s454
      %s456 = smul.addr %s455, 8
      %s457 = scalar_lea.vmem %s0, %s456
      %s458 = smul.u32 2, %s27
      %p459 = scmp.lt.s32.totalorder %s28, 1
      %s460 = scalar_select %p459, %s28, 1
      %s461 = smul.addr %s460, 2
      %s462 = scalar_lea.vmem %s1, %s461
      %s463 = smul.u32 2, %s27
      %p464 = scmp.lt.s32.totalorder %s28, 1
      %s465 = scalar_select %p464, %s28, 1
      %p466 = scmp.lt.s32.totalorder %s463, 1
      %s467 = scalar_select %p466, %s463, 1
      %s468 = smul.addr %s465, 2
      %s469 = sadd.s32 %s467, %s468
      %s470 = smul.addr %s469, 8
      %s471 = scalar_lea.vmem %s12, %s470
      %s472 = smul.u32 2, %s27
      %v474 = vld [vmem:[%s2] sm:$0xff]
      %v475 = vld [vmem:[%s2 + $0x8] sm:$0xff]
      %v476 = vld [vmem:[%s2 + $0x10] sm:$0xff]
      %v477 = vld [vmem:[%s2 + $0x18] sm:$0xff]
      %v478 = vld [vmem:[%s2 + $0x20] sm:$0xff]
      %v479 = vld [vmem:[%s2 + $0x28] sm:$0xff]
      %v480 = vld [vmem:[%s2 + $0x30] sm:$0xff]
      %v481 = vld [vmem:[%s2 + $0x38] sm:$0xff]
      %v482 = vld [vmem:[%s2 + $0x40] sm:$0xff]
      %v483 = vld [vmem:[%s2 + $0x48] sm:$0xff]
      %v484 = vld [vmem:[%s2 + $0x50] sm:$0xff]
      %v485 = vld [vmem:[%s2 + $0x58] sm:$0xff]
      %v486 = vld [vmem:[%s2 + $0x60] sm:$0xff]
      %v487 = vld [vmem:[%s2 + $0x68] sm:$0xff]
      %v488 = vld [vmem:[%s2 + $0x70] sm:$0xff]
      %v489 = vld [vmem:[%s2 + $0x78] sm:$0xff]
      %v490 = vld [vmem:[%s2 + $0x80] sm:$0xff]
      %v491 = vld [vmem:[%s2 + $0x88] sm:$0xff]
      %v492 = vld [vmem:[%s2 + $0x90] sm:$0xff]
      %v493 = vld [vmem:[%s2 + $0x98] sm:$0xff]
      %v494 = vld [vmem:[%s2 + $0xa0] sm:$0xff]
      %v495 = vld [vmem:[%s2 + $0xa8] sm:$0xff]
      %v496 = vld [vmem:[%s2 + $0xb0] sm:$0xff]
      %v497 = vld [vmem:[%s2 + $0xb8] sm:$0xff]
      %v498 = vld [vmem:[%s457] sm:$0xff]
      %v499 = vld [vmem:[%s457 + $0x8] sm:$0xff]
      %v500 = vld [vmem:[%s457 + $0x10] sm:$0xff]
      %v501 = vld [vmem:[%s457 + $0x18] sm:$0xff]
      %v502 = vpack.c.bf16 %v500, %v498
      %v503 = vpack.c.bf16 %v501, %v499
      %v504 = vld [vmem:[%s462] sm:$0x3]
      %v506 = vlaneseq
      %v507 = vshrl.u32 %v506, 7
      %v508 = vsub.s32 0, %v507
      %v509 = vrot.slane %v504, %v508
      %v510 = vlaneseq
      %v511 = vshrl.u32 %v510, 7
      %v512 = vsub.s32 1, %v511
      %v513 = vrot.slane %v504, %v512
      %v540 = vunpack.c.l.b16 %v474
      %v541 = vunpack.c.h.b16 %v474
      %v542 = vunpack.c.l.b16 %v475
      %v543 = vunpack.c.h.b16 %v475
      %v544 = vunpack.c.l.b16 %v476
      %v545 = vunpack.c.h.b16 %v476
      %v546 = vunpack.c.l.b16 %v477
      %v547 = vunpack.c.h.b16 %v477
      %v548 = vunpack.c.l.b16 %v478
      %v549 = vunpack.c.h.b16 %v478
      %v550 = vunpack.c.l.b16 %v479
      %v551 = vunpack.c.h.b16 %v479
      %v552 = vunpack.c.l.b16 %v480
      %v553 = vunpack.c.h.b16 %v480
      %v554 = vunpack.c.l.b16 %v481
      %v555 = vunpack.c.h.b16 %v481
      %v556 = vunpack.c.l.b16 %v482
      %v557 = vunpack.c.h.b16 %v482
      %v558 = vunpack.c.l.b16 %v483
      %v559 = vunpack.c.h.b16 %v483
      %v560 = vunpack.c.l.b16 %v484
      %v561 = vunpack.c.h.b16 %v484
      %v562 = vunpack.c.l.b16 %v485
      %v563 = vunpack.c.h.b16 %v485
      %v564 = vunpack.c.l.b16 %v486
      %v565 = vunpack.c.h.b16 %v486
      %v566 = vunpack.c.l.b16 %v487
      %v567 = vunpack.c.h.b16 %v487
      %v568 = vunpack.c.l.b16 %v488
      %v569 = vunpack.c.h.b16 %v488
      %v570 = vunpack.c.l.b16 %v489
      %v571 = vunpack.c.h.b16 %v489
      %v572 = vunpack.c.l.b16 %v490
      %v573 = vunpack.c.h.b16 %v490
      %v574 = vunpack.c.l.b16 %v491
      %v575 = vunpack.c.h.b16 %v491
      %v576 = vunpack.c.l.b16 %v492
      %v577 = vunpack.c.h.b16 %v492
      %v578 = vunpack.c.l.b16 %v493
      %v579 = vunpack.c.h.b16 %v493
      %v580 = vunpack.c.l.b16 %v494
      %v581 = vunpack.c.h.b16 %v494
      %v582 = vunpack.c.l.b16 %v495
      %v583 = vunpack.c.h.b16 %v495
      %v584 = vunpack.c.l.b16 %v496
      %v585 = vunpack.c.h.b16 %v496
      %v586 = vunpack.c.l.b16 %v497
      %v587 = vunpack.c.h.b16 %v497
      %v588 = vpack.c.b16 %v542, %v540
      %v589 = vpack.c.b16 %v543, %v541
      %v590 = vpack.c.b16 %v546, %v544
      %v591 = vpack.c.b16 %v547, %v545
      %v592 = vpack.c.b16 %v550, %v548
      %v593 = vpack.c.b16 %v551, %v549
      %v594 = vpack.c.b16 %v554, %v552
      %v595 = vpack.c.b16 %v555, %v553
      %v596 = vpack.c.b16 %v558, %v556
      %v597 = vpack.c.b16 %v559, %v557
      %v598 = vpack.c.b16 %v562, %v560
      %v599 = vpack.c.b16 %v563, %v561
      %v600 = vpack.c.b16 %v566, %v564
      %v601 = vpack.c.b16 %v567, %v565
      %v602 = vpack.c.b16 %v570, %v568
      %v603 = vpack.c.b16 %v571, %v569
      %v604 = vpack.c.b16 %v574, %v572
      %v605 = vpack.c.b16 %v575, %v573
      %v606 = vpack.c.b16 %v578, %v576
      %v607 = vpack.c.b16 %v579, %v577
      %v608 = vpack.c.b16 %v582, %v580
      %v609 = vpack.c.b16 %v583, %v581
      %v610 = vpack.c.b16 %v586, %v584
      %v611 = vpack.c.b16 %v587, %v585
      %vm636 = vcmask 523264
      %v638 = vsel %vm636, %v503, 0
      %640 = vmatprep.subr.bf16.mxu0 %v603
      %641 = vmatpush1.bf16.msra.mxu0 %v602
      %642 = vmatprep.subr.bf16.mxu0 %v601
      %643 = vmatpush1.bf16.msra.mxu0 %v600
      %644 = vmatprep.subr.bf16.mxu0 %v599
      %645 = vmatpush1.bf16.msra.mxu0 %v598
      %646 = vmatprep.subr.bf16.mxu0 %v597
      %647 = vmatpush1.bf16.msra.mxu0 %v596
      %648 = vmatprep.subr.bf16.mxu0 %v595
      %649 = vmatpush1.bf16.msra.mxu0 %v594
      %650 = vmatprep.subr.bf16.mxu0 %v593
      %651 = vmatpush1.bf16.msra.mxu0 %v592
      %652 = vmatprep.subr.bf16.mxu0 %v591
      %653 = vmatpush1.bf16.msra.mxu0 %v590
      %654 = vmatprep.subr.bf16.mxu0 %v589
      %655 = vmatpush1.bf16.msra.mxu0 %v588
      %656 = vmatprep.subr.bf16.mxu0 0
      %657 = vmatpush2.bf16.msra.mxu0 0
      %658 = vmatprep.subr.bf16.mxu0 0
      %659 = vmatpush2.bf16.msra.mxu0 0
      %660 = vmatprep.subr.bf16.mxu0 0
      %661 = vmatpush2.bf16.msra.mxu0 0
      %662 = vmatprep.subr.bf16.mxu0 0
      %663 = vmatpush2.bf16.msra.mxu0 0
      %664 = vmatprep.subr.bf16.mxu0 %v611
      %665 = vmatpush2.bf16.msra.mxu0 %v610
      %666 = vmatprep.subr.bf16.mxu0 %v609
      %667 = vmatpush2.bf16.msra.mxu0 %v608
      %668 = vmatprep.subr.bf16.mxu0 %v607
      %669 = vmatpush2.bf16.msra.mxu0 %v606
      %670 = vmatprep.subr.bf16.mxu0 %v605
      %671 = vmatpush2.bf16.msra.mxu0 %v604
      %672 = vmatprep.mubr.bf16.mxu0 %v638
      %673 = vmatmul.mubr.bf16.gmra.mxu0 %v502
      %v674 = vpop.f32.mrf.mxu0
      %v675 = vadd.f32 %v509, %v674
      %v676 = vpop.f32.mrf.mxu0
      %v677 = vadd.f32 %v513, %v676
      %v678 = vpop.f32.mrf.mxu0
      %v679 = vadd.f32 %v509, %v678
      %v680 = vpop.f32.mrf.mxu0
      %v681 = vadd.f32 %v513, %v680
      %682 = vdwg.mxu0
      %v683 = vld [vmem:[%s3] sm:$0x3]
      %v685 = vlaneseq
      %v686 = vshrl.u32 %v685, 7
      %v687 = vsub.s32 0, %v686
      %v688 = vrot.slane %v683, %v687
      %v689 = vlaneseq
      %v690 = vshrl.u32 %v689, 7
      %v691 = vsub.s32 1, %v690
      %v692 = vrot.slane %v683, %v691
      %v695 = vmul.f32 %v675, %v688
      %v696 = vmul.f32 %v677, %v692
      %v697 = vmul.f32 %v679, %v688
      %v698 = vmul.f32 %v681, %v692
      %v699 = vld [vmem:[%s4] sm:$0x3]
      %v701 = vlaneseq
      %v702 = vshrl.u32 %v701, 7
      %v703 = vsub.s32 0, %v702
      %v704 = vrot.slane %v699, %v703
      %v705 = vlaneseq
      %v706 = vshrl.u32 %v705, 7
      %v707 = vsub.s32 1, %v706
      %v708 = vrot.slane %v699, %v707
      %v711 = vadd.f32 %v695, %v704
      %v712 = vadd.f32 %v696, %v708
      %v713 = vadd.f32 %v697, %v704
      %v714 = vadd.f32 %v698, %v708
      %vm715 = vcmp.ge.f32.partialorder %v711, 0.0
      %vm716 = vcmp.ge.f32.partialorder %v712, 0.0
      %vm717 = vcmp.ge.f32.partialorder %v713, 0.0
      %vm718 = vcmp.ge.f32.partialorder %v714, 0.0
      %v719 = vmul.f32 %v711, 0.2
      %v720 = vmul.f32 %v712, 0.2
      %v721 = vmul.f32 %v713, 0.2
      %v722 = vmul.f32 %v714, 0.2
      %v723 = vsel %vm715, %v711, %v719
      %v724 = vsel %vm716, %v712, %v720
      %v725 = vsel %vm717, %v713, %v721
      %v726 = vsel %vm718, %v714, %v722
      %v727 = vld [vmem:[%s5] sm:$0xff]
      %v728 = vld [vmem:[%s5 + $0x8] sm:$0xff]
      %v729 = vld [vmem:[%s5 + $0x10] sm:$0xff]
      %v730 = vld [vmem:[%s5 + $0x18] sm:$0xff]
      %v731 = vld [vmem:[%s5 + $0x20] sm:$0xff]
      %v732 = vld [vmem:[%s5 + $0x28] sm:$0xff]
      %v733 = vld [vmem:[%s5 + $0x30] sm:$0xff]
      %v734 = vld [vmem:[%s5 + $0x38] sm:$0xff]
      %v735 = vld [vmem:[%s5 + $0x40] sm:$0xff]
      %v736 = vld [vmem:[%s5 + $0x48] sm:$0xff]
      %v737 = vld [vmem:[%s5 + $0x50] sm:$0xff]
      %v738 = vld [vmem:[%s5 + $0x58] sm:$0xff]
      %v739 = vld [vmem:[%s5 + $0x60] sm:$0xff]
      %v740 = vld [vmem:[%s5 + $0x68] sm:$0xff]
      %v741 = vld [vmem:[%s5 + $0x70] sm:$0xff]
      %v742 = vld [vmem:[%s5 + $0x78] sm:$0xff]
      %v743 = vld [vmem:[%s5 + $0x80] sm:$0xff]
      %v744 = vld [vmem:[%s5 + $0x88] sm:$0xff]
      %v745 = vld [vmem:[%s5 + $0x90] sm:$0xff]
      %v746 = vld [vmem:[%s5 + $0x98] sm:$0xff]
      %v747 = vld [vmem:[%s5 + $0xa0] sm:$0xff]
      %v748 = vld [vmem:[%s5 + $0xa8] sm:$0xff]
      %v749 = vld [vmem:[%s5 + $0xb0] sm:$0xff]
      %v750 = vld [vmem:[%s5 + $0xb8] sm:$0xff]
      %v751 = vld [vmem:[%s5 + $0xc0] sm:$0xff]
      %v752 = vld [vmem:[%s5 + $0xc8] sm:$0xff]
      %v753 = vld [vmem:[%s5 + $0xd0] sm:$0xff]
      %v754 = vld [vmem:[%s5 + $0xd8] sm:$0xff]
      %v755 = vld [vmem:[%s5 + $0xe0] sm:$0xff]
      %v756 = vld [vmem:[%s5 + $0xe8] sm:$0xff]
      %v757 = vld [vmem:[%s5 + $0xf0] sm:$0xff]
      %v758 = vld [vmem:[%s5 + $0xf8] sm:$0xff]
      %v759 = vpack.c.bf16 %v725, %v723
      %v760 = vpack.c.bf16 %v726, %v724
      %v793 = vunpack.c.l.b16 %v727
      %v794 = vunpack.c.h.b16 %v727
      %v795 = vunpack.c.l.b16 %v728
      %v796 = vunpack.c.h.b16 %v728
      %v797 = vunpack.c.l.b16 %v729
      %v798 = vunpack.c.h.b16 %v729
      %v799 = vunpack.c.l.b16 %v730
      %v800 = vunpack.c.h.b16 %v730
      %v801 = vunpack.c.l.b16 %v731
      %v802 = vunpack.c.h.b16 %v731
      %v803 = vunpack.c.l.b16 %v732
      %v804 = vunpack.c.h.b16 %v732
      %v805 = vunpack.c.l.b16 %v733
      %v806 = vunpack.c.h.b16 %v733
      %v807 = vunpack.c.l.b16 %v734
      %v808 = vunpack.c.h.b16 %v734
      %v809 = vunpack.c.l.b16 %v735
      %v810 = vunpack.c.h.b16 %v735
      %v811 = vunpack.c.l.b16 %v736
      %v812 = vunpack.c.h.b16 %v736
      %v813 = vunpack.c.l.b16 %v737
      %v814 = vunpack.c.h.b16 %v737
      %v815 = vunpack.c.l.b16 %v738
      %v816 = vunpack.c.h.b16 %v738
      %v817 = vunpack.c.l.b16 %v739
      %v818 = vunpack.c.h.b16 %v739
      %v819 = vunpack.c.l.b16 %v740
      %v820 = vunpack.c.h.b16 %v740
      %v821 = vunpack.c.l.b16 %v741
      %v822 = vunpack.c.h.b16 %v741
      %v823 = vunpack.c.l.b16 %v742
      %v824 = vunpack.c.h.b16 %v742
      %v825 = vunpack.c.l.b16 %v743
      %v826 = vunpack.c.h.b16 %v743
      %v827 = vunpack.c.l.b16 %v744
      %v828 = vunpack.c.h.b16 %v744
      %v829 = vunpack.c.l.b16 %v745
      %v830 = vunpack.c.h.b16 %v745
      %v831 = vunpack.c.l.b16 %v746
      %v832 = vunpack.c.h.b16 %v746
      %v833 = vunpack.c.l.b16 %v747
      %v834 = vunpack.c.h.b16 %v747
      %v835 = vunpack.c.l.b16 %v748
      %v836 = vunpack.c.h.b16 %v748
      %v837 = vunpack.c.l.b16 %v749
      %v838 = vunpack.c.h.b16 %v749
      %v839 = vunpack.c.l.b16 %v750
      %v840 = vunpack.c.h.b16 %v750
      %v841 = vunpack.c.l.b16 %v751
      %v842 = vunpack.c.h.b16 %v751
      %v843 = vunpack.c.l.b16 %v752
      %v844 = vunpack.c.h.b16 %v752
      %v845 = vunpack.c.l.b16 %v753
      %v846 = vunpack.c.h.b16 %v753
      %v847 = vunpack.c.l.b16 %v754
      %v848 = vunpack.c.h.b16 %v754
      %v849 = vunpack.c.l.b16 %v755
      %v850 = vunpack.c.h.b16 %v755
      %v851 = vunpack.c.l.b16 %v756
      %v852 = vunpack.c.h.b16 %v756
      %v853 = vunpack.c.l.b16 %v757
      %v854 = vunpack.c.h.b16 %v757
      %v855 = vunpack.c.l.b16 %v758
      %v856 = vunpack.c.h.b16 %v758
      %v857 = vpack.c.b16 %v795, %v793
      %v858 = vpack.c.b16 %v796, %v794
      %v859 = vpack.c.b16 %v799, %v797
      %v860 = vpack.c.b16 %v800, %v798
      %v861 = vpack.c.b16 %v803, %v801
      %v862 = vpack.c.b16 %v804, %v802
      %v863 = vpack.c.b16 %v807, %v805
      %v864 = vpack.c.b16 %v808, %v806
      %v865 = vpack.c.b16 %v811, %v809
      %v866 = vpack.c.b16 %v812, %v810
      %v867 = vpack.c.b16 %v815, %v813
      %v868 = vpack.c.b16 %v816, %v814
      %v869 = vpack.c.b16 %v819, %v817
      %v870 = vpack.c.b16 %v820, %v818
      %v871 = vpack.c.b16 %v823, %v821
      %v872 = vpack.c.b16 %v824, %v822
      %v873 = vpack.c.b16 %v827, %v825
      %v874 = vpack.c.b16 %v828, %v826
      %v875 = vpack.c.b16 %v831, %v829
      %v876 = vpack.c.b16 %v832, %v830
      %v877 = vpack.c.b16 %v835, %v833
      %v878 = vpack.c.b16 %v836, %v834
      %v879 = vpack.c.b16 %v839, %v837
      %v880 = vpack.c.b16 %v840, %v838
      %v881 = vpack.c.b16 %v843, %v841
      %v882 = vpack.c.b16 %v844, %v842
      %v883 = vpack.c.b16 %v847, %v845
      %v884 = vpack.c.b16 %v848, %v846
      %v885 = vpack.c.b16 %v851, %v849
      %v886 = vpack.c.b16 %v852, %v850
      %v887 = vpack.c.b16 %v855, %v853
      %v888 = vpack.c.b16 %v856, %v854
      %921 = vmatprep.subr.bf16.mxu0 %v872
      %922 = vmatpush1.bf16.msra.mxu0 %v871
      %923 = vmatprep.subr.bf16.mxu0 %v870
      %924 = vmatpush1.bf16.msra.mxu0 %v869
      %925 = vmatprep.subr.bf16.mxu0 %v868
      %926 = vmatpush1.bf16.msra.mxu0 %v867
      %927 = vmatprep.subr.bf16.mxu0 %v866
      %928 = vmatpush1.bf16.msra.mxu0 %v865
      %929 = vmatprep.subr.bf16.mxu0 %v864
      %930 = vmatpush1.bf16.msra.mxu0 %v863
      %931 = vmatprep.subr.bf16.mxu0 %v862
      %932 = vmatpush1.bf16.msra.mxu0 %v861
      %933 = vmatprep.subr.bf16.mxu0 %v860
      %934 = vmatpush1.bf16.msra.mxu0 %v859
      %935 = vmatprep.subr.bf16.mxu0 %v858
      %936 = vmatpush1.bf16.msra.mxu0 %v857
      %937 = vmatprep.subr.bf16.mxu0 %v888
      %938 = vmatpush2.bf16.msra.mxu0 %v887
      %939 = vmatprep.subr.bf16.mxu0 %v886
      %940 = vmatpush2.bf16.msra.mxu0 %v885
      %941 = vmatprep.subr.bf16.mxu0 %v884
      %942 = vmatpush2.bf16.msra.mxu0 %v883
      %943 = vmatprep.subr.bf16.mxu0 %v882
      %944 = vmatpush2.bf16.msra.mxu0 %v881
      %945 = vmatprep.subr.bf16.mxu0 %v880
      %946 = vmatpush2.bf16.msra.mxu0 %v879
      %947 = vmatprep.subr.bf16.mxu0 %v878
      %948 = vmatpush2.bf16.msra.mxu0 %v877
      %949 = vmatprep.subr.bf16.mxu0 %v876
      %950 = vmatpush2.bf16.msra.mxu0 %v875
      %951 = vmatprep.subr.bf16.mxu0 %v874
      %952 = vmatpush2.bf16.msra.mxu0 %v873
      %953 = vmatprep.mubr.bf16.mxu0 %v760
      %954 = vmatmul.mubr.bf16.gmra.mxu0 %v759
      %v955 = vpop.f32.mrf.mxu0
      %v956 = vadd.f32 0.0, %v955
      %v957 = vpop.f32.mrf.mxu0
      %v958 = vadd.f32 0.0, %v957
      %v959 = vpop.f32.mrf.mxu0
      %v960 = vadd.f32 0.0, %v959
      %v961 = vpop.f32.mrf.mxu0
      %v962 = vadd.f32 0.0, %v961
      %963 = vdwg.mxu0
      %v964 = vld [vmem:[%s6] sm:$0x3]
      %v966 = vlaneseq
      %v967 = vshrl.u32 %v966, 7
      %v968 = vsub.s32 0, %v967
      %v969 = vrot.slane %v964, %v968
      %v970 = vlaneseq
      %v971 = vshrl.u32 %v970, 7
      %v972 = vsub.s32 1, %v971
      %v973 = vrot.slane %v964, %v972
      %v976 = vmul.f32 %v956, %v969
      %v977 = vmul.f32 %v958, %v973
      %v978 = vmul.f32 %v960, %v969
      %v979 = vmul.f32 %v962, %v973
      %v980 = vld [vmem:[%s7] sm:$0x3]
      %v982 = vlaneseq
      %v983 = vshrl.u32 %v982, 7
      %v984 = vsub.s32 0, %v983
      %v985 = vrot.slane %v980, %v984
      %v986 = vlaneseq
      %v987 = vshrl.u32 %v986, 7
      %v988 = vsub.s32 1, %v987
      %v989 = vrot.slane %v980, %v988
      %v992 = vadd.f32 %v976, %v985
      %v993 = vadd.f32 %v977, %v989
      %v994 = vadd.f32 %v978, %v985
      %v995 = vadd.f32 %v979, %v989
      %vm996 = vcmp.ge.f32.partialorder %v992, 0.0
      %vm997 = vcmp.ge.f32.partialorder %v993, 0.0
      %vm998 = vcmp.ge.f32.partialorder %v994, 0.0
      %vm999 = vcmp.ge.f32.partialorder %v995, 0.0
      %v1000 = vmul.f32 %v992, 0.2
      %v1001 = vmul.f32 %v993, 0.2
      %v1002 = vmul.f32 %v994, 0.2
      %v1003 = vmul.f32 %v995, 0.2
      %v1004 = vsel %vm996, %v992, %v1000
      %v1005 = vsel %vm997, %v993, %v1001
      %v1006 = vsel %vm998, %v994, %v1002
      %v1007 = vsel %vm999, %v995, %v1003
      %v1008 = vld [vmem:[%s8] sm:$0xf]
      %v1009 = vld [vmem:[%s8 + $0x4] sm:$0xf]
      %v1010 = vld [vmem:[%s8 + $0x8] sm:$0xf]
      %v1011 = vld [vmem:[%s8 + $0xc] sm:$0xf]
      %v1012 = vld [vmem:[%s8 + $0x10] sm:$0xf]
      %v1013 = vld [vmem:[%s8 + $0x14] sm:$0xf]
      %v1014 = vld [vmem:[%s8 + $0x18] sm:$0xf]
      %v1015 = vld [vmem:[%s8 + $0x1c] sm:$0xf]
      %v1016 = vld [vmem:[%s8 + $0x20] sm:$0xf]
      %v1017 = vld [vmem:[%s8 + $0x24] sm:$0xf]
      %v1018 = vld [vmem:[%s8 + $0x28] sm:$0xf]
      %v1019 = vld [vmem:[%s8 + $0x2c] sm:$0xf]
      %v1020 = vld [vmem:[%s8 + $0x30] sm:$0xf]
      %v1021 = vld [vmem:[%s8 + $0x34] sm:$0xf]
      %v1022 = vld [vmem:[%s8 + $0x38] sm:$0xf]
      %v1023 = vld [vmem:[%s8 + $0x3c] sm:$0xf]
      %v1024 = vld [vmem:[%s8 + $0x40] sm:$0xf]
      %v1025 = vld [vmem:[%s8 + $0x44] sm:$0xf]
      %v1026 = vld [vmem:[%s8 + $0x48] sm:$0xf]
      %v1027 = vld [vmem:[%s8 + $0x4c] sm:$0xf]
      %v1028 = vld [vmem:[%s8 + $0x50] sm:$0xf]
      %v1029 = vld [vmem:[%s8 + $0x54] sm:$0xf]
      %v1030 = vld [vmem:[%s8 + $0x58] sm:$0xf]
      %v1031 = vld [vmem:[%s8 + $0x5c] sm:$0xf]
      %v1032 = vld [vmem:[%s8 + $0x60] sm:$0xf]
      %v1033 = vld [vmem:[%s8 + $0x64] sm:$0xf]
      %v1034 = vld [vmem:[%s8 + $0x68] sm:$0xf]
      %v1035 = vld [vmem:[%s8 + $0x6c] sm:$0xf]
      %v1036 = vld [vmem:[%s8 + $0x70] sm:$0xf]
      %v1037 = vld [vmem:[%s8 + $0x74] sm:$0xf]
      %v1038 = vld [vmem:[%s8 + $0x78] sm:$0xf]
      %v1039 = vld [vmem:[%s8 + $0x7c] sm:$0xf]
      %v1040 = vpack.c.bf16 %v1006, %v1004
      %v1041 = vpack.c.bf16 %v1007, %v1005
      %v1074 = vunpack.c.l.b16 %v1008
      %v1075 = vunpack.c.l.b16 %v1009
      %v1076 = vunpack.c.l.b16 %v1010
      %v1077 = vunpack.c.l.b16 %v1011
      %v1078 = vunpack.c.l.b16 %v1012
      %v1079 = vunpack.c.l.b16 %v1013
      %v1080 = vunpack.c.l.b16 %v1014
      %v1081 = vunpack.c.l.b16 %v1015
      %v1082 = vunpack.c.l.b16 %v1016
      %v1083 = vunpack.c.l.b16 %v1017
      %v1084 = vunpack.c.l.b16 %v1018
      %v1085 = vunpack.c.l.b16 %v1019
      %v1086 = vunpack.c.l.b16 %v1020
      %v1087 = vunpack.c.l.b16 %v1021
      %v1088 = vunpack.c.l.b16 %v1022
      %v1089 = vunpack.c.l.b16 %v1023
      %v1090 = vunpack.c.l.b16 %v1024
      %v1091 = vunpack.c.l.b16 %v1025
      %v1092 = vunpack.c.l.b16 %v1026
      %v1093 = vunpack.c.l.b16 %v1027
      %v1094 = vunpack.c.l.b16 %v1028
      %v1095 = vunpack.c.l.b16 %v1029
      %v1096 = vunpack.c.l.b16 %v1030
      %v1097 = vunpack.c.l.b16 %v1031
      %v1098 = vunpack.c.l.b16 %v1032
      %v1099 = vunpack.c.l.b16 %v1033
      %v1100 = vunpack.c.l.b16 %v1034
      %v1101 = vunpack.c.l.b16 %v1035
      %v1102 = vunpack.c.l.b16 %v1036
      %v1103 = vunpack.c.l.b16 %v1037
      %v1104 = vunpack.c.l.b16 %v1038
      %v1105 = vunpack.c.l.b16 %v1039
      %v1106 = vpack.c.b16 %v1075, %v1074
      %v1107 = vpack.c.b16 %v1077, %v1076
      %v1108 = vpack.c.b16 %v1079, %v1078
      %v1109 = vpack.c.b16 %v1081, %v1080
      %v1110 = vpack.c.b16 %v1083, %v1082
      %v1111 = vpack.c.b16 %v1085, %v1084
      %v1112 = vpack.c.b16 %v1087, %v1086
      %v1113 = vpack.c.b16 %v1089, %v1088
      %v1114 = vpack.c.b16 %v1091, %v1090
      %v1115 = vpack.c.b16 %v1093, %v1092
      %v1116 = vpack.c.b16 %v1095, %v1094
      %v1117 = vpack.c.b16 %v1097, %v1096
      %v1118 = vpack.c.b16 %v1099, %v1098
      %v1119 = vpack.c.b16 %v1101, %v1100
      %v1120 = vpack.c.b16 %v1103, %v1102
      %v1121 = vpack.c.b16 %v1105, %v1104
      %1138 = vmatprep.subr.bf16.mxu0 0
      %1139 = vmatpush1.bf16.msra.mxu0 %v1113
      %1140 = vmatprep.subr.bf16.mxu0 0
      %1141 = vmatpush1.bf16.msra.mxu0 %v1112
      %1142 = vmatprep.subr.bf16.mxu0 0
      %1143 = vmatpush1.bf16.msra.mxu0 %v1111
      %1144 = vmatprep.subr.bf16.mxu0 0
      %1145 = vmatpush1.bf16.msra.mxu0 %v1110
      %1146 = vmatprep.subr.bf16.mxu0 0
      %1147 = vmatpush1.bf16.msra.mxu0 %v1109
      %1148 = vmatprep.subr.bf16.mxu0 0
      %1149 = vmatpush1.bf16.msra.mxu0 %v1108
      %1150 = vmatprep.subr.bf16.mxu0 0
      %1151 = vmatpush1.bf16.msra.mxu0 %v1107
      %1152 = vmatprep.subr.bf16.mxu0 0
      %1153 = vmatpush1.bf16.msra.mxu0 %v1106
      %1154 = vmatprep.subr.bf16.mxu0 0
      %1155 = vmatpush2.bf16.msra.mxu0 %v1121
      %1156 = vmatprep.subr.bf16.mxu0 0
      %1157 = vmatpush2.bf16.msra.mxu0 %v1120
      %1158 = vmatprep.subr.bf16.mxu0 0
      %1159 = vmatpush2.bf16.msra.mxu0 %v1119
      %1160 = vmatprep.subr.bf16.mxu0 0
      %1161 = vmatpush2.bf16.msra.mxu0 %v1118
      %1162 = vmatprep.subr.bf16.mxu0 0
      %1163 = vmatpush2.bf16.msra.mxu0 %v1117
      %1164 = vmatprep.subr.bf16.mxu0 0
      %1165 = vmatpush2.bf16.msra.mxu0 %v1116
      %1166 = vmatprep.subr.bf16.mxu0 0
      %1167 = vmatpush2.bf16.msra.mxu0 %v1115
      %1168 = vmatprep.subr.bf16.mxu0 0
      %1169 = vmatpush2.bf16.msra.mxu0 %v1114
      %1170 = vmatprep.mubr.bf16.mxu0 %v1041
      %1171 = vmatmul.mubr.bf16.gmra.mxu0 %v1040
      %v1172 = vpop.f32.mrf.mxu0
      %v1173 = vadd.f32 0.0, %v1172
      %v1174 = vpop.f32.mrf.mxu0
      %v1175 = vpop.f32.mrf.mxu0
      %v1176 = vadd.f32 0.0, %v1175
      %v1177 = vpop.f32.mrf.mxu0
      %1178 = vdwg.mxu0
      %v1179 = vld [vmem:[%s9] sm:$0x1]
      %v1181 = vlaneseq
      %v1182 = vshrl.u32 %v1181, 7
      %v1183 = vsub.s32 0, %v1182
      %v1184 = vrot.slane %v1179, %v1183
      %v1186 = vmul.f32 %v1173, %v1184
      %v1187 = vmul.f32 %v1176, %v1184
      %v1188 = vld [vmem:[%s10] sm:$0x1]
      %v1190 = vlaneseq
      %v1191 = vshrl.u32 %v1190, 7
      %v1192 = vsub.s32 0, %v1191
      %v1193 = vrot.slane %v1188, %v1192
      %v1195 = vadd.f32 %v1186, %v1193
      %v1196 = vadd.f32 %v1187, %v1193
      %vm1197 = vcmp.ge.f32.partialorder %v1195, 0.0
      %vm1198 = vcmp.ge.f32.partialorder %v1196, 0.0
      %v1199 = vmul.f32 %v1195, 0.2
      %v1200 = vmul.f32 %v1196, 0.2
      %v1201 = vsel %vm1197, %v1195, %v1199
      %v1202 = vsel %vm1198, %v1196, %v1200
      %v1203 = vld [vmem:[%s11] sm:$0xf]
      %v1204 = vld [vmem:[%s11 + $0x4] sm:$0xf]
      %v1205 = vld [vmem:[%s11 + $0x8] sm:$0xf]
      %v1206 = vld [vmem:[%s11 + $0xc] sm:$0xf]
      %v1207 = vld [vmem:[%s11 + $0x10] sm:$0xf]
      %v1208 = vld [vmem:[%s11 + $0x14] sm:$0xf]
      %v1209 = vld [vmem:[%s11 + $0x18] sm:$0xf]
      %v1210 = vld [vmem:[%s11 + $0x1c] sm:$0xf]
      %v1211 = vld [vmem:[%s11 + $0x20] sm:$0xf]
      %v1212 = vld [vmem:[%s11 + $0x24] sm:$0xf]
      %v1213 = vld [vmem:[%s11 + $0x28] sm:$0xf]
      %v1214 = vld [vmem:[%s11 + $0x2c] sm:$0xf]
      %v1215 = vld [vmem:[%s11 + $0x30] sm:$0xf]
      %v1216 = vld [vmem:[%s11 + $0x34] sm:$0xf]
      %v1217 = vld [vmem:[%s11 + $0x38] sm:$0xf]
      %v1218 = vld [vmem:[%s11 + $0x3c] sm:$0xf]
      %v1219 = vpack.c.bf16 %v1202, %v1201
      %v1236 = vunpack.c.l.b16 %v1203
      %v1237 = vunpack.c.l.b16 %v1204
      %v1238 = vunpack.c.l.b16 %v1205
      %v1239 = vunpack.c.l.b16 %v1206
      %v1240 = vunpack.c.l.b16 %v1207
      %v1241 = vunpack.c.l.b16 %v1208
      %v1242 = vunpack.c.l.b16 %v1209
      %v1243 = vunpack.c.l.b16 %v1210
      %v1244 = vunpack.c.l.b16 %v1211
      %v1245 = vunpack.c.l.b16 %v1212
      %v1246 = vunpack.c.l.b16 %v1213
      %v1247 = vunpack.c.l.b16 %v1214
      %v1248 = vunpack.c.l.b16 %v1215
      %v1249 = vunpack.c.l.b16 %v1216
      %v1250 = vunpack.c.l.b16 %v1217
      %v1251 = vunpack.c.l.b16 %v1218
      %v1252 = vpack.c.b16 %v1237, %v1236
      %v1253 = vpack.c.b16 %v1239, %v1238
      %v1254 = vpack.c.b16 %v1241, %v1240
      %v1255 = vpack.c.b16 %v1243, %v1242
      %v1256 = vpack.c.b16 %v1245, %v1244
      %v1257 = vpack.c.b16 %v1247, %v1246
      %v1258 = vpack.c.b16 %v1249, %v1248
      %v1259 = vpack.c.b16 %v1251, %v1250
      %1268 = vmatprep.subr.bf16.mxu0 0
      %1269 = vmatpush1.bf16.msra.mxu0 %v1259
      %1270 = vmatprep.subr.bf16.mxu0 0
      %1271 = vmatpush1.bf16.msra.mxu0 %v1258
      %1272 = vmatprep.subr.bf16.mxu0 0
      %1273 = vmatpush1.bf16.msra.mxu0 %v1257
      %1274 = vmatprep.subr.bf16.mxu0 0
      %1275 = vmatpush1.bf16.msra.mxu0 %v1256
      %1276 = vmatprep.subr.bf16.mxu0 0
      %1277 = vmatpush1.bf16.msra.mxu0 %v1255
      %1278 = vmatprep.subr.bf16.mxu0 0
      %1279 = vmatpush1.bf16.msra.mxu0 %v1254
      %1280 = vmatprep.subr.bf16.mxu0 0
      %1281 = vmatpush1.bf16.msra.mxu0 %v1253
      %1282 = vmatprep.subr.bf16.mxu0 0
      %1283 = vmatpush1.bf16.msra.mxu0 %v1252
      %1284 = vmatprep.subr.bf16.mxu0 0
      %1285 = vmatpush2.bf16.msra.mxu0 0
      %1286 = vmatprep.subr.bf16.mxu0 0
      %1287 = vmatpush2.bf16.msra.mxu0 0
      %1288 = vmatprep.subr.bf16.mxu0 0
      %1289 = vmatpush2.bf16.msra.mxu0 0
      %1290 = vmatprep.subr.bf16.mxu0 0
      %1291 = vmatpush2.bf16.msra.mxu0 0
      %1292 = vmatprep.subr.bf16.mxu0 0
      %1293 = vmatpush2.bf16.msra.mxu0 0
      %1294 = vmatprep.subr.bf16.mxu0 0
      %1295 = vmatpush2.bf16.msra.mxu0 0
      %1296 = vmatprep.subr.bf16.mxu0 0
      %1297 = vmatpush2.bf16.msra.mxu0 0
      %1298 = vmatprep.subr.bf16.mxu0 0
      %1299 = vmatpush2.bf16.msra.mxu0 0
      %1300 = vmatprep.mubr.bf16.mxu0 0
      %1301 = vmatmul.mubr.bf16.gmra.mxu0 %v1219
      %v1302 = vpop.f32.mrf.mxu0
      %v1303 = vadd.f32 0.0, %v1302
      %v1304 = vpop.f32.mrf.mxu0
      %v1305 = vpop.f32.mrf.mxu0
      %v1306 = vadd.f32 0.0, %v1305
      %v1307 = vpop.f32.mrf.mxu0
      %1308 = vdwg.mxu0
      %1309 = vst [vmem:[%s471] sm:$0xff] %v1303
      %1310 = vst [vmem:[%s471 + $0x8] sm:$0xff] %v1306
      %s1311 = smul.u32 2, %s27
      %p1312 = scmp.lt.s32.totalorder %s28, 1
      %s1313 = scalar_select %p1312, %s28, 1
      %p1314 = scmp.lt.s32.totalorder %s1311, 1
      %s1315 = scalar_select %p1314, %s1311, 1
      %s1316 = smul.addr %s1313, 2
      %s1317 = sadd.s32 %s1315, %s1316
      %s1318 = smul.addr %s1317, 8
      %s1319 = scalar_lea.vmem %s12, %s1318
      // Predicated region
      $region69: #{_lambda_.21} parent=67 // pred_check
        %p1320 = pneg %p319
      $region70: #{_lambda_.21} parent=67 // pred_check_branch
        %1322 = sbr.rel (%p1320) target = $region72
      $region71: #{_lambda_.21} parent=67 // pred_region
        %s1323 = smul.u32 2, %s27
      $region72: #{_lambda_.21} parent=67 // pred_fallthru
        _
    $region68: #{_lambda_.21} parent=5 // pred_fallthru
      _
    %p1324 = scmp.le.s32.totalorder 2, %s18
    // Predicated region
    $region73: #{_lambda_.21} parent=5 // pred_check
      %p1325 = pneg %p1324
    $region74: #{_lambda_.21} parent=5 // pred_check_branch
      %1327 = sbr.rel (%p1325) target = $region76
    $region75: #{_lambda_.21} parent=5 // pred_region
      %s1328 = ssub.s32 %s18, 2
      // Predicated region
      $region77: #{_lambda_.21} parent=75 // pred_check
        %p1329 = pneg %p325
      $region78: #{_lambda_.21} parent=75 // pred_check_branch
        %1331 = sbr.rel (%p1329) target = $region80
      $region79: #{_lambda_.21} parent=75 // pred_region
        %s1332 = smul.u32 2, %s29
        %p1333 = scmp.lt.s32.totalorder %s30, 1
        %s1334 = scalar_select %p1333, %s30, 1
        %p1335 = scmp.lt.s32.totalorder %s1332, 1
        %s1336 = scalar_select %p1335, %s1332, 1
        %s1337 = smul.addr %s1334, 2
        %s1338 = sadd.s32 %s1336, %s1337
        %s1339 = smul.addr %s1338, 8
        %s1340 = scalar_lea.vmem %s12, %s1339
      $region80: #{_lambda_.21} parent=75 // pred_fallthru
        _
    $region76: #{_lambda_.21} parent=5 // pred_fallthru
      _
  $region6: #{_lambda_.21} parent=0 // loop_footer
    %s22 = sadd.s32 1, %s18
  $region7: #{_lambda_.21} parent=0 // loop_footer_branch
    %17 = sbr.rel target = $region3
  $region8: #{_lambda_.21} parent=0 // loop_exit
    _

</llo_original>
